<compile_context>
chip_gen: v7x
topology: tpu7x:2x2x1
jax: 0.10.0
libtpu: 0.0.40
codegen_flags: <defaults>
</compile_context>

<pallas_src>
import jax
import jax.numpy as jnp
from jax import lax
from jax.experimental import pallas as pl
from jax.experimental.pallas import tpu as pltpu

_EXACT_GELU = False   # True -> Abramowitz&Stegun erf polynomial (closer to torch GELU)


# ----------------------------- in-kernel helpers ---------------------------

def _gelu(x):
    if _EXACT_GELU:
        z = x * 0.7071067811865476
        a = jnp.abs(z)
        t = 1.0 / (1.0 + 0.3275911 * a)
        poly = t * (0.254829592 + t * (-0.284496736 + t * (1.421413741
                   + t * (-1.453152027 + t * 1.061405429))))
        erf_a = 1.0 - poly * jnp.exp(-a * a)
        erf_z = jnp.where(z >= 0.0, erf_a, -erf_a)
        return 0.5 * x * (1.0 + erf_z)
    # tanh-approx GELU: a single EUP transcendental instead of ~10 VPU ops.
    return 0.5 * x * (1.0 + jnp.tanh(0.7978845608028654 * (x + 0.044715 * x * x * x)))


def _l2norm(x):
    # F.normalize(x, p=2) over channels: x / max(||x||, 1e-12) == x * rsqrt(max(ss, 1e-24))
    ss = jnp.sum(x * x, axis=-1, keepdims=True)
    return x * lax.rsqrt(jnp.maximum(ss, 1e-24))


def _zero_border(pad_ref):
    # Only the 1-pixel ring must be zero; the interior is fully overwritten each
    # grid step, so no full-buffer zero sweep is needed.
    hp, wp, c = pad_ref.shape
    zr = jnp.zeros((1, wp, c), jnp.float32)
    zc = jnp.zeros((hp, 1, c), jnp.float32)
    pad_ref[0:1, :, :] = zr
    pad_ref[hp - 1:hp, :, :] = zr
    pad_ref[:, 0:1, :] = zc
    pad_ref[:, wp - 1:wp, :] = zc


def _im2col9(pad_ref, h, w, c):
    # 9 shifted (h, w, c) views of the zero-padded buffer, flattened and
    # concatenated along lanes -> (h*w, 9c) feeding one MXU matmul.
    cols = []
    for k in range(9):
        dy, dx = k // 3, k % 3
        cols.append(pad_ref[dy:dy + h, dx:dx + w, :].reshape(h * w, c))
    return jnp.concatenate(cols, axis=-1)


# ------------------------------- fused kernel ------------------------------

def _fmb_kernel(x_ref,
                l0_w, l0_b, l1_w, l1_b, l2_w, l2_b,
                dw_w, dw_b,
                lde_w, lde_b, lde1_w, lde1_b,
                alpha, belt,
                c0_w, c0_b, c1_w, c1_b, c2_w, c2_b,
                o_ref,
                pad_img, pad_pool, pad_part):
    H, W, C = x_ref.shape
    HW = H * W
    Hs, Ws = H // 8, W // 8
    p_dim = c1_b.shape[-1]

    _zero_border(pad_img)
    _zero_border(pad_pool)
    _zero_border(pad_part)

    f = x_ref[...]                                            # (H, W, C) f32

    # ------------------------- SMFA(F.normalize(x)) -------------------------
    n1 = _l2norm(f)
    yx = jnp.dot(n1.reshape(HW, C), l0_w[...],
                 preferred_element_type=jnp.float32) + l0_b[...]        # (HW, 2C)
    xx = yx[:, C:]                                            # "x" chunk (HW, C)
    x_img = xx.reshape(H, W, C)

    # pooled branch: adaptive max pool (8x8 windows) -> depthwise 3x3 (tiny map)
    pooled = jnp.max(jnp.max(x_img.reshape(Hs, 8, Ws, 8, C), axis=3), axis=1)
    pad_pool[1:Hs + 1, 1:Ws + 1, :] = pooled
    dwt = dw_w[...]                                           # (9, C)
    x_s = jnp.zeros((Hs, Ws, C), jnp.float32)
    for k in range(9):
        dy, dx = k // 3, k % 3
        x_s = x_s + pad_pool[dy:dy + Hs, dx:dx + Ws, :] * dwt[k:k + 1, :]
    x_s = x_s + dw_b[...]

    # spatial variance over (H, W): two-pass (subtract mean) to avoid cancellation
    mu = jnp.sum(xx, axis=0, keepdims=True) * (1.0 / float(HW))          # (1, C)
    d = xx - mu
    x_v = jnp.sum(d * d, axis=0, keepdims=True) * (1.0 / float(HW - 1))  # (1, C)

    # gate: gelu(linear_1(x_s*alpha + x_v*belt)), nearest-upsampled, times x
    t = x_s * alpha[...] + x_v * belt[...]                    # (Hs, Ws, C)
    t = jnp.dot(t.reshape(Hs * Ws, C), l1_w[...],
                preferred_element_type=jnp.float32) + l1_b[...]
    t3 = _gelu(t).reshape(Hs, Ws, C)
    x_l = (x_img.reshape(Hs, 8, Ws, 8, C)
           * t3[:, None, :, None, :]).reshape(HW, C)

    # DMlp on y: grouped 3x3 + 1x1 folded (at init) into ONE (9C, 2C) weight,
    # applied as a single im2col MXU matmul; then gelu; then 1x1 back to C.
    pad_img[1:H + 1, 1:W + 1, :] = yx[:, :C].reshape(H, W, C)
    cols = _im2col9(pad_img, H, W, C)                         # (HW, 9C)
    h1 = _gelu(jnp.dot(cols, lde_w[...],
                       preferred_element_type=jnp.float32) + lde_b[...])   # (HW, 2C)
    y_d = jnp.dot(h1, lde1_w[...], preferred_element_type=jnp.float32) + lde1_b[...]

    s = x_l + y_d
    smfa_out = jnp.dot(s, l2_w[...], preferred_element_type=jnp.float32) + l2_b[...]
    x1 = smfa_out.reshape(H, W, C) + f                        # first residual

    # ------------------------ PCFN(F.normalize(x1)) -------------------------
    n2 = _l2norm(x1)
    hcat = _gelu(jnp.dot(n2.reshape(HW, C), c0_w[...],
                         preferred_element_type=jnp.float32) + c0_b[...])  # (HW, hidden)

    # conv_1: full 3x3 on the partial channels as ONE im2col matmul (HW,9p)@(9p,p)
    pad_part[1:H + 1, 1:W + 1, :] = hcat[:, :p_dim].reshape(H, W, p_dim)
    cols_p = _im2col9(pad_part, H, W, p_dim)                  # (HW, 9p)
    x1c = _gelu(jnp.dot(cols_p, c1_w[...],
                        preferred_element_type=jnp.float32) + c1_b[...])   # (HW, p)

    # conv_2 on concat([act(conv_1(x_p)), x_rest]) as a single K=hidden matmul
    cat2 = jnp.concatenate([x1c, hcat[:, p_dim:]], axis=-1)   # (HW, hidden)
    pcfn_out = jnp.dot(cat2, c2_w[...],
                       preferred_element_type=jnp.float32) + c2_b[...]
    o_ref[...] = (pcfn_out.reshape(H, W, C) + x1).astype(o_ref.dtype)
    # NOTE: feature_show(...) debug dumps of the reference are intentionally omitted.


# ------------------------------- host wrapper -------------------------------

_W_ORDER = ("l0_w", "l0_b", "l1_w", "l1_b", "l2_w", "l2_b",
            "dw_w", "dw_b",
            "lde_w", "lde_b", "lde1_w", "lde1_b",
            "alpha", "belt",
            "c0_w", "c0_b", "c1_w", "c1_b", "c2_w", "c2_b")


def fmb_forward_nhwc(x_nhwc, p):
    """FMB forward on an NHWC feature map (preferred entry when chaining blocks:
    no per-block NCHW<->NHWC transposes)."""
    x = x_nhwc.astype(jnp.float32)
    B, H, W, C = x.shape
    assert H % 8 == 0 and W % 8 == 0, "down_scale=8 needs H, W divisible by 8"
    Hs, Ws = H // 8, W // 8
    hidden = p["c0_b"].shape[-1]
    p_dim = p["c1_b"].shape[-1]

    weights = [p[name] for name in _W_ORDER]

    def resident(arr):  # weight stays VMEM-resident across the batch grid
        return pl.BlockSpec(arr.shape, lambda b, _n=arr.ndim: (0,) * _n)

    img_spec = pl.BlockSpec((None, H, W, C), lambda b: (b, 0, 0, 0))

    # Advisory cost estimate (MXU flops dominate) so XLA schedules around the call.
    mm = 2 * H * W * (C * 2 * C + 9 * C * 2 * C + 2 * C * C + C * C
                      + C * hidden + 9 * p_dim * p_dim + hidden * C) \
         + 2 * Hs * Ws * C * C
    cost = pl.CostEstimate(
        flops=int(B * (mm + 60 * H * W * C)),
        transcendentals=int(B * H * W * (2 * C + hidden + p_dim)),
        bytes_accessed=int(4 * (2 * x.size + sum(int(w.size) for w in weights))))

    out = pl.pallas_call(
        _fmb_kernel,
        out_shape=jax.ShapeDtypeStruct((B, H, W, C), jnp.float32),
        grid=(B,),
        in_specs=[img_spec] + [resident(a) for a in weights],
        out_specs=img_spec,
        scratch_shapes=[
            pltpu.VMEM((H + 2, W + 2, C), jnp.float32),       # pad buf: DMlp 3x3 im2col
            pltpu.VMEM((Hs + 2, Ws + 2, C), jnp.float32),     # pad buf: pooled dw 3x3
            pltpu.VMEM((H + 2, W + 2, p_dim), jnp.float32),   # pad buf: PCFN 3x3 im2col
        ],
        compiler_params=pltpu.CompilerParams(
            dimension_semantics=("parallel",),
            vmem_limit_bytes=64 * 1024 * 1024),               # > 16/32 MiB scoped defaults
        cost_estimate=cost,
    )(x, *weights)
    return out


def fmb_forward(x_nchw, p):
    # NCHW public API (PyTorch convention); transpose only at the network boundary.
    x = jnp.transpose(x_nchw, (0, 2, 3, 1))
    return jnp.transpose(fmb_forward_nhwc(x, p), (0, 3, 1, 2))


# --------------------------- deterministic params ---------------------------

def init_params(key, dim):
    hidden = int(dim * 2.0)              # ffn_scale / growth_rate = 2.0
    p_dim = int(hidden * 0.25)
    ks = jax.random.split(key, 15)

    def w(k, shape, scale=0.1):
        return (scale * jax.random.normal(k, shape)).astype(jnp.float32)

    # generated in torch Conv2d layout (Cout, Cin, kh, kw), converted below
    l0, l0_b = w(ks[0], (2 * dim, dim, 1, 1)), w(ks[1], (2 * dim,))
    l1, l1_b = w(ks[2], (dim, dim, 1, 1)), w(ks[3], (dim,))
    l2, l2_b = w(ks[4], (dim, dim, 1, 1)), w(ks[5], (dim,))
    dw, dw_b = w(ks[6], (dim, 1, 3, 3)), w(ks[7], (dim,))
    lde0_dw, lde0_dw_b = w(ks[8], (2 * dim, 1, 3, 3)), w(ks[9], (2 * dim,))
    lde0_pw, lde0_pw_b = w(ks[10], (2 * dim, 2 * dim, 1, 1)), w(ks[11], (2 * dim,))
    lde1, lde1_b = w(ks[12], (dim, 2 * dim, 1, 1)), w(ks[13], (dim,))
    kp = jax.random.split(ks[14], 6)
    c0, c0_b = w(kp[0], (hidden, dim, 1, 1)), w(kp[1], (hidden,))
    c1, c1_b = w(kp[2], (p_dim, p_dim, 3, 3)), w(kp[3], (p_dim,))
    c2, c2_b = w(kp[4], (dim, hidden, 1, 1)), w(kp[5], (dim,))

    def pw_mat(wt):   # (Cout, Cin, 1, 1) -> (Cin, Cout) matmul weight
        return jnp.transpose(wt[:, :, 0, 0], (1, 0))

    # SMFA pooled-branch depthwise taps: (C, 1, 3, 3) -> (9, C)
    dw_taps = jnp.transpose(dw[:, 0].reshape(dim, 9), (1, 0))

    # DMlp conv_0 = grouped 3x3 (dim->2dim, groups=dim) + 1x1 (2dim->2dim) composed
    # at init into one dense 3x3 conv, laid out as a (9*dim, 2*dim) im2col weight
    # (row index = tap*dim + cin):  W[tap, c, o] = sum_j pw[o, 2c+j] * g[2c+j, tap]
    pwm = lde0_pw[:, :, 0, 0]                                  # (o, m)
    g_taps = lde0_dw[:, 0].reshape(2 * dim, 9)                 # (m, tap)
    lde_w = jnp.einsum('ocj,cjt->tco',
                       pwm.reshape(2 * dim, dim, 2),
                       g_taps.reshape(dim, 2, 9)).reshape(9 * dim, 2 * dim)
    lde_b = pwm @ lde0_dw_b + lde0_pw_b                        # (2*dim,)

    # PCFN conv_1 stacked for im2col: (9*p_dim, p_dim), row index = tap*p_dim + cin
    c1_w = jnp.transpose(c1, (2, 3, 1, 0)).reshape(9 * p_dim, p_dim)

    return dict(
        l0_w=pw_mat(l0), l0_b=l0_b.reshape(1, -1),
        l1_w=pw_mat(l1), l1_b=l1_b.reshape(1, -1),
        l2_w=pw_mat(l2), l2_b=l2_b.reshape(1, -1),
        dw_w=dw_taps, dw_b=dw_b.reshape(1, -1),
        lde_w=lde_w, lde_b=lde_b.reshape(1, -1),
        lde1_w=pw_mat(lde1), lde1_b=lde1_b.reshape(1, -1),
        alpha=jnp.ones((1, dim), jnp.float32),                 # nn.Parameter(torch.ones)
        belt=jnp.zeros((1, dim), jnp.float32),                 # nn.Parameter(torch.zeros)
        c0_w=pw_mat(c0), c0_b=c0_b.reshape(1, -1),
        c1_w=c1_w, c1_b=c1_b.reshape(1, -1),
        c2_w=pw_mat(c2), c2_b=c2_b.reshape(1, -1),
    )


if __name__ == "__main__":
    dim, B, H, W = 16, 2, 16, 16          # H, W divisible by down_scale=8
    key = jax.random.PRNGKey(0)
    kx, kparam = jax.random.split(key)
    x = jax.random.normal(kx, (B, dim, H, W), dtype=jnp.float32)   # NCHW like torch
    params = init_params(kparam, dim)

    out = jax.jit(fmb_forward)(x, params)
    out = jax.block_until_ready(out)
    assert out.shape == (B, dim, H, W) and out.dtype == jnp.float32
    assert bool(jnp.all(jnp.isfinite(out)))
    print("KERNEL_OK")
</pallas_src>

<mosaic_0001>
module attributes {stable_mosaic.version = 11 : i64} {
  func.func @_fmb_kernel(%arg0: i32, %arg1: memref<1x16x16x16xf32, #tpu.memory_space<vmem>>, %arg2: memref<16x32xf32, #tpu.memory_space<vmem>>, %arg3: memref<1x32xf32, #tpu.memory_space<vmem>>, %arg4: memref<16x16xf32, #tpu.memory_space<vmem>>, %arg5: memref<1x16xf32, #tpu.memory_space<vmem>>, %arg6: memref<16x16xf32, #tpu.memory_space<vmem>>, %arg7: memref<1x16xf32, #tpu.memory_space<vmem>>, %arg8: memref<9x16xf32, #tpu.memory_space<vmem>>, %arg9: memref<1x16xf32, #tpu.memory_space<vmem>>, %arg10: memref<144x32xf32, #tpu.memory_space<vmem>>, %arg11: memref<1x32xf32, #tpu.memory_space<vmem>>, %arg12: memref<32x16xf32, #tpu.memory_space<vmem>>, %arg13: memref<1x16xf32, #tpu.memory_space<vmem>>, %arg14: memref<1x16xf32, #tpu.memory_space<vmem>>, %arg15: memref<1x16xf32, #tpu.memory_space<vmem>>, %arg16: memref<16x32xf32, #tpu.memory_space<vmem>>, %arg17: memref<1x32xf32, #tpu.memory_space<vmem>>, %arg18: memref<72x8xf32, #tpu.memory_space<vmem>>, %arg19: memref<1x8xf32, #tpu.memory_space<vmem>>, %arg20: memref<32x16xf32, #tpu.memory_space<vmem>>, %arg21: memref<1x16xf32, #tpu.memory_space<vmem>>, %arg22: memref<1x16x16x16xf32, #tpu.memory_space<vmem>>, %arg23: memref<18x18x16xf32, #tpu.memory_space<vmem>>, %arg24: memref<4x4x16xf32, #tpu.memory_space<vmem>>, %arg25: memref<18x18x8xf32, #tpu.memory_space<vmem>>) attributes {dimension_semantics = [#tpu.dimension_semantics<parallel>], iteration_bounds = array<i64: 2>, scalar_prefetch = 0 : i64, scratch_operands = 3 : i64, tpu.core_type = #tpu.core_type<tc>, window_params = [{transform_indices = @transform_0, window_bounds = array<i64: 1, 16, 16, 16>}, {pipeline_mode = #tpu.pipeline_mode<synchronous>, transform_indices = @transform_1, window_bounds = array<i64: 16, 32>}, {pipeline_mode = #tpu.pipeline_mode<synchronous>, transform_indices = @transform_2, window_bounds = array<i64: 1, 32>}, {pipeline_mode = #tpu.pipeline_mode<synchronous>, transform_indices = @transform_3, window_bounds = array<i64: 16, 16>}, {pipeline_mode = #tpu.pipeline_mode<synchronous>, transform_indices = @transform_4, window_bounds = array<i64: 1, 16>}, {pipeline_mode = #tpu.pipeline_mode<synchronous>, transform_indices = @transform_5, window_bounds = array<i64: 16, 16>}, {pipeline_mode = #tpu.pipeline_mode<synchronous>, transform_indices = @transform_6, window_bounds = array<i64: 1, 16>}, {pipeline_mode = #tpu.pipeline_mode<synchronous>, transform_indices = @transform_7, window_bounds = array<i64: 9, 16>}, {pipeline_mode = #tpu.pipeline_mode<synchronous>, transform_indices = @transform_8, window_bounds = array<i64: 1, 16>}, {pipeline_mode = #tpu.pipeline_mode<synchronous>, transform_indices = @transform_9, window_bounds = array<i64: 144, 32>}, {pipeline_mode = #tpu.pipeline_mode<synchronous>, transform_indices = @transform_10, window_bounds = array<i64: 1, 32>}, {pipeline_mode = #tpu.pipeline_mode<synchronous>, transform_indices = @transform_11, window_bounds = array<i64: 32, 16>}, {pipeline_mode = #tpu.pipeline_mode<synchronous>, transform_indices = @transform_12, window_bounds = array<i64: 1, 16>}, {pipeline_mode = #tpu.pipeline_mode<synchronous>, transform_indices = @transform_13, window_bounds = array<i64: 1, 16>}, {pipeline_mode = #tpu.pipeline_mode<synchronous>, transform_indices = @transform_14, window_bounds = array<i64: 1, 16>}, {pipeline_mode = #tpu.pipeline_mode<synchronous>, transform_indices = @transform_15, window_bounds = array<i64: 16, 32>}, {pipeline_mode = #tpu.pipeline_mode<synchronous>, transform_indices = @transform_16, window_bounds = array<i64: 1, 32>}, {pipeline_mode = #tpu.pipeline_mode<synchronous>, transform_indices = @transform_17, window_bounds = array<i64: 72, 8>}, {pipeline_mode = #tpu.pipeline_mode<synchronous>, transform_indices = @transform_18, window_bounds = array<i64: 1, 8>}, {pipeline_mode = #tpu.pipeline_mode<synchronous>, transform_indices = @transform_19, window_bounds = array<i64: 32, 16>}, {pipeline_mode = #tpu.pipeline_mode<synchronous>, transform_indices = @transform_20, window_bounds = array<i64: 1, 16>}, {transform_indices = @transform_21, window_bounds = array<i64: 1, 16, 16, 16>}]} {
    %cst = arith.constant 0.000000e+00 : f32
    %0 = vector.broadcast %cst : f32 to vector<1x18x16xf32>
    %cst_0 = arith.constant 0.000000e+00 : f32
    %1 = vector.broadcast %cst_0 : f32 to vector<18x1x16xf32>
    %c0 = arith.constant 0 : index
    %c0_1 = arith.constant 0 : index
    %c0_2 = arith.constant 0 : index
    %2 = vector.load %arg23[%c0, %c0_1, %c0_2] : memref<18x18x16xf32, #tpu.memory_space<vmem>>, vector<1x18x16xf32>
    tpu.vector_store %arg23[%c0, %c0_1, %c0_2], %0 {strides = array<i32>} : memref<18x18x16xf32, #tpu.memory_space<vmem>>, vector<1x18x16xf32>,
    %c17 = arith.constant 17 : index
    %c0_3 = arith.constant 0 : index
    %c0_4 = arith.constant 0 : index
    %3 = vector.load %arg23[%c17, %c0_3, %c0_4] : memref<18x18x16xf32, #tpu.memory_space<vmem>>, vector<1x18x16xf32>
    tpu.vector_store %arg23[%c17, %c0_3, %c0_4], %0 {strides = array<i32>} : memref<18x18x16xf32, #tpu.memory_space<vmem>>, vector<1x18x16xf32>,
    %c0_5 = arith.constant 0 : index
    %c0_6 = arith.constant 0 : index
    %c0_7 = arith.constant 0 : index
    %4 = vector.load %arg23[%c0_5, %c0_6, %c0_7] : memref<18x18x16xf32, #tpu.memory_space<vmem>>, vector<18x1x16xf32>
    tpu.vector_store %arg23[%c0_5, %c0_6, %c0_7], %1 {strides = array<i32>} : memref<18x18x16xf32, #tpu.memory_space<vmem>>, vector<18x1x16xf32>,
    %c0_8 = arith.constant 0 : index
    %c17_9 = arith.constant 17 : index
    %c0_10 = arith.constant 0 : index
    %5 = vector.load %arg23[%c0_8, %c17_9, %c0_10] : memref<18x18x16xf32, #tpu.memory_space<vmem>>, vector<18x1x16xf32>
    tpu.vector_store %arg23[%c0_8, %c17_9, %c0_10], %1 {strides = array<i32>} : memref<18x18x16xf32, #tpu.memory_space<vmem>>, vector<18x1x16xf32>,
    %cst_11 = arith.constant 0.000000e+00 : f32
    %6 = vector.broadcast %cst_11 : f32 to vector<1x4x16xf32>
    %cst_12 = arith.constant 0.000000e+00 : f32
    %7 = vector.broadcast %cst_12 : f32 to vector<4x1x16xf32>
    %c0_13 = arith.constant 0 : index
    %c0_14 = arith.constant 0 : index
    %c0_15 = arith.constant 0 : index
    %8 = vector.load %arg24[%c0_13, %c0_14, %c0_15] : memref<4x4x16xf32, #tpu.memory_space<vmem>>, vector<1x4x16xf32>
    tpu.vector_store %arg24[%c0_13, %c0_14, %c0_15], %6 {strides = array<i32>} : memref<4x4x16xf32, #tpu.memory_space<vmem>>, vector<1x4x16xf32>,
    %c3 = arith.constant 3 : index
    %c0_16 = arith.constant 0 : index
    %c0_17 = arith.constant 0 : index
    %9 = vector.load %arg24[%c3, %c0_16, %c0_17] : memref<4x4x16xf32, #tpu.memory_space<vmem>>, vector<1x4x16xf32>
    tpu.vector_store %arg24[%c3, %c0_16, %c0_17], %6 {strides = array<i32>} : memref<4x4x16xf32, #tpu.memory_space<vmem>>, vector<1x4x16xf32>,
    %c0_18 = arith.constant 0 : index
    %c0_19 = arith.constant 0 : index
    %c0_20 = arith.constant 0 : index
    %10 = vector.load %arg24[%c0_18, %c0_19, %c0_20] : memref<4x4x16xf32, #tpu.memory_space<vmem>>, vector<4x1x16xf32>
    tpu.vector_store %arg24[%c0_18, %c0_19, %c0_20], %7 {strides = array<i32>} : memref<4x4x16xf32, #tpu.memory_space<vmem>>, vector<4x1x16xf32>,
    %c0_21 = arith.constant 0 : index
    %c3_22 = arith.constant 3 : index
    %c0_23 = arith.constant 0 : index
    %11 = vector.load %arg24[%c0_21, %c3_22, %c0_23] : memref<4x4x16xf32, #tpu.memory_space<vmem>>, vector<4x1x16xf32>
    tpu.vector_store %arg24[%c0_21, %c3_22, %c0_23], %7 {strides = array<i32>} : memref<4x4x16xf32, #tpu.memory_space<vmem>>, vector<4x1x16xf32>,
    %cst_24 = arith.constant 0.000000e+00 : f32
    %12 = vector.broadcast %cst_24 : f32 to vector<1x18x8xf32>
    %cst_25 = arith.constant 0.000000e+00 : f32
    %13 = vector.broadcast %cst_25 : f32 to vector<18x1x8xf32>
    %c0_26 = arith.constant 0 : index
    %c0_27 = arith.constant 0 : index
    %c0_28 = arith.constant 0 : index
    %14 = vector.load %arg25[%c0_26, %c0_27, %c0_28] : memref<18x18x8xf32, #tpu.memory_space<vmem>>, vector<1x18x8xf32>
    tpu.vector_store %arg25[%c0_26, %c0_27, %c0_28], %12 {strides = array<i32>} : memref<18x18x8xf32, #tpu.memory_space<vmem>>, vector<1x18x8xf32>,
    %c17_29 = arith.constant 17 : index
    %c0_30 = arith.constant 0 : index
    %c0_31 = arith.constant 0 : index
    %15 = vector.load %arg25[%c17_29, %c0_30, %c0_31] : memref<18x18x8xf32, #tpu.memory_space<vmem>>, vector<1x18x8xf32>
    tpu.vector_store %arg25[%c17_29, %c0_30, %c0_31], %12 {strides = array<i32>} : memref<18x18x8xf32, #tpu.memory_space<vmem>>, vector<1x18x8xf32>,
    %c0_32 = arith.constant 0 : index
    %c0_33 = arith.constant 0 : index
    %c0_34 = arith.constant 0 : index
    %16 = vector.load %arg25[%c0_32, %c0_33, %c0_34] : memref<18x18x8xf32, #tpu.memory_space<vmem>>, vector<18x1x8xf32>
    tpu.vector_store %arg25[%c0_32, %c0_33, %c0_34], %13 {strides = array<i32>} : memref<18x18x8xf32, #tpu.memory_space<vmem>>, vector<18x1x8xf32>,
    %c0_35 = arith.constant 0 : index
    %c17_36 = arith.constant 17 : index
    %c0_37 = arith.constant 0 : index
    %17 = vector.load %arg25[%c0_35, %c17_36, %c0_37] : memref<18x18x8xf32, #tpu.memory_space<vmem>>, vector<18x1x8xf32>
    tpu.vector_store %arg25[%c0_35, %c17_36, %c0_37], %13 {strides = array<i32>} : memref<18x18x8xf32, #tpu.memory_space<vmem>>, vector<18x1x8xf32>,
    %c0_38 = arith.constant 0 : index
    %c0_39 = arith.constant 0 : index
    %c0_40 = arith.constant 0 : index
    %c0_41 = arith.constant 0 : index
    %18 = vector.load %arg1[%c0_38, %c0_39, %c0_40, %c0_41] : memref<1x16x16x16xf32, #tpu.memory_space<vmem>>, vector<1x16x16x16xf32>
    %19 = vector.shape_cast %18 : vector<1x16x16x16xf32> to vector<16x16x16xf32>
    %20 = arith.mulf %19, %19 : vector<16x16x16xf32>
    %cst_42 = arith.constant dense<0.000000e+00> : vector<16x16xf32>
    %21 = vector.multi_reduction <add>, %20, %cst_42 [2] : vector<16x16x16xf32> to vector<16x16xf32>
    %22 = vector.shape_cast %21 : vector<16x16xf32> to vector<16x16x1xf32>
    %cst_43 = arith.constant 1.000000e-24 : f32
    %23 = vector.broadcast %cst_43 : f32 to vector<16x16x1xf32>
    %24 = arith.maximumf %22, %23 : vector<16x16x1xf32>
    %25 = math.rsqrt %24 : vector<16x16x1xf32>
    %26 = vector.broadcast %25 : vector<16x16x1xf32> to vector<16x16x16xf32>
    %27 = arith.mulf %19, %26 : vector<16x16x16xf32>
    %28 = vector.shape_cast %27 : vector<16x16x16xf32> to vector<256x16xf32>
    %c0_44 = arith.constant 0 : index
    %c0_45 = arith.constant 0 : index
    %29 = vector.load %arg2[%c0_44, %c0_45] : memref<16x32xf32, #tpu.memory_space<vmem>>, vector<16x32xf32>
    %cst_46 = arith.constant dense<0.000000e+00> : vector<256x32xf32>
    %30 = tpu.matmul %28, %29, %cst_46 {dimension_numbers = #tpu.dot_dimension_numbers<[1], [0], [0], [1], [0, 0, 1, 1], [], []>} : vector<256x16xf32>, vector<16x32xf32>, vector<256x32xf32> -> vector<256x32xf32>
    %c0_47 = arith.constant 0 : index
    %c0_48 = arith.constant 0 : index
    %31 = vector.load %arg3[%c0_47, %c0_48] : memref<1x32xf32, #tpu.memory_space<vmem>>, vector<1x32xf32>
    %32 = vector.broadcast %31 : vector<1x32xf32> to vector<256x32xf32>
    %33 = arith.addf %30, %32 : vector<256x32xf32>
    %34 = vector.extract_strided_slice %33 {offsets = [0, 16], sizes = [256, 16], strides = [1, 1]} : vector<256x32xf32> to vector<256x16xf32>
    %35 = vector.shape_cast %34 : vector<256x16xf32> to vector<16x16x16xf32>
    %36 = vector.shape_cast %35 : vector<16x16x16xf32> to vector<2x8x2x8x16xf32>
    %cst_49 = arith.constant dense<0xFF800000> : vector<2x8x2x16xf32>
    %37 = vector.multi_reduction <maximumf>, %36, %cst_49 [3] : vector<2x8x2x8x16xf32> to vector<2x8x2x16xf32>
    %cst_50 = arith.constant dense<0xFF800000> : vector<2x2x16xf32>
    %38 = vector.multi_reduction <maximumf>, %37, %cst_50 [1] : vector<2x8x2x16xf32> to vector<2x2x16xf32>
    %c1 = arith.constant 1 : index
    %c1_51 = arith.constant 1 : index
    %c0_52 = arith.constant 0 : index
    %39 = vector.load %arg24[%c1, %c1_51, %c0_52] : memref<4x4x16xf32, #tpu.memory_space<vmem>>, vector<2x2x16xf32>
    tpu.vector_store %arg24[%c1, %c1_51, %c0_52], %38 {strides = array<i32>} : memref<4x4x16xf32, #tpu.memory_space<vmem>>, vector<2x2x16xf32>,
    %c0_53 = arith.constant 0 : index
    %c0_54 = arith.constant 0 : index
    %40 = vector.load %arg8[%c0_53, %c0_54] : memref<9x16xf32, #tpu.memory_space<vmem>>, vector<9x16xf32>
    %cst_55 = arith.constant 0.000000e+00 : f32
    %41 = vector.broadcast %cst_55 : f32 to vector<2x2x16xf32>
    %c0_56 = arith.constant 0 : index
    %c0_57 = arith.constant 0 : index
    %c0_58 = arith.constant 0 : index
    %42 = vector.load %arg24[%c0_56, %c0_57, %c0_58] : memref<4x4x16xf32, #tpu.memory_space<vmem>>, vector<2x2x16xf32>
    %43 = vector.extract_strided_slice %40 {offsets = [0, 0], sizes = [1, 16], strides = [1, 1]} : vector<9x16xf32> to vector<1x16xf32>
    %44 = vector.shape_cast %43 : vector<1x16xf32> to vector<1x1x16xf32>
    %45 = vector.broadcast %44 : vector<1x1x16xf32> to vector<2x2x16xf32>
    %46 = arith.mulf %42, %45 : vector<2x2x16xf32>
    %47 = arith.addf %41, %46 : vector<2x2x16xf32>
    %c0_59 = arith.constant 0 : index
    %c1_60 = arith.constant 1 : index
    %c0_61 = arith.constant 0 : index
    %48 = vector.load %arg24[%c0_59, %c1_60, %c0_61] : memref<4x4x16xf32, #tpu.memory_space<vmem>>, vector<2x2x16xf32>
    %49 = vector.extract_strided_slice %40 {offsets = [1, 0], sizes = [1, 16], strides = [1, 1]} : vector<9x16xf32> to vector<1x16xf32>
    %50 = vector.shape_cast %49 : vector<1x16xf32> to vector<1x1x16xf32>
    %51 = vector.broadcast %50 : vector<1x1x16xf32> to vector<2x2x16xf32>
    %52 = arith.mulf %48, %51 : vector<2x2x16xf32>
    %53 = arith.addf %47, %52 : vector<2x2x16xf32>
    %c0_62 = arith.constant 0 : index
    %c2 = arith.constant 2 : index
    %c0_63 = arith.constant 0 : index
    %54 = vector.load %arg24[%c0_62, %c2, %c0_63] : memref<4x4x16xf32, #tpu.memory_space<vmem>>, vector<2x2x16xf32>
    %55 = vector.extract_strided_slice %40 {offsets = [2, 0], sizes = [1, 16], strides = [1, 1]} : vector<9x16xf32> to vector<1x16xf32>
    %56 = vector.shape_cast %55 : vector<1x16xf32> to vector<1x1x16xf32>
    %57 = vector.broadcast %56 : vector<1x1x16xf32> to vector<2x2x16xf32>
    %58 = arith.mulf %54, %57 : vector<2x2x16xf32>
    %59 = arith.addf %53, %58 : vector<2x2x16xf32>
    %c1_64 = arith.constant 1 : index
    %c0_65 = arith.constant 0 : index
    %c0_66 = arith.constant 0 : index
    %60 = vector.load %arg24[%c1_64, %c0_65, %c0_66] : memref<4x4x16xf32, #tpu.memory_space<vmem>>, vector<2x2x16xf32>
    %61 = vector.extract_strided_slice %40 {offsets = [3, 0], sizes = [1, 16], strides = [1, 1]} : vector<9x16xf32> to vector<1x16xf32>
    %62 = vector.shape_cast %61 : vector<1x16xf32> to vector<1x1x16xf32>
    %63 = vector.broadcast %62 : vector<1x1x16xf32> to vector<2x2x16xf32>
    %64 = arith.mulf %60, %63 : vector<2x2x16xf32>
    %65 = arith.addf %59, %64 : vector<2x2x16xf32>
    %c1_67 = arith.constant 1 : index
    %c1_68 = arith.constant 1 : index
    %c0_69 = arith.constant 0 : index
    %66 = vector.load %arg24[%c1_67, %c1_68, %c0_69] : memref<4x4x16xf32, #tpu.memory_space<vmem>>, vector<2x2x16xf32>
    %67 = vector.extract_strided_slice %40 {offsets = [4, 0], sizes = [1, 16], strides = [1, 1]} : vector<9x16xf32> to vector<1x16xf32>
    %68 = vector.shape_cast %67 : vector<1x16xf32> to vector<1x1x16xf32>
    %69 = vector.broadcast %68 : vector<1x1x16xf32> to vector<2x2x16xf32>
    %70 = arith.mulf %66, %69 : vector<2x2x16xf32>
    %71 = arith.addf %65, %70 : vector<2x2x16xf32>
    %c1_70 = arith.constant 1 : index
    %c2_71 = arith.constant 2 : index
    %c0_72 = arith.constant 0 : index
    %72 = vector.load %arg24[%c1_70, %c2_71, %c0_72] : memref<4x4x16xf32, #tpu.memory_space<vmem>>, vector<2x2x16xf32>
    %73 = vector.extract_strided_slice %40 {offsets = [5, 0], sizes = [1, 16], strides = [1, 1]} : vector<9x16xf32> to vector<1x16xf32>
    %74 = vector.shape_cast %73 : vector<1x16xf32> to vector<1x1x16xf32>
    %75 = vector.broadcast %74 : vector<1x1x16xf32> to vector<2x2x16xf32>
    %76 = arith.mulf %72, %75 : vector<2x2x16xf32>
    %77 = arith.addf %71, %76 : vector<2x2x16xf32>
    %c2_73 = arith.constant 2 : index
    %c0_74 = arith.constant 0 : index
    %c0_75 = arith.constant 0 : index
    %78 = vector.load %arg24[%c2_73, %c0_74, %c0_75] : memref<4x4x16xf32, #tpu.memory_space<vmem>>, vector<2x2x16xf32>
    %79 = vector.extract_strided_slice %40 {offsets = [6, 0], sizes = [1, 16], strides = [1, 1]} : vector<9x16xf32> to vector<1x16xf32>
    %80 = vector.shape_cast %79 : vector<1x16xf32> to vector<1x1x16xf32>
    %81 = vector.broadcast %80 : vector<1x1x16xf32> to vector<2x2x16xf32>
    %82 = arith.mulf %78, %81 : vector<2x2x16xf32>
    %83 = arith.addf %77, %82 : vector<2x2x16xf32>
    %c2_76 = arith.constant 2 : index
    %c1_77 = arith.constant 1 : index
    %c0_78 = arith.constant 0 : index
    %84 = vector.load %arg24[%c2_76, %c1_77, %c0_78] : memref<4x4x16xf32, #tpu.memory_space<vmem>>, vector<2x2x16xf32>
    %85 = vector.extract_strided_slice %40 {offsets = [7, 0], sizes = [1, 16], strides = [1, 1]} : vector<9x16xf32> to vector<1x16xf32>
    %86 = vector.shape_cast %85 : vector<1x16xf32> to vector<1x1x16xf32>
    %87 = vector.broadcast %86 : vector<1x1x16xf32> to vector<2x2x16xf32>
    %88 = arith.mulf %84, %87 : vector<2x2x16xf32>
    %89 = arith.addf %83, %88 : vector<2x2x16xf32>
    %c2_79 = arith.constant 2 : index
    %c2_80 = arith.constant 2 : index
    %c0_81 = arith.constant 0 : index
    %90 = vector.load %arg24[%c2_79, %c2_80, %c0_81] : memref<4x4x16xf32, #tpu.memory_space<vmem>>, vector<2x2x16xf32>
    %91 = vector.extract_strided_slice %40 {offsets = [8, 0], sizes = [1, 16], strides = [1, 1]} : vector<9x16xf32> to vector<1x16xf32>
    %92 = vector.shape_cast %91 : vector<1x16xf32> to vector<1x1x16xf32>
    %93 = vector.broadcast %92 : vector<1x1x16xf32> to vector<2x2x16xf32>
    %94 = arith.mulf %90, %93 : vector<2x2x16xf32>
    %95 = arith.addf %89, %94 : vector<2x2x16xf32>
    %c0_82 = arith.constant 0 : index
    %c0_83 = arith.constant 0 : index
    %96 = vector.load %arg9[%c0_82, %c0_83] : memref<1x16xf32, #tpu.memory_space<vmem>>, vector<1x16xf32>
    %97 = vector.shape_cast %96 : vector<1x16xf32> to vector<1x1x16xf32>
    %98 = vector.broadcast %97 : vector<1x1x16xf32> to vector<2x2x16xf32>
    %99 = arith.addf %95, %98 : vector<2x2x16xf32>
    %cst_84 = arith.constant dense<0.000000e+00> : vector<16xf32>
    %100 = vector.multi_reduction <add>, %34, %cst_84 [0] : vector<256x16xf32> to vector<16xf32>
    %101 = vector.shape_cast %100 : vector<16xf32> to vector<1x16xf32>
    %cst_85 = arith.constant 3.906250e-03 : f32
    %102 = vector.broadcast %cst_85 : f32 to vector<1x16xf32>
    %103 = arith.mulf %101, %102 : vector<1x16xf32>
    %104 = vector.broadcast %103 : vector<1x16xf32> to vector<256x16xf32>
    %105 = arith.subf %34, %104 : vector<256x16xf32>
    %106 = arith.mulf %105, %105 : vector<256x16xf32>
    %cst_86 = arith.constant dense<0.000000e+00> : vector<16xf32>
    %107 = vector.multi_reduction <add>, %106, %cst_86 [0] : vector<256x16xf32> to vector<16xf32>
    %108 = vector.shape_cast %107 : vector<16xf32> to vector<1x16xf32>
    %cst_87 = arith.constant 0.00392156886 : f32
    %109 = vector.broadcast %cst_87 : f32 to vector<1x16xf32>
    %110 = arith.mulf %108, %109 : vector<1x16xf32>
    %c0_88 = arith.constant 0 : index
    %c0_89 = arith.constant 0 : index
    %111 = vector.load %arg14[%c0_88, %c0_89] : memref<1x16xf32, #tpu.memory_space<vmem>>, vector<1x16xf32>
    %112 = vector.shape_cast %111 : vector<1x16xf32> to vector<1x1x16xf32>
    %113 = vector.broadcast %112 : vector<1x1x16xf32> to vector<2x2x16xf32>
    %114 = arith.mulf %99, %113 : vector<2x2x16xf32>
    %c0_90 = arith.constant 0 : index
    %c0_91 = arith.constant 0 : index
    %115 = vector.load %arg15[%c0_90, %c0_91] : memref<1x16xf32, #tpu.memory_space<vmem>>, vector<1x16xf32>
    %116 = arith.mulf %110, %115 : vector<1x16xf32>
    %117 = vector.shape_cast %116 : vector<1x16xf32> to vector<1x1x16xf32>
    %118 = vector.broadcast %117 : vector<1x1x16xf32> to vector<2x2x16xf32>
    %119 = arith.addf %114, %118 : vector<2x2x16xf32>
    %120 = vector.shape_cast %119 : vector<2x2x16xf32> to vector<4x16xf32>
    %c0_92 = arith.constant 0 : index
    %c0_93 = arith.constant 0 : index
    %121 = vector.load %arg4[%c0_92, %c0_93] : memref<16x16xf32, #tpu.memory_space<vmem>>, vector<16x16xf32>
    %cst_94 = arith.constant dense<0.000000e+00> : vector<4x16xf32>
    %122 = tpu.matmul %120, %121, %cst_94 {dimension_numbers = #tpu.dot_dimension_numbers<[1], [0], [0], [1], [0, 0, 1, 1], [], []>} : vector<4x16xf32>, vector<16x16xf32>, vector<4x16xf32> -> vector<4x16xf32>
    %c0_95 = arith.constant 0 : index
    %c0_96 = arith.constant 0 : index
    %123 = vector.load %arg5[%c0_95, %c0_96] : memref<1x16xf32, #tpu.memory_space<vmem>>, vector<1x16xf32>
    %124 = vector.broadcast %123 : vector<1x16xf32> to vector<4x16xf32>
    %125 = arith.addf %122, %124 : vector<4x16xf32>
    %cst_97 = arith.constant 5.000000e-01 : f32
    %126 = vector.broadcast %cst_97 : f32 to vector<4x16xf32>
    %127 = arith.mulf %126, %125 : vector<4x16xf32>
    %cst_98 = arith.constant 4.471500e-02 : f32
    %128 = vector.broadcast %cst_98 : f32 to vector<4x16xf32>
    %129 = arith.mulf %128, %125 : vector<4x16xf32>
    %130 = arith.mulf %129, %125 : vector<4x16xf32>
    %131 = arith.mulf %130, %125 : vector<4x16xf32>
    %132 = arith.addf %125, %131 : vector<4x16xf32>
    %cst_99 = arith.constant 0.797884583 : f32
    %133 = vector.broadcast %cst_99 : f32 to vector<4x16xf32>
    %134 = arith.mulf %133, %132 : vector<4x16xf32>
    %135 = math.tanh %134 : vector<4x16xf32>
    %cst_100 = arith.constant 1.000000e+00 : f32
    %136 = vector.broadcast %cst_100 : f32 to vector<4x16xf32>
    %137 = arith.addf %136, %135 : vector<4x16xf32>
    %138 = arith.mulf %127, %137 : vector<4x16xf32>
    %139 = vector.shape_cast %138 : vector<4x16xf32> to vector<2x2x16xf32>
    %140 = vector.shape_cast %35 : vector<16x16x16xf32> to vector<2x8x2x8x16xf32>
    %141 = vector.shape_cast %139 : vector<2x2x16xf32> to vector<2x1x2x1x16xf32>
    %142 = vector.broadcast %141 : vector<2x1x2x1x16xf32> to vector<2x8x2x8x16xf32>
    %143 = arith.mulf %140, %142 : vector<2x8x2x8x16xf32>
    %144 = vector.shape_cast %143 : vector<2x8x2x8x16xf32> to vector<256x16xf32>
    %145 = vector.extract_strided_slice %33 {offsets = [0, 0], sizes = [256, 16], strides = [1, 1]} : vector<256x32xf32> to vector<256x16xf32>
    %146 = vector.shape_cast %145 : vector<256x16xf32> to vector<16x16x16xf32>
    %c1_101 = arith.constant 1 : index
    %c1_102 = arith.constant 1 : index
    %c0_103 = arith.constant 0 : index
    %147 = vector.load %arg23[%c1_101, %c1_102, %c0_103] : memref<18x18x16xf32, #tpu.memory_space<vmem>>, vector<16x16x16xf32>
    tpu.vector_store %arg23[%c1_101, %c1_102, %c0_103], %146 {strides = array<i32>} : memref<18x18x16xf32, #tpu.memory_space<vmem>>, vector<16x16x16xf32>,
    %c0_104 = arith.constant 0 : index
    %c0_105 = arith.constant 0 : index
    %c0_106 = arith.constant 0 : index
    %148 = vector.load %arg23[%c0_104, %c0_105, %c0_106] : memref<18x18x16xf32, #tpu.memory_space<vmem>>, vector<16x16x16xf32>
    %149 = vector.shape_cast %148 : vector<16x16x16xf32> to vector<256x16xf32>
    %c0_107 = arith.constant 0 : index
    %c1_108 = arith.constant 1 : index
    %c0_109 = arith.constant 0 : index
    %150 = vector.load %arg23[%c0_107, %c1_108, %c0_109] : memref<18x18x16xf32, #tpu.memory_space<vmem>>, vector<16x16x16xf32>
    %151 = vector.shape_cast %150 : vector<16x16x16xf32> to vector<256x16xf32>
    %c0_110 = arith.constant 0 : index
    %c2_111 = arith.constant 2 : index
    %c0_112 = arith.constant 0 : index
    %152 = vector.load %arg23[%c0_110, %c2_111, %c0_112] : memref<18x18x16xf32, #tpu.memory_space<vmem>>, vector<16x16x16xf32>
    %153 = vector.shape_cast %152 : vector<16x16x16xf32> to vector<256x16xf32>
    %c1_113 = arith.constant 1 : index
    %c0_114 = arith.constant 0 : index
    %c0_115 = arith.constant 0 : index
    %154 = vector.load %arg23[%c1_113, %c0_114, %c0_115] : memref<18x18x16xf32, #tpu.memory_space<vmem>>, vector<16x16x16xf32>
    %155 = vector.shape_cast %154 : vector<16x16x16xf32> to vector<256x16xf32>
    %c1_116 = arith.constant 1 : index
    %c1_117 = arith.constant 1 : index
    %c0_118 = arith.constant 0 : index
    %156 = vector.load %arg23[%c1_116, %c1_117, %c0_118] : memref<18x18x16xf32, #tpu.memory_space<vmem>>, vector<16x16x16xf32>
    %157 = vector.shape_cast %156 : vector<16x16x16xf32> to vector<256x16xf32>
    %c1_119 = arith.constant 1 : index
    %c2_120 = arith.constant 2 : index
    %c0_121 = arith.constant 0 : index
    %158 = vector.load %arg23[%c1_119, %c2_120, %c0_121] : memref<18x18x16xf32, #tpu.memory_space<vmem>>, vector<16x16x16xf32>
    %159 = vector.shape_cast %158 : vector<16x16x16xf32> to vector<256x16xf32>
    %c2_122 = arith.constant 2 : index
    %c0_123 = arith.constant 0 : index
    %c0_124 = arith.constant 0 : index
    %160 = vector.load %arg23[%c2_122, %c0_123, %c0_124] : memref<18x18x16xf32, #tpu.memory_space<vmem>>, vector<16x16x16xf32>
    %161 = vector.shape_cast %160 : vector<16x16x16xf32> to vector<256x16xf32>
    %c2_125 = arith.constant 2 : index
    %c1_126 = arith.constant 1 : index
    %c0_127 = arith.constant 0 : index
    %162 = vector.load %arg23[%c2_125, %c1_126, %c0_127] : memref<18x18x16xf32, #tpu.memory_space<vmem>>, vector<16x16x16xf32>
    %163 = vector.shape_cast %162 : vector<16x16x16xf32> to vector<256x16xf32>
    %c2_128 = arith.constant 2 : index
    %c2_129 = arith.constant 2 : index
    %c0_130 = arith.constant 0 : index
    %164 = vector.load %arg23[%c2_128, %c2_129, %c0_130] : memref<18x18x16xf32, #tpu.memory_space<vmem>>, vector<16x16x16xf32>
    %165 = vector.shape_cast %164 : vector<16x16x16xf32> to vector<256x16xf32>
    %166 = tpu.concatenate %149, %151, %153, %155, %157, %159, %161, %163, %165 in 1 : vector<256x16xf32>, vector<256x16xf32>, vector<256x16xf32>, vector<256x16xf32>, vector<256x16xf32>, vector<256x16xf32>, vector<256x16xf32>, vector<256x16xf32>, vector<256x16xf32> -> vector<256x144xf32>
    %c0_131 = arith.constant 0 : index
    %c0_132 = arith.constant 0 : index
    %167 = vector.load %arg10[%c0_131, %c0_132] : memref<144x32xf32, #tpu.memory_space<vmem>>, vector<144x32xf32>
    %cst_133 = arith.constant dense<0.000000e+00> : vector<256x32xf32>
    %168 = tpu.matmul %166, %167, %cst_133 {dimension_numbers = #tpu.dot_dimension_numbers<[1], [0], [0], [1], [0, 0, 1, 1], [], []>} : vector<256x144xf32>, vector<144x32xf32>, vector<256x32xf32> -> vector<256x32xf32>
    %c0_134 = arith.constant 0 : index
    %c0_135 = arith.constant 0 : index
    %169 = vector.load %arg11[%c0_134, %c0_135] : memref<1x32xf32, #tpu.memory_space<vmem>>, vector<1x32xf32>
    %170 = vector.broadcast %169 : vector<1x32xf32> to vector<256x32xf32>
    %171 = arith.addf %168, %170 : vector<256x32xf32>
    %cst_136 = arith.constant 5.000000e-01 : f32
    %172 = vector.broadcast %cst_136 : f32 to vector<256x32xf32>
    %173 = arith.mulf %172, %171 : vector<256x32xf32>
    %cst_137 = arith.constant 4.471500e-02 : f32
    %174 = vector.broadcast %cst_137 : f32 to vector<256x32xf32>
    %175 = arith.mulf %174, %171 : vector<256x32xf32>
    %176 = arith.mulf %175, %171 : vector<256x32xf32>
    %177 = arith.mulf %176, %171 : vector<256x32xf32>
    %178 = arith.addf %171, %177 : vector<256x32xf32>
    %cst_138 = arith.constant 0.797884583 : f32
    %179 = vector.broadcast %cst_138 : f32 to vector<256x32xf32>
    %180 = arith.mulf %179, %178 : vector<256x32xf32>
    %181 = math.tanh %180 : vector<256x32xf32>
    %cst_139 = arith.constant 1.000000e+00 : f32
    %182 = vector.broadcast %cst_139 : f32 to vector<256x32xf32>
    %183 = arith.addf %182, %181 : vector<256x32xf32>
    %184 = arith.mulf %173, %183 : vector<256x32xf32>
    %c0_140 = arith.constant 0 : index
    %c0_141 = arith.constant 0 : index
    %185 = vector.load %arg12[%c0_140, %c0_141] : memref<32x16xf32, #tpu.memory_space<vmem>>, vector<32x16xf32>
    %cst_142 = arith.constant dense<0.000000e+00> : vector<256x16xf32>
    %186 = tpu.matmul %184, %185, %cst_142 {dimension_numbers = #tpu.dot_dimension_numbers<[1], [0], [0], [1], [0, 0, 1, 1], [], []>} : vector<256x32xf32>, vector<32x16xf32>, vector<256x16xf32> -> vector<256x16xf32>
    %c0_143 = arith.constant 0 : index
    %c0_144 = arith.constant 0 : index
    %187 = vector.load %arg13[%c0_143, %c0_144] : memref<1x16xf32, #tpu.memory_space<vmem>>, vector<1x16xf32>
    %188 = vector.broadcast %187 : vector<1x16xf32> to vector<256x16xf32>
    %189 = arith.addf %186, %188 : vector<256x16xf32>
    %190 = arith.addf %144, %189 : vector<256x16xf32>
    %c0_145 = arith.constant 0 : index
    %c0_146 = arith.constant 0 : index
    %191 = vector.load %arg6[%c0_145, %c0_146] : memref<16x16xf32, #tpu.memory_space<vmem>>, vector<16x16xf32>
    %cst_147 = arith.constant dense<0.000000e+00> : vector<256x16xf32>
    %192 = tpu.matmul %190, %191, %cst_147 {dimension_numbers = #tpu.dot_dimension_numbers<[1], [0], [0], [1], [0, 0, 1, 1], [], []>} : vector<256x16xf32>, vector<16x16xf32>, vector<256x16xf32> -> vector<256x16xf32>
    %c0_148 = arith.constant 0 : index
    %c0_149 = arith.constant 0 : index
    %193 = vector.load %arg7[%c0_148, %c0_149] : memref<1x16xf32, #tpu.memory_space<vmem>>, vector<1x16xf32>
    %194 = vector.broadcast %193 : vector<1x16xf32> to vector<256x16xf32>
    %195 = arith.addf %192, %194 : vector<256x16xf32>
    %196 = vector.shape_cast %195 : vector<256x16xf32> to vector<16x16x16xf32>
    %197 = arith.addf %196, %19 : vector<16x16x16xf32>
    %198 = arith.mulf %197, %197 : vector<16x16x16xf32>
    %cst_150 = arith.constant dense<0.000000e+00> : vector<16x16xf32>
    %199 = vector.multi_reduction <add>, %198, %cst_150 [2] : vector<16x16x16xf32> to vector<16x16xf32>
    %200 = vector.shape_cast %199 : vector<16x16xf32> to vector<16x16x1xf32>
    %cst_151 = arith.constant 1.000000e-24 : f32
    %201 = vector.broadcast %cst_151 : f32 to vector<16x16x1xf32>
    %202 = arith.maximumf %200, %201 : vector<16x16x1xf32>
    %203 = math.rsqrt %202 : vector<16x16x1xf32>
    %204 = vector.broadcast %203 : vector<16x16x1xf32> to vector<16x16x16xf32>
    %205 = arith.mulf %197, %204 : vector<16x16x16xf32>
    %206 = vector.shape_cast %205 : vector<16x16x16xf32> to vector<256x16xf32>
    %c0_152 = arith.constant 0 : index
    %c0_153 = arith.constant 0 : index
    %207 = vector.load %arg16[%c0_152, %c0_153] : memref<16x32xf32, #tpu.memory_space<vmem>>, vector<16x32xf32>
    %cst_154 = arith.constant dense<0.000000e+00> : vector<256x32xf32>
    %208 = tpu.matmul %206, %207, %cst_154 {dimension_numbers = #tpu.dot_dimension_numbers<[1], [0], [0], [1], [0, 0, 1, 1], [], []>} : vector<256x16xf32>, vector<16x32xf32>, vector<256x32xf32> -> vector<256x32xf32>
    %c0_155 = arith.constant 0 : index
    %c0_156 = arith.constant 0 : index
    %209 = vector.load %arg17[%c0_155, %c0_156] : memref<1x32xf32, #tpu.memory_space<vmem>>, vector<1x32xf32>
    %210 = vector.broadcast %209 : vector<1x32xf32> to vector<256x32xf32>
    %211 = arith.addf %208, %210 : vector<256x32xf32>
    %cst_157 = arith.constant 5.000000e-01 : f32
    %212 = vector.broadcast %cst_157 : f32 to vector<256x32xf32>
    %213 = arith.mulf %212, %211 : vector<256x32xf32>
    %cst_158 = arith.constant 4.471500e-02 : f32
    %214 = vector.broadcast %cst_158 : f32 to vector<256x32xf32>
    %215 = arith.mulf %214, %211 : vector<256x32xf32>
    %216 = arith.mulf %215, %211 : vector<256x32xf32>
    %217 = arith.mulf %216, %211 : vector<256x32xf32>
    %218 = arith.addf %211, %217 : vector<256x32xf32>
    %cst_159 = arith.constant 0.797884583 : f32
    %219 = vector.broadcast %cst_159 : f32 to vector<256x32xf32>
    %220 = arith.mulf %219, %218 : vector<256x32xf32>
    %221 = math.tanh %220 : vector<256x32xf32>
    %cst_160 = arith.constant 1.000000e+00 : f32
    %222 = vector.broadcast %cst_160 : f32 to vector<256x32xf32>
    %223 = arith.addf %222, %221 : vector<256x32xf32>
    %224 = arith.mulf %213, %223 : vector<256x32xf32>
    %225 = vector.extract_strided_slice %224 {offsets = [0, 0], sizes = [256, 8], strides = [1, 1]} : vector<256x32xf32> to vector<256x8xf32>
    %226 = vector.shape_cast %225 : vector<256x8xf32> to vector<16x16x8xf32>
    %c1_161 = arith.constant 1 : index
    %c1_162 = arith.constant 1 : index
    %c0_163 = arith.constant 0 : index
    %227 = vector.load %arg25[%c1_161, %c1_162, %c0_163] : memref<18x18x8xf32, #tpu.memory_space<vmem>>, vector<16x16x8xf32>
    tpu.vector_store %arg25[%c1_161, %c1_162, %c0_163], %226 {strides = array<i32>} : memref<18x18x8xf32, #tpu.memory_space<vmem>>, vector<16x16x8xf32>,
    %c0_164 = arith.constant 0 : index
    %c0_165 = arith.constant 0 : index
    %c0_166 = arith.constant 0 : index
    %228 = vector.load %arg25[%c0_164, %c0_165, %c0_166] : memref<18x18x8xf32, #tpu.memory_space<vmem>>, vector<16x16x8xf32>
    %229 = vector.shape_cast %228 : vector<16x16x8xf32> to vector<256x8xf32>
    %c0_167 = arith.constant 0 : index
    %c1_168 = arith.constant 1 : index
    %c0_169 = arith.constant 0 : index
    %230 = vector.load %arg25[%c0_167, %c1_168, %c0_169] : memref<18x18x8xf32, #tpu.memory_space<vmem>>, vector<16x16x8xf32>
    %231 = vector.shape_cast %230 : vector<16x16x8xf32> to vector<256x8xf32>
    %c0_170 = arith.constant 0 : index
    %c2_171 = arith.constant 2 : index
    %c0_172 = arith.constant 0 : index
    %232 = vector.load %arg25[%c0_170, %c2_171, %c0_172] : memref<18x18x8xf32, #tpu.memory_space<vmem>>, vector<16x16x8xf32>
    %233 = vector.shape_cast %232 : vector<16x16x8xf32> to vector<256x8xf32>
    %c1_173 = arith.constant 1 : index
    %c0_174 = arith.constant 0 : index
    %c0_175 = arith.constant 0 : index
    %234 = vector.load %arg25[%c1_173, %c0_174, %c0_175] : memref<18x18x8xf32, #tpu.memory_space<vmem>>, vector<16x16x8xf32>
    %235 = vector.shape_cast %234 : vector<16x16x8xf32> to vector<256x8xf32>
    %c1_176 = arith.constant 1 : index
    %c1_177 = arith.constant 1 : index
    %c0_178 = arith.constant 0 : index
    %236 = vector.load %arg25[%c1_176, %c1_177, %c0_178] : memref<18x18x8xf32, #tpu.memory_space<vmem>>, vector<16x16x8xf32>
    %237 = vector.shape_cast %236 : vector<16x16x8xf32> to vector<256x8xf32>
    %c1_179 = arith.constant 1 : index
    %c2_180 = arith.constant 2 : index
    %c0_181 = arith.constant 0 : index
    %238 = vector.load %arg25[%c1_179, %c2_180, %c0_181] : memref<18x18x8xf32, #tpu.memory_space<vmem>>, vector<16x16x8xf32>
    %239 = vector.shape_cast %238 : vector<16x16x8xf32> to vector<256x8xf32>
    %c2_182 = arith.constant 2 : index
    %c0_183 = arith.constant 0 : index
    %c0_184 = arith.constant 0 : index
    %240 = vector.load %arg25[%c2_182, %c0_183, %c0_184] : memref<18x18x8xf32, #tpu.memory_space<vmem>>, vector<16x16x8xf32>
    %241 = vector.shape_cast %240 : vector<16x16x8xf32> to vector<256x8xf32>
    %c2_185 = arith.constant 2 : index
    %c1_186 = arith.constant 1 : index
    %c0_187 = arith.constant 0 : index
    %242 = vector.load %arg25[%c2_185, %c1_186, %c0_187] : memref<18x18x8xf32, #tpu.memory_space<vmem>>, vector<16x16x8xf32>
    %243 = vector.shape_cast %242 : vector<16x16x8xf32> to vector<256x8xf32>
    %c2_188 = arith.constant 2 : index
    %c2_189 = arith.constant 2 : index
    %c0_190 = arith.constant 0 : index
    %244 = vector.load %arg25[%c2_188, %c2_189, %c0_190] : memref<18x18x8xf32, #tpu.memory_space<vmem>>, vector<16x16x8xf32>
    %245 = vector.shape_cast %244 : vector<16x16x8xf32> to vector<256x8xf32>
    %246 = tpu.concatenate %229, %231, %233, %235, %237, %239, %241, %243, %245 in 1 : vector<256x8xf32>, vector<256x8xf32>, vector<256x8xf32>, vector<256x8xf32>, vector<256x8xf32>, vector<256x8xf32>, vector<256x8xf32>, vector<256x8xf32>, vector<256x8xf32> -> vector<256x72xf32>
    %c0_191 = arith.constant 0 : index
    %c0_192 = arith.constant 0 : index
    %247 = vector.load %arg18[%c0_191, %c0_192] : memref<72x8xf32, #tpu.memory_space<vmem>>, vector<72x8xf32>
    %cst_193 = arith.constant dense<0.000000e+00> : vector<256x8xf32>
    %248 = tpu.matmul %246, %247, %cst_193 {dimension_numbers = #tpu.dot_dimension_numbers<[1], [0], [0], [1], [0, 0, 1, 1], [], []>} : vector<256x72xf32>, vector<72x8xf32>, vector<256x8xf32> -> vector<256x8xf32>
    %c0_194 = arith.constant 0 : index
    %c0_195 = arith.constant 0 : index
    %249 = vector.load %arg19[%c0_194, %c0_195] : memref<1x8xf32, #tpu.memory_space<vmem>>, vector<1x8xf32>
    %250 = vector.broadcast %249 : vector<1x8xf32> to vector<256x8xf32>
    %251 = arith.addf %248, %250 : vector<256x8xf32>
    %cst_196 = arith.constant 5.000000e-01 : f32
    %252 = vector.broadcast %cst_196 : f32 to vector<256x8xf32>
    %253 = arith.mulf %252, %251 : vector<256x8xf32>
    %cst_197 = arith.constant 4.471500e-02 : f32
    %254 = vector.broadcast %cst_197 : f32 to vector<256x8xf32>
    %255 = arith.mulf %254, %251 : vector<256x8xf32>
    %256 = arith.mulf %255, %251 : vector<256x8xf32>
    %257 = arith.mulf %256, %251 : vector<256x8xf32>
    %258 = arith.addf %251, %257 : vector<256x8xf32>
    %cst_198 = arith.constant 0.797884583 : f32
    %259 = vector.broadcast %cst_198 : f32 to vector<256x8xf32>
    %260 = arith.mulf %259, %258 : vector<256x8xf32>
    %261 = math.tanh %260 : vector<256x8xf32>
    %cst_199 = arith.constant 1.000000e+00 : f32
    %262 = vector.broadcast %cst_199 : f32 to vector<256x8xf32>
    %263 = arith.addf %262, %261 : vector<256x8xf32>
    %264 = arith.mulf %253, %263 : vector<256x8xf32>
    %265 = vector.extract_strided_slice %224 {offsets = [0, 8], sizes = [256, 24], strides = [1, 1]} : vector<256x32xf32> to vector<256x24xf32>
    %266 = tpu.concatenate %264, %265 in 1 : vector<256x8xf32>, vector<256x24xf32> -> vector<256x32xf32>
    %c0_200 = arith.constant 0 : index
    %c0_201 = arith.constant 0 : index
    %267 = vector.load %arg20[%c0_200, %c0_201] : memref<32x16xf32, #tpu.memory_space<vmem>>, vector<32x16xf32>
    %cst_202 = arith.constant dense<0.000000e+00> : vector<256x16xf32>
    %268 = tpu.matmul %266, %267, %cst_202 {dimension_numbers = #tpu.dot_dimension_numbers<[1], [0], [0], [1], [0, 0, 1, 1], [], []>} : vector<256x32xf32>, vector<32x16xf32>, vector<256x16xf32> -> vector<256x16xf32>
    %c0_203 = arith.constant 0 : index
    %c0_204 = arith.constant 0 : index
    %269 = vector.load %arg21[%c0_203, %c0_204] : memref<1x16xf32, #tpu.memory_space<vmem>>, vector<1x16xf32>
    %270 = vector.broadcast %269 : vector<1x16xf32> to vector<256x16xf32>
    %271 = arith.addf %268, %270 : vector<256x16xf32>
    %272 = vector.shape_cast %271 : vector<256x16xf32> to vector<16x16x16xf32>
    %273 = arith.addf %272, %197 : vector<16x16x16xf32>
    %c0_205 = arith.constant 0 : index
    %c0_206 = arith.constant 0 : index
    %c0_207 = arith.constant 0 : index
    %c0_208 = arith.constant 0 : index
    %274 = vector.load %arg22[%c0_205, %c0_206, %c0_207, %c0_208] : memref<1x16x16x16xf32, #tpu.memory_space<vmem>>, vector<1x16x16x16xf32>
    %275 = vector.shape_cast %274 : vector<1x16x16x16xf32> to vector<16x16x16xf32>
    %276 = vector.shape_cast %273 : vector<16x16x16xf32> to vector<1x16x16x16xf32>
    tpu.vector_store %arg22[%c0_205, %c0_206, %c0_207, %c0_208], %276 {strides = array<i32>} : memref<1x16x16x16xf32, #tpu.memory_space<vmem>>, vector<1x16x16x16xf32>,
    return
  }
  func.func @transform_0(%arg0: i32) -> (i32, i32, i32, i32) {
    %c0_i32 = arith.constant 0 : i32
    %c0_i32_0 = arith.constant 0 : i32
    %c0_i32_1 = arith.constant 0 : i32
    %c0_i32_2 = arith.constant 0 : i32
    return %arg0, %c0_i32, %c0_i32_0, %c0_i32_1 : i32, i32, i32, i32
  }
  func.func @transform_1(%arg0: i32) -> (i32, i32) {
    %c0_i32 = arith.constant 0 : i32
    %c0_i32_0 = arith.constant 0 : i32
    %c0_i32_1 = arith.constant 0 : i32
    return %c0_i32, %c0_i32_0 : i32, i32
  }
  func.func @transform_2(%arg0: i32) -> (i32, i32) {
    %c0_i32 = arith.constant 0 : i32
    %c0_i32_0 = arith.constant 0 : i32
    %c0_i32_1 = arith.constant 0 : i32
    return %c0_i32, %c0_i32_0 : i32, i32
  }
  func.func @transform_3(%arg0: i32) -> (i32, i32) {
    %c0_i32 = arith.constant 0 : i32
    %c0_i32_0 = arith.constant 0 : i32
    %c0_i32_1 = arith.constant 0 : i32
    return %c0_i32, %c0_i32_0 : i32, i32
  }
  func.func @transform_4(%arg0: i32) -> (i32, i32) {
    %c0_i32 = arith.constant 0 : i32
    %c0_i32_0 = arith.constant 0 : i32
    %c0_i32_1 = arith.constant 0 : i32
    return %c0_i32, %c0_i32_0 : i32, i32
  }
  func.func @transform_5(%arg0: i32) -> (i32, i32) {
    %c0_i32 = arith.constant 0 : i32
    %c0_i32_0 = arith.constant 0 : i32
    %c0_i32_1 = arith.constant 0 : i32
    return %c0_i32, %c0_i32_0 : i32, i32
  }
  func.func @transform_6(%arg0: i32) -> (i32, i32) {
    %c0_i32 = arith.constant 0 : i32
    %c0_i32_0 = arith.constant 0 : i32
    %c0_i32_1 = arith.constant 0 : i32
    return %c0_i32, %c0_i32_0 : i32, i32
  }
  func.func @transform_7(%arg0: i32) -> (i32, i32) {
    %c0_i32 = arith.constant 0 : i32
    %c0_i32_0 = arith.constant 0 : i32
    %c0_i32_1 = arith.constant 0 : i32
    return %c0_i32, %c0_i32_0 : i32, i32
  }
  func.func @transform_8(%arg0: i32) -> (i32, i32) {
    %c0_i32 = arith.constant 0 : i32
    %c0_i32_0 = arith.constant 0 : i32
    %c0_i32_1 = arith.constant 0 : i32
    return %c0_i32, %c0_i32_0 : i32, i32
  }
  func.func @transform_9(%arg0: i32) -> (i32, i32) {
    %c0_i32 = arith.constant 0 : i32
    %c0_i32_0 = arith.constant 0 : i32
    %c0_i32_1 = arith.constant 0 : i32
    return %c0_i32, %c0_i32_0 : i32, i32
  }
  func.func @transform_10(%arg0: i32) -> (i32, i32) {
    %c0_i32 = arith.constant 0 : i32
    %c0_i32_0 = arith.constant 0 : i32
    %c0_i32_1 = arith.constant 0 : i32
    return %c0_i32, %c0_i32_0 : i32, i32
  }
  func.func @transform_11(%arg0: i32) -> (i32, i32) {
    %c0_i32 = arith.constant 0 : i32
    %c0_i32_0 = arith.constant 0 : i32
    %c0_i32_1 = arith.constant 0 : i32
    return %c0_i32, %c0_i32_0 : i32, i32
  }
  func.func @transform_12(%arg0: i32) -> (i32, i32) {
    %c0_i32 = arith.constant 0 : i32
    %c0_i32_0 = arith.constant 0 : i32
    %c0_i32_1 = arith.constant 0 : i32
    return %c0_i32, %c0_i32_0 : i32, i32
  }
  func.func @transform_13(%arg0: i32) -> (i32, i32) {
    %c0_i32 = arith.constant 0 : i32
    %c0_i32_0 = arith.constant 0 : i32
    %c0_i32_1 = arith.constant 0 : i32
    return %c0_i32, %c0_i32_0 : i32, i32
  }
  func.func @transform_14(%arg0: i32) -> (i32, i32) {
    %c0_i32 = arith.constant 0 : i32
    %c0_i32_0 = arith.constant 0 : i32
    %c0_i32_1 = arith.constant 0 : i32
    return %c0_i32, %c0_i32_0 : i32, i32
  }
  func.func @transform_15(%arg0: i32) -> (i32, i32) {
    %c0_i32 = arith.constant 0 : i32
    %c0_i32_0 = arith.constant 0 : i32
    %c0_i32_1 = arith.constant 0 : i32
    return %c0_i32, %c0_i32_0 : i32, i32
  }
  func.func @transform_16(%arg0: i32) -> (i32, i32) {
    %c0_i32 = arith.constant 0 : i32
    %c0_i32_0 = arith.constant 0 : i32
    %c0_i32_1 = arith.constant 0 : i32
    return %c0_i32, %c0_i32_0 : i32, i32
  }
  func.func @transform_17(%arg0: i32) -> (i32, i32) {
    %c0_i32 = arith.constant 0 : i32
    %c0_i32_0 = arith.constant 0 : i32
    %c0_i32_1 = arith.constant 0 : i32
    return %c0_i32, %c0_i32_0 : i32, i32
  }
  func.func @transform_18(%arg0: i32) -> (i32, i32) {
    %c0_i32 = arith.constant 0 : i32
    %c0_i32_0 = arith.constant 0 : i32
    %c0_i32_1 = arith.constant 0 : i32
    return %c0_i32, %c0_i32_0 : i32, i32
  }
  func.func @transform_19(%arg0: i32) -> (i32, i32) {
    %c0_i32 = arith.constant 0 : i32
    %c0_i32_0 = arith.constant 0 : i32
    %c0_i32_1 = arith.constant 0 : i32
    return %c0_i32, %c0_i32_0 : i32, i32
  }
  func.func @transform_20(%arg0: i32) -> (i32, i32) {
    %c0_i32 = arith.constant 0 : i32
    %c0_i32_0 = arith.constant 0 : i32
    %c0_i32_1 = arith.constant 0 : i32
    return %c0_i32, %c0_i32_0 : i32, i32
  }
  func.func @transform_21(%arg0: i32) -> (i32, i32, i32, i32) {
    %c0_i32 = arith.constant 0 : i32
    %c0_i32_0 = arith.constant 0 : i32
    %c0_i32_1 = arith.constant 0 : i32
    %c0_i32_2 = arith.constant 0 : i32
    return %arg0, %c0_i32, %c0_i32_0, %c0_i32_1 : i32, i32, i32, i32
  }
}

</mosaic_0001>

<llo_original>
// kernel: fmb_forward.1
$region0: #{fmb_forward.1}
  #allocation0 [shape = 'u32[]', space=smem, size = 0x4, offset = 0x4, fixed_abs, tag = 'smem constant byte address 0x4 - core index']
  #allocation1 [shape = 'u32[144,128]{1,0:T(1,128)}', space=vmem, size = 0x12000, scoped, tag = 'internal scratch']
  #allocation2 [shape = 'f32[18,18,16]{2,1,0:T(8,128)}', space=vmem, size = 0x36000, scoped, tag = 'scratch operand']
  #allocation3 [shape = 'f32[4,4,16]{2,1,0:T(4,128)}', space=vmem, size = 0x2000, scoped, tag = 'scratch operand']
  #allocation4 [shape = 'f32[18,18,8]{2,1,0:T(8,128)}', space=vmem, size = 0x36000, scoped, tag = 'scratch operand']
  %s0 = inlined_call_operand.hbm [shape: f32[2,16,16,16], index: 0, kind: input, shape index: {}]
  %s1 = inlined_call_operand.hbm [shape: f32[16,32], index: 1, kind: input, shape index: {}]
  %s2 = inlined_call_operand.hbm [shape: f32[1,32], index: 2, kind: input, shape index: {}]
  %s3 = inlined_call_operand.hbm [shape: f32[16,16], index: 3, kind: input, shape index: {}]
  %s4 = inlined_call_operand.hbm [shape: f32[1,16], index: 4, kind: input, shape index: {}]
  %s5 = inlined_call_operand.hbm [shape: f32[16,16], index: 5, kind: input, shape index: {}]
  %s6 = inlined_call_operand.hbm [shape: f32[1,16], index: 6, kind: input, shape index: {}]
  %s7 = inlined_call_operand.hbm [shape: f32[9,16], index: 7, kind: input, shape index: {}]
  %s8 = inlined_call_operand.hbm [shape: f32[1,16], index: 8, kind: input, shape index: {}]
  %s9 = inlined_call_operand.hbm [shape: f32[144,32], index: 9, kind: input, shape index: {}]
  %s10 = inlined_call_operand.hbm [shape: f32[1,32], index: 10, kind: input, shape index: {}]
  %s11 = inlined_call_operand.hbm [shape: f32[32,16], index: 11, kind: input, shape index: {}]
  %s12 = inlined_call_operand.hbm [shape: f32[1,16], index: 12, kind: input, shape index: {}]
  %s13 = inlined_call_operand.hbm [shape: f32[1,16], index: 13, kind: input, shape index: {}]
  %s14 = inlined_call_operand.hbm [shape: f32[1,16], index: 14, kind: input, shape index: {}]
  %s15 = inlined_call_operand.hbm [shape: f32[16,32], index: 15, kind: input, shape index: {}]
  %s16 = inlined_call_operand.hbm [shape: f32[1,32], index: 16, kind: input, shape index: {}]
  %s17 = inlined_call_operand.hbm [shape: f32[72,8], index: 17, kind: input, shape index: {}]
  %s18 = inlined_call_operand.hbm [shape: f32[1,8], index: 18, kind: input, shape index: {}]
  %s19 = inlined_call_operand.hbm [shape: f32[32,16], index: 19, kind: input, shape index: {}]
  %s20 = inlined_call_operand.hbm [shape: f32[1,16], index: 20, kind: input, shape index: {}]
  %s21 = inlined_call_operand.hbm [shape: f32[2,16,16,16], index: 21, kind: output, shape index: {}]
  %s22 = sld [smem:[#allocation0]]
  $region201: #{fmb_forward.1} parent=0
    _
  %s24 = ssub.s32 1, %s22
  %s25 = scalar_select 0, %s24, %s22
  $region1: #{fmb_forward.1} parent=0
    #allocation5 [shape = 'u8[262144]{0}', space=vmem, size = 0x40000, scoped, tag = 'input window, operand 0']
    #allocation6 [shape = 's32[2]{0}', space=sflag, size = 0x8, scoped, tag = 'scoped memory for fmb_forward.1']
    #allocation7 [shape = 's32[2]{0}', space=sflag, size = 0x8, scoped, tag = 'scoped memory for fmb_forward.1']
    #allocation8 [shape = 'u8[8192]{0}', space=vmem, size = 0x2000, scoped, tag = 'input window, operand 1, single buffered']
    #allocation9 [shape = 's32[1]{0}', space=sflag, size = 0x4, scoped, tag = 'scoped memory for fmb_forward.1']
    #allocation10 [shape = 'u8[512]{0}', space=vmem, size = 0x400, scoped, tag = 'input window, operand 2, single buffered']
    #allocation11 [shape = 'u8[8192]{0}', space=vmem, size = 0x2000, scoped, tag = 'input window, operand 3, single buffered']
    #allocation12 [shape = 's32[1]{0}', space=sflag, size = 0x4, scoped, tag = 'scoped memory for fmb_forward.1']
    #allocation13 [shape = 'u8[512]{0}', space=vmem, size = 0x400, scoped, tag = 'input window, operand 4, single buffered']
    #allocation14 [shape = 'u8[8192]{0}', space=vmem, size = 0x2000, scoped, tag = 'input window, operand 5, single buffered']
    #allocation15 [shape = 's32[1]{0}', space=sflag, size = 0x4, scoped, tag = 'scoped memory for fmb_forward.1']
    #allocation16 [shape = 'u8[512]{0}', space=vmem, size = 0x400, scoped, tag = 'input window, operand 6, single buffered']
    #allocation17 [shape = 'u8[8192]{0}', space=vmem, size = 0x2000, scoped, tag = 'input window, operand 7, single buffered']
    #allocation18 [shape = 's32[1]{0}', space=sflag, size = 0x4, scoped, tag = 'scoped memory for fmb_forward.1']
    #allocation19 [shape = 'u8[512]{0}', space=vmem, size = 0x400, scoped, tag = 'input window, operand 8, single buffered']
    #allocation20 [shape = 'u8[73728]{0}', space=vmem, size = 0x12000, scoped, tag = 'input window, operand 9, single buffered']
    #allocation21 [shape = 's32[1]{0}', space=sflag, size = 0x4, scoped, tag = 'scoped memory for fmb_forward.1']
    #allocation22 [shape = 'u8[512]{0}', space=vmem, size = 0x400, scoped, tag = 'input window, operand 10, single buffered']
    #allocation23 [shape = 'u8[16384]{0}', space=vmem, size = 0x4000, scoped, tag = 'input window, operand 11, single buffered']
    #allocation24 [shape = 's32[1]{0}', space=sflag, size = 0x4, scoped, tag = 'scoped memory for fmb_forward.1']
    #allocation25 [shape = 'u8[512]{0}', space=vmem, size = 0x400, scoped, tag = 'input window, operand 12, single buffered']
    #allocation26 [shape = 'u8[512]{0}', space=vmem, size = 0x400, scoped, tag = 'input window, operand 13, single buffered']
    #allocation27 [shape = 's32[1]{0}', space=sflag, size = 0x4, scoped, tag = 'scoped memory for fmb_forward.1']
    #allocation28 [shape = 'u8[512]{0}', space=vmem, size = 0x400, scoped, tag = 'input window, operand 14, single buffered']
    #allocation29 [shape = 'u8[8192]{0}', space=vmem, size = 0x2000, scoped, tag = 'input window, operand 15, single buffered']
    #allocation30 [shape = 's32[1]{0}', space=sflag, size = 0x4, scoped, tag = 'scoped memory for fmb_forward.1']
    #allocation31 [shape = 'u8[512]{0}', space=vmem, size = 0x400, scoped, tag = 'input window, operand 16, single buffered']
    #allocation32 [shape = 'u8[36864]{0}', space=vmem, size = 0x9000, scoped, tag = 'input window, operand 17, single buffered']
    #allocation33 [shape = 's32[1]{0}', space=sflag, size = 0x4, scoped, tag = 'scoped memory for fmb_forward.1']
    #allocation34 [shape = 'u8[512]{0}', space=vmem, size = 0x400, scoped, tag = 'input window, operand 18, single buffered']
    #allocation35 [shape = 'u8[16384]{0}', space=vmem, size = 0x4000, scoped, tag = 'input window, operand 19, single buffered']
    #allocation36 [shape = 's32[1]{0}', space=sflag, size = 0x4, scoped, tag = 'scoped memory for fmb_forward.1']
    #allocation37 [shape = 'u8[512]{0}', space=vmem, size = 0x400, scoped, tag = 'input window, operand 20, single buffered']
    #allocation38 [shape = 'u8[262144]{0}', space=vmem, size = 0x40000, scoped, tag = 'output window, operand 0']
    %26 = vsyncpa [#allocation6], 0
    %s27 = scalar_lea.sflag [#allocation6], 1
    %28 = vsyncpa %s27, 0
    %29 = vsyncpa [#allocation9], 0
    %30 = vsyncpa [#allocation12], 0
    %31 = vsyncpa [#allocation15], 0
    %32 = vsyncpa [#allocation18], 0
    %33 = vsyncpa [#allocation21], 0
    %34 = vsyncpa [#allocation24], 0
    %35 = vsyncpa [#allocation27], 0
    %36 = vsyncpa [#allocation30], 0
    %37 = vsyncpa [#allocation33], 0
    %38 = vsyncpa [#allocation36], 0
    %39 = vsyncpa [#allocation7], 0
    %s40 = scalar_lea.sflag [#allocation7], 1
    %41 = vsyncpa %s40, 0
    loop: start=0, step=1, limit=4
    $region2: #{fmb_forward.1} parent=1 // loop_pre_header
      _
    $region3: #{fmb_forward.1} parent=1 // loop_header
      %s43 = sphi 0, %s47
      %p44 = scmp.ge.s32.totalorder %s43, 4
      %s53 = sphi 0, %s55
      %s56 = sphi 0, %s53
      %s57 = sphi 0, %s56
      %s73 = sphi 0, %s57
      %s77 = sphi 0, %s77
      %s79 = sphi 0, %s77
      %s80 = sphi 0, %s79
      %s94 = sphi 0, %s80
      %s98 = sphi 0, %s98
      %s100 = sphi 0, %s98
      %s101 = sphi 0, %s100
      %s115 = sphi 0, %s101
      %s119 = sphi 0, %s119
      %s121 = sphi 0, %s119
      %s122 = sphi 0, %s121
      %s136 = sphi 0, %s122
      %s140 = sphi 0, %s140
      %s142 = sphi 0, %s140
      %s143 = sphi 0, %s142
      %s157 = sphi 0, %s143
      %s161 = sphi 0, %s161
      %s163 = sphi 0, %s161
      %s164 = sphi 0, %s163
      %s178 = sphi 0, %s164
      %s182 = sphi 0, %s182
      %s184 = sphi 0, %s182
      %s185 = sphi 0, %s184
      %s199 = sphi 0, %s185
      %s203 = sphi 0, %s203
      %s205 = sphi 0, %s203
      %s206 = sphi 0, %s205
      %s220 = sphi 0, %s206
      %s224 = sphi 0, %s224
      %s226 = sphi 0, %s224
      %s227 = sphi 0, %s226
      %s241 = sphi 0, %s227
      %s245 = sphi 0, %s245
      %s247 = sphi 0, %s245
      %s248 = sphi 0, %s247
      %s262 = sphi 0, %s248
      %s266 = sphi 0, %s266
      %s268 = sphi 0, %s266
      %s269 = sphi 0, %s268
      %s283 = sphi 0, %s269
      %s287 = sphi 0, %s287
      %s289 = sphi 0, %s287
      %s290 = sphi 0, %s289
      %s304 = sphi 0, %s290
      %s308 = sphi 0, %s308
      %s310 = sphi 0, %s308
      %s311 = sphi 0, %s310
      %s325 = sphi 0, %s311
      %s329 = sphi 0, %s329
      %s331 = sphi 0, %s329
      %s332 = sphi 0, %s331
      %s346 = sphi 0, %s332
      %s350 = sphi 0, %s350
      %s352 = sphi 0, %s350
      %s353 = sphi 0, %s352
      %s367 = sphi 0, %s353
      %s371 = sphi 0, %s371
      %s373 = sphi 0, %s371
      %s374 = sphi 0, %s373
      %s388 = sphi 0, %s374
      %s392 = sphi 0, %s392
      %s394 = sphi 0, %s392
      %s395 = sphi 0, %s394
      %s409 = sphi 0, %s395
      %s413 = sphi 0, %s413
      %s415 = sphi 0, %s413
      %s416 = sphi 0, %s415
      %s430 = sphi 0, %s416
      %s434 = sphi 0, %s434
      %s436 = sphi 0, %s434
      %s437 = sphi 0, %s436
      %s451 = sphi 0, %s437
      %s455 = sphi 0, %s455
      %s457 = sphi 0, %s455
      %s458 = sphi 0, %s457
      %s472 = sphi 0, %s458
      %s476 = sphi 0, %s476
      %s478 = sphi 0, %s476
      %s479 = sphi 0, %s478
      %s493 = sphi 0, %s479
      %s499 = sphi 0, %s501
      %s502 = sphi 0, %s499
      %s503 = sphi 0, %s502
      %s519 = sphi 0, %s503
    $region4: #{fmb_forward.1} parent=1 // loop_header_branch
      %46 = sbr.rel (%p44) target = $region8
    $region5: #{fmb_forward.1} parent=1 // loop_body
      %s48 = ssub.s32 %s43, 1
      %s49 = ssub.s32 %s43, 2
      %s50 = sadd.s32 %s43, 1
      %s51 = ssub.s32 %s43, %s50
      %p52 = scmp.eq.s32.totalorder %s51, 0
      %s54 = sadd.s32 %s53, 1
      %s55 = scalar_select %p52, %s53, %s54
      %p58 = pneg %p52
      %p59 = scmp.eq.s32.totalorder %s43, 1
      %p60 = por %p58, %p59
      %p61 = scmp.ne.s32.totalorder %s53, %s56
      %p62 = scmp.eq.s32.totalorder %s43, 0
      %p63 = por %p61, %p62
      %p64 = scmp.ne.s32.totalorder %s53, %s56
      %p65 = scmp.eq.s32.totalorder %s48, 1
      %p66 = por %p64, %p65
      %p67 = scmp.ne.s32.totalorder %s56, %s57
      %p68 = scmp.eq.s32.totalorder %s48, 0
      %p69 = por %p67, %p68
      %p70 = scmp.ne.s32.totalorder %s56, %s57
      %p71 = scmp.eq.s32.totalorder %s49, 1
      %p72 = por %p70, %p71
      %p74 = scmp.ne.s32.totalorder %s57, %s73
      %p75 = scmp.eq.s32.totalorder %s49, 0
      %p76 = por %p74, %p75
      %s78 = sadd.s32 %s77, 1
      %p81 = scmp.eq.s32.totalorder %s43, 1
      %p82 = scmp.ne.s32.totalorder %s77, %s79
      %p83 = scmp.eq.s32.totalorder %s43, 0
      %p84 = por %p82, %p83
      %p85 = scmp.ne.s32.totalorder %s77, %s79
      %p86 = scmp.eq.s32.totalorder %s48, 1
      %p87 = por %p85, %p86
      %p88 = scmp.ne.s32.totalorder %s79, %s80
      %p89 = scmp.eq.s32.totalorder %s48, 0
      %p90 = por %p88, %p89
      %p91 = scmp.ne.s32.totalorder %s79, %s80
      %p92 = scmp.eq.s32.totalorder %s49, 1
      %p93 = por %p91, %p92
      %p95 = scmp.ne.s32.totalorder %s80, %s94
      %p96 = scmp.eq.s32.totalorder %s49, 0
      %p97 = por %p95, %p96
      %s99 = sadd.s32 %s98, 1
      %p102 = scmp.eq.s32.totalorder %s43, 1
      %p103 = scmp.ne.s32.totalorder %s98, %s100
      %p104 = scmp.eq.s32.totalorder %s43, 0
      %p105 = por %p103, %p104
      %p106 = scmp.ne.s32.totalorder %s98, %s100
      %p107 = scmp.eq.s32.totalorder %s48, 1
      %p108 = por %p106, %p107
      %p109 = scmp.ne.s32.totalorder %s100, %s101
      %p110 = scmp.eq.s32.totalorder %s48, 0
      %p111 = por %p109, %p110
      %p112 = scmp.ne.s32.totalorder %s100, %s101
      %p113 = scmp.eq.s32.totalorder %s49, 1
      %p114 = por %p112, %p113
      %p116 = scmp.ne.s32.totalorder %s101, %s115
      %p117 = scmp.eq.s32.totalorder %s49, 0
      %p118 = por %p116, %p117
      %s120 = sadd.s32 %s119, 1
      %p123 = scmp.eq.s32.totalorder %s43, 1
      %p124 = scmp.ne.s32.totalorder %s119, %s121
      %p125 = scmp.eq.s32.totalorder %s43, 0
      %p126 = por %p124, %p125
      %p127 = scmp.ne.s32.totalorder %s119, %s121
      %p128 = scmp.eq.s32.totalorder %s48, 1
      %p129 = por %p127, %p128
      %p130 = scmp.ne.s32.totalorder %s121, %s122
      %p131 = scmp.eq.s32.totalorder %s48, 0
      %p132 = por %p130, %p131
      %p133 = scmp.ne.s32.totalorder %s121, %s122
      %p134 = scmp.eq.s32.totalorder %s49, 1
      %p135 = por %p133, %p134
      %p137 = scmp.ne.s32.totalorder %s122, %s136
      %p138 = scmp.eq.s32.totalorder %s49, 0
      %p139 = por %p137, %p138
      %s141 = sadd.s32 %s140, 1
      %p144 = scmp.eq.s32.totalorder %s43, 1
      %p145 = scmp.ne.s32.totalorder %s140, %s142
      %p146 = scmp.eq.s32.totalorder %s43, 0
      %p147 = por %p145, %p146
      %p148 = scmp.ne.s32.totalorder %s140, %s142
      %p149 = scmp.eq.s32.totalorder %s48, 1
      %p150 = por %p148, %p149
      %p151 = scmp.ne.s32.totalorder %s142, %s143
      %p152 = scmp.eq.s32.totalorder %s48, 0
      %p153 = por %p151, %p152
      %p154 = scmp.ne.s32.totalorder %s142, %s143
      %p155 = scmp.eq.s32.totalorder %s49, 1
      %p156 = por %p154, %p155
      %p158 = scmp.ne.s32.totalorder %s143, %s157
      %p159 = scmp.eq.s32.totalorder %s49, 0
      %p160 = por %p158, %p159
      %s162 = sadd.s32 %s161, 1
      %p165 = scmp.eq.s32.totalorder %s43, 1
      %p166 = scmp.ne.s32.totalorder %s161, %s163
      %p167 = scmp.eq.s32.totalorder %s43, 0
      %p168 = por %p166, %p167
      %p169 = scmp.ne.s32.totalorder %s161, %s163
      %p170 = scmp.eq.s32.totalorder %s48, 1
      %p171 = por %p169, %p170
      %p172 = scmp.ne.s32.totalorder %s163, %s164
      %p173 = scmp.eq.s32.totalorder %s48, 0
      %p174 = por %p172, %p173
      %p175 = scmp.ne.s32.totalorder %s163, %s164
      %p176 = scmp.eq.s32.totalorder %s49, 1
      %p177 = por %p175, %p176
      %p179 = scmp.ne.s32.totalorder %s164, %s178
      %p180 = scmp.eq.s32.totalorder %s49, 0
      %p181 = por %p179, %p180
      %s183 = sadd.s32 %s182, 1
      %p186 = scmp.eq.s32.totalorder %s43, 1
      %p187 = scmp.ne.s32.totalorder %s182, %s184
      %p188 = scmp.eq.s32.totalorder %s43, 0
      %p189 = por %p187, %p188
      %p190 = scmp.ne.s32.totalorder %s182, %s184
      %p191 = scmp.eq.s32.totalorder %s48, 1
      %p192 = por %p190, %p191
      %p193 = scmp.ne.s32.totalorder %s184, %s185
      %p194 = scmp.eq.s32.totalorder %s48, 0
      %p195 = por %p193, %p194
      %p196 = scmp.ne.s32.totalorder %s184, %s185
      %p197 = scmp.eq.s32.totalorder %s49, 1
      %p198 = por %p196, %p197
      %p200 = scmp.ne.s32.totalorder %s185, %s199
      %p201 = scmp.eq.s32.totalorder %s49, 0
      %p202 = por %p200, %p201
      %s204 = sadd.s32 %s203, 1
      %p207 = scmp.eq.s32.totalorder %s43, 1
      %p208 = scmp.ne.s32.totalorder %s203, %s205
      %p209 = scmp.eq.s32.totalorder %s43, 0
      %p210 = por %p208, %p209
      %p211 = scmp.ne.s32.totalorder %s203, %s205
      %p212 = scmp.eq.s32.totalorder %s48, 1
      %p213 = por %p211, %p212
      %p214 = scmp.ne.s32.totalorder %s205, %s206
      %p215 = scmp.eq.s32.totalorder %s48, 0
      %p216 = por %p214, %p215
      %p217 = scmp.ne.s32.totalorder %s205, %s206
      %p218 = scmp.eq.s32.totalorder %s49, 1
      %p219 = por %p217, %p218
      %p221 = scmp.ne.s32.totalorder %s206, %s220
      %p222 = scmp.eq.s32.totalorder %s49, 0
      %p223 = por %p221, %p222
      %s225 = sadd.s32 %s224, 1
      %p228 = scmp.eq.s32.totalorder %s43, 1
      %p229 = scmp.ne.s32.totalorder %s224, %s226
      %p230 = scmp.eq.s32.totalorder %s43, 0
      %p231 = por %p229, %p230
      %p232 = scmp.ne.s32.totalorder %s224, %s226
      %p233 = scmp.eq.s32.totalorder %s48, 1
      %p234 = por %p232, %p233
      %p235 = scmp.ne.s32.totalorder %s226, %s227
      %p236 = scmp.eq.s32.totalorder %s48, 0
      %p237 = por %p235, %p236
      %p238 = scmp.ne.s32.totalorder %s226, %s227
      %p239 = scmp.eq.s32.totalorder %s49, 1
      %p240 = por %p238, %p239
      %p242 = scmp.ne.s32.totalorder %s227, %s241
      %p243 = scmp.eq.s32.totalorder %s49, 0
      %p244 = por %p242, %p243
      %s246 = sadd.s32 %s245, 1
      %p249 = scmp.eq.s32.totalorder %s43, 1
      %p250 = scmp.ne.s32.totalorder %s245, %s247
      %p251 = scmp.eq.s32.totalorder %s43, 0
      %p252 = por %p250, %p251
      %p253 = scmp.ne.s32.totalorder %s245, %s247
      %p254 = scmp.eq.s32.totalorder %s48, 1
      %p255 = por %p253, %p254
      %p256 = scmp.ne.s32.totalorder %s247, %s248
      %p257 = scmp.eq.s32.totalorder %s48, 0
      %p258 = por %p256, %p257
      %p259 = scmp.ne.s32.totalorder %s247, %s248
      %p260 = scmp.eq.s32.totalorder %s49, 1
      %p261 = por %p259, %p260
      %p263 = scmp.ne.s32.totalorder %s248, %s262
      %p264 = scmp.eq.s32.totalorder %s49, 0
      %p265 = por %p263, %p264
      %s267 = sadd.s32 %s266, 1
      %p270 = scmp.eq.s32.totalorder %s43, 1
      %p271 = scmp.ne.s32.totalorder %s266, %s268
      %p272 = scmp.eq.s32.totalorder %s43, 0
      %p273 = por %p271, %p272
      %p274 = scmp.ne.s32.totalorder %s266, %s268
      %p275 = scmp.eq.s32.totalorder %s48, 1
      %p276 = por %p274, %p275
      %p277 = scmp.ne.s32.totalorder %s268, %s269
      %p278 = scmp.eq.s32.totalorder %s48, 0
      %p279 = por %p277, %p278
      %p280 = scmp.ne.s32.totalorder %s268, %s269
      %p281 = scmp.eq.s32.totalorder %s49, 1
      %p282 = por %p280, %p281
      %p284 = scmp.ne.s32.totalorder %s269, %s283
      %p285 = scmp.eq.s32.totalorder %s49, 0
      %p286 = por %p284, %p285
      %s288 = sadd.s32 %s287, 1
      %p291 = scmp.eq.s32.totalorder %s43, 1
      %p292 = scmp.ne.s32.totalorder %s287, %s289
      %p293 = scmp.eq.s32.totalorder %s43, 0
      %p294 = por %p292, %p293
      %p295 = scmp.ne.s32.totalorder %s287, %s289
      %p296 = scmp.eq.s32.totalorder %s48, 1
      %p297 = por %p295, %p296
      %p298 = scmp.ne.s32.totalorder %s289, %s290
      %p299 = scmp.eq.s32.totalorder %s48, 0
      %p300 = por %p298, %p299
      %p301 = scmp.ne.s32.totalorder %s289, %s290
      %p302 = scmp.eq.s32.totalorder %s49, 1
      %p303 = por %p301, %p302
      %p305 = scmp.ne.s32.totalorder %s290, %s304
      %p306 = scmp.eq.s32.totalorder %s49, 0
      %p307 = por %p305, %p306
      %s309 = sadd.s32 %s308, 1
      %p312 = scmp.eq.s32.totalorder %s43, 1
      %p313 = scmp.ne.s32.totalorder %s308, %s310
      %p314 = scmp.eq.s32.totalorder %s43, 0
      %p315 = por %p313, %p314
      %p316 = scmp.ne.s32.totalorder %s308, %s310
      %p317 = scmp.eq.s32.totalorder %s48, 1
      %p318 = por %p316, %p317
      %p319 = scmp.ne.s32.totalorder %s310, %s311
      %p320 = scmp.eq.s32.totalorder %s48, 0
      %p321 = por %p319, %p320
      %p322 = scmp.ne.s32.totalorder %s310, %s311
      %p323 = scmp.eq.s32.totalorder %s49, 1
      %p324 = por %p322, %p323
      %p326 = scmp.ne.s32.totalorder %s311, %s325
      %p327 = scmp.eq.s32.totalorder %s49, 0
      %p328 = por %p326, %p327
      %s330 = sadd.s32 %s329, 1
      %p333 = scmp.eq.s32.totalorder %s43, 1
      %p334 = scmp.ne.s32.totalorder %s329, %s331
      %p335 = scmp.eq.s32.totalorder %s43, 0
      %p336 = por %p334, %p335
      %p337 = scmp.ne.s32.totalorder %s329, %s331
      %p338 = scmp.eq.s32.totalorder %s48, 1
      %p339 = por %p337, %p338
      %p340 = scmp.ne.s32.totalorder %s331, %s332
      %p341 = scmp.eq.s32.totalorder %s48, 0
      %p342 = por %p340, %p341
      %p343 = scmp.ne.s32.totalorder %s331, %s332
      %p344 = scmp.eq.s32.totalorder %s49, 1
      %p345 = por %p343, %p344
      %p347 = scmp.ne.s32.totalorder %s332, %s346
      %p348 = scmp.eq.s32.totalorder %s49, 0
      %p349 = por %p347, %p348
      %s351 = sadd.s32 %s350, 1
      %p354 = scmp.eq.s32.totalorder %s43, 1
      %p355 = scmp.ne.s32.totalorder %s350, %s352
      %p356 = scmp.eq.s32.totalorder %s43, 0
      %p357 = por %p355, %p356
      %p358 = scmp.ne.s32.totalorder %s350, %s352
      %p359 = scmp.eq.s32.totalorder %s48, 1
      %p360 = por %p358, %p359
      %p361 = scmp.ne.s32.totalorder %s352, %s353
      %p362 = scmp.eq.s32.totalorder %s48, 0
      %p363 = por %p361, %p362
      %p364 = scmp.ne.s32.totalorder %s352, %s353
      %p365 = scmp.eq.s32.totalorder %s49, 1
      %p366 = por %p364, %p365
      %p368 = scmp.ne.s32.totalorder %s353, %s367
      %p369 = scmp.eq.s32.totalorder %s49, 0
      %p370 = por %p368, %p369
      %s372 = sadd.s32 %s371, 1
      %p375 = scmp.eq.s32.totalorder %s43, 1
      %p376 = scmp.ne.s32.totalorder %s371, %s373
      %p377 = scmp.eq.s32.totalorder %s43, 0
      %p378 = por %p376, %p377
      %p379 = scmp.ne.s32.totalorder %s371, %s373
      %p380 = scmp.eq.s32.totalorder %s48, 1
      %p381 = por %p379, %p380
      %p382 = scmp.ne.s32.totalorder %s373, %s374
      %p383 = scmp.eq.s32.totalorder %s48, 0
      %p384 = por %p382, %p383
      %p385 = scmp.ne.s32.totalorder %s373, %s374
      %p386 = scmp.eq.s32.totalorder %s49, 1
      %p387 = por %p385, %p386
      %p389 = scmp.ne.s32.totalorder %s374, %s388
      %p390 = scmp.eq.s32.totalorder %s49, 0
      %p391 = por %p389, %p390
      %s393 = sadd.s32 %s392, 1
      %p396 = scmp.eq.s32.totalorder %s43, 1
      %p397 = scmp.ne.s32.totalorder %s392, %s394
      %p398 = scmp.eq.s32.totalorder %s43, 0
      %p399 = por %p397, %p398
      %p400 = scmp.ne.s32.totalorder %s392, %s394
      %p401 = scmp.eq.s32.totalorder %s48, 1
      %p402 = por %p400, %p401
      %p403 = scmp.ne.s32.totalorder %s394, %s395
      %p404 = scmp.eq.s32.totalorder %s48, 0
      %p405 = por %p403, %p404
      %p406 = scmp.ne.s32.totalorder %s394, %s395
      %p407 = scmp.eq.s32.totalorder %s49, 1
      %p408 = por %p406, %p407
      %p410 = scmp.ne.s32.totalorder %s395, %s409
      %p411 = scmp.eq.s32.totalorder %s49, 0
      %p412 = por %p410, %p411
      %s414 = sadd.s32 %s413, 1
      %p417 = scmp.eq.s32.totalorder %s43, 1
      %p418 = scmp.ne.s32.totalorder %s413, %s415
      %p419 = scmp.eq.s32.totalorder %s43, 0
      %p420 = por %p418, %p419
      %p421 = scmp.ne.s32.totalorder %s413, %s415
      %p422 = scmp.eq.s32.totalorder %s48, 1
      %p423 = por %p421, %p422
      %p424 = scmp.ne.s32.totalorder %s415, %s416
      %p425 = scmp.eq.s32.totalorder %s48, 0
      %p426 = por %p424, %p425
      %p427 = scmp.ne.s32.totalorder %s415, %s416
      %p428 = scmp.eq.s32.totalorder %s49, 1
      %p429 = por %p427, %p428
      %p431 = scmp.ne.s32.totalorder %s416, %s430
      %p432 = scmp.eq.s32.totalorder %s49, 0
      %p433 = por %p431, %p432
      %s435 = sadd.s32 %s434, 1
      %p438 = scmp.eq.s32.totalorder %s43, 1
      %p439 = scmp.ne.s32.totalorder %s434, %s436
      %p440 = scmp.eq.s32.totalorder %s43, 0
      %p441 = por %p439, %p440
      %p442 = scmp.ne.s32.totalorder %s434, %s436
      %p443 = scmp.eq.s32.totalorder %s48, 1
      %p444 = por %p442, %p443
      %p445 = scmp.ne.s32.totalorder %s436, %s437
      %p446 = scmp.eq.s32.totalorder %s48, 0
      %p447 = por %p445, %p446
      %p448 = scmp.ne.s32.totalorder %s436, %s437
      %p449 = scmp.eq.s32.totalorder %s49, 1
      %p450 = por %p448, %p449
      %p452 = scmp.ne.s32.totalorder %s437, %s451
      %p453 = scmp.eq.s32.totalorder %s49, 0
      %p454 = por %p452, %p453
      %s456 = sadd.s32 %s455, 1
      %p459 = scmp.eq.s32.totalorder %s43, 1
      %p460 = scmp.ne.s32.totalorder %s455, %s457
      %p461 = scmp.eq.s32.totalorder %s43, 0
      %p462 = por %p460, %p461
      %p463 = scmp.ne.s32.totalorder %s455, %s457
      %p464 = scmp.eq.s32.totalorder %s48, 1
      %p465 = por %p463, %p464
      %p466 = scmp.ne.s32.totalorder %s457, %s458
      %p467 = scmp.eq.s32.totalorder %s48, 0
      %p468 = por %p466, %p467
      %p469 = scmp.ne.s32.totalorder %s457, %s458
      %p470 = scmp.eq.s32.totalorder %s49, 1
      %p471 = por %p469, %p470
      %p473 = scmp.ne.s32.totalorder %s458, %s472
      %p474 = scmp.eq.s32.totalorder %s49, 0
      %p475 = por %p473, %p474
      %s477 = sadd.s32 %s476, 1
      %p480 = scmp.eq.s32.totalorder %s43, 1
      %p481 = scmp.ne.s32.totalorder %s476, %s478
      %p482 = scmp.eq.s32.totalorder %s43, 0
      %p483 = por %p481, %p482
      %p484 = scmp.ne.s32.totalorder %s476, %s478
      %p485 = scmp.eq.s32.totalorder %s48, 1
      %p486 = por %p484, %p485
      %p487 = scmp.ne.s32.totalorder %s478, %s479
      %p488 = scmp.eq.s32.totalorder %s48, 0
      %p489 = por %p487, %p488
      %p490 = scmp.ne.s32.totalorder %s478, %s479
      %p491 = scmp.eq.s32.totalorder %s49, 1
      %p492 = por %p490, %p491
      %p494 = scmp.ne.s32.totalorder %s479, %s493
      %p495 = scmp.eq.s32.totalorder %s49, 0
      %p496 = por %p494, %p495
      %s497 = ssub.s32 %s43, %s50
      %p498 = scmp.eq.s32.totalorder %s497, 0
      %s500 = sadd.s32 %s499, 1
      %s501 = scalar_select %p498, %s499, %s500
      %p504 = pneg %p498
      %p505 = scmp.eq.s32.totalorder %s43, 1
      %p506 = por %p504, %p505
      %p507 = scmp.ne.s32.totalorder %s499, %s502
      %p508 = scmp.eq.s32.totalorder %s43, 0
      %p509 = por %p507, %p508
      %p510 = scmp.ne.s32.totalorder %s499, %s502
      %p511 = scmp.eq.s32.totalorder %s48, 1
      %p512 = por %p510, %p511
      %p513 = scmp.ne.s32.totalorder %s502, %s503
      %p514 = scmp.eq.s32.totalorder %s48, 0
      %p515 = por %p513, %p514
      %p516 = scmp.ne.s32.totalorder %s502, %s503
      %p517 = scmp.eq.s32.totalorder %s49, 1
      %p518 = por %p516, %p517
      %p520 = scmp.ne.s32.totalorder %s503, %s519
      %p521 = scmp.eq.s32.totalorder %s49, 0
      %p522 = por %p520, %p521
      %p523 = scmp.le.s32.totalorder 1, %s43
      %p524 = scmp.lt.s32.totalorder %s43, 3
      %p525 = pnand %p523, %p524
      %p526 = pneg %p525
      // Predicated region
      $region9: #{fmb_forward.1} parent=5 // pred_check
        _
      $region10: #{fmb_forward.1} parent=5 // pred_check_branch
        %528 = sbr.rel (%p525) target = $region12
      $region11: #{fmb_forward.1} parent=5 // pred_region
        %s529 = ssub.s32 %s43, 1
        // Predicated region
        $region13: #{fmb_forward.1} parent=11 // pred_check
          %p530 = pneg %p90
        $region14: #{fmb_forward.1} parent=11 // pred_check_branch
          %532 = sbr.rel (%p530) target = $region16
        $region15: #{fmb_forward.1} parent=11 // pred_region
          %s534 = ssub.s32 256, 256
          %535 = vsyncadd [#allocation9], %s534
          %s536 = sshll.u32 [#allocation8], 4
          %s537 = int_to_ptr.vmem [resolvable:$true] %s536
          %542 = dma.hbm_to_vmem [thread:$0]  %s1, 256, %s537, [#allocation9], 128, 128, 8
        $region16: #{fmb_forward.1} parent=11 // pred_fallthru
          _
        // Predicated region
        $region17: #{fmb_forward.1} parent=11 // pred_check
          %p543 = pneg %p111
        $region18: #{fmb_forward.1} parent=11 // pred_check_branch
          %545 = sbr.rel (%p543) target = $region20
        $region19: #{fmb_forward.1} parent=11 // pred_region
          %s547 = ssub.s32 16, 16
          %548 = vsyncadd [#allocation9], %s547
          %s550 = sshll.u32 [#allocation10], 4
          %s551 = int_to_ptr.vmem [resolvable:$true] %s550
          %553 = dma.hbm_to_vmem [thread:$0]  %s2, 16, %s551, [#allocation9]
        $region20: #{fmb_forward.1} parent=11 // pred_fallthru
          _
        // Predicated region
        $region21: #{fmb_forward.1} parent=11 // pred_check
          %p554 = pneg %p132
        $region22: #{fmb_forward.1} parent=11 // pred_check_branch
          %556 = sbr.rel (%p554) target = $region24
        $region23: #{fmb_forward.1} parent=11 // pred_region
          %s558 = ssub.s32 256, 256
          %559 = vsyncadd [#allocation12], %s558
          %s560 = sshll.u32 [#allocation11], 4
          %s561 = int_to_ptr.vmem [resolvable:$true] %s560
          %566 = dma.hbm_to_vmem [thread:$0]  %s3, 256, %s561, [#allocation12], 128, 128, 8
        $region24: #{fmb_forward.1} parent=11 // pred_fallthru
          _
        // Predicated region
        $region25: #{fmb_forward.1} parent=11 // pred_check
          %p567 = pneg %p153
        $region26: #{fmb_forward.1} parent=11 // pred_check_branch
          %569 = sbr.rel (%p567) target = $region28
        $region27: #{fmb_forward.1} parent=11 // pred_region
          %s571 = ssub.s32 16, 16
          %572 = vsyncadd [#allocation12], %s571
          %s574 = sshll.u32 [#allocation13], 4
          %s575 = int_to_ptr.vmem [resolvable:$true] %s574
          %577 = dma.hbm_to_vmem [thread:$0]  %s4, 16, %s575, [#allocation12]
        $region28: #{fmb_forward.1} parent=11 // pred_fallthru
          _
        // Predicated region
        $region29: #{fmb_forward.1} parent=11 // pred_check
          %p578 = pneg %p174
        $region30: #{fmb_forward.1} parent=11 // pred_check_branch
          %580 = sbr.rel (%p578) target = $region32
        $region31: #{fmb_forward.1} parent=11 // pred_region
          %s582 = ssub.s32 256, 256
          %583 = vsyncadd [#allocation15], %s582
          %s584 = sshll.u32 [#allocation14], 4
          %s585 = int_to_ptr.vmem [resolvable:$true] %s584
          %590 = dma.hbm_to_vmem [thread:$0]  %s5, 256, %s585, [#allocation15], 128, 128, 8
        $region32: #{fmb_forward.1} parent=11 // pred_fallthru
          _
        // Predicated region
        $region33: #{fmb_forward.1} parent=11 // pred_check
          %p591 = pneg %p195
        $region34: #{fmb_forward.1} parent=11 // pred_check_branch
          %593 = sbr.rel (%p591) target = $region36
        $region35: #{fmb_forward.1} parent=11 // pred_region
          %s595 = ssub.s32 16, 16
          %596 = vsyncadd [#allocation15], %s595
          %s598 = sshll.u32 [#allocation16], 4
          %s599 = int_to_ptr.vmem [resolvable:$true] %s598
          %601 = dma.hbm_to_vmem [thread:$0]  %s6, 16, %s599, [#allocation15]
        $region36: #{fmb_forward.1} parent=11 // pred_fallthru
          _
        // Predicated region
        $region37: #{fmb_forward.1} parent=11 // pred_check
          %p602 = pneg %p216
        $region38: #{fmb_forward.1} parent=11 // pred_check_branch
          %604 = sbr.rel (%p602) target = $region40
        $region39: #{fmb_forward.1} parent=11 // pred_region
          %s606 = ssub.s32 256, 256
          %607 = vsyncadd [#allocation18], %s606
          %s608 = sshll.u32 [#allocation17], 4
          %s609 = int_to_ptr.vmem [resolvable:$true] %s608
          %614 = dma.hbm_to_vmem [thread:$0]  %s7, 256, %s609, [#allocation18], 128, 128, 8
        $region40: #{fmb_forward.1} parent=11 // pred_fallthru
          _
        // Predicated region
        $region41: #{fmb_forward.1} parent=11 // pred_check
          %p615 = pneg %p237
        $region42: #{fmb_forward.1} parent=11 // pred_check_branch
          %617 = sbr.rel (%p615) target = $region44
        $region43: #{fmb_forward.1} parent=11 // pred_region
          %s619 = ssub.s32 16, 16
          %620 = vsyncadd [#allocation18], %s619
          %s622 = sshll.u32 [#allocation19], 4
          %s623 = int_to_ptr.vmem [resolvable:$true] %s622
          %625 = dma.hbm_to_vmem [thread:$0]  %s8, 16, %s623, [#allocation18]
        $region44: #{fmb_forward.1} parent=11 // pred_fallthru
          _
        // Predicated region
        $region45: #{fmb_forward.1} parent=11 // pred_check
          %p626 = pneg %p258
        $region46: #{fmb_forward.1} parent=11 // pred_check_branch
          %628 = sbr.rel (%p626) target = $region48
        $region47: #{fmb_forward.1} parent=11 // pred_region
          %s630 = ssub.s32 2304, 2304
          %631 = vsyncadd [#allocation21], %s630
          %s632 = sshll.u32 [#allocation20], 4
          %s633 = int_to_ptr.vmem [resolvable:$true] %s632
          %638 = dma.hbm_to_vmem [thread:$0]  %s9, 2304, %s633, [#allocation21], 128, 128, 8
        $region48: #{fmb_forward.1} parent=11 // pred_fallthru
          _
        // Predicated region
        $region49: #{fmb_forward.1} parent=11 // pred_check
          %p639 = pneg %p279
        $region50: #{fmb_forward.1} parent=11 // pred_check_branch
          %641 = sbr.rel (%p639) target = $region52
        $region51: #{fmb_forward.1} parent=11 // pred_region
          %s643 = ssub.s32 16, 16
          %644 = vsyncadd [#allocation21], %s643
          %s646 = sshll.u32 [#allocation22], 4
          %s647 = int_to_ptr.vmem [resolvable:$true] %s646
          %649 = dma.hbm_to_vmem [thread:$0]  %s10, 16, %s647, [#allocation21]
        $region52: #{fmb_forward.1} parent=11 // pred_fallthru
          _
        // Predicated region
        $region53: #{fmb_forward.1} parent=11 // pred_check
          %p650 = pneg %p300
        $region54: #{fmb_forward.1} parent=11 // pred_check_branch
          %652 = sbr.rel (%p650) target = $region56
        $region55: #{fmb_forward.1} parent=11 // pred_region
          %s654 = ssub.s32 512, 512
          %655 = vsyncadd [#allocation24], %s654
          %s656 = sshll.u32 [#allocation23], 4
          %s657 = int_to_ptr.vmem [resolvable:$true] %s656
          %662 = dma.hbm_to_vmem [thread:$0]  %s11, 512, %s657, [#allocation24], 128, 128, 8
        $region56: #{fmb_forward.1} parent=11 // pred_fallthru
          _
        // Predicated region
        $region57: #{fmb_forward.1} parent=11 // pred_check
          %p663 = pneg %p321
        $region58: #{fmb_forward.1} parent=11 // pred_check_branch
          %665 = sbr.rel (%p663) target = $region60
        $region59: #{fmb_forward.1} parent=11 // pred_region
          %s667 = ssub.s32 16, 16
          %668 = vsyncadd [#allocation24], %s667
          %s670 = sshll.u32 [#allocation25], 4
          %s671 = int_to_ptr.vmem [resolvable:$true] %s670
          %673 = dma.hbm_to_vmem [thread:$0]  %s12, 16, %s671, [#allocation24]
        $region60: #{fmb_forward.1} parent=11 // pred_fallthru
          _
        // Predicated region
        $region61: #{fmb_forward.1} parent=11 // pred_check
          %p674 = pneg %p342
        $region62: #{fmb_forward.1} parent=11 // pred_check_branch
          %676 = sbr.rel (%p674) target = $region64
        $region63: #{fmb_forward.1} parent=11 // pred_region
          %s678 = ssub.s32 16, 16
          %679 = vsyncadd [#allocation27], %s678
          %s681 = sshll.u32 [#allocation26], 4
          %s682 = int_to_ptr.vmem [resolvable:$true] %s681
          %684 = dma.hbm_to_vmem [thread:$0]  %s13, 16, %s682, [#allocation27]
        $region64: #{fmb_forward.1} parent=11 // pred_fallthru
          _
        // Predicated region
        $region65: #{fmb_forward.1} parent=11 // pred_check
          %p685 = pneg %p363
        $region66: #{fmb_forward.1} parent=11 // pred_check_branch
          %687 = sbr.rel (%p685) target = $region68
        $region67: #{fmb_forward.1} parent=11 // pred_region
          %s689 = ssub.s32 16, 16
          %690 = vsyncadd [#allocation27], %s689
          %s692 = sshll.u32 [#allocation28], 4
          %s693 = int_to_ptr.vmem [resolvable:$true] %s692
          %695 = dma.hbm_to_vmem [thread:$0]  %s14, 16, %s693, [#allocation27]
        $region68: #{fmb_forward.1} parent=11 // pred_fallthru
          _
        // Predicated region
        $region69: #{fmb_forward.1} parent=11 // pred_check
          %p696 = pneg %p384
        $region70: #{fmb_forward.1} parent=11 // pred_check_branch
          %698 = sbr.rel (%p696) target = $region72
        $region71: #{fmb_forward.1} parent=11 // pred_region
          %s700 = ssub.s32 256, 256
          %701 = vsyncadd [#allocation30], %s700
          %s702 = sshll.u32 [#allocation29], 4
          %s703 = int_to_ptr.vmem [resolvable:$true] %s702
          %708 = dma.hbm_to_vmem [thread:$0]  %s15, 256, %s703, [#allocation30], 128, 128, 8
        $region72: #{fmb_forward.1} parent=11 // pred_fallthru
          _
        // Predicated region
        $region73: #{fmb_forward.1} parent=11 // pred_check
          %p709 = pneg %p405
        $region74: #{fmb_forward.1} parent=11 // pred_check_branch
          %711 = sbr.rel (%p709) target = $region76
        $region75: #{fmb_forward.1} parent=11 // pred_region
          %s713 = ssub.s32 16, 16
          %714 = vsyncadd [#allocation30], %s713
          %s716 = sshll.u32 [#allocation31], 4
          %s717 = int_to_ptr.vmem [resolvable:$true] %s716
          %719 = dma.hbm_to_vmem [thread:$0]  %s16, 16, %s717, [#allocation30]
        $region76: #{fmb_forward.1} parent=11 // pred_fallthru
          _
        // Predicated region
        $region77: #{fmb_forward.1} parent=11 // pred_check
          %p720 = pneg %p426
        $region78: #{fmb_forward.1} parent=11 // pred_check_branch
          %722 = sbr.rel (%p720) target = $region80
        $region79: #{fmb_forward.1} parent=11 // pred_region
          %s724 = ssub.s32 1152, 1152
          %725 = vsyncadd [#allocation33], %s724
          %s726 = sshll.u32 [#allocation32], 4
          %s727 = int_to_ptr.vmem [resolvable:$true] %s726
          %732 = dma.hbm_to_vmem [thread:$0]  %s17, 1152, %s727, [#allocation33], 128, 128, 8
        $region80: #{fmb_forward.1} parent=11 // pred_fallthru
          _
        // Predicated region
        $region81: #{fmb_forward.1} parent=11 // pred_check
          %p733 = pneg %p447
        $region82: #{fmb_forward.1} parent=11 // pred_check_branch
          %735 = sbr.rel (%p733) target = $region84
        $region83: #{fmb_forward.1} parent=11 // pred_region
          %s737 = ssub.s32 16, 16
          %738 = vsyncadd [#allocation33], %s737
          %s740 = sshll.u32 [#allocation34], 4
          %s741 = int_to_ptr.vmem [resolvable:$true] %s740
          %743 = dma.hbm_to_vmem [thread:$0]  %s18, 16, %s741, [#allocation33]
        $region84: #{fmb_forward.1} parent=11 // pred_fallthru
          _
        // Predicated region
        $region85: #{fmb_forward.1} parent=11 // pred_check
          %p744 = pneg %p468
        $region86: #{fmb_forward.1} parent=11 // pred_check_branch
          %746 = sbr.rel (%p744) target = $region88
        $region87: #{fmb_forward.1} parent=11 // pred_region
          %s748 = ssub.s32 512, 512
          %749 = vsyncadd [#allocation36], %s748
          %s750 = sshll.u32 [#allocation35], 4
          %s751 = int_to_ptr.vmem [resolvable:$true] %s750
          %756 = dma.hbm_to_vmem [thread:$0]  %s19, 512, %s751, [#allocation36], 128, 128, 8
        $region88: #{fmb_forward.1} parent=11 // pred_fallthru
          _
        // Predicated region
        $region89: #{fmb_forward.1} parent=11 // pred_check
          %p757 = pneg %p489
        $region90: #{fmb_forward.1} parent=11 // pred_check_branch
          %759 = sbr.rel (%p757) target = $region92
        $region91: #{fmb_forward.1} parent=11 // pred_region
          %s761 = ssub.s32 16, 16
          %762 = vsyncadd [#allocation36], %s761
          %s764 = sshll.u32 [#allocation37], 4
          %s765 = int_to_ptr.vmem [resolvable:$true] %s764
          %767 = dma.hbm_to_vmem [thread:$0]  %s20, 16, %s765, [#allocation36]
        $region92: #{fmb_forward.1} parent=11 // pred_fallthru
          _
      $region12: #{fmb_forward.1} parent=5 // pred_fallthru
        _
      %p768 = scmp.lt.s32.totalorder %s43, 2
      // Predicated region
      $region93: #{fmb_forward.1} parent=5 // pred_check
        %p769 = pneg %p768
      $region94: #{fmb_forward.1} parent=5 // pred_check_branch
        %771 = sbr.rel (%p769) target = $region96
      $region95: #{fmb_forward.1} parent=5 // pred_region
        // Predicated region
        $region97: #{fmb_forward.1} parent=95 // pred_check
          %p772 = pneg %p63
        $region98: #{fmb_forward.1} parent=95 // pred_check_branch
          %774 = sbr.rel (%p772) target = $region100
        $region99: #{fmb_forward.1} parent=95 // pred_region
          %s775 = sand.u32 %s53, 1
          %s776 = scalar_lea.sflag [#allocation6], %s775
          %s777 = sand.u32 %s53, 1
          %s778 = smul.addr %s777, 256
          %s779 = scalar_lea.vmem [#allocation5], %s778
          %s781 = ssub.s32 4096, 4096
          %782 = vsyncadd %s776, %s781
          %s783 = smul.addr %s43, 32
          %s784 = smul.addr %s783, 128
          %s785 = scalar_lea.hbm %s0, %s784
          %s786 = sshll.u32 %s779, 4
          %s787 = int_to_ptr.vmem [resolvable:$true] %s786
          %792 = dma.hbm_to_vmem [thread:$0]  %s785, 4096, %s787, %s776, 128, 128, 8
        $region100: #{fmb_forward.1} parent=95 // pred_fallthru
          _
      $region96: #{fmb_forward.1} parent=5 // pred_fallthru
        _
      %p793 = scmp.le.s32.totalorder 1, %s43
      %p794 = scmp.lt.s32.totalorder %s43, 3
      %p795 = pnand %p793, %p794
      %p796 = pneg %p795
      // Predicated region
      $region101: #{fmb_forward.1} parent=5 // pred_check
        _
      $region102: #{fmb_forward.1} parent=5 // pred_check_branch
        %798 = sbr.rel (%p795) target = $region104
      $region103: #{fmb_forward.1} parent=5 // pred_region
        %s799 = ssub.s32 %s43, 1
        %s800 = sand.u32 %s56, 1
        %s801 = scalar_lea.sflag [#allocation6], %s800
        %s802 = sand.u32 %s56, 1
        %s803 = smul.addr %s802, 256
        %s804 = scalar_lea.vmem [#allocation5], %s803
        // Predicated region
        $region105: #{fmb_forward.1} parent=103 // pred_check
          %p805 = pneg %p69
        $region106: #{fmb_forward.1} parent=103 // pred_check_branch
          %807 = sbr.rel (%p805) target = $region108
        $region107: #{fmb_forward.1} parent=103 // pred_region
          %808 = dma.done %s801, 4096
        $region108: #{fmb_forward.1} parent=103 // pred_fallthru
          _
        // Predicated region
        $region109: #{fmb_forward.1} parent=103 // pred_check
          %p809 = pneg %p90
        $region110: #{fmb_forward.1} parent=103 // pred_check_branch
          %811 = sbr.rel (%p809) target = $region112
        $region111: #{fmb_forward.1} parent=103 // pred_region
          %812 = dma.done [#allocation9], 256
        $region112: #{fmb_forward.1} parent=103 // pred_fallthru
          _
        // Predicated region
        $region113: #{fmb_forward.1} parent=103 // pred_check
          %p813 = pneg %p111
        $region114: #{fmb_forward.1} parent=103 // pred_check_branch
          %815 = sbr.rel (%p813) target = $region116
        $region115: #{fmb_forward.1} parent=103 // pred_region
          %816 = dma.done [#allocation9], 16
        $region116: #{fmb_forward.1} parent=103 // pred_fallthru
          _
        // Predicated region
        $region117: #{fmb_forward.1} parent=103 // pred_check
          %p817 = pneg %p132
        $region118: #{fmb_forward.1} parent=103 // pred_check_branch
          %819 = sbr.rel (%p817) target = $region120
        $region119: #{fmb_forward.1} parent=103 // pred_region
          %820 = dma.done [#allocation12], 256
        $region120: #{fmb_forward.1} parent=103 // pred_fallthru
          _
        // Predicated region
        $region121: #{fmb_forward.1} parent=103 // pred_check
          %p821 = pneg %p153
        $region122: #{fmb_forward.1} parent=103 // pred_check_branch
          %823 = sbr.rel (%p821) target = $region124
        $region123: #{fmb_forward.1} parent=103 // pred_region
          %824 = dma.done [#allocation12], 16
        $region124: #{fmb_forward.1} parent=103 // pred_fallthru
          _
        // Predicated region
        $region125: #{fmb_forward.1} parent=103 // pred_check
          %p825 = pneg %p174
        $region126: #{fmb_forward.1} parent=103 // pred_check_branch
          %827 = sbr.rel (%p825) target = $region128
        $region127: #{fmb_forward.1} parent=103 // pred_region
          %828 = dma.done [#allocation15], 256
        $region128: #{fmb_forward.1} parent=103 // pred_fallthru
          _
        // Predicated region
        $region129: #{fmb_forward.1} parent=103 // pred_check
          %p829 = pneg %p195
        $region130: #{fmb_forward.1} parent=103 // pred_check_branch
          %831 = sbr.rel (%p829) target = $region132
        $region131: #{fmb_forward.1} parent=103 // pred_region
          %832 = dma.done [#allocation15], 16
        $region132: #{fmb_forward.1} parent=103 // pred_fallthru
          _
        // Predicated region
        $region133: #{fmb_forward.1} parent=103 // pred_check
          %p833 = pneg %p216
        $region134: #{fmb_forward.1} parent=103 // pred_check_branch
          %835 = sbr.rel (%p833) target = $region136
        $region135: #{fmb_forward.1} parent=103 // pred_region
          %836 = dma.done [#allocation18], 256
        $region136: #{fmb_forward.1} parent=103 // pred_fallthru
          _
        // Predicated region
        $region137: #{fmb_forward.1} parent=103 // pred_check
          %p837 = pneg %p237
        $region138: #{fmb_forward.1} parent=103 // pred_check_branch
          %839 = sbr.rel (%p837) target = $region140
        $region139: #{fmb_forward.1} parent=103 // pred_region
          %840 = dma.done [#allocation18], 16
        $region140: #{fmb_forward.1} parent=103 // pred_fallthru
          _
        // Predicated region
        $region141: #{fmb_forward.1} parent=103 // pred_check
          %p841 = pneg %p258
        $region142: #{fmb_forward.1} parent=103 // pred_check_branch
          %843 = sbr.rel (%p841) target = $region144
        $region143: #{fmb_forward.1} parent=103 // pred_region
          %844 = dma.done [#allocation21], 2304
        $region144: #{fmb_forward.1} parent=103 // pred_fallthru
          _
        // Predicated region
        $region145: #{fmb_forward.1} parent=103 // pred_check
          %p845 = pneg %p279
        $region146: #{fmb_forward.1} parent=103 // pred_check_branch
          %847 = sbr.rel (%p845) target = $region148
        $region147: #{fmb_forward.1} parent=103 // pred_region
          %848 = dma.done [#allocation21], 16
        $region148: #{fmb_forward.1} parent=103 // pred_fallthru
          _
        // Predicated region
        $region149: #{fmb_forward.1} parent=103 // pred_check
          %p849 = pneg %p300
        $region150: #{fmb_forward.1} parent=103 // pred_check_branch
          %851 = sbr.rel (%p849) target = $region152
        $region151: #{fmb_forward.1} parent=103 // pred_region
          %852 = dma.done [#allocation24], 512
        $region152: #{fmb_forward.1} parent=103 // pred_fallthru
          _
        // Predicated region
        $region153: #{fmb_forward.1} parent=103 // pred_check
          %p853 = pneg %p321
        $region154: #{fmb_forward.1} parent=103 // pred_check_branch
          %855 = sbr.rel (%p853) target = $region156
        $region155: #{fmb_forward.1} parent=103 // pred_region
          %856 = dma.done [#allocation24], 16
        $region156: #{fmb_forward.1} parent=103 // pred_fallthru
          _
        // Predicated region
        $region157: #{fmb_forward.1} parent=103 // pred_check
          %p857 = pneg %p342
        $region158: #{fmb_forward.1} parent=103 // pred_check_branch
          %859 = sbr.rel (%p857) target = $region160
        $region159: #{fmb_forward.1} parent=103 // pred_region
          %860 = dma.done [#allocation27], 16
        $region160: #{fmb_forward.1} parent=103 // pred_fallthru
          _
        // Predicated region
        $region161: #{fmb_forward.1} parent=103 // pred_check
          %p861 = pneg %p363
        $region162: #{fmb_forward.1} parent=103 // pred_check_branch
          %863 = sbr.rel (%p861) target = $region164
        $region163: #{fmb_forward.1} parent=103 // pred_region
          %864 = dma.done [#allocation27], 16
        $region164: #{fmb_forward.1} parent=103 // pred_fallthru
          _
        // Predicated region
        $region165: #{fmb_forward.1} parent=103 // pred_check
          %p865 = pneg %p384
        $region166: #{fmb_forward.1} parent=103 // pred_check_branch
          %867 = sbr.rel (%p865) target = $region168
        $region167: #{fmb_forward.1} parent=103 // pred_region
          %868 = dma.done [#allocation30], 256
        $region168: #{fmb_forward.1} parent=103 // pred_fallthru
          _
        // Predicated region
        $region169: #{fmb_forward.1} parent=103 // pred_check
          %p869 = pneg %p405
        $region170: #{fmb_forward.1} parent=103 // pred_check_branch
          %871 = sbr.rel (%p869) target = $region172
        $region171: #{fmb_forward.1} parent=103 // pred_region
          %872 = dma.done [#allocation30], 16
        $region172: #{fmb_forward.1} parent=103 // pred_fallthru
          _
        // Predicated region
        $region173: #{fmb_forward.1} parent=103 // pred_check
          %p873 = pneg %p426
        $region174: #{fmb_forward.1} parent=103 // pred_check_branch
          %875 = sbr.rel (%p873) target = $region176
        $region175: #{fmb_forward.1} parent=103 // pred_region
          %876 = dma.done [#allocation33], 1152
        $region176: #{fmb_forward.1} parent=103 // pred_fallthru
          _
        // Predicated region
        $region177: #{fmb_forward.1} parent=103 // pred_check
          %p877 = pneg %p447
        $region178: #{fmb_forward.1} parent=103 // pred_check_branch
          %879 = sbr.rel (%p877) target = $region180
        $region179: #{fmb_forward.1} parent=103 // pred_region
          %880 = dma.done [#allocation33], 16
        $region180: #{fmb_forward.1} parent=103 // pred_fallthru
          _
        // Predicated region
        $region181: #{fmb_forward.1} parent=103 // pred_check
          %p881 = pneg %p468
        $region182: #{fmb_forward.1} parent=103 // pred_check_branch
          %883 = sbr.rel (%p881) target = $region184
        $region183: #{fmb_forward.1} parent=103 // pred_region
          %884 = dma.done [#allocation36], 512
        $region184: #{fmb_forward.1} parent=103 // pred_fallthru
          _
        // Predicated region
        $region185: #{fmb_forward.1} parent=103 // pred_check
          %p885 = pneg %p489
        $region186: #{fmb_forward.1} parent=103 // pred_check_branch
          %887 = sbr.rel (%p885) target = $region188
        $region187: #{fmb_forward.1} parent=103 // pred_region
          %888 = dma.done [#allocation36], 16
        $region188: #{fmb_forward.1} parent=103 // pred_fallthru
          _
        %s889 = sand.u32 %s56, 1
        %s890 = scalar_lea.sflag [#allocation6], %s889
        %s891 = sand.u32 %s56, 1
        %s892 = smul.addr %s891, 256
        %s893 = scalar_lea.vmem [#allocation5], %s892
        %p894 = pneg %p69
        %p895 = pneg %p66
        %p896 = pneg %p90
        %p897 = pneg %p87
        %p898 = pneg %p111
        %p899 = pneg %p108
        %p900 = pneg %p132
        %p901 = pneg %p129
        %p902 = pneg %p153
        %p903 = pneg %p150
        %p904 = pneg %p174
        %p905 = pneg %p171
        %p906 = pneg %p195
        %p907 = pneg %p192
        %p908 = pneg %p216
        %p909 = pneg %p213
        %p910 = pneg %p237
        %p911 = pneg %p234
        %p912 = pneg %p258
        %p913 = pneg %p255
        %p914 = pneg %p279
        %p915 = pneg %p276
        %p916 = pneg %p300
        %p917 = pneg %p297
        %p918 = pneg %p321
        %p919 = pneg %p318
        %p920 = pneg %p342
        %p921 = pneg %p339
        %p922 = pneg %p363
        %p923 = pneg %p360
        %p924 = pneg %p384
        %p925 = pneg %p381
        %p926 = pneg %p405
        %p927 = pneg %p402
        %p928 = pneg %p426
        %p929 = pneg %p423
        %p930 = pneg %p447
        %p931 = pneg %p444
        %p932 = pneg %p468
        %p933 = pneg %p465
        %p934 = pneg %p489
        %p935 = pneg %p486
        %p936 = pneg %p515
        %p937 = pneg %p512
        %s938 = sand.u32 %s502, 1
        %s939 = scalar_lea.sflag [#allocation7], %s938
        %s940 = sand.u32 %s502, 1
        %s941 = smul.addr %s940, 256
        %s942 = scalar_lea.vmem [#allocation38], %s941
        %vm943 = vcmask 130048
        %944 = vst.msk [vmem:[#allocation2] sm:$0xff] %vm943, 0.0
        %945 = vst.msk [vmem:[#allocation2 + $0x8] sm:$0xff] %vm943, 0.0
        %vm946 = vcmask 123904
        %947 = vst.msk [vmem:[#allocation2 + $0x10] sm:$0x3] %vm946, 0.0
        %s948 = scalar_lea.vmem [#allocation2], 408
        %949 = vst.msk [vmem:[%s948] sm:$0xff] %vm943, 0.0
        %950 = vst.msk [vmem:[%s948 + $0x8] sm:$0xff] %vm943, 0.0
        %951 = vst.msk [vmem:[%s948 + $0x10] sm:$0x3] %vm946, 0.0
        %vm952 = vcmask 122880
        %953 = vst.msk [vmem:[#allocation2] sm:$0x1] %vm952, 0.0
        %954 = vst.msk [vmem:[#allocation2 + $0x18] sm:$0x1] %vm952, 0.0
        %955 = vst.msk [vmem:[#allocation2 + $0x30] sm:$0x1] %vm952, 0.0
        %956 = vst.msk [vmem:[#allocation2 + $0x48] sm:$0x1] %vm952, 0.0
        %957 = vst.msk [vmem:[#allocation2 + $0x60] sm:$0x1] %vm952, 0.0
        %958 = vst.msk [vmem:[#allocation2 + $0x78] sm:$0x1] %vm952, 0.0
        %959 = vst.msk [vmem:[#allocation2 + $0x90] sm:$0x1] %vm952, 0.0
        %960 = vst.msk [vmem:[#allocation2 + $0xa8] sm:$0x1] %vm952, 0.0
        %961 = vst.msk [vmem:[#allocation2 + $0xc0] sm:$0x1] %vm952, 0.0
        %962 = vst.msk [vmem:[#allocation2 + $0xd8] sm:$0x1] %vm952, 0.0
        %963 = vst.msk [vmem:[#allocation2 + $0xf0] sm:$0x1] %vm952, 0.0
        %964 = vst.msk [vmem:[#allocation2 + $0x108] sm:$0x1] %vm952, 0.0
        %965 = vst.msk [vmem:[#allocation2 + $0x120] sm:$0x1] %vm952, 0.0
        %966 = vst.msk [vmem:[#allocation2 + $0x138] sm:$0x1] %vm952, 0.0
        %967 = vst.msk [vmem:[#allocation2 + $0x150] sm:$0x1] %vm952, 0.0
        %968 = vst.msk [vmem:[#allocation2 + $0x168] sm:$0x1] %vm952, 0.0
        %969 = vst.msk [vmem:[#allocation2 + $0x180] sm:$0x1] %vm952, 0.0
        %970 = vst.msk [vmem:[#allocation2 + $0x198] sm:$0x1] %vm952, 0.0
        %971 = vst.msk [vmem:[#allocation2 + $0x11] sm:$0x1] %vm952, 0.0
        %972 = vst.msk [vmem:[#allocation2 + $0x29] sm:$0x1] %vm952, 0.0
        %973 = vst.msk [vmem:[#allocation2 + $0x41] sm:$0x1] %vm952, 0.0
        %974 = vst.msk [vmem:[#allocation2 + $0x59] sm:$0x1] %vm952, 0.0
        %975 = vst.msk [vmem:[#allocation2 + $0x71] sm:$0x1] %vm952, 0.0
        %976 = vst.msk [vmem:[#allocation2 + $0x89] sm:$0x1] %vm952, 0.0
        %977 = vst.msk [vmem:[#allocation2 + $0xa1] sm:$0x1] %vm952, 0.0
        %978 = vst.msk [vmem:[#allocation2 + $0xb9] sm:$0x1] %vm952, 0.0
        %979 = vst.msk [vmem:[#allocation2 + $0xd1] sm:$0x1] %vm952, 0.0
        %980 = vst.msk [vmem:[#allocation2 + $0xe9] sm:$0x1] %vm952, 0.0
        %981 = vst.msk [vmem:[#allocation2 + $0x101] sm:$0x1] %vm952, 0.0
        %982 = vst.msk [vmem:[#allocation2 + $0x119] sm:$0x1] %vm952, 0.0
        %983 = vst.msk [vmem:[#allocation2 + $0x131] sm:$0x1] %vm952, 0.0
        %984 = vst.msk [vmem:[#allocation2 + $0x149] sm:$0x1] %vm952, 0.0
        %985 = vst.msk [vmem:[#allocation2 + $0x161] sm:$0x1] %vm952, 0.0
        %986 = vst.msk [vmem:[#allocation2 + $0x179] sm:$0x1] %vm952, 0.0
        %987 = vst.msk [vmem:[#allocation2 + $0x191] sm:$0x1] %vm952, 0.0
        %988 = vst.msk [vmem:[#allocation2 + $0x1a9] sm:$0x1] %vm952, 0.0
        %vm989 = vcmask 125952
        %990 = vst.msk [vmem:[#allocation3] sm:$0xf] %vm989, 0.0
        %s991 = scalar_lea.vmem [#allocation3], 12
        %992 = vst.msk [vmem:[%s991] sm:$0xf] %vm989, 0.0
        %993 = vst.msk [vmem:[#allocation3] sm:$0x1] %vm952, 0.0
        %994 = vst.msk [vmem:[#allocation3 + $0x4] sm:$0x1] %vm952, 0.0
        %995 = vst.msk [vmem:[#allocation3 + $0x8] sm:$0x1] %vm952, 0.0
        %996 = vst.msk [vmem:[#allocation3 + $0xc] sm:$0x1] %vm952, 0.0
        %997 = vst.msk [vmem:[#allocation3 + $0x3] sm:$0x1] %vm952, 0.0
        %998 = vst.msk [vmem:[#allocation3 + $0x7] sm:$0x1] %vm952, 0.0
        %999 = vst.msk [vmem:[#allocation3 + $0xb] sm:$0x1] %vm952, 0.0
        %1000 = vst.msk [vmem:[#allocation3 + $0xf] sm:$0x1] %vm952, 0.0
        %vm1001 = vcmask 64512
        %1002 = vst.msk [vmem:[#allocation4] sm:$0xff] %vm1001, 0.0
        %1003 = vst.msk [vmem:[#allocation4 + $0x8] sm:$0xff] %vm1001, 0.0
        %vm1004 = vcmask 58368
        %1005 = vst.msk [vmem:[#allocation4 + $0x10] sm:$0x3] %vm1004, 0.0
        %s1006 = scalar_lea.vmem [#allocation4], 408
        %1007 = vst.msk [vmem:[%s1006] sm:$0xff] %vm1001, 0.0
        %1008 = vst.msk [vmem:[%s1006 + $0x8] sm:$0xff] %vm1001, 0.0
        %1009 = vst.msk [vmem:[%s1006 + $0x10] sm:$0x3] %vm1004, 0.0
        %vm1010 = vcmask 57344
        %1011 = vst.msk [vmem:[#allocation4] sm:$0x1] %vm1010, 0.0
        %1012 = vst.msk [vmem:[#allocation4 + $0x18] sm:$0x1] %vm1010, 0.0
        %1013 = vst.msk [vmem:[#allocation4 + $0x30] sm:$0x1] %vm1010, 0.0
        %1014 = vst.msk [vmem:[#allocation4 + $0x48] sm:$0x1] %vm1010, 0.0
        %1015 = vst.msk [vmem:[#allocation4 + $0x60] sm:$0x1] %vm1010, 0.0
        %1016 = vst.msk [vmem:[#allocation4 + $0x78] sm:$0x1] %vm1010, 0.0
        %1017 = vst.msk [vmem:[#allocation4 + $0x90] sm:$0x1] %vm1010, 0.0
        %1018 = vst.msk [vmem:[#allocation4 + $0xa8] sm:$0x1] %vm1010, 0.0
        %1019 = vst.msk [vmem:[#allocation4 + $0xc0] sm:$0x1] %vm1010, 0.0
        %1020 = vst.msk [vmem:[#allocation4 + $0xd8] sm:$0x1] %vm1010, 0.0
        %1021 = vst.msk [vmem:[#allocation4 + $0xf0] sm:$0x1] %vm1010, 0.0
        %1022 = vst.msk [vmem:[#allocation4 + $0x108] sm:$0x1] %vm1010, 0.0
        %1023 = vst.msk [vmem:[#allocation4 + $0x120] sm:$0x1] %vm1010, 0.0
        %1024 = vst.msk [vmem:[#allocation4 + $0x138] sm:$0x1] %vm1010, 0.0
        %1025 = vst.msk [vmem:[#allocation4 + $0x150] sm:$0x1] %vm1010, 0.0
        %1026 = vst.msk [vmem:[#allocation4 + $0x168] sm:$0x1] %vm1010, 0.0
        %1027 = vst.msk [vmem:[#allocation4 + $0x180] sm:$0x1] %vm1010, 0.0
        %1028 = vst.msk [vmem:[#allocation4 + $0x198] sm:$0x1] %vm1010, 0.0
        %1029 = vst.msk [vmem:[#allocation4 + $0x11] sm:$0x1] %vm1010, 0.0
        %1030 = vst.msk [vmem:[#allocation4 + $0x29] sm:$0x1] %vm1010, 0.0
        %1031 = vst.msk [vmem:[#allocation4 + $0x41] sm:$0x1] %vm1010, 0.0
        %1032 = vst.msk [vmem:[#allocation4 + $0x59] sm:$0x1] %vm1010, 0.0
        %1033 = vst.msk [vmem:[#allocation4 + $0x71] sm:$0x1] %vm1010, 0.0
        %1034 = vst.msk [vmem:[#allocation4 + $0x89] sm:$0x1] %vm1010, 0.0
        %1035 = vst.msk [vmem:[#allocation4 + $0xa1] sm:$0x1] %vm1010, 0.0
        %1036 = vst.msk [vmem:[#allocation4 + $0xb9] sm:$0x1] %vm1010, 0.0
        %1037 = vst.msk [vmem:[#allocation4 + $0xd1] sm:$0x1] %vm1010, 0.0
        %1038 = vst.msk [vmem:[#allocation4 + $0xe9] sm:$0x1] %vm1010, 0.0
        %1039 = vst.msk [vmem:[#allocation4 + $0x101] sm:$0x1] %vm1010, 0.0
        %1040 = vst.msk [vmem:[#allocation4 + $0x119] sm:$0x1] %vm1010, 0.0
        %1041 = vst.msk [vmem:[#allocation4 + $0x131] sm:$0x1] %vm1010, 0.0
        %1042 = vst.msk [vmem:[#allocation4 + $0x149] sm:$0x1] %vm1010, 0.0
        %1043 = vst.msk [vmem:[#allocation4 + $0x161] sm:$0x1] %vm1010, 0.0
        %1044 = vst.msk [vmem:[#allocation4 + $0x179] sm:$0x1] %vm1010, 0.0
        %1045 = vst.msk [vmem:[#allocation4 + $0x191] sm:$0x1] %vm1010, 0.0
        %1046 = vst.msk [vmem:[#allocation4 + $0x1a9] sm:$0x1] %vm1010, 0.0
        %v1047 = vld [vmem:[%s804] sm:$0xff]
        %v1048 = vld [vmem:[%s804 + $0x8] sm:$0xff]
        %v1049 = vld [vmem:[%s804 + $0x10] sm:$0xff]
        %v1050 = vld [vmem:[%s804 + $0x18] sm:$0xff]
        %v1051 = vld [vmem:[%s804 + $0x20] sm:$0xff]
        %v1052 = vld [vmem:[%s804 + $0x28] sm:$0xff]
        %v1053 = vld [vmem:[%s804 + $0x30] sm:$0xff]
        %v1054 = vld [vmem:[%s804 + $0x38] sm:$0xff]
        %v1055 = vld [vmem:[%s804 + $0x40] sm:$0xff]
        %v1056 = vld [vmem:[%s804 + $0x48] sm:$0xff]
        %v1057 = vld [vmem:[%s804 + $0x50] sm:$0xff]
        %v1058 = vld [vmem:[%s804 + $0x58] sm:$0xff]
        %v1059 = vld [vmem:[%s804 + $0x60] sm:$0xff]
        %v1060 = vld [vmem:[%s804 + $0x68] sm:$0xff]
        %v1061 = vld [vmem:[%s804 + $0x70] sm:$0xff]
        %v1062 = vld [vmem:[%s804 + $0x78] sm:$0xff]
        %v1063 = vld [vmem:[%s804 + $0x80] sm:$0xff]
        %v1064 = vld [vmem:[%s804 + $0x88] sm:$0xff]
        %v1065 = vld [vmem:[%s804 + $0x90] sm:$0xff]
        %v1066 = vld [vmem:[%s804 + $0x98] sm:$0xff]
        %v1067 = vld [vmem:[%s804 + $0xa0] sm:$0xff]
        %v1068 = vld [vmem:[%s804 + $0xa8] sm:$0xff]
        %v1069 = vld [vmem:[%s804 + $0xb0] sm:$0xff]
        %v1070 = vld [vmem:[%s804 + $0xb8] sm:$0xff]
        %v1071 = vld [vmem:[%s804 + $0xc0] sm:$0xff]
        %v1072 = vld [vmem:[%s804 + $0xc8] sm:$0xff]
        %v1073 = vld [vmem:[%s804 + $0xd0] sm:$0xff]
        %v1074 = vld [vmem:[%s804 + $0xd8] sm:$0xff]
        %v1075 = vld [vmem:[%s804 + $0xe0] sm:$0xff]
        %v1076 = vld [vmem:[%s804 + $0xe8] sm:$0xff]
        %v1077 = vld [vmem:[%s804 + $0xf0] sm:$0xff]
        %v1078 = vld [vmem:[%s804 + $0xf8] sm:$0xff]
        %v1079 = vmul.f32 %v1047, %v1047
        %v1080 = vmul.f32 %v1048, %v1048
        %v1081 = vmul.f32 %v1049, %v1049
        %v1082 = vmul.f32 %v1050, %v1050
        %v1083 = vmul.f32 %v1051, %v1051
        %v1084 = vmul.f32 %v1052, %v1052
        %v1085 = vmul.f32 %v1053, %v1053
        %v1086 = vmul.f32 %v1054, %v1054
        %v1087 = vmul.f32 %v1055, %v1055
        %v1088 = vmul.f32 %v1056, %v1056
        %v1089 = vmul.f32 %v1057, %v1057
        %v1090 = vmul.f32 %v1058, %v1058
        %v1091 = vmul.f32 %v1059, %v1059
        %v1092 = vmul.f32 %v1060, %v1060
        %v1093 = vmul.f32 %v1061, %v1061
        %v1094 = vmul.f32 %v1062, %v1062
        %v1095 = vmul.f32 %v1063, %v1063
        %v1096 = vmul.f32 %v1064, %v1064
        %v1097 = vmul.f32 %v1065, %v1065
        %v1098 = vmul.f32 %v1066, %v1066
        %v1099 = vmul.f32 %v1067, %v1067
        %v1100 = vmul.f32 %v1068, %v1068
        %v1101 = vmul.f32 %v1069, %v1069
        %v1102 = vmul.f32 %v1070, %v1070
        %v1103 = vmul.f32 %v1071, %v1071
        %v1104 = vmul.f32 %v1072, %v1072
        %v1105 = vmul.f32 %v1073, %v1073
        %v1106 = vmul.f32 %v1074, %v1074
        %v1107 = vmul.f32 %v1075, %v1075
        %v1108 = vmul.f32 %v1076, %v1076
        %v1109 = vmul.f32 %v1077, %v1077
        %v1110 = vmul.f32 %v1078, %v1078
        %v1111 = vsel %vm943, %v1079, 0.0
        %1112 = vadd.xlane.f32.xlu0 %v1111
        %v1113 = vpop.xlane.xlu0 %1112
        %v1114 = vsel %vm943, %v1080, 0.0
        %1115 = vadd.xlane.f32.xlu0 %v1114
        %v1116 = vpop.xlane.xlu0 %1115
        %v1117 = vsel %vm943, %v1081, 0.0
        %1118 = vadd.xlane.f32.xlu0 %v1117
        %v1119 = vpop.xlane.xlu0 %1118
        %v1120 = vsel %vm943, %v1082, 0.0
        %1121 = vadd.xlane.f32.xlu0 %v1120
        %v1122 = vpop.xlane.xlu0 %1121
        %v1123 = vsel %vm943, %v1083, 0.0
        %1124 = vadd.xlane.f32.xlu0 %v1123
        %v1125 = vpop.xlane.xlu0 %1124
        %v1126 = vsel %vm943, %v1084, 0.0
        %1127 = vadd.xlane.f32.xlu0 %v1126
        %v1128 = vpop.xlane.xlu0 %1127
        %v1129 = vsel %vm943, %v1085, 0.0
        %1130 = vadd.xlane.f32.xlu0 %v1129
        %v1131 = vpop.xlane.xlu0 %1130
        %v1132 = vsel %vm943, %v1086, 0.0
        %1133 = vadd.xlane.f32.xlu0 %v1132
        %v1134 = vpop.xlane.xlu0 %1133
        %v1135 = vsel %vm943, %v1087, 0.0
        %1136 = vadd.xlane.f32.xlu0 %v1135
        %v1137 = vpop.xlane.xlu0 %1136
        %v1138 = vsel %vm943, %v1088, 0.0
        %1139 = vadd.xlane.f32.xlu0 %v1138
        %v1140 = vpop.xlane.xlu0 %1139
        %v1141 = vsel %vm943, %v1089, 0.0
        %1142 = vadd.xlane.f32.xlu0 %v1141
        %v1143 = vpop.xlane.xlu0 %1142
        %v1144 = vsel %vm943, %v1090, 0.0
        %1145 = vadd.xlane.f32.xlu0 %v1144
        %v1146 = vpop.xlane.xlu0 %1145
        %v1147 = vsel %vm943, %v1091, 0.0
        %1148 = vadd.xlane.f32.xlu0 %v1147
        %v1149 = vpop.xlane.xlu0 %1148
        %v1150 = vsel %vm943, %v1092, 0.0
        %1151 = vadd.xlane.f32.xlu0 %v1150
        %v1152 = vpop.xlane.xlu0 %1151
        %v1153 = vsel %vm943, %v1093, 0.0
        %1154 = vadd.xlane.f32.xlu0 %v1153
        %v1155 = vpop.xlane.xlu0 %1154
        %v1156 = vsel %vm943, %v1094, 0.0
        %1157 = vadd.xlane.f32.xlu0 %v1156
        %v1158 = vpop.xlane.xlu0 %1157
        %v1159 = vsel %vm943, %v1095, 0.0
        %1160 = vadd.xlane.f32.xlu0 %v1159
        %v1161 = vpop.xlane.xlu0 %1160
        %v1162 = vsel %vm943, %v1096, 0.0
        %1163 = vadd.xlane.f32.xlu0 %v1162
        %v1164 = vpop.xlane.xlu0 %1163
        %v1165 = vsel %vm943, %v1097, 0.0
        %1166 = vadd.xlane.f32.xlu0 %v1165
        %v1167 = vpop.xlane.xlu0 %1166
        %v1168 = vsel %vm943, %v1098, 0.0
        %1169 = vadd.xlane.f32.xlu0 %v1168
        %v1170 = vpop.xlane.xlu0 %1169
        %v1171 = vsel %vm943, %v1099, 0.0
        %1172 = vadd.xlane.f32.xlu0 %v1171
        %v1173 = vpop.xlane.xlu0 %1172
        %v1174 = vsel %vm943, %v1100, 0.0
        %1175 = vadd.xlane.f32.xlu0 %v1174
        %v1176 = vpop.xlane.xlu0 %1175
        %v1177 = vsel %vm943, %v1101, 0.0
        %1178 = vadd.xlane.f32.xlu0 %v1177
        %v1179 = vpop.xlane.xlu0 %1178
        %v1180 = vsel %vm943, %v1102, 0.0
        %1181 = vadd.xlane.f32.xlu0 %v1180
        %v1182 = vpop.xlane.xlu0 %1181
        %v1183 = vsel %vm943, %v1103, 0.0
        %1184 = vadd.xlane.f32.xlu0 %v1183
        %v1185 = vpop.xlane.xlu0 %1184
        %v1186 = vsel %vm943, %v1104, 0.0
        %1187 = vadd.xlane.f32.xlu0 %v1186
        %v1188 = vpop.xlane.xlu0 %1187
        %v1189 = vsel %vm943, %v1105, 0.0
        %1190 = vadd.xlane.f32.xlu0 %v1189
        %v1191 = vpop.xlane.xlu0 %1190
        %v1192 = vsel %vm943, %v1106, 0.0
        %1193 = vadd.xlane.f32.xlu0 %v1192
        %v1194 = vpop.xlane.xlu0 %1193
        %v1195 = vsel %vm943, %v1107, 0.0
        %1196 = vadd.xlane.f32.xlu0 %v1195
        %v1197 = vpop.xlane.xlu0 %1196
        %v1198 = vsel %vm943, %v1108, 0.0
        %1199 = vadd.xlane.f32.xlu0 %v1198
        %v1200 = vpop.xlane.xlu0 %1199
        %v1201 = vsel %vm943, %v1109, 0.0
        %1202 = vadd.xlane.f32.xlu0 %v1201
        %v1203 = vpop.xlane.xlu0 %1202
        %v1204 = vsel %vm943, %v1110, 0.0
        %1205 = vadd.xlane.f32.xlu0 %v1204
        %v1206 = vpop.xlane.xlu0 %1205
        %v1207 = vmax.f32 %v1113, 1e-24
        %v1208 = vmax.f32 %v1116, 1e-24
        %v1209 = vmax.f32 %v1119, 1e-24
        %v1210 = vmax.f32 %v1122, 1e-24
        %v1211 = vmax.f32 %v1125, 1e-24
        %v1212 = vmax.f32 %v1128, 1e-24
        %v1213 = vmax.f32 %v1131, 1e-24
        %v1214 = vmax.f32 %v1134, 1e-24
        %v1215 = vmax.f32 %v1137, 1e-24
        %v1216 = vmax.f32 %v1140, 1e-24
        %v1217 = vmax.f32 %v1143, 1e-24
        %v1218 = vmax.f32 %v1146, 1e-24
        %v1219 = vmax.f32 %v1149, 1e-24
        %v1220 = vmax.f32 %v1152, 1e-24
        %v1221 = vmax.f32 %v1155, 1e-24
        %v1222 = vmax.f32 %v1158, 1e-24
        %v1223 = vmax.f32 %v1161, 1e-24
        %v1224 = vmax.f32 %v1164, 1e-24
        %v1225 = vmax.f32 %v1167, 1e-24
        %v1226 = vmax.f32 %v1170, 1e-24
        %v1227 = vmax.f32 %v1173, 1e-24
        %v1228 = vmax.f32 %v1176, 1e-24
        %v1229 = vmax.f32 %v1179, 1e-24
        %v1230 = vmax.f32 %v1182, 1e-24
        %v1231 = vmax.f32 %v1185, 1e-24
        %v1232 = vmax.f32 %v1188, 1e-24
        %v1233 = vmax.f32 %v1191, 1e-24
        %v1234 = vmax.f32 %v1194, 1e-24
        %v1235 = vmax.f32 %v1197, 1e-24
        %v1236 = vmax.f32 %v1200, 1e-24
        %v1237 = vmax.f32 %v1203, 1e-24
        %v1238 = vmax.f32 %v1206, 1e-24
        %v1239 = vrsqrt.pop %v1207
        %v1240 = vrsqrt.pop %v1208
        %v1241 = vrsqrt.pop %v1209
        %v1242 = vrsqrt.pop %v1210
        %v1243 = vrsqrt.pop %v1211
        %v1244 = vrsqrt.pop %v1212
        %v1245 = vrsqrt.pop %v1213
        %v1246 = vrsqrt.pop %v1214
        %v1247 = vrsqrt.pop %v1215
        %v1248 = vrsqrt.pop %v1216
        %v1249 = vrsqrt.pop %v1217
        %v1250 = vrsqrt.pop %v1218
        %v1251 = vrsqrt.pop %v1219
        %v1252 = vrsqrt.pop %v1220
        %v1253 = vrsqrt.pop %v1221
        %v1254 = vrsqrt.pop %v1222
        %v1255 = vrsqrt.pop %v1223
        %v1256 = vrsqrt.pop %v1224
        %v1257 = vrsqrt.pop %v1225
        %v1258 = vrsqrt.pop %v1226
        %v1259 = vrsqrt.pop %v1227
        %v1260 = vrsqrt.pop %v1228
        %v1261 = vrsqrt.pop %v1229
        %v1262 = vrsqrt.pop %v1230
        %v1263 = vrsqrt.pop %v1231
        %v1264 = vrsqrt.pop %v1232
        %v1265 = vrsqrt.pop %v1233
        %v1266 = vrsqrt.pop %v1234
        %v1267 = vrsqrt.pop %v1235
        %v1268 = vrsqrt.pop %v1236
        %v1269 = vrsqrt.pop %v1237
        %v1270 = vrsqrt.pop %v1238
        %v1271 = vmul.f32 %v1047, %v1239
        %v1272 = vmul.f32 %v1048, %v1240
        %v1273 = vmul.f32 %v1049, %v1241
        %v1274 = vmul.f32 %v1050, %v1242
        %v1275 = vmul.f32 %v1051, %v1243
        %v1276 = vmul.f32 %v1052, %v1244
        %v1277 = vmul.f32 %v1053, %v1245
        %v1278 = vmul.f32 %v1054, %v1246
        %v1279 = vmul.f32 %v1055, %v1247
        %v1280 = vmul.f32 %v1056, %v1248
        %v1281 = vmul.f32 %v1057, %v1249
        %v1282 = vmul.f32 %v1058, %v1250
        %v1283 = vmul.f32 %v1059, %v1251
        %v1284 = vmul.f32 %v1060, %v1252
        %v1285 = vmul.f32 %v1061, %v1253
        %v1286 = vmul.f32 %v1062, %v1254
        %v1287 = vmul.f32 %v1063, %v1255
        %v1288 = vmul.f32 %v1064, %v1256
        %v1289 = vmul.f32 %v1065, %v1257
        %v1290 = vmul.f32 %v1066, %v1258
        %v1291 = vmul.f32 %v1067, %v1259
        %v1292 = vmul.f32 %v1068, %v1260
        %v1293 = vmul.f32 %v1069, %v1261
        %v1294 = vmul.f32 %v1070, %v1262
        %v1295 = vmul.f32 %v1071, %v1263
        %v1296 = vmul.f32 %v1072, %v1264
        %v1297 = vmul.f32 %v1073, %v1265
        %v1298 = vmul.f32 %v1074, %v1266
        %v1299 = vmul.f32 %v1075, %v1267
        %v1300 = vmul.f32 %v1076, %v1268
        %v1301 = vmul.f32 %v1077, %v1269
        %v1302 = vmul.f32 %v1078, %v1270
        %v1303 = vld [vmem:[#allocation8] sm:$0xff]
        %v1304 = vld [vmem:[#allocation8 + $0x8] sm:$0xff]
        %v1305 = vld [vmem:[#allocation10] sm:$0x1]
        %v1307 = vlaneseq
        %v1308 = vshrl.u32 %v1307, 7
        %v1309 = vsub.s32 0, %v1308
        %v1310 = vrot.slane %v1305, %v1309
        %v1313 = vsel %vm943, %v1271, 0
        %v1316 = vsel %vm943, %v1272, 0
        %v1319 = vsel %vm943, %v1273, 0
        %v1322 = vsel %vm943, %v1274, 0
        %v1325 = vsel %vm943, %v1275, 0
        %v1328 = vsel %vm943, %v1276, 0
        %v1331 = vsel %vm943, %v1277, 0
        %v1334 = vsel %vm943, %v1278, 0
        %v1337 = vsel %vm943, %v1279, 0
        %v1340 = vsel %vm943, %v1280, 0
        %v1343 = vsel %vm943, %v1281, 0
        %v1346 = vsel %vm943, %v1282, 0
        %v1349 = vsel %vm943, %v1283, 0
        %v1352 = vsel %vm943, %v1284, 0
        %v1355 = vsel %vm943, %v1285, 0
        %v1358 = vsel %vm943, %v1286, 0
        %v1361 = vsel %vm943, %v1287, 0
        %v1364 = vsel %vm943, %v1288, 0
        %v1367 = vsel %vm943, %v1289, 0
        %v1370 = vsel %vm943, %v1290, 0
        %v1373 = vsel %vm943, %v1291, 0
        %v1376 = vsel %vm943, %v1292, 0
        %v1379 = vsel %vm943, %v1293, 0
        %v1382 = vsel %vm943, %v1294, 0
        %v1385 = vsel %vm943, %v1295, 0
        %v1388 = vsel %vm943, %v1296, 0
        %v1391 = vsel %vm943, %v1297, 0
        %v1394 = vsel %vm943, %v1298, 0
        %v1397 = vsel %vm943, %v1299, 0
        %v1400 = vsel %vm943, %v1300, 0
        %v1403 = vsel %vm943, %v1301, 0
        %v1406 = vsel %vm943, %v1302, 0
        %1408 = vmatprep.subr.mxu0 0.0
        %1409 = vmatpush1.msra.mxu0 %v1303
        %1410 = vmatprep.subr.mxu0 0.0
        %1411 = vmatpush1.msra.mxu0 %v1304
        %1412 = vmatprep.subr.mxu0 0.0
        %1413 = vmatpush1.msra.mxu0 0.0
        %1414 = vmatprep.subr.mxu0 0.0
        %1415 = vmatpush1.msra.mxu0 0.0
        %1416 = vmatprep.subr.mxu0 0.0
        %1417 = vmatpush1.msra.mxu0 0.0
        %1418 = vmatprep.subr.mxu0 0.0
        %1419 = vmatpush1.msra.mxu0 0.0
        %1420 = vmatprep.subr.mxu0 0.0
        %1421 = vmatpush1.msra.mxu0 0.0
        %1422 = vmatprep.subr.mxu0 0.0
        %1423 = vmatpush1.msra.mxu0 0.0
        %1424 = vmatprep.subr.mxu0 0.0
        %1425 = vmatpush1.msra.mxu0 0.0
        %1426 = vmatprep.subr.mxu0 0.0
        %1427 = vmatpush1.msra.mxu0 0.0
        %1428 = vmatprep.subr.mxu0 0.0
        %1429 = vmatpush1.msra.mxu0 0.0
        %1430 = vmatprep.subr.mxu0 0.0
        %1431 = vmatpush1.msra.mxu0 0.0
        %1432 = vmatprep.subr.mxu0 0.0
        %1433 = vmatpush1.msra.mxu0 0.0
        %1434 = vmatprep.subr.mxu0 0.0
        %1435 = vmatpush1.msra.mxu0 0.0
        %1436 = vmatprep.subr.mxu0 0.0
        %1437 = vmatpush1.msra.mxu0 0.0
        %1438 = vmatprep.subr.mxu0 0.0
        %1439 = vmatpush1.msra.mxu0 0.0
        %1440 = vmatprep.subr.mxu0 0.0
        %1441 = vmatpush1.msra.mxu0 0.0
        %1442 = vmatprep.subr.mxu0 0.0
        %1443 = vmatpush1.msra.mxu0 0.0
        %1444 = vmatprep.subr.mxu0 0.0
        %1445 = vmatpush1.msra.mxu0 0.0
        %1446 = vmatprep.subr.mxu0 0.0
        %1447 = vmatpush1.msra.mxu0 0.0
        %1448 = vmatprep.subr.mxu0 0.0
        %1449 = vmatpush1.msra.mxu0 0.0
        %1450 = vmatprep.subr.mxu0 0.0
        %1451 = vmatpush1.msra.mxu0 0.0
        %1452 = vmatprep.subr.mxu0 0.0
        %1453 = vmatpush1.msra.mxu0 0.0
        %1454 = vmatprep.subr.mxu0 0.0
        %1455 = vmatpush1.msra.mxu0 0.0
        %1456 = vmatprep.subr.mxu0 0.0
        %1457 = vmatpush1.msra.mxu0 0.0
        %1458 = vmatprep.subr.mxu0 0.0
        %1459 = vmatpush1.msra.mxu0 0.0
        %1460 = vmatprep.subr.mxu0 0.0
        %1461 = vmatpush1.msra.mxu0 0.0
        %1462 = vmatprep.subr.mxu0 0.0
        %1463 = vmatpush1.msra.mxu0 0.0
        %1464 = vmatprep.subr.mxu0 0.0
        %1465 = vmatpush1.msra.mxu0 0.0
        %1466 = vmatprep.subr.mxu0 0.0
        %1467 = vmatpush1.msra.mxu0 0.0
        %1468 = vmatprep.subr.mxu0 0.0
        %1469 = vmatpush1.msra.mxu0 0.0
        %1470 = vmatprep.subr.mxu0 0.0
        %1471 = vmatpush1.msra.mxu0 0.0
        %1472 = vmatprep.mubr.f32.mxu0 0.0
        %1473 = vmatmul.mubr.f32.gmra.mrb[0].mxu0 %v1313
        %v1474 = vpop.f32.mrb[0].mxu0
        %v1475 = vadd.f32 %v1310, %v1474
        %v1476 = vpop.f32.mrb[0].mxu0
        %1477 = vmatprep.mubr.f32.mxu0 0.0
        %1478 = vmatmul.mubr.f32.gmra.mrb[0].mxu0 %v1316
        %v1479 = vpop.f32.mrb[0].mxu0
        %v1480 = vadd.f32 %v1310, %v1479
        %v1481 = vpop.f32.mrb[0].mxu0
        %1482 = vmatprep.mubr.f32.mxu0 0.0
        %1483 = vmatmul.mubr.f32.gmra.mrb[0].mxu0 %v1319
        %v1484 = vpop.f32.mrb[0].mxu0
        %v1485 = vadd.f32 %v1310, %v1484
        %v1486 = vpop.f32.mrb[0].mxu0
        %1487 = vmatprep.mubr.f32.mxu0 0.0
        %1488 = vmatmul.mubr.f32.gmra.mrb[0].mxu0 %v1322
        %v1489 = vpop.f32.mrb[0].mxu0
        %v1490 = vadd.f32 %v1310, %v1489
        %v1491 = vpop.f32.mrb[0].mxu0
        %1492 = vmatprep.mubr.f32.mxu0 0.0
        %1493 = vmatmul.mubr.f32.gmra.mrb[0].mxu0 %v1325
        %v1494 = vpop.f32.mrb[0].mxu0
        %v1495 = vadd.f32 %v1310, %v1494
        %v1496 = vpop.f32.mrb[0].mxu0
        %1497 = vmatprep.mubr.f32.mxu0 0.0
        %1498 = vmatmul.mubr.f32.gmra.mrb[0].mxu0 %v1328
        %v1499 = vpop.f32.mrb[0].mxu0
        %v1500 = vadd.f32 %v1310, %v1499
        %v1501 = vpop.f32.mrb[0].mxu0
        %1502 = vmatprep.mubr.f32.mxu0 0.0
        %1503 = vmatmul.mubr.f32.gmra.mrb[0].mxu0 %v1331
        %v1504 = vpop.f32.mrb[0].mxu0
        %v1505 = vadd.f32 %v1310, %v1504
        %v1506 = vpop.f32.mrb[0].mxu0
        %1507 = vmatprep.mubr.f32.mxu0 0.0
        %1508 = vmatmul.mubr.f32.gmra.mrb[0].mxu0 %v1334
        %v1509 = vpop.f32.mrb[0].mxu0
        %v1510 = vadd.f32 %v1310, %v1509
        %v1511 = vpop.f32.mrb[0].mxu0
        %1512 = vmatprep.mubr.f32.mxu0 0.0
        %1513 = vmatmul.mubr.f32.gmra.mrb[0].mxu0 %v1337
        %v1514 = vpop.f32.mrb[0].mxu0
        %v1515 = vadd.f32 %v1310, %v1514
        %v1516 = vpop.f32.mrb[0].mxu0
        %1517 = vmatprep.mubr.f32.mxu0 0.0
        %1518 = vmatmul.mubr.f32.gmra.mrb[0].mxu0 %v1340
        %v1519 = vpop.f32.mrb[0].mxu0
        %v1520 = vadd.f32 %v1310, %v1519
        %v1521 = vpop.f32.mrb[0].mxu0
        %1522 = vmatprep.mubr.f32.mxu0 0.0
        %1523 = vmatmul.mubr.f32.gmra.mrb[0].mxu0 %v1343
        %v1524 = vpop.f32.mrb[0].mxu0
        %v1525 = vadd.f32 %v1310, %v1524
        %v1526 = vpop.f32.mrb[0].mxu0
        %1527 = vmatprep.mubr.f32.mxu0 0.0
        %1528 = vmatmul.mubr.f32.gmra.mrb[0].mxu0 %v1346
        %v1529 = vpop.f32.mrb[0].mxu0
        %v1530 = vadd.f32 %v1310, %v1529
        %v1531 = vpop.f32.mrb[0].mxu0
        %1532 = vmatprep.mubr.f32.mxu0 0.0
        %1533 = vmatmul.mubr.f32.gmra.mrb[0].mxu0 %v1349
        %v1534 = vpop.f32.mrb[0].mxu0
        %v1535 = vadd.f32 %v1310, %v1534
        %v1536 = vpop.f32.mrb[0].mxu0
        %1537 = vmatprep.mubr.f32.mxu0 0.0
        %1538 = vmatmul.mubr.f32.gmra.mrb[0].mxu0 %v1352
        %v1539 = vpop.f32.mrb[0].mxu0
        %v1540 = vadd.f32 %v1310, %v1539
        %v1541 = vpop.f32.mrb[0].mxu0
        %1542 = vmatprep.mubr.f32.mxu0 0.0
        %1543 = vmatmul.mubr.f32.gmra.mrb[0].mxu0 %v1355
        %v1544 = vpop.f32.mrb[0].mxu0
        %v1545 = vadd.f32 %v1310, %v1544
        %v1546 = vpop.f32.mrb[0].mxu0
        %1547 = vmatprep.mubr.f32.mxu0 0.0
        %1548 = vmatmul.mubr.f32.gmra.mrb[0].mxu0 %v1358
        %v1549 = vpop.f32.mrb[0].mxu0
        %v1550 = vadd.f32 %v1310, %v1549
        %v1551 = vpop.f32.mrb[0].mxu0
        %1552 = vmatprep.mubr.f32.mxu0 0.0
        %1553 = vmatmul.mubr.f32.gmra.mrb[0].mxu0 %v1361
        %v1554 = vpop.f32.mrb[0].mxu0
        %v1555 = vadd.f32 %v1310, %v1554
        %v1556 = vpop.f32.mrb[0].mxu0
        %1557 = vmatprep.mubr.f32.mxu0 0.0
        %1558 = vmatmul.mubr.f32.gmra.mrb[0].mxu0 %v1364
        %v1559 = vpop.f32.mrb[0].mxu0
        %v1560 = vadd.f32 %v1310, %v1559
        %v1561 = vpop.f32.mrb[0].mxu0
        %1562 = vmatprep.mubr.f32.mxu0 0.0
        %1563 = vmatmul.mubr.f32.gmra.mrb[0].mxu0 %v1367
        %v1564 = vpop.f32.mrb[0].mxu0
        %v1565 = vadd.f32 %v1310, %v1564
        %v1566 = vpop.f32.mrb[0].mxu0
        %1567 = vmatprep.mubr.f32.mxu0 0.0
        %1568 = vmatmul.mubr.f32.gmra.mrb[0].mxu0 %v1370
        %v1569 = vpop.f32.mrb[0].mxu0
        %v1570 = vadd.f32 %v1310, %v1569
        %v1571 = vpop.f32.mrb[0].mxu0
        %1572 = vmatprep.mubr.f32.mxu0 0.0
        %1573 = vmatmul.mubr.f32.gmra.mrb[0].mxu0 %v1373
        %v1574 = vpop.f32.mrb[0].mxu0
        %v1575 = vadd.f32 %v1310, %v1574
        %v1576 = vpop.f32.mrb[0].mxu0
        %1577 = vmatprep.mubr.f32.mxu0 0.0
        %1578 = vmatmul.mubr.f32.gmra.mrb[0].mxu0 %v1376
        %v1579 = vpop.f32.mrb[0].mxu0
        %v1580 = vadd.f32 %v1310, %v1579
        %v1581 = vpop.f32.mrb[0].mxu0
        %1582 = vmatprep.mubr.f32.mxu0 0.0
        %1583 = vmatmul.mubr.f32.gmra.mrb[0].mxu0 %v1379
        %v1584 = vpop.f32.mrb[0].mxu0
        %v1585 = vadd.f32 %v1310, %v1584
        %v1586 = vpop.f32.mrb[0].mxu0
        %1587 = vmatprep.mubr.f32.mxu0 0.0
        %1588 = vmatmul.mubr.f32.gmra.mrb[0].mxu0 %v1382
        %v1589 = vpop.f32.mrb[0].mxu0
        %v1590 = vadd.f32 %v1310, %v1589
        %v1591 = vpop.f32.mrb[0].mxu0
        %1592 = vmatprep.mubr.f32.mxu0 0.0
        %1593 = vmatmul.mubr.f32.gmra.mrb[0].mxu0 %v1385
        %v1594 = vpop.f32.mrb[0].mxu0
        %v1595 = vadd.f32 %v1310, %v1594
        %v1596 = vpop.f32.mrb[0].mxu0
        %1597 = vmatprep.mubr.f32.mxu0 0.0
        %1598 = vmatmul.mubr.f32.gmra.mrb[0].mxu0 %v1388
        %v1599 = vpop.f32.mrb[0].mxu0
        %v1600 = vadd.f32 %v1310, %v1599
        %v1601 = vpop.f32.mrb[0].mxu0
        %1602 = vmatprep.mubr.f32.mxu0 0.0
        %1603 = vmatmul.mubr.f32.gmra.mrb[0].mxu0 %v1391
        %v1604 = vpop.f32.mrb[0].mxu0
        %v1605 = vadd.f32 %v1310, %v1604
        %v1606 = vpop.f32.mrb[0].mxu0
        %1607 = vmatprep.mubr.f32.mxu0 0.0
        %1608 = vmatmul.mubr.f32.gmra.mrb[0].mxu0 %v1394
        %v1609 = vpop.f32.mrb[0].mxu0
        %v1610 = vadd.f32 %v1310, %v1609
        %v1611 = vpop.f32.mrb[0].mxu0
        %1612 = vmatprep.mubr.f32.mxu0 0.0
        %1613 = vmatmul.mubr.f32.gmra.mrb[0].mxu0 %v1397
        %v1614 = vpop.f32.mrb[0].mxu0
        %v1615 = vadd.f32 %v1310, %v1614
        %v1616 = vpop.f32.mrb[0].mxu0
        %1617 = vmatprep.mubr.f32.mxu0 0.0
        %1618 = vmatmul.mubr.f32.gmra.mrb[0].mxu0 %v1400
        %v1619 = vpop.f32.mrb[0].mxu0
        %v1620 = vadd.f32 %v1310, %v1619
        %v1621 = vpop.f32.mrb[0].mxu0
        %1622 = vmatprep.mubr.f32.mxu0 0.0
        %1623 = vmatmul.mubr.f32.gmra.mrb[0].mxu0 %v1403
        %v1624 = vpop.f32.mrb[0].mxu0
        %v1625 = vadd.f32 %v1310, %v1624
        %v1626 = vpop.f32.mrb[0].mxu0
        %1627 = vmatprep.mubr.f32.mxu0 0.0
        %1628 = vmatmul.mubr.f32.gmra.mrb[0].mxu0 %v1406
        %v1629 = vpop.f32.mrb[0].mxu0
        %v1630 = vadd.f32 %v1310, %v1629
        %v1631 = vpop.f32.mrb[0].mxu0
        %1632 = vdwg.mxu0
        %vm1633 = vcmask 261248
        %v1634 = vsel %vm1633, %v1475, -inf
        %v1635 = vrot.slane %v1634, 4
        %v1636 = vmax.f32 %v1634, %v1635
        %v1637 = vrot.slane %v1636, 2
        %v1638 = vmax.f32 %v1636, %v1637
        %v1639 = vrot.slane %v1638, 1
        %v1640 = vmax.f32 %v1638, %v1639
        %v1641 = vsel %vm1633, %v1480, -inf
        %v1642 = vrot.slane %v1641, 4
        %v1643 = vmax.f32 %v1641, %v1642
        %v1644 = vrot.slane %v1643, 2
        %v1645 = vmax.f32 %v1643, %v1644
        %v1646 = vrot.slane %v1645, 1
        %v1647 = vmax.f32 %v1645, %v1646
        %v1648 = vsel %vm1633, %v1485, -inf
        %v1649 = vrot.slane %v1648, 4
        %v1650 = vmax.f32 %v1648, %v1649
        %v1651 = vrot.slane %v1650, 2
        %v1652 = vmax.f32 %v1650, %v1651
        %v1653 = vrot.slane %v1652, 1
        %v1654 = vmax.f32 %v1652, %v1653
        %v1655 = vsel %vm1633, %v1490, -inf
        %v1656 = vrot.slane %v1655, 4
        %v1657 = vmax.f32 %v1655, %v1656
        %v1658 = vrot.slane %v1657, 2
        %v1659 = vmax.f32 %v1657, %v1658
        %v1660 = vrot.slane %v1659, 1
        %v1661 = vmax.f32 %v1659, %v1660
        %v1662 = vsel %vm1633, %v1495, -inf
        %v1663 = vrot.slane %v1662, 4
        %v1664 = vmax.f32 %v1662, %v1663
        %v1665 = vrot.slane %v1664, 2
        %v1666 = vmax.f32 %v1664, %v1665
        %v1667 = vrot.slane %v1666, 1
        %v1668 = vmax.f32 %v1666, %v1667
        %v1669 = vsel %vm1633, %v1500, -inf
        %v1670 = vrot.slane %v1669, 4
        %v1671 = vmax.f32 %v1669, %v1670
        %v1672 = vrot.slane %v1671, 2
        %v1673 = vmax.f32 %v1671, %v1672
        %v1674 = vrot.slane %v1673, 1
        %v1675 = vmax.f32 %v1673, %v1674
        %v1676 = vsel %vm1633, %v1505, -inf
        %v1677 = vrot.slane %v1676, 4
        %v1678 = vmax.f32 %v1676, %v1677
        %v1679 = vrot.slane %v1678, 2
        %v1680 = vmax.f32 %v1678, %v1679
        %v1681 = vrot.slane %v1680, 1
        %v1682 = vmax.f32 %v1680, %v1681
        %v1683 = vsel %vm1633, %v1510, -inf
        %v1684 = vrot.slane %v1683, 4
        %v1685 = vmax.f32 %v1683, %v1684
        %v1686 = vrot.slane %v1685, 2
        %v1687 = vmax.f32 %v1685, %v1686
        %v1688 = vrot.slane %v1687, 1
        %v1689 = vmax.f32 %v1687, %v1688
        %v1690 = vsel %vm1633, %v1515, -inf
        %v1691 = vrot.slane %v1690, 4
        %v1692 = vmax.f32 %v1690, %v1691
        %v1693 = vrot.slane %v1692, 2
        %v1694 = vmax.f32 %v1692, %v1693
        %v1695 = vrot.slane %v1694, 1
        %v1696 = vmax.f32 %v1694, %v1695
        %v1697 = vsel %vm1633, %v1520, -inf
        %v1698 = vrot.slane %v1697, 4
        %v1699 = vmax.f32 %v1697, %v1698
        %v1700 = vrot.slane %v1699, 2
        %v1701 = vmax.f32 %v1699, %v1700
        %v1702 = vrot.slane %v1701, 1
        %v1703 = vmax.f32 %v1701, %v1702
        %v1704 = vsel %vm1633, %v1525, -inf
        %v1705 = vrot.slane %v1704, 4
        %v1706 = vmax.f32 %v1704, %v1705
        %v1707 = vrot.slane %v1706, 2
        %v1708 = vmax.f32 %v1706, %v1707
        %v1709 = vrot.slane %v1708, 1
        %v1710 = vmax.f32 %v1708, %v1709
        %v1711 = vsel %vm1633, %v1530, -inf
        %v1712 = vrot.slane %v1711, 4
        %v1713 = vmax.f32 %v1711, %v1712
        %v1714 = vrot.slane %v1713, 2
        %v1715 = vmax.f32 %v1713, %v1714
        %v1716 = vrot.slane %v1715, 1
        %v1717 = vmax.f32 %v1715, %v1716
        %v1718 = vsel %vm1633, %v1535, -inf
        %v1719 = vrot.slane %v1718, 4
        %v1720 = vmax.f32 %v1718, %v1719
        %v1721 = vrot.slane %v1720, 2
        %v1722 = vmax.f32 %v1720, %v1721
        %v1723 = vrot.slane %v1722, 1
        %v1724 = vmax.f32 %v1722, %v1723
        %v1725 = vsel %vm1633, %v1540, -inf
        %v1726 = vrot.slane %v1725, 4
        %v1727 = vmax.f32 %v1725, %v1726
        %v1728 = vrot.slane %v1727, 2
        %v1729 = vmax.f32 %v1727, %v1728
        %v1730 = vrot.slane %v1729, 1
        %v1731 = vmax.f32 %v1729, %v1730
        %v1732 = vsel %vm1633, %v1545, -inf
        %v1733 = vrot.slane %v1732, 4
        %v1734 = vmax.f32 %v1732, %v1733
        %v1735 = vrot.slane %v1734, 2
        %v1736 = vmax.f32 %v1734, %v1735
        %v1737 = vrot.slane %v1736, 1
        %v1738 = vmax.f32 %v1736, %v1737
        %v1739 = vsel %vm1633, %v1550, -inf
        %v1740 = vrot.slane %v1739, 4
        %v1741 = vmax.f32 %v1739, %v1740
        %v1742 = vrot.slane %v1741, 2
        %v1743 = vmax.f32 %v1741, %v1742
        %v1744 = vrot.slane %v1743, 1
        %v1745 = vmax.f32 %v1743, %v1744
        %v1746 = vsel %vm1633, %v1555, -inf
        %v1747 = vrot.slane %v1746, 4
        %v1748 = vmax.f32 %v1746, %v1747
        %v1749 = vrot.slane %v1748, 2
        %v1750 = vmax.f32 %v1748, %v1749
        %v1751 = vrot.slane %v1750, 1
        %v1752 = vmax.f32 %v1750, %v1751
        %v1753 = vsel %vm1633, %v1560, -inf
        %v1754 = vrot.slane %v1753, 4
        %v1755 = vmax.f32 %v1753, %v1754
        %v1756 = vrot.slane %v1755, 2
        %v1757 = vmax.f32 %v1755, %v1756
        %v1758 = vrot.slane %v1757, 1
        %v1759 = vmax.f32 %v1757, %v1758
        %v1760 = vsel %vm1633, %v1565, -inf
        %v1761 = vrot.slane %v1760, 4
        %v1762 = vmax.f32 %v1760, %v1761
        %v1763 = vrot.slane %v1762, 2
        %v1764 = vmax.f32 %v1762, %v1763
        %v1765 = vrot.slane %v1764, 1
        %v1766 = vmax.f32 %v1764, %v1765
        %v1767 = vsel %vm1633, %v1570, -inf
        %v1768 = vrot.slane %v1767, 4
        %v1769 = vmax.f32 %v1767, %v1768
        %v1770 = vrot.slane %v1769, 2
        %v1771 = vmax.f32 %v1769, %v1770
        %v1772 = vrot.slane %v1771, 1
        %v1773 = vmax.f32 %v1771, %v1772
        %v1774 = vsel %vm1633, %v1575, -inf
        %v1775 = vrot.slane %v1774, 4
        %v1776 = vmax.f32 %v1774, %v1775
        %v1777 = vrot.slane %v1776, 2
        %v1778 = vmax.f32 %v1776, %v1777
        %v1779 = vrot.slane %v1778, 1
        %v1780 = vmax.f32 %v1778, %v1779
        %v1781 = vsel %vm1633, %v1580, -inf
        %v1782 = vrot.slane %v1781, 4
        %v1783 = vmax.f32 %v1781, %v1782
        %v1784 = vrot.slane %v1783, 2
        %v1785 = vmax.f32 %v1783, %v1784
        %v1786 = vrot.slane %v1785, 1
        %v1787 = vmax.f32 %v1785, %v1786
        %v1788 = vsel %vm1633, %v1585, -inf
        %v1789 = vrot.slane %v1788, 4
        %v1790 = vmax.f32 %v1788, %v1789
        %v1791 = vrot.slane %v1790, 2
        %v1792 = vmax.f32 %v1790, %v1791
        %v1793 = vrot.slane %v1792, 1
        %v1794 = vmax.f32 %v1792, %v1793
        %v1795 = vsel %vm1633, %v1590, -inf
        %v1796 = vrot.slane %v1795, 4
        %v1797 = vmax.f32 %v1795, %v1796
        %v1798 = vrot.slane %v1797, 2
        %v1799 = vmax.f32 %v1797, %v1798
        %v1800 = vrot.slane %v1799, 1
        %v1801 = vmax.f32 %v1799, %v1800
        %v1802 = vsel %vm1633, %v1595, -inf
        %v1803 = vrot.slane %v1802, 4
        %v1804 = vmax.f32 %v1802, %v1803
        %v1805 = vrot.slane %v1804, 2
        %v1806 = vmax.f32 %v1804, %v1805
        %v1807 = vrot.slane %v1806, 1
        %v1808 = vmax.f32 %v1806, %v1807
        %v1809 = vsel %vm1633, %v1600, -inf
        %v1810 = vrot.slane %v1809, 4
        %v1811 = vmax.f32 %v1809, %v1810
        %v1812 = vrot.slane %v1811, 2
        %v1813 = vmax.f32 %v1811, %v1812
        %v1814 = vrot.slane %v1813, 1
        %v1815 = vmax.f32 %v1813, %v1814
        %v1816 = vsel %vm1633, %v1605, -inf
        %v1817 = vrot.slane %v1816, 4
        %v1818 = vmax.f32 %v1816, %v1817
        %v1819 = vrot.slane %v1818, 2
        %v1820 = vmax.f32 %v1818, %v1819
        %v1821 = vrot.slane %v1820, 1
        %v1822 = vmax.f32 %v1820, %v1821
        %v1823 = vsel %vm1633, %v1610, -inf
        %v1824 = vrot.slane %v1823, 4
        %v1825 = vmax.f32 %v1823, %v1824
        %v1826 = vrot.slane %v1825, 2
        %v1827 = vmax.f32 %v1825, %v1826
        %v1828 = vrot.slane %v1827, 1
        %v1829 = vmax.f32 %v1827, %v1828
        %v1830 = vsel %vm1633, %v1615, -inf
        %v1831 = vrot.slane %v1830, 4
        %v1832 = vmax.f32 %v1830, %v1831
        %v1833 = vrot.slane %v1832, 2
        %v1834 = vmax.f32 %v1832, %v1833
        %v1835 = vrot.slane %v1834, 1
        %v1836 = vmax.f32 %v1834, %v1835
        %v1837 = vsel %vm1633, %v1620, -inf
        %v1838 = vrot.slane %v1837, 4
        %v1839 = vmax.f32 %v1837, %v1838
        %v1840 = vrot.slane %v1839, 2
        %v1841 = vmax.f32 %v1839, %v1840
        %v1842 = vrot.slane %v1841, 1
        %v1843 = vmax.f32 %v1841, %v1842
        %v1844 = vsel %vm1633, %v1625, -inf
        %v1845 = vrot.slane %v1844, 4
        %v1846 = vmax.f32 %v1844, %v1845
        %v1847 = vrot.slane %v1846, 2
        %v1848 = vmax.f32 %v1846, %v1847
        %v1849 = vrot.slane %v1848, 1
        %v1850 = vmax.f32 %v1848, %v1849
        %v1851 = vsel %vm1633, %v1630, -inf
        %v1852 = vrot.slane %v1851, 4
        %v1853 = vmax.f32 %v1851, %v1852
        %v1854 = vrot.slane %v1853, 2
        %v1855 = vmax.f32 %v1853, %v1854
        %v1856 = vrot.slane %v1855, 1
        %v1857 = vmax.f32 %v1855, %v1856
        %v1858 = vsel %vm1633, %v1640, -inf
        %v1859 = vsel %vm1633, %v1654, -inf
        %v1860 = vmax.f32 %v1858, %v1859
        %v1861 = vsel %vm1633, %v1668, -inf
        %v1862 = vmax.f32 %v1860, %v1861
        %v1863 = vsel %vm1633, %v1682, -inf
        %v1864 = vmax.f32 %v1862, %v1863
        %v1865 = vsel %vm1633, %v1696, -inf
        %v1866 = vmax.f32 %v1864, %v1865
        %v1867 = vsel %vm1633, %v1710, -inf
        %v1868 = vmax.f32 %v1866, %v1867
        %v1869 = vsel %vm1633, %v1724, -inf
        %v1870 = vmax.f32 %v1868, %v1869
        %v1871 = vsel %vm1633, %v1738, -inf
        %v1872 = vmax.f32 %v1870, %v1871
        %v1873 = vsel %vm1633, %v1647, -inf
        %v1874 = vsel %vm1633, %v1661, -inf
        %v1875 = vmax.f32 %v1873, %v1874
        %v1876 = vsel %vm1633, %v1675, -inf
        %v1877 = vmax.f32 %v1875, %v1876
        %v1878 = vsel %vm1633, %v1689, -inf
        %v1879 = vmax.f32 %v1877, %v1878
        %v1880 = vsel %vm1633, %v1703, -inf
        %v1881 = vmax.f32 %v1879, %v1880
        %v1882 = vsel %vm1633, %v1717, -inf
        %v1883 = vmax.f32 %v1881, %v1882
        %v1884 = vsel %vm1633, %v1731, -inf
        %v1885 = vmax.f32 %v1883, %v1884
        %v1886 = vsel %vm1633, %v1745, -inf
        %v1887 = vmax.f32 %v1885, %v1886
        %v1888 = vsel %vm1633, %v1752, -inf
        %v1889 = vsel %vm1633, %v1766, -inf
        %v1890 = vmax.f32 %v1888, %v1889
        %v1891 = vsel %vm1633, %v1780, -inf
        %v1892 = vmax.f32 %v1890, %v1891
        %v1893 = vsel %vm1633, %v1794, -inf
        %v1894 = vmax.f32 %v1892, %v1893
        %v1895 = vsel %vm1633, %v1808, -inf
        %v1896 = vmax.f32 %v1894, %v1895
        %v1897 = vsel %vm1633, %v1822, -inf
        %v1898 = vmax.f32 %v1896, %v1897
        %v1899 = vsel %vm1633, %v1836, -inf
        %v1900 = vmax.f32 %v1898, %v1899
        %v1901 = vsel %vm1633, %v1850, -inf
        %v1902 = vmax.f32 %v1900, %v1901
        %v1903 = vsel %vm1633, %v1759, -inf
        %v1904 = vsel %vm1633, %v1773, -inf
        %v1905 = vmax.f32 %v1903, %v1904
        %v1906 = vsel %vm1633, %v1787, -inf
        %v1907 = vmax.f32 %v1905, %v1906
        %v1908 = vsel %vm1633, %v1801, -inf
        %v1909 = vmax.f32 %v1907, %v1908
        %v1910 = vsel %vm1633, %v1815, -inf
        %v1911 = vmax.f32 %v1909, %v1910
        %v1912 = vsel %vm1633, %v1829, -inf
        %v1913 = vmax.f32 %v1911, %v1912
        %v1914 = vsel %vm1633, %v1843, -inf
        %v1915 = vmax.f32 %v1913, %v1914
        %v1916 = vsel %vm1633, %v1857, -inf
        %v1917 = vmax.f32 %v1915, %v1916
        %vm1922 = vcmask 1041409
        %v1923 = vsel %vm1922, %v1887, %v1872
        %v1924 = vsel %vm1922, %v1917, %v1902
        %1925 = vrot.lane.b32.xlu0 %v1923, 112
        %v1926 = vpop.permute.xlu0 %1925
        %1927 = vrot.lane.b32.xlu0 %v1924, 112
        %v1928 = vpop.permute.xlu0 %1927
        %s1931 = scalar_lea.vmem [#allocation3], 4
        %1932 = vst.msk [vmem:[%s1931 + $0x1] sm:$0x3] %vm946, %v1926
        %1933 = vst.msk [vmem:[%s1931 + $0x5] sm:$0x3] %vm946, %v1928
        %v1934 = vld [vmem:[#allocation17] sm:$0xff]
        %v1935 = vld [vmem:[#allocation17 + $0x8] sm:$0x1]
        %v1936 = vld [vmem:[#allocation3] sm:$0x3]
        %v1937 = vld [vmem:[#allocation3 + $0x4] sm:$0x3]
        %v1938 = vlaneseq
        %v1939 = vshrl.u32 %v1938, 7
        %v1940 = vsub.s32 0, %v1939
        %v1941 = vrot.slane %v1934, %v1940
        %v1942 = vmul.f32 %v1936, %v1941
        %v1943 = vmul.f32 %v1937, %v1941
        %v1944 = vadd.f32 %v1942, 0.0
        %v1945 = vadd.f32 %v1943, 0.0
        %v1946 = vld [vmem:[#allocation3 + $0x1] sm:$0x3]
        %v1947 = vld [vmem:[#allocation3 + $0x5] sm:$0x3]
        %v1948 = vlaneseq
        %v1949 = vshrl.u32 %v1948, 7
        %v1950 = vsub.s32 1, %v1949
        %v1951 = vrot.slane %v1934, %v1950
        %v1952 = vmul.f32 %v1946, %v1951
        %v1953 = vmul.f32 %v1947, %v1951
        %v1954 = vadd.f32 %v1944, %v1952
        %v1955 = vadd.f32 %v1945, %v1953
        %v1956 = vld [vmem:[#allocation3 + $0x2] sm:$0x3]
        %v1957 = vld [vmem:[#allocation3 + $0x6] sm:$0x3]
        %v1958 = vlaneseq
        %v1959 = vshrl.u32 %v1958, 7
        %v1960 = vsub.s32 2, %v1959
        %v1961 = vrot.slane %v1934, %v1960
        %v1962 = vmul.f32 %v1956, %v1961
        %v1963 = vmul.f32 %v1957, %v1961
        %v1964 = vadd.f32 %v1954, %v1962
        %v1965 = vadd.f32 %v1955, %v1963
        %v1966 = vld [vmem:[%s1931] sm:$0x3]
        %v1967 = vld [vmem:[%s1931 + $0x4] sm:$0x3]
        %v1968 = vlaneseq
        %v1969 = vshrl.u32 %v1968, 7
        %v1970 = vsub.s32 3, %v1969
        %v1971 = vrot.slane %v1934, %v1970
        %v1972 = vmul.f32 %v1966, %v1971
        %v1973 = vmul.f32 %v1967, %v1971
        %v1974 = vadd.f32 %v1964, %v1972
        %v1975 = vadd.f32 %v1965, %v1973
        %v1976 = vld [vmem:[%s1931 + $0x1] sm:$0x3]
        %v1977 = vld [vmem:[%s1931 + $0x5] sm:$0x3]
        %v1978 = vlaneseq
        %v1979 = vshrl.u32 %v1978, 7
        %v1980 = vsub.s32 4, %v1979
        %v1981 = vrot.slane %v1934, %v1980
        %v1982 = vmul.f32 %v1976, %v1981
        %v1983 = vmul.f32 %v1977, %v1981
        %v1984 = vadd.f32 %v1974, %v1982
        %v1985 = vadd.f32 %v1975, %v1983
        %v1986 = vld [vmem:[%s1931 + $0x2] sm:$0x3]
        %v1987 = vld [vmem:[%s1931 + $0x6] sm:$0x3]
        %v1988 = vlaneseq
        %v1989 = vshrl.u32 %v1988, 7
        %v1990 = vsub.s32 5, %v1989
        %v1991 = vrot.slane %v1934, %v1990
        %v1992 = vmul.f32 %v1986, %v1991
        %v1993 = vmul.f32 %v1987, %v1991
        %v1994 = vadd.f32 %v1984, %v1992
        %v1995 = vadd.f32 %v1985, %v1993
        %s1996 = scalar_lea.vmem [#allocation3], 8
        %v1997 = vld [vmem:[%s1996] sm:$0x3]
        %v1998 = vld [vmem:[%s1996 + $0x4] sm:$0x3]
        %v1999 = vlaneseq
        %v2000 = vshrl.u32 %v1999, 7
        %v2001 = vsub.s32 6, %v2000
        %v2002 = vrot.slane %v1934, %v2001
        %v2003 = vmul.f32 %v1997, %v2002
        %v2004 = vmul.f32 %v1998, %v2002
        %v2005 = vadd.f32 %v1994, %v2003
        %v2006 = vadd.f32 %v1995, %v2004
        %v2007 = vld [vmem:[%s1996 + $0x1] sm:$0x3]
        %v2008 = vld [vmem:[%s1996 + $0x5] sm:$0x3]
        %v2009 = vlaneseq
        %v2010 = vshrl.u32 %v2009, 7
        %v2011 = vsub.s32 7, %v2010
        %v2012 = vrot.slane %v1934, %v2011
        %v2013 = vmul.f32 %v2007, %v2012
        %v2014 = vmul.f32 %v2008, %v2012
        %v2015 = vadd.f32 %v2005, %v2013
        %v2016 = vadd.f32 %v2006, %v2014
        %v2017 = vld [vmem:[%s1996 + $0x2] sm:$0x3]
        %v2018 = vld [vmem:[%s1996 + $0x6] sm:$0x3]
        %v2019 = vlaneseq
        %v2020 = vshrl.u32 %v2019, 7
        %v2021 = vsub.s32 0, %v2020
        %v2022 = vrot.slane %v1935, %v2021
        %v2023 = vmul.f32 %v2017, %v2022
        %v2024 = vmul.f32 %v2018, %v2022
        %v2025 = vadd.f32 %v2015, %v2023
        %v2026 = vadd.f32 %v2016, %v2024
        %v2027 = vld [vmem:[#allocation19] sm:$0x1]
        %v2029 = vlaneseq
        %v2030 = vshrl.u32 %v2029, 7
        %v2031 = vsub.s32 0, %v2030
        %v2032 = vrot.slane %v2027, %v2031
        %v2034 = vadd.f32 %v2025, %v2032
        %v2035 = vadd.f32 %v2026, %v2032
        %v2036 = vsel %vm1633, %v1475, 0.0
        %v2037 = vsel %vm1633, %v1480, 0.0
        %v2038 = vadd.f32 %v2036, %v2037
        %v2039 = vsel %vm1633, %v1485, 0.0
        %v2040 = vadd.f32 %v2038, %v2039
        %v2041 = vsel %vm1633, %v1490, 0.0
        %v2042 = vadd.f32 %v2040, %v2041
        %v2043 = vsel %vm1633, %v1495, 0.0
        %v2044 = vadd.f32 %v2042, %v2043
        %v2045 = vsel %vm1633, %v1500, 0.0
        %v2046 = vadd.f32 %v2044, %v2045
        %v2047 = vsel %vm1633, %v1505, 0.0
        %v2048 = vadd.f32 %v2046, %v2047
        %v2049 = vsel %vm1633, %v1510, 0.0
        %v2050 = vadd.f32 %v2048, %v2049
        %v2051 = vsel %vm1633, %v1515, 0.0
        %v2052 = vadd.f32 %v2050, %v2051
        %v2053 = vsel %vm1633, %v1520, 0.0
        %v2054 = vadd.f32 %v2052, %v2053
        %v2055 = vsel %vm1633, %v1525, 0.0
        %v2056 = vadd.f32 %v2054, %v2055
        %v2057 = vsel %vm1633, %v1530, 0.0
        %v2058 = vadd.f32 %v2056, %v2057
        %v2059 = vsel %vm1633, %v1535, 0.0
        %v2060 = vadd.f32 %v2058, %v2059
        %v2061 = vsel %vm1633, %v1540, 0.0
        %v2062 = vadd.f32 %v2060, %v2061
        %v2063 = vsel %vm1633, %v1545, 0.0
        %v2064 = vadd.f32 %v2062, %v2063
        %v2065 = vsel %vm1633, %v1550, 0.0
        %v2066 = vadd.f32 %v2064, %v2065
        %v2067 = vsel %vm1633, %v1555, 0.0
        %v2068 = vadd.f32 %v2066, %v2067
        %v2069 = vsel %vm1633, %v1560, 0.0
        %v2070 = vadd.f32 %v2068, %v2069
        %v2071 = vsel %vm1633, %v1565, 0.0
        %v2072 = vadd.f32 %v2070, %v2071
        %v2073 = vsel %vm1633, %v1570, 0.0
        %v2074 = vadd.f32 %v2072, %v2073
        %v2075 = vsel %vm1633, %v1575, 0.0
        %v2076 = vadd.f32 %v2074, %v2075
        %v2077 = vsel %vm1633, %v1580, 0.0
        %v2078 = vadd.f32 %v2076, %v2077
        %v2079 = vsel %vm1633, %v1585, 0.0
        %v2080 = vadd.f32 %v2078, %v2079
        %v2081 = vsel %vm1633, %v1590, 0.0
        %v2082 = vadd.f32 %v2080, %v2081
        %v2083 = vsel %vm1633, %v1595, 0.0
        %v2084 = vadd.f32 %v2082, %v2083
        %v2085 = vsel %vm1633, %v1600, 0.0
        %v2086 = vadd.f32 %v2084, %v2085
        %v2087 = vsel %vm1633, %v1605, 0.0
        %v2088 = vadd.f32 %v2086, %v2087
        %v2089 = vsel %vm1633, %v1610, 0.0
        %v2090 = vadd.f32 %v2088, %v2089
        %v2091 = vsel %vm1633, %v1615, 0.0
        %v2092 = vadd.f32 %v2090, %v2091
        %v2093 = vsel %vm1633, %v1620, 0.0
        %v2094 = vadd.f32 %v2092, %v2093
        %v2095 = vsel %vm1633, %v1625, 0.0
        %v2096 = vadd.f32 %v2094, %v2095
        %v2097 = vsel %vm1633, %v1630, 0.0
        %v2098 = vadd.f32 %v2096, %v2097
        %v2099 = vrot.slane %v2098, 4
        %v2100 = vadd.f32 %v2098, %v2099
        %v2101 = vrot.slane %v2100, 2
        %v2102 = vadd.f32 %v2100, %v2101
        %v2103 = vrot.slane %v2102, 1
        %v2104 = vadd.f32 %v2102, %v2103
        %v2105 = vmul.f32 %v2104, 0.00390625
        %v2106 = vsub.f32 %v1475, %v2105
        %v2107 = vsub.f32 %v1480, %v2105
        %v2108 = vsub.f32 %v1485, %v2105
        %v2109 = vsub.f32 %v1490, %v2105
        %v2110 = vsub.f32 %v1495, %v2105
        %v2111 = vsub.f32 %v1500, %v2105
        %v2112 = vsub.f32 %v1505, %v2105
        %v2113 = vsub.f32 %v1510, %v2105
        %v2114 = vsub.f32 %v1515, %v2105
        %v2115 = vsub.f32 %v1520, %v2105
        %v2116 = vsub.f32 %v1525, %v2105
        %v2117 = vsub.f32 %v1530, %v2105
        %v2118 = vsub.f32 %v1535, %v2105
        %v2119 = vsub.f32 %v1540, %v2105
        %v2120 = vsub.f32 %v1545, %v2105
        %v2121 = vsub.f32 %v1550, %v2105
        %v2122 = vsub.f32 %v1555, %v2105
        %v2123 = vsub.f32 %v1560, %v2105
        %v2124 = vsub.f32 %v1565, %v2105
        %v2125 = vsub.f32 %v1570, %v2105
        %v2126 = vsub.f32 %v1575, %v2105
        %v2127 = vsub.f32 %v1580, %v2105
        %v2128 = vsub.f32 %v1585, %v2105
        %v2129 = vsub.f32 %v1590, %v2105
        %v2130 = vsub.f32 %v1595, %v2105
        %v2131 = vsub.f32 %v1600, %v2105
        %v2132 = vsub.f32 %v1605, %v2105
        %v2133 = vsub.f32 %v1610, %v2105
        %v2134 = vsub.f32 %v1615, %v2105
        %v2135 = vsub.f32 %v1620, %v2105
        %v2136 = vsub.f32 %v1625, %v2105
        %v2137 = vsub.f32 %v1630, %v2105
        %v2138 = vmul.f32 %v2106, %v2106
        %v2139 = vmul.f32 %v2107, %v2107
        %v2140 = vmul.f32 %v2108, %v2108
        %v2141 = vmul.f32 %v2109, %v2109
        %v2142 = vmul.f32 %v2110, %v2110
        %v2143 = vmul.f32 %v2111, %v2111
        %v2144 = vmul.f32 %v2112, %v2112
        %v2145 = vmul.f32 %v2113, %v2113
        %v2146 = vmul.f32 %v2114, %v2114
        %v2147 = vmul.f32 %v2115, %v2115
        %v2148 = vmul.f32 %v2116, %v2116
        %v2149 = vmul.f32 %v2117, %v2117
        %v2150 = vmul.f32 %v2118, %v2118
        %v2151 = vmul.f32 %v2119, %v2119
        %v2152 = vmul.f32 %v2120, %v2120
        %v2153 = vmul.f32 %v2121, %v2121
        %v2154 = vmul.f32 %v2122, %v2122
        %v2155 = vmul.f32 %v2123, %v2123
        %v2156 = vmul.f32 %v2124, %v2124
        %v2157 = vmul.f32 %v2125, %v2125
        %v2158 = vmul.f32 %v2126, %v2126
        %v2159 = vmul.f32 %v2127, %v2127
        %v2160 = vmul.f32 %v2128, %v2128
        %v2161 = vmul.f32 %v2129, %v2129
        %v2162 = vmul.f32 %v2130, %v2130
        %v2163 = vmul.f32 %v2131, %v2131
        %v2164 = vmul.f32 %v2132, %v2132
        %v2165 = vmul.f32 %v2133, %v2133
        %v2166 = vmul.f32 %v2134, %v2134
        %v2167 = vmul.f32 %v2135, %v2135
        %v2168 = vmul.f32 %v2136, %v2136
        %v2169 = vmul.f32 %v2137, %v2137
        %v2170 = vsel %vm1633, %v2138, 0.0
        %v2171 = vsel %vm1633, %v2139, 0.0
        %v2172 = vadd.f32 %v2170, %v2171
        %v2173 = vsel %vm1633, %v2140, 0.0
        %v2174 = vadd.f32 %v2172, %v2173
        %v2175 = vsel %vm1633, %v2141, 0.0
        %v2176 = vadd.f32 %v2174, %v2175
        %v2177 = vsel %vm1633, %v2142, 0.0
        %v2178 = vadd.f32 %v2176, %v2177
        %v2179 = vsel %vm1633, %v2143, 0.0
        %v2180 = vadd.f32 %v2178, %v2179
        %v2181 = vsel %vm1633, %v2144, 0.0
        %v2182 = vadd.f32 %v2180, %v2181
        %v2183 = vsel %vm1633, %v2145, 0.0
        %v2184 = vadd.f32 %v2182, %v2183
        %v2185 = vsel %vm1633, %v2146, 0.0
        %v2186 = vadd.f32 %v2184, %v2185
        %v2187 = vsel %vm1633, %v2147, 0.0
        %v2188 = vadd.f32 %v2186, %v2187
        %v2189 = vsel %vm1633, %v2148, 0.0
        %v2190 = vadd.f32 %v2188, %v2189
        %v2191 = vsel %vm1633, %v2149, 0.0
        %v2192 = vadd.f32 %v2190, %v2191
        %v2193 = vsel %vm1633, %v2150, 0.0
        %v2194 = vadd.f32 %v2192, %v2193
        %v2195 = vsel %vm1633, %v2151, 0.0
        %v2196 = vadd.f32 %v2194, %v2195
        %v2197 = vsel %vm1633, %v2152, 0.0
        %v2198 = vadd.f32 %v2196, %v2197
        %v2199 = vsel %vm1633, %v2153, 0.0
        %v2200 = vadd.f32 %v2198, %v2199
        %v2201 = vsel %vm1633, %v2154, 0.0
        %v2202 = vadd.f32 %v2200, %v2201
        %v2203 = vsel %vm1633, %v2155, 0.0
        %v2204 = vadd.f32 %v2202, %v2203
        %v2205 = vsel %vm1633, %v2156, 0.0
        %v2206 = vadd.f32 %v2204, %v2205
        %v2207 = vsel %vm1633, %v2157, 0.0
        %v2208 = vadd.f32 %v2206, %v2207
        %v2209 = vsel %vm1633, %v2158, 0.0
        %v2210 = vadd.f32 %v2208, %v2209
        %v2211 = vsel %vm1633, %v2159, 0.0
        %v2212 = vadd.f32 %v2210, %v2211
        %v2213 = vsel %vm1633, %v2160, 0.0
        %v2214 = vadd.f32 %v2212, %v2213
        %v2215 = vsel %vm1633, %v2161, 0.0
        %v2216 = vadd.f32 %v2214, %v2215
        %v2217 = vsel %vm1633, %v2162, 0.0
        %v2218 = vadd.f32 %v2216, %v2217
        %v2219 = vsel %vm1633, %v2163, 0.0
        %v2220 = vadd.f32 %v2218, %v2219
        %v2221 = vsel %vm1633, %v2164, 0.0
        %v2222 = vadd.f32 %v2220, %v2221
        %v2223 = vsel %vm1633, %v2165, 0.0
        %v2224 = vadd.f32 %v2222, %v2223
        %v2225 = vsel %vm1633, %v2166, 0.0
        %v2226 = vadd.f32 %v2224, %v2225
        %v2227 = vsel %vm1633, %v2167, 0.0
        %v2228 = vadd.f32 %v2226, %v2227
        %v2229 = vsel %vm1633, %v2168, 0.0
        %v2230 = vadd.f32 %v2228, %v2229
        %v2231 = vsel %vm1633, %v2169, 0.0
        %v2232 = vadd.f32 %v2230, %v2231
        %v2233 = vrot.slane %v2232, 4
        %v2234 = vadd.f32 %v2232, %v2233
        %v2235 = vrot.slane %v2234, 2
        %v2236 = vadd.f32 %v2234, %v2235
        %v2237 = vrot.slane %v2236, 1
        %v2238 = vadd.f32 %v2236, %v2237
        %v2239 = vmul.f32 %v2238, 0.003921569
        %v2240 = vld [vmem:[#allocation26] sm:$0x1]
        %v2242 = vlaneseq
        %v2243 = vshrl.u32 %v2242, 7
        %v2244 = vsub.s32 0, %v2243
        %v2245 = vrot.slane %v2240, %v2244
        %v2247 = vmul.f32 %v2034, %v2245
        %v2248 = vmul.f32 %v2035, %v2245
        %v2249 = vld [vmem:[#allocation28] sm:$0x1]
        %v2251 = vlaneseq
        %v2252 = vshrl.u32 %v2251, 7
        %v2253 = vsub.s32 0, %v2252
        %v2254 = vrot.slane %v2249, %v2253
        %2255 = vrot.lane.b32.xlu0 %v2254, 16
        %v2256 = vpop.permute.xlu0 %2255
        %v2258 = vmul.f32 %v2239, %v2256
        %v2259 = vlaneseq
        %v2260 = vshrl.u32 %v2259, 7
        %v2261 = vsub.s32 0, %v2260
        %v2262 = vrot.slane %v2258, %v2261
        %2264 = vrot.lane.b32.xlu0 %v2262, 112
        %v2265 = vpop.permute.xlu0 %2264
        %v2267 = vadd.f32 %v2247, %v2265
        %v2268 = vadd.f32 %v2248, %v2265
        %v2269 = vld [vmem:[#allocation11] sm:$0xff]
        %v2270 = vld [vmem:[#allocation11 + $0x8] sm:$0xff]
        %v2271 = vld [vmem:[#allocation13] sm:$0x1]
        %v2273 = vlaneseq
        %v2274 = vshrl.u32 %v2273, 7
        %v2275 = vsub.s32 0, %v2274
        %v2276 = vrot.slane %v2271, %v2275
        %v2280 = vcombine.low %v2267, %v2268
        %v2282 = vunpack.c.l.s4 1983009808
        %v2283 = vunpack.c.0.s8 %v2282
        %v2284 = vlaneseq
        %v2285 = vshrl.u32 %v2284, 7
        %v2286 = vsub.s32 %v2283, %v2285
        %v2287 = vrot.slane %v2280, %v2286
        %v2288 = vsel %vm943, %v2287, 0
        %2290 = vmatprep.subr.mxu0 0.0
        %2291 = vmatpush1.msra.mxu0 %v2269
        %2292 = vmatprep.subr.mxu0 0.0
        %2293 = vmatpush1.msra.mxu0 %v2270
        %2294 = vmatprep.subr.mxu0 0.0
        %2295 = vmatpush1.msra.mxu0 0.0
        %2296 = vmatprep.subr.mxu0 0.0
        %2297 = vmatpush1.msra.mxu0 0.0
        %2298 = vmatprep.subr.mxu0 0.0
        %2299 = vmatpush1.msra.mxu0 0.0
        %2300 = vmatprep.subr.mxu0 0.0
        %2301 = vmatpush1.msra.mxu0 0.0
        %2302 = vmatprep.subr.mxu0 0.0
        %2303 = vmatpush1.msra.mxu0 0.0
        %2304 = vmatprep.subr.mxu0 0.0
        %2305 = vmatpush1.msra.mxu0 0.0
        %2306 = vmatprep.subr.mxu0 0.0
        %2307 = vmatpush1.msra.mxu0 0.0
        %2308 = vmatprep.subr.mxu0 0.0
        %2309 = vmatpush1.msra.mxu0 0.0
        %2310 = vmatprep.subr.mxu0 0.0
        %2311 = vmatpush1.msra.mxu0 0.0
        %2312 = vmatprep.subr.mxu0 0.0
        %2313 = vmatpush1.msra.mxu0 0.0
        %2314 = vmatprep.subr.mxu0 0.0
        %2315 = vmatpush1.msra.mxu0 0.0
        %2316 = vmatprep.subr.mxu0 0.0
        %2317 = vmatpush1.msra.mxu0 0.0
        %2318 = vmatprep.subr.mxu0 0.0
        %2319 = vmatpush1.msra.mxu0 0.0
        %2320 = vmatprep.subr.mxu0 0.0
        %2321 = vmatpush1.msra.mxu0 0.0
        %2322 = vmatprep.subr.mxu0 0.0
        %2323 = vmatpush1.msra.mxu0 0.0
        %2324 = vmatprep.subr.mxu0 0.0
        %2325 = vmatpush1.msra.mxu0 0.0
        %2326 = vmatprep.subr.mxu0 0.0
        %2327 = vmatpush1.msra.mxu0 0.0
        %2328 = vmatprep.subr.mxu0 0.0
        %2329 = vmatpush1.msra.mxu0 0.0
        %2330 = vmatprep.subr.mxu0 0.0
        %2331 = vmatpush1.msra.mxu0 0.0
        %2332 = vmatprep.subr.mxu0 0.0
        %2333 = vmatpush1.msra.mxu0 0.0
        %2334 = vmatprep.subr.mxu0 0.0
        %2335 = vmatpush1.msra.mxu0 0.0
        %2336 = vmatprep.subr.mxu0 0.0
        %2337 = vmatpush1.msra.mxu0 0.0
        %2338 = vmatprep.subr.mxu0 0.0
        %2339 = vmatpush1.msra.mxu0 0.0
        %2340 = vmatprep.subr.mxu0 0.0
        %2341 = vmatpush1.msra.mxu0 0.0
        %2342 = vmatprep.subr.mxu0 0.0
        %2343 = vmatpush1.msra.mxu0 0.0
        %2344 = vmatprep.subr.mxu0 0.0
        %2345 = vmatpush1.msra.mxu0 0.0
        %2346 = vmatprep.subr.mxu0 0.0
        %2347 = vmatpush1.msra.mxu0 0.0
        %2348 = vmatprep.subr.mxu0 0.0
        %2349 = vmatpush1.msra.mxu0 0.0
        %2350 = vmatprep.subr.mxu0 0.0
        %2351 = vmatpush1.msra.mxu0 0.0
        %2352 = vmatprep.subr.mxu0 0.0
        %2353 = vmatpush1.msra.mxu0 0.0
        %2354 = vmatprep.mubr.f32.mxu0 0.0
        %2355 = vmatmul.mubr.f32.gmra.mrb[0].mxu0 %v2288
        %v2356 = vpop.f32.mrb[0].mxu0
        %v2357 = vadd.f32 %v2276, %v2356
        %v2358 = vpop.f32.mrb[0].mxu0
        %2359 = vdwg.mxu0
        %v2360 = vmul.f32 %v2357, 0.5
        %v2361 = vmul.f32 %v2357, 0.044715
        %v2362 = vmul.f32 %v2361, %v2357
        %v2363 = vmul.f32 %v2362, %v2357
        %v2364 = vadd.f32 %v2357, %v2363
        %v2365 = vmul.f32 %v2364, 0.7978846
        %v2366 = vtanh.pop %v2365
        %v2367 = vadd.f32 %v2366, 1.0
        %v2368 = vmul.f32 %v2360, %v2367
        %v2371 = vunpack.c.l.s4 1966171168
        %v2372 = vunpack.c.0.s8 %v2371
        %v2373 = vlaneseq
        %v2374 = vshrl.u32 %v2373, 7
        %v2375 = vsub.s32 %v2372, %v2374
        %v2376 = vrot.slane %v2368, %v2375
        %v2377 = vcombine.high %v2376, %v2376
        %v2379 = vunpack.c.l.s4 1966171168
        %v2380 = vunpack.c.0.s8 %v2379
        %v2381 = vlaneseq
        %v2382 = vshrl.u32 %v2381, 7
        %v2383 = vsub.s32 %v2380, %v2382
        %v2384 = vrot.slane %v2376, %v2383
        %v2386 = vunpack.c.l.s4 1966171168
        %v2387 = vunpack.c.0.s8 %v2386
        %v2388 = vlaneseq
        %v2389 = vshrl.u32 %v2388, 7
        %v2390 = vsub.s32 %v2387, %v2389
        %v2391 = vrot.slane %v2377, %v2390
        %v2392 = vcombine.high %v2384, %v2384
        %v2393 = vcombine.high %v2391, %v2391
        %v2394 = vlaneseq
        %v2395 = vshrl.u32 %v2394, 7
        %v2396 = vsub.s32 0, %v2395
        %v2397 = vrot.slane %v2384, %v2396
        %v2398 = vlaneseq
        %v2399 = vshrl.u32 %v2398, 7
        %v2400 = vsub.s32 0, %v2399
        %v2401 = vrot.slane %v2391, %v2400
        %v2402 = vlaneseq
        %v2403 = vshrl.u32 %v2402, 7
        %v2404 = vsub.s32 0, %v2403
        %v2405 = vrot.slane %v2392, %v2404
        %v2406 = vlaneseq
        %v2407 = vshrl.u32 %v2406, 7
        %v2408 = vsub.s32 0, %v2407
        %v2409 = vrot.slane %v2393, %v2408
        %2410 = vrot.lane.b32.xlu0 %v2397, 16
        %v2411 = vpop.permute.xlu0 %2410
        %2412 = vrot.lane.b32.xlu0 %v2401, 16
        %v2413 = vpop.permute.xlu0 %2412
        %2414 = vrot.lane.b32.xlu0 %v2405, 16
        %v2415 = vpop.permute.xlu0 %2414
        %2416 = vrot.lane.b32.xlu0 %v2409, 16
        %v2417 = vpop.permute.xlu0 %2416
        %v2422 = vmul.f32 %v1475, %v2411
        %v2423 = vmul.f32 %v1480, %v2413
        %v2424 = vmul.f32 %v1485, %v2411
        %v2425 = vmul.f32 %v1490, %v2413
        %v2426 = vmul.f32 %v1495, %v2411
        %v2427 = vmul.f32 %v1500, %v2413
        %v2428 = vmul.f32 %v1505, %v2411
        %v2429 = vmul.f32 %v1510, %v2413
        %v2430 = vmul.f32 %v1515, %v2411
        %v2431 = vmul.f32 %v1520, %v2413
        %v2432 = vmul.f32 %v1525, %v2411
        %v2433 = vmul.f32 %v1530, %v2413
        %v2434 = vmul.f32 %v1535, %v2411
        %v2435 = vmul.f32 %v1540, %v2413
        %v2436 = vmul.f32 %v1545, %v2411
        %v2437 = vmul.f32 %v1550, %v2413
        %v2438 = vmul.f32 %v1555, %v2415
        %v2439 = vmul.f32 %v1560, %v2417
        %v2440 = vmul.f32 %v1565, %v2415
        %v2441 = vmul.f32 %v1570, %v2417
        %v2442 = vmul.f32 %v1575, %v2415
        %v2443 = vmul.f32 %v1580, %v2417
        %v2444 = vmul.f32 %v1585, %v2415
        %v2445 = vmul.f32 %v1590, %v2417
        %v2446 = vmul.f32 %v1595, %v2415
        %v2447 = vmul.f32 %v1600, %v2417
        %v2448 = vmul.f32 %v1605, %v2415
        %v2449 = vmul.f32 %v1610, %v2417
        %v2450 = vmul.f32 %v1615, %v2415
        %v2451 = vmul.f32 %v1620, %v2417
        %v2452 = vmul.f32 %v1625, %v2415
        %v2453 = vmul.f32 %v1630, %v2417
        %s2454 = scalar_lea.vmem [#allocation2], 24
        %2455 = vst.msk [vmem:[%s2454 + $0x1] sm:$0xff] %vm943, %v1475
        %2456 = vst.msk [vmem:[%s2454 + $0x9] sm:$0xff] %vm943, %v1480
        %2457 = vst.msk [vmem:[%s2454 + $0x19] sm:$0xff] %vm943, %v1485
        %2458 = vst.msk [vmem:[%s2454 + $0x21] sm:$0xff] %vm943, %v1490
        %2459 = vst.msk [vmem:[%s2454 + $0x31] sm:$0xff] %vm943, %v1495
        %2460 = vst.msk [vmem:[%s2454 + $0x39] sm:$0xff] %vm943, %v1500
        %2461 = vst.msk [vmem:[%s2454 + $0x49] sm:$0xff] %vm943, %v1505
        %2462 = vst.msk [vmem:[%s2454 + $0x51] sm:$0xff] %vm943, %v1510
        %2463 = vst.msk [vmem:[%s2454 + $0x61] sm:$0xff] %vm943, %v1515
        %2464 = vst.msk [vmem:[%s2454 + $0x69] sm:$0xff] %vm943, %v1520
        %2465 = vst.msk [vmem:[%s2454 + $0x79] sm:$0xff] %vm943, %v1525
        %2466 = vst.msk [vmem:[%s2454 + $0x81] sm:$0xff] %vm943, %v1530
        %2467 = vst.msk [vmem:[%s2454 + $0x91] sm:$0xff] %vm943, %v1535
        %2468 = vst.msk [vmem:[%s2454 + $0x99] sm:$0xff] %vm943, %v1540
        %2469 = vst.msk [vmem:[%s2454 + $0xa9] sm:$0xff] %vm943, %v1545
        %2470 = vst.msk [vmem:[%s2454 + $0xb1] sm:$0xff] %vm943, %v1550
        %2471 = vst.msk [vmem:[%s2454 + $0xc1] sm:$0xff] %vm943, %v1555
        %2472 = vst.msk [vmem:[%s2454 + $0xc9] sm:$0xff] %vm943, %v1560
        %2473 = vst.msk [vmem:[%s2454 + $0xd9] sm:$0xff] %vm943, %v1565
        %2474 = vst.msk [vmem:[%s2454 + $0xe1] sm:$0xff] %vm943, %v1570
        %2475 = vst.msk [vmem:[%s2454 + $0xf1] sm:$0xff] %vm943, %v1575
        %2476 = vst.msk [vmem:[%s2454 + $0xf9] sm:$0xff] %vm943, %v1580
        %2477 = vst.msk [vmem:[%s2454 + $0x109] sm:$0xff] %vm943, %v1585
        %2478 = vst.msk [vmem:[%s2454 + $0x111] sm:$0xff] %vm943, %v1590
        %2479 = vst.msk [vmem:[%s2454 + $0x121] sm:$0xff] %vm943, %v1595
        %2480 = vst.msk [vmem:[%s2454 + $0x129] sm:$0xff] %vm943, %v1600
        %2481 = vst.msk [vmem:[%s2454 + $0x139] sm:$0xff] %vm943, %v1605
        %2482 = vst.msk [vmem:[%s2454 + $0x141] sm:$0xff] %vm943, %v1610
        %2483 = vst.msk [vmem:[%s2454 + $0x151] sm:$0xff] %vm943, %v1615
        %2484 = vst.msk [vmem:[%s2454 + $0x159] sm:$0xff] %vm943, %v1620
        %2485 = vst.msk [vmem:[%s2454 + $0x169] sm:$0xff] %vm943, %v1625
        %2486 = vst.msk [vmem:[%s2454 + $0x171] sm:$0xff] %vm943, %v1630
        %v2487 = vld [vmem:[#allocation2] sm:$0xff]
        %v2488 = vld [vmem:[#allocation2 + $0x8] sm:$0xff]
        %v2489 = vld [vmem:[#allocation2 + $0x18] sm:$0xff]
        %v2490 = vld [vmem:[#allocation2 + $0x20] sm:$0xff]
        %v2491 = vld [vmem:[#allocation2 + $0x30] sm:$0xff]
        %v2492 = vld [vmem:[#allocation2 + $0x38] sm:$0xff]
        %v2493 = vld [vmem:[#allocation2 + $0x48] sm:$0xff]
        %v2494 = vld [vmem:[#allocation2 + $0x50] sm:$0xff]
        %v2495 = vld [vmem:[#allocation2 + $0x60] sm:$0xff]
        %v2496 = vld [vmem:[#allocation2 + $0x68] sm:$0xff]
        %v2497 = vld [vmem:[#allocation2 + $0x78] sm:$0xff]
        %v2498 = vld [vmem:[#allocation2 + $0x80] sm:$0xff]
        %v2499 = vld [vmem:[#allocation2 + $0x90] sm:$0xff]
        %v2500 = vld [vmem:[#allocation2 + $0x98] sm:$0xff]
        %v2501 = vld [vmem:[#allocation2 + $0xa8] sm:$0xff]
        %v2502 = vld [vmem:[#allocation2 + $0xb0] sm:$0xff]
        %v2503 = vld [vmem:[#allocation2 + $0xc0] sm:$0xff]
        %v2504 = vld [vmem:[#allocation2 + $0xc8] sm:$0xff]
        %v2505 = vld [vmem:[#allocation2 + $0xd8] sm:$0xff]
        %v2506 = vld [vmem:[#allocation2 + $0xe0] sm:$0xff]
        %v2507 = vld [vmem:[#allocation2 + $0xf0] sm:$0xff]
        %v2508 = vld [vmem:[#allocation2 + $0xf8] sm:$0xff]
        %v2509 = vld [vmem:[#allocation2 + $0x108] sm:$0xff]
        %v2510 = vld [vmem:[#allocation2 + $0x110] sm:$0xff]
        %v2511 = vld [vmem:[#allocation2 + $0x120] sm:$0xff]
        %v2512 = vld [vmem:[#allocation2 + $0x128] sm:$0xff]
        %v2513 = vld [vmem:[#allocation2 + $0x138] sm:$0xff]
        %v2514 = vld [vmem:[#allocation2 + $0x140] sm:$0xff]
        %v2515 = vld [vmem:[#allocation2 + $0x150] sm:$0xff]
        %v2516 = vld [vmem:[#allocation2 + $0x158] sm:$0xff]
        %v2517 = vld [vmem:[#allocation2 + $0x168] sm:$0xff]
        %v2518 = vld [vmem:[#allocation2 + $0x170] sm:$0xff]
        %v2519 = vld [vmem:[#allocation2 + $0x1] sm:$0xff]
        %v2520 = vld [vmem:[#allocation2 + $0x9] sm:$0xff]
        %v2521 = vld [vmem:[#allocation2 + $0x19] sm:$0xff]
        %v2522 = vld [vmem:[#allocation2 + $0x21] sm:$0xff]
        %v2523 = vld [vmem:[#allocation2 + $0x31] sm:$0xff]
        %v2524 = vld [vmem:[#allocation2 + $0x39] sm:$0xff]
        %v2525 = vld [vmem:[#allocation2 + $0x49] sm:$0xff]
        %v2526 = vld [vmem:[#allocation2 + $0x51] sm:$0xff]
        %v2527 = vld [vmem:[#allocation2 + $0x61] sm:$0xff]
        %v2528 = vld [vmem:[#allocation2 + $0x69] sm:$0xff]
        %v2529 = vld [vmem:[#allocation2 + $0x79] sm:$0xff]
        %v2530 = vld [vmem:[#allocation2 + $0x81] sm:$0xff]
        %v2531 = vld [vmem:[#allocation2 + $0x91] sm:$0xff]
        %v2532 = vld [vmem:[#allocation2 + $0x99] sm:$0xff]
        %v2533 = vld [vmem:[#allocation2 + $0xa9] sm:$0xff]
        %v2534 = vld [vmem:[#allocation2 + $0xb1] sm:$0xff]
        %v2535 = vld [vmem:[#allocation2 + $0xc1] sm:$0xff]
        %v2536 = vld [vmem:[#allocation2 + $0xc9] sm:$0xff]
        %v2537 = vld [vmem:[#allocation2 + $0xd9] sm:$0xff]
        %v2538 = vld [vmem:[#allocation2 + $0xe1] sm:$0xff]
        %v2539 = vld [vmem:[#allocation2 + $0xf1] sm:$0xff]
        %v2540 = vld [vmem:[#allocation2 + $0xf9] sm:$0xff]
        %v2541 = vld [vmem:[#allocation2 + $0x109] sm:$0xff]
        %v2542 = vld [vmem:[#allocation2 + $0x111] sm:$0xff]
        %v2543 = vld [vmem:[#allocation2 + $0x121] sm:$0xff]
        %v2544 = vld [vmem:[#allocation2 + $0x129] sm:$0xff]
        %v2545 = vld [vmem:[#allocation2 + $0x139] sm:$0xff]
        %v2546 = vld [vmem:[#allocation2 + $0x141] sm:$0xff]
        %v2547 = vld [vmem:[#allocation2 + $0x151] sm:$0xff]
        %v2548 = vld [vmem:[#allocation2 + $0x159] sm:$0xff]
        %v2549 = vld [vmem:[#allocation2 + $0x169] sm:$0xff]
        %v2550 = vld [vmem:[#allocation2 + $0x171] sm:$0xff]
        %v2551 = vld [vmem:[#allocation2 + $0x2] sm:$0xff]
        %v2552 = vld [vmem:[#allocation2 + $0xa] sm:$0xff]
        %v2553 = vld [vmem:[#allocation2 + $0x1a] sm:$0xff]
        %v2554 = vld [vmem:[#allocation2 + $0x22] sm:$0xff]
        %v2555 = vld [vmem:[#allocation2 + $0x32] sm:$0xff]
        %v2556 = vld [vmem:[#allocation2 + $0x3a] sm:$0xff]
        %v2557 = vld [vmem:[#allocation2 + $0x4a] sm:$0xff]
        %v2558 = vld [vmem:[#allocation2 + $0x52] sm:$0xff]
        %v2559 = vld [vmem:[#allocation2 + $0x62] sm:$0xff]
        %v2560 = vld [vmem:[#allocation2 + $0x6a] sm:$0xff]
        %v2561 = vld [vmem:[#allocation2 + $0x7a] sm:$0xff]
        %v2562 = vld [vmem:[#allocation2 + $0x82] sm:$0xff]
        %v2563 = vld [vmem:[#allocation2 + $0x92] sm:$0xff]
        %v2564 = vld [vmem:[#allocation2 + $0x9a] sm:$0xff]
        %v2565 = vld [vmem:[#allocation2 + $0xaa] sm:$0xff]
        %v2566 = vld [vmem:[#allocation2 + $0xb2] sm:$0xff]
        %v2567 = vld [vmem:[#allocation2 + $0xc2] sm:$0xff]
        %v2568 = vld [vmem:[#allocation2 + $0xca] sm:$0xff]
        %v2569 = vld [vmem:[#allocation2 + $0xda] sm:$0xff]
        %v2570 = vld [vmem:[#allocation2 + $0xe2] sm:$0xff]
        %v2571 = vld [vmem:[#allocation2 + $0xf2] sm:$0xff]
        %v2572 = vld [vmem:[#allocation2 + $0xfa] sm:$0xff]
        %v2573 = vld [vmem:[#allocation2 + $0x10a] sm:$0xff]
        %v2574 = vld [vmem:[#allocation2 + $0x112] sm:$0xff]
        %v2575 = vld [vmem:[#allocation2 + $0x122] sm:$0xff]
        %v2576 = vld [vmem:[#allocation2 + $0x12a] sm:$0xff]
        %v2577 = vld [vmem:[#allocation2 + $0x13a] sm:$0xff]
        %v2578 = vld [vmem:[#allocation2 + $0x142] sm:$0xff]
        %v2579 = vld [vmem:[#allocation2 + $0x152] sm:$0xff]
        %v2580 = vld [vmem:[#allocation2 + $0x15a] sm:$0xff]
        %v2581 = vld [vmem:[#allocation2 + $0x16a] sm:$0xff]
        %v2582 = vld [vmem:[#allocation2 + $0x172] sm:$0xff]
        %v2583 = vld [vmem:[%s2454] sm:$0xff]
        %v2584 = vld [vmem:[%s2454 + $0x8] sm:$0xff]
        %v2585 = vld [vmem:[%s2454 + $0x18] sm:$0xff]
        %v2586 = vld [vmem:[%s2454 + $0x20] sm:$0xff]
        %v2587 = vld [vmem:[%s2454 + $0x30] sm:$0xff]
        %v2588 = vld [vmem:[%s2454 + $0x38] sm:$0xff]
        %v2589 = vld [vmem:[%s2454 + $0x48] sm:$0xff]
        %v2590 = vld [vmem:[%s2454 + $0x50] sm:$0xff]
        %v2591 = vld [vmem:[%s2454 + $0x60] sm:$0xff]
        %v2592 = vld [vmem:[%s2454 + $0x68] sm:$0xff]
        %v2593 = vld [vmem:[%s2454 + $0x78] sm:$0xff]
        %v2594 = vld [vmem:[%s2454 + $0x80] sm:$0xff]
        %v2595 = vld [vmem:[%s2454 + $0x90] sm:$0xff]
        %v2596 = vld [vmem:[%s2454 + $0x98] sm:$0xff]
        %v2597 = vld [vmem:[%s2454 + $0xa8] sm:$0xff]
        %v2598 = vld [vmem:[%s2454 + $0xb0] sm:$0xff]
        %v2599 = vld [vmem:[%s2454 + $0xc0] sm:$0xff]
        %v2600 = vld [vmem:[%s2454 + $0xc8] sm:$0xff]
        %v2601 = vld [vmem:[%s2454 + $0xd8] sm:$0xff]
        %v2602 = vld [vmem:[%s2454 + $0xe0] sm:$0xff]
        %v2603 = vld [vmem:[%s2454 + $0xf0] sm:$0xff]
        %v2604 = vld [vmem:[%s2454 + $0xf8] sm:$0xff]
        %v2605 = vld [vmem:[%s2454 + $0x108] sm:$0xff]
        %v2606 = vld [vmem:[%s2454 + $0x110] sm:$0xff]
        %v2607 = vld [vmem:[%s2454 + $0x120] sm:$0xff]
        %v2608 = vld [vmem:[%s2454 + $0x128] sm:$0xff]
        %v2609 = vld [vmem:[%s2454 + $0x138] sm:$0xff]
        %v2610 = vld [vmem:[%s2454 + $0x140] sm:$0xff]
        %v2611 = vld [vmem:[%s2454 + $0x150] sm:$0xff]
        %v2612 = vld [vmem:[%s2454 + $0x158] sm:$0xff]
        %v2613 = vld [vmem:[%s2454 + $0x168] sm:$0xff]
        %v2614 = vld [vmem:[%s2454 + $0x170] sm:$0xff]
        %v2615 = vld [vmem:[%s2454 + $0x1] sm:$0xff]
        %v2616 = vld [vmem:[%s2454 + $0x9] sm:$0xff]
        %v2617 = vld [vmem:[%s2454 + $0x19] sm:$0xff]
        %v2618 = vld [vmem:[%s2454 + $0x21] sm:$0xff]
        %v2619 = vld [vmem:[%s2454 + $0x31] sm:$0xff]
        %v2620 = vld [vmem:[%s2454 + $0x39] sm:$0xff]
        %v2621 = vld [vmem:[%s2454 + $0x49] sm:$0xff]
        %v2622 = vld [vmem:[%s2454 + $0x51] sm:$0xff]
        %v2623 = vld [vmem:[%s2454 + $0x61] sm:$0xff]
        %v2624 = vld [vmem:[%s2454 + $0x69] sm:$0xff]
        %v2625 = vld [vmem:[%s2454 + $0x79] sm:$0xff]
        %v2626 = vld [vmem:[%s2454 + $0x81] sm:$0xff]
        %v2627 = vld [vmem:[%s2454 + $0x91] sm:$0xff]
        %v2628 = vld [vmem:[%s2454 + $0x99] sm:$0xff]
        %v2629 = vld [vmem:[%s2454 + $0xa9] sm:$0xff]
        %v2630 = vld [vmem:[%s2454 + $0xb1] sm:$0xff]
        %v2631 = vld [vmem:[%s2454 + $0xc1] sm:$0xff]
        %v2632 = vld [vmem:[%s2454 + $0xc9] sm:$0xff]
        %v2633 = vld [vmem:[%s2454 + $0xd9] sm:$0xff]
        %v2634 = vld [vmem:[%s2454 + $0xe1] sm:$0xff]
        %v2635 = vld [vmem:[%s2454 + $0xf1] sm:$0xff]
        %v2636 = vld [vmem:[%s2454 + $0xf9] sm:$0xff]
        %v2637 = vld [vmem:[%s2454 + $0x109] sm:$0xff]
        %v2638 = vld [vmem:[%s2454 + $0x111] sm:$0xff]
        %v2639 = vld [vmem:[%s2454 + $0x121] sm:$0xff]
        %v2640 = vld [vmem:[%s2454 + $0x129] sm:$0xff]
        %v2641 = vld [vmem:[%s2454 + $0x139] sm:$0xff]
        %v2642 = vld [vmem:[%s2454 + $0x141] sm:$0xff]
        %v2643 = vld [vmem:[%s2454 + $0x151] sm:$0xff]
        %v2644 = vld [vmem:[%s2454 + $0x159] sm:$0xff]
        %v2645 = vld [vmem:[%s2454 + $0x169] sm:$0xff]
        %v2646 = vld [vmem:[%s2454 + $0x171] sm:$0xff]
        %v2647 = vld [vmem:[%s2454 + $0x2] sm:$0xff]
        %v2648 = vld [vmem:[%s2454 + $0xa] sm:$0xff]
        %v2649 = vld [vmem:[%s2454 + $0x1a] sm:$0xff]
        %v2650 = vld [vmem:[%s2454 + $0x22] sm:$0xff]
        %v2651 = vld [vmem:[%s2454 + $0x32] sm:$0xff]
        %v2652 = vld [vmem:[%s2454 + $0x3a] sm:$0xff]
        %v2653 = vld [vmem:[%s2454 + $0x4a] sm:$0xff]
        %v2654 = vld [vmem:[%s2454 + $0x52] sm:$0xff]
        %v2655 = vld [vmem:[%s2454 + $0x62] sm:$0xff]
        %v2656 = vld [vmem:[%s2454 + $0x6a] sm:$0xff]
        %v2657 = vld [vmem:[%s2454 + $0x7a] sm:$0xff]
        %v2658 = vld [vmem:[%s2454 + $0x82] sm:$0xff]
        %v2659 = vld [vmem:[%s2454 + $0x92] sm:$0xff]
        %v2660 = vld [vmem:[%s2454 + $0x9a] sm:$0xff]
        %v2661 = vld [vmem:[%s2454 + $0xaa] sm:$0xff]
        %v2662 = vld [vmem:[%s2454 + $0xb2] sm:$0xff]
        %v2663 = vld [vmem:[%s2454 + $0xc2] sm:$0xff]
        %v2664 = vld [vmem:[%s2454 + $0xca] sm:$0xff]
        %v2665 = vld [vmem:[%s2454 + $0xda] sm:$0xff]
        %v2666 = vld [vmem:[%s2454 + $0xe2] sm:$0xff]
        %v2667 = vld [vmem:[%s2454 + $0xf2] sm:$0xff]
        %v2668 = vld [vmem:[%s2454 + $0xfa] sm:$0xff]
        %v2669 = vld [vmem:[%s2454 + $0x10a] sm:$0xff]
        %v2670 = vld [vmem:[%s2454 + $0x112] sm:$0xff]
        %v2671 = vld [vmem:[%s2454 + $0x122] sm:$0xff]
        %v2672 = vld [vmem:[%s2454 + $0x12a] sm:$0xff]
        %v2673 = vld [vmem:[%s2454 + $0x13a] sm:$0xff]
        %v2674 = vld [vmem:[%s2454 + $0x142] sm:$0xff]
        %v2675 = vld [vmem:[%s2454 + $0x152] sm:$0xff]
        %v2676 = vld [vmem:[%s2454 + $0x15a] sm:$0xff]
        %v2677 = vld [vmem:[%s2454 + $0x16a] sm:$0xff]
        %v2678 = vld [vmem:[%s2454 + $0x172] sm:$0xff]
        %s2679 = scalar_lea.vmem [#allocation2], 48
        %v2680 = vld [vmem:[%s2679] sm:$0xff]
        %v2681 = vld [vmem:[%s2679 + $0x8] sm:$0xff]
        %v2682 = vld [vmem:[%s2679 + $0x18] sm:$0xff]
        %v2683 = vld [vmem:[%s2679 + $0x20] sm:$0xff]
        %v2684 = vld [vmem:[%s2679 + $0x30] sm:$0xff]
        %v2685 = vld [vmem:[%s2679 + $0x38] sm:$0xff]
        %v2686 = vld [vmem:[%s2679 + $0x48] sm:$0xff]
        %v2687 = vld [vmem:[%s2679 + $0x50] sm:$0xff]
        %v2688 = vld [vmem:[%s2679 + $0x60] sm:$0xff]
        %v2689 = vld [vmem:[%s2679 + $0x68] sm:$0xff]
        %v2690 = vld [vmem:[%s2679 + $0x78] sm:$0xff]
        %v2691 = vld [vmem:[%s2679 + $0x80] sm:$0xff]
        %v2692 = vld [vmem:[%s2679 + $0x90] sm:$0xff]
        %v2693 = vld [vmem:[%s2679 + $0x98] sm:$0xff]
        %v2694 = vld [vmem:[%s2679 + $0xa8] sm:$0xff]
        %v2695 = vld [vmem:[%s2679 + $0xb0] sm:$0xff]
        %v2696 = vld [vmem:[%s2679 + $0xc0] sm:$0xff]
        %v2697 = vld [vmem:[%s2679 + $0xc8] sm:$0xff]
        %v2698 = vld [vmem:[%s2679 + $0xd8] sm:$0xff]
        %v2699 = vld [vmem:[%s2679 + $0xe0] sm:$0xff]
        %v2700 = vld [vmem:[%s2679 + $0xf0] sm:$0xff]
        %v2701 = vld [vmem:[%s2679 + $0xf8] sm:$0xff]
        %v2702 = vld [vmem:[%s2679 + $0x108] sm:$0xff]
        %v2703 = vld [vmem:[%s2679 + $0x110] sm:$0xff]
        %v2704 = vld [vmem:[%s2679 + $0x120] sm:$0xff]
        %v2705 = vld [vmem:[%s2679 + $0x128] sm:$0xff]
        %v2706 = vld [vmem:[%s2679 + $0x138] sm:$0xff]
        %v2707 = vld [vmem:[%s2679 + $0x140] sm:$0xff]
        %v2708 = vld [vmem:[%s2679 + $0x150] sm:$0xff]
        %v2709 = vld [vmem:[%s2679 + $0x158] sm:$0xff]
        %v2710 = vld [vmem:[%s2679 + $0x168] sm:$0xff]
        %v2711 = vld [vmem:[%s2679 + $0x170] sm:$0xff]
        %v2712 = vld [vmem:[%s2679 + $0x1] sm:$0xff]
        %v2713 = vld [vmem:[%s2679 + $0x9] sm:$0xff]
        %v2714 = vld [vmem:[%s2679 + $0x19] sm:$0xff]
        %v2715 = vld [vmem:[%s2679 + $0x21] sm:$0xff]
        %v2716 = vld [vmem:[%s2679 + $0x31] sm:$0xff]
        %v2717 = vld [vmem:[%s2679 + $0x39] sm:$0xff]
        %v2718 = vld [vmem:[%s2679 + $0x49] sm:$0xff]
        %v2719 = vld [vmem:[%s2679 + $0x51] sm:$0xff]
        %v2720 = vld [vmem:[%s2679 + $0x61] sm:$0xff]
        %v2721 = vld [vmem:[%s2679 + $0x69] sm:$0xff]
        %v2722 = vld [vmem:[%s2679 + $0x79] sm:$0xff]
        %v2723 = vld [vmem:[%s2679 + $0x81] sm:$0xff]
        %v2724 = vld [vmem:[%s2679 + $0x91] sm:$0xff]
        %v2725 = vld [vmem:[%s2679 + $0x99] sm:$0xff]
        %v2726 = vld [vmem:[%s2679 + $0xa9] sm:$0xff]
        %v2727 = vld [vmem:[%s2679 + $0xb1] sm:$0xff]
        %v2728 = vld [vmem:[%s2679 + $0xc1] sm:$0xff]
        %v2729 = vld [vmem:[%s2679 + $0xc9] sm:$0xff]
        %v2730 = vld [vmem:[%s2679 + $0xd9] sm:$0xff]
        %v2731 = vld [vmem:[%s2679 + $0xe1] sm:$0xff]
        %v2732 = vld [vmem:[%s2679 + $0xf1] sm:$0xff]
        %v2733 = vld [vmem:[%s2679 + $0xf9] sm:$0xff]
        %v2734 = vld [vmem:[%s2679 + $0x109] sm:$0xff]
        %v2735 = vld [vmem:[%s2679 + $0x111] sm:$0xff]
        %v2736 = vld [vmem:[%s2679 + $0x121] sm:$0xff]
        %v2737 = vld [vmem:[%s2679 + $0x129] sm:$0xff]
        %v2738 = vld [vmem:[%s2679 + $0x139] sm:$0xff]
        %v2739 = vld [vmem:[%s2679 + $0x141] sm:$0xff]
        %v2740 = vld [vmem:[%s2679 + $0x151] sm:$0xff]
        %v2741 = vld [vmem:[%s2679 + $0x159] sm:$0xff]
        %v2742 = vld [vmem:[%s2679 + $0x169] sm:$0xff]
        %v2743 = vld [vmem:[%s2679 + $0x171] sm:$0xff]
        %v2744 = vld [vmem:[%s2679 + $0x2] sm:$0xff]
        %v2745 = vld [vmem:[%s2679 + $0xa] sm:$0xff]
        %v2746 = vld [vmem:[%s2679 + $0x1a] sm:$0xff]
        %v2747 = vld [vmem:[%s2679 + $0x22] sm:$0xff]
        %v2748 = vld [vmem:[%s2679 + $0x32] sm:$0xff]
        %v2749 = vld [vmem:[%s2679 + $0x3a] sm:$0xff]
        %v2750 = vld [vmem:[%s2679 + $0x4a] sm:$0xff]
        %v2751 = vld [vmem:[%s2679 + $0x52] sm:$0xff]
        %v2752 = vld [vmem:[%s2679 + $0x62] sm:$0xff]
        %v2753 = vld [vmem:[%s2679 + $0x6a] sm:$0xff]
        %v2754 = vld [vmem:[%s2679 + $0x7a] sm:$0xff]
        %v2755 = vld [vmem:[%s2679 + $0x82] sm:$0xff]
        %v2756 = vld [vmem:[%s2679 + $0x92] sm:$0xff]
        %v2757 = vld [vmem:[%s2679 + $0x9a] sm:$0xff]
        %v2758 = vld [vmem:[%s2679 + $0xaa] sm:$0xff]
        %v2759 = vld [vmem:[%s2679 + $0xb2] sm:$0xff]
        %v2760 = vld [vmem:[%s2679 + $0xc2] sm:$0xff]
        %v2761 = vld [vmem:[%s2679 + $0xca] sm:$0xff]
        %v2762 = vld [vmem:[%s2679 + $0xda] sm:$0xff]
        %v2763 = vld [vmem:[%s2679 + $0xe2] sm:$0xff]
        %v2764 = vld [vmem:[%s2679 + $0xf2] sm:$0xff]
        %v2765 = vld [vmem:[%s2679 + $0xfa] sm:$0xff]
        %v2766 = vld [vmem:[%s2679 + $0x10a] sm:$0xff]
        %v2767 = vld [vmem:[%s2679 + $0x112] sm:$0xff]
        %v2768 = vld [vmem:[%s2679 + $0x122] sm:$0xff]
        %v2769 = vld [vmem:[%s2679 + $0x12a] sm:$0xff]
        %v2770 = vld [vmem:[%s2679 + $0x13a] sm:$0xff]
        %v2771 = vld [vmem:[%s2679 + $0x142] sm:$0xff]
        %v2772 = vld [vmem:[%s2679 + $0x152] sm:$0xff]
        %v2773 = vld [vmem:[%s2679 + $0x15a] sm:$0xff]
        %v2774 = vld [vmem:[%s2679 + $0x16a] sm:$0xff]
        %v2775 = vld [vmem:[%s2679 + $0x172] sm:$0xff]
        %2808 = vrot.lane.b32.xlu0 %v2519, 16
        %v2809 = vpop.permute.xlu0 %2808
        %2810 = vrot.lane.b32.xlu0 %v2520, 16
        %v2811 = vpop.permute.xlu0 %2810
        %2812 = vrot.lane.b32.xlu0 %v2521, 16
        %v2813 = vpop.permute.xlu0 %2812
        %2814 = vrot.lane.b32.xlu0 %v2522, 16
        %v2815 = vpop.permute.xlu0 %2814
        %2816 = vrot.lane.b32.xlu0 %v2523, 16
        %v2817 = vpop.permute.xlu0 %2816
        %2818 = vrot.lane.b32.xlu0 %v2524, 16
        %v2819 = vpop.permute.xlu0 %2818
        %2820 = vrot.lane.b32.xlu0 %v2525, 16
        %v2821 = vpop.permute.xlu0 %2820
        %2822 = vrot.lane.b32.xlu0 %v2526, 16
        %v2823 = vpop.permute.xlu0 %2822
        %2824 = vrot.lane.b32.xlu0 %v2527, 16
        %v2825 = vpop.permute.xlu0 %2824
        %2826 = vrot.lane.b32.xlu0 %v2528, 16
        %v2827 = vpop.permute.xlu0 %2826
        %2828 = vrot.lane.b32.xlu0 %v2529, 16
        %v2829 = vpop.permute.xlu0 %2828
        %2830 = vrot.lane.b32.xlu0 %v2530, 16
        %v2831 = vpop.permute.xlu0 %2830
        %2832 = vrot.lane.b32.xlu0 %v2531, 16
        %v2833 = vpop.permute.xlu0 %2832
        %2834 = vrot.lane.b32.xlu0 %v2532, 16
        %v2835 = vpop.permute.xlu0 %2834
        %2836 = vrot.lane.b32.xlu0 %v2533, 16
        %v2837 = vpop.permute.xlu0 %2836
        %2838 = vrot.lane.b32.xlu0 %v2534, 16
        %v2839 = vpop.permute.xlu0 %2838
        %2840 = vrot.lane.b32.xlu0 %v2535, 16
        %v2841 = vpop.permute.xlu0 %2840
        %2842 = vrot.lane.b32.xlu0 %v2536, 16
        %v2843 = vpop.permute.xlu0 %2842
        %2844 = vrot.lane.b32.xlu0 %v2537, 16
        %v2845 = vpop.permute.xlu0 %2844
        %2846 = vrot.lane.b32.xlu0 %v2538, 16
        %v2847 = vpop.permute.xlu0 %2846
        %2848 = vrot.lane.b32.xlu0 %v2539, 16
        %v2849 = vpop.permute.xlu0 %2848
        %2850 = vrot.lane.b32.xlu0 %v2540, 16
        %v2851 = vpop.permute.xlu0 %2850
        %2852 = vrot.lane.b32.xlu0 %v2541, 16
        %v2853 = vpop.permute.xlu0 %2852
        %2854 = vrot.lane.b32.xlu0 %v2542, 16
        %v2855 = vpop.permute.xlu0 %2854
        %2856 = vrot.lane.b32.xlu0 %v2543, 16
        %v2857 = vpop.permute.xlu0 %2856
        %2858 = vrot.lane.b32.xlu0 %v2544, 16
        %v2859 = vpop.permute.xlu0 %2858
        %2860 = vrot.lane.b32.xlu0 %v2545, 16
        %v2861 = vpop.permute.xlu0 %2860
        %2862 = vrot.lane.b32.xlu0 %v2546, 16
        %v2863 = vpop.permute.xlu0 %2862
        %2864 = vrot.lane.b32.xlu0 %v2547, 16
        %v2865 = vpop.permute.xlu0 %2864
        %2866 = vrot.lane.b32.xlu0 %v2548, 16
        %v2867 = vpop.permute.xlu0 %2866
        %2868 = vrot.lane.b32.xlu0 %v2549, 16
        %v2869 = vpop.permute.xlu0 %2868
        %2870 = vrot.lane.b32.xlu0 %v2550, 16
        %v2871 = vpop.permute.xlu0 %2870
        %2936 = vrot.lane.b32.xlu0 %v2551, 32
        %v2937 = vpop.permute.xlu0 %2936
        %2938 = vrot.lane.b32.xlu0 %v2552, 32
        %v2939 = vpop.permute.xlu0 %2938
        %2940 = vrot.lane.b32.xlu0 %v2553, 32
        %v2941 = vpop.permute.xlu0 %2940
        %2942 = vrot.lane.b32.xlu0 %v2554, 32
        %v2943 = vpop.permute.xlu0 %2942
        %2944 = vrot.lane.b32.xlu0 %v2555, 32
        %v2945 = vpop.permute.xlu0 %2944
        %2946 = vrot.lane.b32.xlu0 %v2556, 32
        %v2947 = vpop.permute.xlu0 %2946
        %2948 = vrot.lane.b32.xlu0 %v2557, 32
        %v2949 = vpop.permute.xlu0 %2948
        %2950 = vrot.lane.b32.xlu0 %v2558, 32
        %v2951 = vpop.permute.xlu0 %2950
        %2952 = vrot.lane.b32.xlu0 %v2559, 32
        %v2953 = vpop.permute.xlu0 %2952
        %2954 = vrot.lane.b32.xlu0 %v2560, 32
        %v2955 = vpop.permute.xlu0 %2954
        %2956 = vrot.lane.b32.xlu0 %v2561, 32
        %v2957 = vpop.permute.xlu0 %2956
        %2958 = vrot.lane.b32.xlu0 %v2562, 32
        %v2959 = vpop.permute.xlu0 %2958
        %2960 = vrot.lane.b32.xlu0 %v2563, 32
        %v2961 = vpop.permute.xlu0 %2960
        %2962 = vrot.lane.b32.xlu0 %v2564, 32
        %v2963 = vpop.permute.xlu0 %2962
        %2964 = vrot.lane.b32.xlu0 %v2565, 32
        %v2965 = vpop.permute.xlu0 %2964
        %2966 = vrot.lane.b32.xlu0 %v2566, 32
        %v2967 = vpop.permute.xlu0 %2966
        %2968 = vrot.lane.b32.xlu0 %v2567, 32
        %v2969 = vpop.permute.xlu0 %2968
        %2970 = vrot.lane.b32.xlu0 %v2568, 32
        %v2971 = vpop.permute.xlu0 %2970
        %2972 = vrot.lane.b32.xlu0 %v2569, 32
        %v2973 = vpop.permute.xlu0 %2972
        %2974 = vrot.lane.b32.xlu0 %v2570, 32
        %v2975 = vpop.permute.xlu0 %2974
        %2976 = vrot.lane.b32.xlu0 %v2571, 32
        %v2977 = vpop.permute.xlu0 %2976
        %2978 = vrot.lane.b32.xlu0 %v2572, 32
        %v2979 = vpop.permute.xlu0 %2978
        %2980 = vrot.lane.b32.xlu0 %v2573, 32
        %v2981 = vpop.permute.xlu0 %2980
        %2982 = vrot.lane.b32.xlu0 %v2574, 32
        %v2983 = vpop.permute.xlu0 %2982
        %2984 = vrot.lane.b32.xlu0 %v2575, 32
        %v2985 = vpop.permute.xlu0 %2984
        %2986 = vrot.lane.b32.xlu0 %v2576, 32
        %v2987 = vpop.permute.xlu0 %2986
        %2988 = vrot.lane.b32.xlu0 %v2577, 32
        %v2989 = vpop.permute.xlu0 %2988
        %2990 = vrot.lane.b32.xlu0 %v2578, 32
        %v2991 = vpop.permute.xlu0 %2990
        %2992 = vrot.lane.b32.xlu0 %v2579, 32
        %v2993 = vpop.permute.xlu0 %2992
        %2994 = vrot.lane.b32.xlu0 %v2580, 32
        %v2995 = vpop.permute.xlu0 %2994
        %2996 = vrot.lane.b32.xlu0 %v2581, 32
        %v2997 = vpop.permute.xlu0 %2996
        %2998 = vrot.lane.b32.xlu0 %v2582, 32
        %v2999 = vpop.permute.xlu0 %2998
        %3064 = vrot.lane.b32.xlu0 %v2583, 48
        %v3065 = vpop.permute.xlu0 %3064
        %3066 = vrot.lane.b32.xlu0 %v2584, 48
        %v3067 = vpop.permute.xlu0 %3066
        %3068 = vrot.lane.b32.xlu0 %v2585, 48
        %v3069 = vpop.permute.xlu0 %3068
        %3070 = vrot.lane.b32.xlu0 %v2586, 48
        %v3071 = vpop.permute.xlu0 %3070
        %3072 = vrot.lane.b32.xlu0 %v2587, 48
        %v3073 = vpop.permute.xlu0 %3072
        %3074 = vrot.lane.b32.xlu0 %v2588, 48
        %v3075 = vpop.permute.xlu0 %3074
        %3076 = vrot.lane.b32.xlu0 %v2589, 48
        %v3077 = vpop.permute.xlu0 %3076
        %3078 = vrot.lane.b32.xlu0 %v2590, 48
        %v3079 = vpop.permute.xlu0 %3078
        %3080 = vrot.lane.b32.xlu0 %v2591, 48
        %v3081 = vpop.permute.xlu0 %3080
        %3082 = vrot.lane.b32.xlu0 %v2592, 48
        %v3083 = vpop.permute.xlu0 %3082
        %3084 = vrot.lane.b32.xlu0 %v2593, 48
        %v3085 = vpop.permute.xlu0 %3084
        %3086 = vrot.lane.b32.xlu0 %v2594, 48
        %v3087 = vpop.permute.xlu0 %3086
        %3088 = vrot.lane.b32.xlu0 %v2595, 48
        %v3089 = vpop.permute.xlu0 %3088
        %3090 = vrot.lane.b32.xlu0 %v2596, 48
        %v3091 = vpop.permute.xlu0 %3090
        %3092 = vrot.lane.b32.xlu0 %v2597, 48
        %v3093 = vpop.permute.xlu0 %3092
        %3094 = vrot.lane.b32.xlu0 %v2598, 48
        %v3095 = vpop.permute.xlu0 %3094
        %3096 = vrot.lane.b32.xlu0 %v2599, 48
        %v3097 = vpop.permute.xlu0 %3096
        %3098 = vrot.lane.b32.xlu0 %v2600, 48
        %v3099 = vpop.permute.xlu0 %3098
        %3100 = vrot.lane.b32.xlu0 %v2601, 48
        %v3101 = vpop.permute.xlu0 %3100
        %3102 = vrot.lane.b32.xlu0 %v2602, 48
        %v3103 = vpop.permute.xlu0 %3102
        %3104 = vrot.lane.b32.xlu0 %v2603, 48
        %v3105 = vpop.permute.xlu0 %3104
        %3106 = vrot.lane.b32.xlu0 %v2604, 48
        %v3107 = vpop.permute.xlu0 %3106
        %3108 = vrot.lane.b32.xlu0 %v2605, 48
        %v3109 = vpop.permute.xlu0 %3108
        %3110 = vrot.lane.b32.xlu0 %v2606, 48
        %v3111 = vpop.permute.xlu0 %3110
        %3112 = vrot.lane.b32.xlu0 %v2607, 48
        %v3113 = vpop.permute.xlu0 %3112
        %3114 = vrot.lane.b32.xlu0 %v2608, 48
        %v3115 = vpop.permute.xlu0 %3114
        %3116 = vrot.lane.b32.xlu0 %v2609, 48
        %v3117 = vpop.permute.xlu0 %3116
        %3118 = vrot.lane.b32.xlu0 %v2610, 48
        %v3119 = vpop.permute.xlu0 %3118
        %3120 = vrot.lane.b32.xlu0 %v2611, 48
        %v3121 = vpop.permute.xlu0 %3120
        %3122 = vrot.lane.b32.xlu0 %v2612, 48
        %v3123 = vpop.permute.xlu0 %3122
        %3124 = vrot.lane.b32.xlu0 %v2613, 48
        %v3125 = vpop.permute.xlu0 %3124
        %3126 = vrot.lane.b32.xlu0 %v2614, 48
        %v3127 = vpop.permute.xlu0 %3126
        %3192 = vrot.lane.b32.xlu0 %v2615, 64
        %v3193 = vpop.permute.xlu0 %3192
        %3194 = vrot.lane.b32.xlu0 %v2616, 64
        %v3195 = vpop.permute.xlu0 %3194
        %3196 = vrot.lane.b32.xlu0 %v2617, 64
        %v3197 = vpop.permute.xlu0 %3196
        %3198 = vrot.lane.b32.xlu0 %v2618, 64
        %v3199 = vpop.permute.xlu0 %3198
        %3200 = vrot.lane.b32.xlu0 %v2619, 64
        %v3201 = vpop.permute.xlu0 %3200
        %3202 = vrot.lane.b32.xlu0 %v2620, 64
        %v3203 = vpop.permute.xlu0 %3202
        %3204 = vrot.lane.b32.xlu0 %v2621, 64
        %v3205 = vpop.permute.xlu0 %3204
        %3206 = vrot.lane.b32.xlu0 %v2622, 64
        %v3207 = vpop.permute.xlu0 %3206
        %3208 = vrot.lane.b32.xlu0 %v2623, 64
        %v3209 = vpop.permute.xlu0 %3208
        %3210 = vrot.lane.b32.xlu0 %v2624, 64
        %v3211 = vpop.permute.xlu0 %3210
        %3212 = vrot.lane.b32.xlu0 %v2625, 64
        %v3213 = vpop.permute.xlu0 %3212
        %3214 = vrot.lane.b32.xlu0 %v2626, 64
        %v3215 = vpop.permute.xlu0 %3214
        %3216 = vrot.lane.b32.xlu0 %v2627, 64
        %v3217 = vpop.permute.xlu0 %3216
        %3218 = vrot.lane.b32.xlu0 %v2628, 64
        %v3219 = vpop.permute.xlu0 %3218
        %3220 = vrot.lane.b32.xlu0 %v2629, 64
        %v3221 = vpop.permute.xlu0 %3220
        %3222 = vrot.lane.b32.xlu0 %v2630, 64
        %v3223 = vpop.permute.xlu0 %3222
        %3224 = vrot.lane.b32.xlu0 %v2631, 64
        %v3225 = vpop.permute.xlu0 %3224
        %3226 = vrot.lane.b32.xlu0 %v2632, 64
        %v3227 = vpop.permute.xlu0 %3226
        %3228 = vrot.lane.b32.xlu0 %v2633, 64
        %v3229 = vpop.permute.xlu0 %3228
        %3230 = vrot.lane.b32.xlu0 %v2634, 64
        %v3231 = vpop.permute.xlu0 %3230
        %3232 = vrot.lane.b32.xlu0 %v2635, 64
        %v3233 = vpop.permute.xlu0 %3232
        %3234 = vrot.lane.b32.xlu0 %v2636, 64
        %v3235 = vpop.permute.xlu0 %3234
        %3236 = vrot.lane.b32.xlu0 %v2637, 64
        %v3237 = vpop.permute.xlu0 %3236
        %3238 = vrot.lane.b32.xlu0 %v2638, 64
        %v3239 = vpop.permute.xlu0 %3238
        %3240 = vrot.lane.b32.xlu0 %v2639, 64
        %v3241 = vpop.permute.xlu0 %3240
        %3242 = vrot.lane.b32.xlu0 %v2640, 64
        %v3243 = vpop.permute.xlu0 %3242
        %3244 = vrot.lane.b32.xlu0 %v2641, 64
        %v3245 = vpop.permute.xlu0 %3244
        %3246 = vrot.lane.b32.xlu0 %v2642, 64
        %v3247 = vpop.permute.xlu0 %3246
        %3248 = vrot.lane.b32.xlu0 %v2643, 64
        %v3249 = vpop.permute.xlu0 %3248
        %3250 = vrot.lane.b32.xlu0 %v2644, 64
        %v3251 = vpop.permute.xlu0 %3250
        %3252 = vrot.lane.b32.xlu0 %v2645, 64
        %v3253 = vpop.permute.xlu0 %3252
        %3254 = vrot.lane.b32.xlu0 %v2646, 64
        %v3255 = vpop.permute.xlu0 %3254
        %3320 = vrot.lane.b32.xlu0 %v2647, 80
        %v3321 = vpop.permute.xlu0 %3320
        %3322 = vrot.lane.b32.xlu0 %v2648, 80
        %v3323 = vpop.permute.xlu0 %3322
        %3324 = vrot.lane.b32.xlu0 %v2649, 80
        %v3325 = vpop.permute.xlu0 %3324
        %3326 = vrot.lane.b32.xlu0 %v2650, 80
        %v3327 = vpop.permute.xlu0 %3326
        %3328 = vrot.lane.b32.xlu0 %v2651, 80
        %v3329 = vpop.permute.xlu0 %3328
        %3330 = vrot.lane.b32.xlu0 %v2652, 80
        %v3331 = vpop.permute.xlu0 %3330
        %3332 = vrot.lane.b32.xlu0 %v2653, 80
        %v3333 = vpop.permute.xlu0 %3332
        %3334 = vrot.lane.b32.xlu0 %v2654, 80
        %v3335 = vpop.permute.xlu0 %3334
        %3336 = vrot.lane.b32.xlu0 %v2655, 80
        %v3337 = vpop.permute.xlu0 %3336
        %3338 = vrot.lane.b32.xlu0 %v2656, 80
        %v3339 = vpop.permute.xlu0 %3338
        %3340 = vrot.lane.b32.xlu0 %v2657, 80
        %v3341 = vpop.permute.xlu0 %3340
        %3342 = vrot.lane.b32.xlu0 %v2658, 80
        %v3343 = vpop.permute.xlu0 %3342
        %3344 = vrot.lane.b32.xlu0 %v2659, 80
        %v3345 = vpop.permute.xlu0 %3344
        %3346 = vrot.lane.b32.xlu0 %v2660, 80
        %v3347 = vpop.permute.xlu0 %3346
        %3348 = vrot.lane.b32.xlu0 %v2661, 80
        %v3349 = vpop.permute.xlu0 %3348
        %3350 = vrot.lane.b32.xlu0 %v2662, 80
        %v3351 = vpop.permute.xlu0 %3350
        %3352 = vrot.lane.b32.xlu0 %v2663, 80
        %v3353 = vpop.permute.xlu0 %3352
        %3354 = vrot.lane.b32.xlu0 %v2664, 80
        %v3355 = vpop.permute.xlu0 %3354
        %3356 = vrot.lane.b32.xlu0 %v2665, 80
        %v3357 = vpop.permute.xlu0 %3356
        %3358 = vrot.lane.b32.xlu0 %v2666, 80
        %v3359 = vpop.permute.xlu0 %3358
        %3360 = vrot.lane.b32.xlu0 %v2667, 80
        %v3361 = vpop.permute.xlu0 %3360
        %3362 = vrot.lane.b32.xlu0 %v2668, 80
        %v3363 = vpop.permute.xlu0 %3362
        %3364 = vrot.lane.b32.xlu0 %v2669, 80
        %v3365 = vpop.permute.xlu0 %3364
        %3366 = vrot.lane.b32.xlu0 %v2670, 80
        %v3367 = vpop.permute.xlu0 %3366
        %3368 = vrot.lane.b32.xlu0 %v2671, 80
        %v3369 = vpop.permute.xlu0 %3368
        %3370 = vrot.lane.b32.xlu0 %v2672, 80
        %v3371 = vpop.permute.xlu0 %3370
        %3372 = vrot.lane.b32.xlu0 %v2673, 80
        %v3373 = vpop.permute.xlu0 %3372
        %3374 = vrot.lane.b32.xlu0 %v2674, 80
        %v3375 = vpop.permute.xlu0 %3374
        %3376 = vrot.lane.b32.xlu0 %v2675, 80
        %v3377 = vpop.permute.xlu0 %3376
        %3378 = vrot.lane.b32.xlu0 %v2676, 80
        %v3379 = vpop.permute.xlu0 %3378
        %3380 = vrot.lane.b32.xlu0 %v2677, 80
        %v3381 = vpop.permute.xlu0 %3380
        %3382 = vrot.lane.b32.xlu0 %v2678, 80
        %v3383 = vpop.permute.xlu0 %3382
        %3448 = vrot.lane.b32.xlu0 %v2680, 96
        %v3449 = vpop.permute.xlu0 %3448
        %3450 = vrot.lane.b32.xlu0 %v2681, 96
        %v3451 = vpop.permute.xlu0 %3450
        %3452 = vrot.lane.b32.xlu0 %v2682, 96
        %v3453 = vpop.permute.xlu0 %3452
        %3454 = vrot.lane.b32.xlu0 %v2683, 96
        %v3455 = vpop.permute.xlu0 %3454
        %3456 = vrot.lane.b32.xlu0 %v2684, 96
        %v3457 = vpop.permute.xlu0 %3456
        %3458 = vrot.lane.b32.xlu0 %v2685, 96
        %v3459 = vpop.permute.xlu0 %3458
        %3460 = vrot.lane.b32.xlu0 %v2686, 96
        %v3461 = vpop.permute.xlu0 %3460
        %3462 = vrot.lane.b32.xlu0 %v2687, 96
        %v3463 = vpop.permute.xlu0 %3462
        %3464 = vrot.lane.b32.xlu0 %v2688, 96
        %v3465 = vpop.permute.xlu0 %3464
        %3466 = vrot.lane.b32.xlu0 %v2689, 96
        %v3467 = vpop.permute.xlu0 %3466
        %3468 = vrot.lane.b32.xlu0 %v2690, 96
        %v3469 = vpop.permute.xlu0 %3468
        %3470 = vrot.lane.b32.xlu0 %v2691, 96
        %v3471 = vpop.permute.xlu0 %3470
        %3472 = vrot.lane.b32.xlu0 %v2692, 96
        %v3473 = vpop.permute.xlu0 %3472
        %3474 = vrot.lane.b32.xlu0 %v2693, 96
        %v3475 = vpop.permute.xlu0 %3474
        %3476 = vrot.lane.b32.xlu0 %v2694, 96
        %v3477 = vpop.permute.xlu0 %3476
        %3478 = vrot.lane.b32.xlu0 %v2695, 96
        %v3479 = vpop.permute.xlu0 %3478
        %3480 = vrot.lane.b32.xlu0 %v2696, 96
        %v3481 = vpop.permute.xlu0 %3480
        %3482 = vrot.lane.b32.xlu0 %v2697, 96
        %v3483 = vpop.permute.xlu0 %3482
        %3484 = vrot.lane.b32.xlu0 %v2698, 96
        %v3485 = vpop.permute.xlu0 %3484
        %3486 = vrot.lane.b32.xlu0 %v2699, 96
        %v3487 = vpop.permute.xlu0 %3486
        %3488 = vrot.lane.b32.xlu0 %v2700, 96
        %v3489 = vpop.permute.xlu0 %3488
        %3490 = vrot.lane.b32.xlu0 %v2701, 96
        %v3491 = vpop.permute.xlu0 %3490
        %3492 = vrot.lane.b32.xlu0 %v2702, 96
        %v3493 = vpop.permute.xlu0 %3492
        %3494 = vrot.lane.b32.xlu0 %v2703, 96
        %v3495 = vpop.permute.xlu0 %3494
        %3496 = vrot.lane.b32.xlu0 %v2704, 96
        %v3497 = vpop.permute.xlu0 %3496
        %3498 = vrot.lane.b32.xlu0 %v2705, 96
        %v3499 = vpop.permute.xlu0 %3498
        %3500 = vrot.lane.b32.xlu0 %v2706, 96
        %v3501 = vpop.permute.xlu0 %3500
        %3502 = vrot.lane.b32.xlu0 %v2707, 96
        %v3503 = vpop.permute.xlu0 %3502
        %3504 = vrot.lane.b32.xlu0 %v2708, 96
        %v3505 = vpop.permute.xlu0 %3504
        %3506 = vrot.lane.b32.xlu0 %v2709, 96
        %v3507 = vpop.permute.xlu0 %3506
        %3508 = vrot.lane.b32.xlu0 %v2710, 96
        %v3509 = vpop.permute.xlu0 %3508
        %3510 = vrot.lane.b32.xlu0 %v2711, 96
        %v3511 = vpop.permute.xlu0 %3510
        %3576 = vrot.lane.b32.xlu0 %v2712, 112
        %v3577 = vpop.permute.xlu0 %3576
        %3578 = vrot.lane.b32.xlu0 %v2713, 112
        %v3579 = vpop.permute.xlu0 %3578
        %3580 = vrot.lane.b32.xlu0 %v2714, 112
        %v3581 = vpop.permute.xlu0 %3580
        %3582 = vrot.lane.b32.xlu0 %v2715, 112
        %v3583 = vpop.permute.xlu0 %3582
        %3584 = vrot.lane.b32.xlu0 %v2716, 112
        %v3585 = vpop.permute.xlu0 %3584
        %3586 = vrot.lane.b32.xlu0 %v2717, 112
        %v3587 = vpop.permute.xlu0 %3586
        %3588 = vrot.lane.b32.xlu0 %v2718, 112
        %v3589 = vpop.permute.xlu0 %3588
        %3590 = vrot.lane.b32.xlu0 %v2719, 112
        %v3591 = vpop.permute.xlu0 %3590
        %3592 = vrot.lane.b32.xlu0 %v2720, 112
        %v3593 = vpop.permute.xlu0 %3592
        %3594 = vrot.lane.b32.xlu0 %v2721, 112
        %v3595 = vpop.permute.xlu0 %3594
        %3596 = vrot.lane.b32.xlu0 %v2722, 112
        %v3597 = vpop.permute.xlu0 %3596
        %3598 = vrot.lane.b32.xlu0 %v2723, 112
        %v3599 = vpop.permute.xlu0 %3598
        %3600 = vrot.lane.b32.xlu0 %v2724, 112
        %v3601 = vpop.permute.xlu0 %3600
        %3602 = vrot.lane.b32.xlu0 %v2725, 112
        %v3603 = vpop.permute.xlu0 %3602
        %3604 = vrot.lane.b32.xlu0 %v2726, 112
        %v3605 = vpop.permute.xlu0 %3604
        %3606 = vrot.lane.b32.xlu0 %v2727, 112
        %v3607 = vpop.permute.xlu0 %3606
        %3608 = vrot.lane.b32.xlu0 %v2728, 112
        %v3609 = vpop.permute.xlu0 %3608
        %3610 = vrot.lane.b32.xlu0 %v2729, 112
        %v3611 = vpop.permute.xlu0 %3610
        %3612 = vrot.lane.b32.xlu0 %v2730, 112
        %v3613 = vpop.permute.xlu0 %3612
        %3614 = vrot.lane.b32.xlu0 %v2731, 112
        %v3615 = vpop.permute.xlu0 %3614
        %3616 = vrot.lane.b32.xlu0 %v2732, 112
        %v3617 = vpop.permute.xlu0 %3616
        %3618 = vrot.lane.b32.xlu0 %v2733, 112
        %v3619 = vpop.permute.xlu0 %3618
        %3620 = vrot.lane.b32.xlu0 %v2734, 112
        %v3621 = vpop.permute.xlu0 %3620
        %3622 = vrot.lane.b32.xlu0 %v2735, 112
        %v3623 = vpop.permute.xlu0 %3622
        %3624 = vrot.lane.b32.xlu0 %v2736, 112
        %v3625 = vpop.permute.xlu0 %3624
        %3626 = vrot.lane.b32.xlu0 %v2737, 112
        %v3627 = vpop.permute.xlu0 %3626
        %3628 = vrot.lane.b32.xlu0 %v2738, 112
        %v3629 = vpop.permute.xlu0 %3628
        %3630 = vrot.lane.b32.xlu0 %v2739, 112
        %v3631 = vpop.permute.xlu0 %3630
        %3632 = vrot.lane.b32.xlu0 %v2740, 112
        %v3633 = vpop.permute.xlu0 %3632
        %3634 = vrot.lane.b32.xlu0 %v2741, 112
        %v3635 = vpop.permute.xlu0 %3634
        %3636 = vrot.lane.b32.xlu0 %v2742, 112
        %v3637 = vpop.permute.xlu0 %3636
        %3638 = vrot.lane.b32.xlu0 %v2743, 112
        %v3639 = vpop.permute.xlu0 %3638
        %v3672 = vsel %vm943, %v2487, %v2809
        %v3673 = vsel %vm943, %v2488, %v2811
        %v3674 = vsel %vm943, %v2489, %v2813
        %v3675 = vsel %vm943, %v2490, %v2815
        %v3676 = vsel %vm943, %v2491, %v2817
        %v3677 = vsel %vm943, %v2492, %v2819
        %v3678 = vsel %vm943, %v2493, %v2821
        %v3679 = vsel %vm943, %v2494, %v2823
        %v3680 = vsel %vm943, %v2495, %v2825
        %v3681 = vsel %vm943, %v2496, %v2827
        %v3682 = vsel %vm943, %v2497, %v2829
        %v3683 = vsel %vm943, %v2498, %v2831
        %v3684 = vsel %vm943, %v2499, %v2833
        %v3685 = vsel %vm943, %v2500, %v2835
        %v3686 = vsel %vm943, %v2501, %v2837
        %v3687 = vsel %vm943, %v2502, %v2839
        %v3688 = vsel %vm943, %v2503, %v2841
        %v3689 = vsel %vm943, %v2504, %v2843
        %v3690 = vsel %vm943, %v2505, %v2845
        %v3691 = vsel %vm943, %v2506, %v2847
        %v3692 = vsel %vm943, %v2507, %v2849
        %v3693 = vsel %vm943, %v2508, %v2851
        %v3694 = vsel %vm943, %v2509, %v2853
        %v3695 = vsel %vm943, %v2510, %v2855
        %v3696 = vsel %vm943, %v2511, %v2857
        %v3697 = vsel %vm943, %v2512, %v2859
        %v3698 = vsel %vm943, %v2513, %v2861
        %v3699 = vsel %vm943, %v2514, %v2863
        %v3700 = vsel %vm943, %v2515, %v2865
        %v3701 = vsel %vm943, %v2516, %v2867
        %v3702 = vsel %vm943, %v2517, %v2869
        %v3703 = vsel %vm943, %v2518, %v2871
        %vm3704 = vcmask 261120
        %v3705 = vsel %vm3704, %v3672, %v2937
        %v3706 = vsel %vm3704, %v3673, %v2939
        %v3707 = vsel %vm3704, %v3674, %v2941
        %v3708 = vsel %vm3704, %v3675, %v2943
        %v3709 = vsel %vm3704, %v3676, %v2945
        %v3710 = vsel %vm3704, %v3677, %v2947
        %v3711 = vsel %vm3704, %v3678, %v2949
        %v3712 = vsel %vm3704, %v3679, %v2951
        %v3713 = vsel %vm3704, %v3680, %v2953
        %v3714 = vsel %vm3704, %v3681, %v2955
        %v3715 = vsel %vm3704, %v3682, %v2957
        %v3716 = vsel %vm3704, %v3683, %v2959
        %v3717 = vsel %vm3704, %v3684, %v2961
        %v3718 = vsel %vm3704, %v3685, %v2963
        %v3719 = vsel %vm3704, %v3686, %v2965
        %v3720 = vsel %vm3704, %v3687, %v2967
        %v3721 = vsel %vm3704, %v3688, %v2969
        %v3722 = vsel %vm3704, %v3689, %v2971
        %v3723 = vsel %vm3704, %v3690, %v2973
        %v3724 = vsel %vm3704, %v3691, %v2975
        %v3725 = vsel %vm3704, %v3692, %v2977
        %v3726 = vsel %vm3704, %v3693, %v2979
        %v3727 = vsel %vm3704, %v3694, %v2981
        %v3728 = vsel %vm3704, %v3695, %v2983
        %v3729 = vsel %vm3704, %v3696, %v2985
        %v3730 = vsel %vm3704, %v3697, %v2987
        %v3731 = vsel %vm3704, %v3698, %v2989
        %v3732 = vsel %vm3704, %v3699, %v2991
        %v3733 = vsel %vm3704, %v3700, %v2993
        %v3734 = vsel %vm3704, %v3701, %v2995
        %v3735 = vsel %vm3704, %v3702, %v2997
        %v3736 = vsel %vm3704, %v3703, %v2999
        %vm3737 = vcmask 392192
        %v3738 = vsel %vm3737, %v3705, %v3065
        %v3739 = vsel %vm3737, %v3706, %v3067
        %v3740 = vsel %vm3737, %v3707, %v3069
        %v3741 = vsel %vm3737, %v3708, %v3071
        %v3742 = vsel %vm3737, %v3709, %v3073
        %v3743 = vsel %vm3737, %v3710, %v3075
        %v3744 = vsel %vm3737, %v3711, %v3077
        %v3745 = vsel %vm3737, %v3712, %v3079
        %v3746 = vsel %vm3737, %v3713, %v3081
        %v3747 = vsel %vm3737, %v3714, %v3083
        %v3748 = vsel %vm3737, %v3715, %v3085
        %v3749 = vsel %vm3737, %v3716, %v3087
        %v3750 = vsel %vm3737, %v3717, %v3089
        %v3751 = vsel %vm3737, %v3718, %v3091
        %v3752 = vsel %vm3737, %v3719, %v3093
        %v3753 = vsel %vm3737, %v3720, %v3095
        %v3754 = vsel %vm3737, %v3721, %v3097
        %v3755 = vsel %vm3737, %v3722, %v3099
        %v3756 = vsel %vm3737, %v3723, %v3101
        %v3757 = vsel %vm3737, %v3724, %v3103
        %v3758 = vsel %vm3737, %v3725, %v3105
        %v3759 = vsel %vm3737, %v3726, %v3107
        %v3760 = vsel %vm3737, %v3727, %v3109
        %v3761 = vsel %vm3737, %v3728, %v3111
        %v3762 = vsel %vm3737, %v3729, %v3113
        %v3763 = vsel %vm3737, %v3730, %v3115
        %v3764 = vsel %vm3737, %v3731, %v3117
        %v3765 = vsel %vm3737, %v3732, %v3119
        %v3766 = vsel %vm3737, %v3733, %v3121
        %v3767 = vsel %vm3737, %v3734, %v3123
        %v3768 = vsel %vm3737, %v3735, %v3125
        %v3769 = vsel %vm3737, %v3736, %v3127
        %vm3770 = vcmask 523264
        %v3771 = vsel %vm3770, %v3738, %v3193
        %v3772 = vsel %vm3770, %v3739, %v3195
        %v3773 = vsel %vm3770, %v3740, %v3197
        %v3774 = vsel %vm3770, %v3741, %v3199
        %v3775 = vsel %vm3770, %v3742, %v3201
        %v3776 = vsel %vm3770, %v3743, %v3203
        %v3777 = vsel %vm3770, %v3744, %v3205
        %v3778 = vsel %vm3770, %v3745, %v3207
        %v3779 = vsel %vm3770, %v3746, %v3209
        %v3780 = vsel %vm3770, %v3747, %v3211
        %v3781 = vsel %vm3770, %v3748, %v3213
        %v3782 = vsel %vm3770, %v3749, %v3215
        %v3783 = vsel %vm3770, %v3750, %v3217
        %v3784 = vsel %vm3770, %v3751, %v3219
        %v3785 = vsel %vm3770, %v3752, %v3221
        %v3786 = vsel %vm3770, %v3753, %v3223
        %v3787 = vsel %vm3770, %v3754, %v3225
        %v3788 = vsel %vm3770, %v3755, %v3227
        %v3789 = vsel %vm3770, %v3756, %v3229
        %v3790 = vsel %vm3770, %v3757, %v3231
        %v3791 = vsel %vm3770, %v3758, %v3233
        %v3792 = vsel %vm3770, %v3759, %v3235
        %v3793 = vsel %vm3770, %v3760, %v3237
        %v3794 = vsel %vm3770, %v3761, %v3239
        %v3795 = vsel %vm3770, %v3762, %v3241
        %v3796 = vsel %vm3770, %v3763, %v3243
        %v3797 = vsel %vm3770, %v3764, %v3245
        %v3798 = vsel %vm3770, %v3765, %v3247
        %v3799 = vsel %vm3770, %v3766, %v3249
        %v3800 = vsel %vm3770, %v3767, %v3251
        %v3801 = vsel %vm3770, %v3768, %v3253
        %v3802 = vsel %vm3770, %v3769, %v3255
        %vm3803 = vcmask 654336
        %v3804 = vsel %vm3803, %v3771, %v3321
        %v3805 = vsel %vm3803, %v3772, %v3323
        %v3806 = vsel %vm3803, %v3773, %v3325
        %v3807 = vsel %vm3803, %v3774, %v3327
        %v3808 = vsel %vm3803, %v3775, %v3329
        %v3809 = vsel %vm3803, %v3776, %v3331
        %v3810 = vsel %vm3803, %v3777, %v3333
        %v3811 = vsel %vm3803, %v3778, %v3335
        %v3812 = vsel %vm3803, %v3779, %v3337
        %v3813 = vsel %vm3803, %v3780, %v3339
        %v3814 = vsel %vm3803, %v3781, %v3341
        %v3815 = vsel %vm3803, %v3782, %v3343
        %v3816 = vsel %vm3803, %v3783, %v3345
        %v3817 = vsel %vm3803, %v3784, %v3347
        %v3818 = vsel %vm3803, %v3785, %v3349
        %v3819 = vsel %vm3803, %v3786, %v3351
        %v3820 = vsel %vm3803, %v3787, %v3353
        %v3821 = vsel %vm3803, %v3788, %v3355
        %v3822 = vsel %vm3803, %v3789, %v3357
        %v3823 = vsel %vm3803, %v3790, %v3359
        %v3824 = vsel %vm3803, %v3791, %v3361
        %v3825 = vsel %vm3803, %v3792, %v3363
        %v3826 = vsel %vm3803, %v3793, %v3365
        %v3827 = vsel %vm3803, %v3794, %v3367
        %v3828 = vsel %vm3803, %v3795, %v3369
        %v3829 = vsel %vm3803, %v3796, %v3371
        %v3830 = vsel %vm3803, %v3797, %v3373
        %v3831 = vsel %vm3803, %v3798, %v3375
        %v3832 = vsel %vm3803, %v3799, %v3377
        %v3833 = vsel %vm3803, %v3800, %v3379
        %v3834 = vsel %vm3803, %v3801, %v3381
        %v3835 = vsel %vm3803, %v3802, %v3383
        %vm3836 = vcmask 785408
        %v3837 = vsel %vm3836, %v3804, %v3449
        %v3838 = vsel %vm3836, %v3805, %v3451
        %v3839 = vsel %vm3836, %v3806, %v3453
        %v3840 = vsel %vm3836, %v3807, %v3455
        %v3841 = vsel %vm3836, %v3808, %v3457
        %v3842 = vsel %vm3836, %v3809, %v3459
        %v3843 = vsel %vm3836, %v3810, %v3461
        %v3844 = vsel %vm3836, %v3811, %v3463
        %v3845 = vsel %vm3836, %v3812, %v3465
        %v3846 = vsel %vm3836, %v3813, %v3467
        %v3847 = vsel %vm3836, %v3814, %v3469
        %v3848 = vsel %vm3836, %v3815, %v3471
        %v3849 = vsel %vm3836, %v3816, %v3473
        %v3850 = vsel %vm3836, %v3817, %v3475
        %v3851 = vsel %vm3836, %v3818, %v3477
        %v3852 = vsel %vm3836, %v3819, %v3479
        %v3853 = vsel %vm3836, %v3820, %v3481
        %v3854 = vsel %vm3836, %v3821, %v3483
        %v3855 = vsel %vm3836, %v3822, %v3485
        %v3856 = vsel %vm3836, %v3823, %v3487
        %v3857 = vsel %vm3836, %v3824, %v3489
        %v3858 = vsel %vm3836, %v3825, %v3491
        %v3859 = vsel %vm3836, %v3826, %v3493
        %v3860 = vsel %vm3836, %v3827, %v3495
        %v3861 = vsel %vm3836, %v3828, %v3497
        %v3862 = vsel %vm3836, %v3829, %v3499
        %v3863 = vsel %vm3836, %v3830, %v3501
        %v3864 = vsel %vm3836, %v3831, %v3503
        %v3865 = vsel %vm3836, %v3832, %v3505
        %v3866 = vsel %vm3836, %v3833, %v3507
        %v3867 = vsel %vm3836, %v3834, %v3509
        %v3868 = vsel %vm3836, %v3835, %v3511
        %vm3869 = vcmask 916480
        %v3870 = vsel %vm3869, %v3837, %v3577
        %v3871 = vsel %vm3869, %v3838, %v3579
        %v3872 = vsel %vm3869, %v3839, %v3581
        %v3873 = vsel %vm3869, %v3840, %v3583
        %v3874 = vsel %vm3869, %v3841, %v3585
        %v3875 = vsel %vm3869, %v3842, %v3587
        %v3876 = vsel %vm3869, %v3843, %v3589
        %v3877 = vsel %vm3869, %v3844, %v3591
        %v3878 = vsel %vm3869, %v3845, %v3593
        %v3879 = vsel %vm3869, %v3846, %v3595
        %v3880 = vsel %vm3869, %v3847, %v3597
        %v3881 = vsel %vm3869, %v3848, %v3599
        %v3882 = vsel %vm3869, %v3849, %v3601
        %v3883 = vsel %vm3869, %v3850, %v3603
        %v3884 = vsel %vm3869, %v3851, %v3605
        %v3885 = vsel %vm3869, %v3852, %v3607
        %v3886 = vsel %vm3869, %v3853, %v3609
        %v3887 = vsel %vm3869, %v3854, %v3611
        %v3888 = vsel %vm3869, %v3855, %v3613
        %v3889 = vsel %vm3869, %v3856, %v3615
        %v3890 = vsel %vm3869, %v3857, %v3617
        %v3891 = vsel %vm3869, %v3858, %v3619
        %v3892 = vsel %vm3869, %v3859, %v3621
        %v3893 = vsel %vm3869, %v3860, %v3623
        %v3894 = vsel %vm3869, %v3861, %v3625
        %v3895 = vsel %vm3869, %v3862, %v3627
        %v3896 = vsel %vm3869, %v3863, %v3629
        %v3897 = vsel %vm3869, %v3864, %v3631
        %v3898 = vsel %vm3869, %v3865, %v3633
        %v3899 = vsel %vm3869, %v3866, %v3635
        %v3900 = vsel %vm3869, %v3867, %v3637
        %v3901 = vsel %vm3869, %v3868, %v3639
        %v3902 = vld [vmem:[#allocation20] sm:$0xff]
        %v3903 = vld [vmem:[#allocation20 + $0x8] sm:$0xff]
        %v3904 = vld [vmem:[#allocation20 + $0x10] sm:$0xff]
        %v3905 = vld [vmem:[#allocation20 + $0x18] sm:$0xff]
        %v3906 = vld [vmem:[#allocation20 + $0x20] sm:$0xff]
        %v3907 = vld [vmem:[#allocation20 + $0x28] sm:$0xff]
        %v3908 = vld [vmem:[#allocation20 + $0x30] sm:$0xff]
        %v3909 = vld [vmem:[#allocation20 + $0x38] sm:$0xff]
        %v3910 = vld [vmem:[#allocation20 + $0x40] sm:$0xff]
        %v3911 = vld [vmem:[#allocation20 + $0x48] sm:$0xff]
        %v3912 = vld [vmem:[#allocation20 + $0x50] sm:$0xff]
        %v3913 = vld [vmem:[#allocation20 + $0x58] sm:$0xff]
        %v3914 = vld [vmem:[#allocation20 + $0x60] sm:$0xff]
        %v3915 = vld [vmem:[#allocation20 + $0x68] sm:$0xff]
        %v3916 = vld [vmem:[#allocation20 + $0x70] sm:$0xff]
        %v3917 = vld [vmem:[#allocation20 + $0x78] sm:$0xff]
        %v3918 = vld [vmem:[#allocation20 + $0x80] sm:$0xff]
        %v3919 = vld [vmem:[#allocation20 + $0x88] sm:$0xff]
        %v3920 = vld [vmem:[#allocation22] sm:$0x1]
        %v3922 = vlaneseq
        %v3923 = vshrl.u32 %v3922, 7
        %v3924 = vsub.s32 0, %v3923
        %v3925 = vrot.slane %v3920, %v3924
        %v3928 = vsel %vm943, %v2744, 0
        %v3931 = vsel %vm943, %v2745, 0
        %v3934 = vsel %vm943, %v2746, 0
        %v3937 = vsel %vm943, %v2747, 0
        %v3940 = vsel %vm943, %v2748, 0
        %v3943 = vsel %vm943, %v2749, 0
        %v3946 = vsel %vm943, %v2750, 0
        %v3949 = vsel %vm943, %v2751, 0
        %v3952 = vsel %vm943, %v2752, 0
        %v3955 = vsel %vm943, %v2753, 0
        %v3958 = vsel %vm943, %v2754, 0
        %v3961 = vsel %vm943, %v2755, 0
        %v3964 = vsel %vm943, %v2756, 0
        %v3967 = vsel %vm943, %v2757, 0
        %v3970 = vsel %vm943, %v2758, 0
        %v3973 = vsel %vm943, %v2759, 0
        %v3976 = vsel %vm943, %v2760, 0
        %v3979 = vsel %vm943, %v2761, 0
        %v3982 = vsel %vm943, %v2762, 0
        %v3985 = vsel %vm943, %v2763, 0
        %v3988 = vsel %vm943, %v2764, 0
        %v3991 = vsel %vm943, %v2765, 0
        %v3994 = vsel %vm943, %v2766, 0
        %v3997 = vsel %vm943, %v2767, 0
        %v4000 = vsel %vm943, %v2768, 0
        %v4003 = vsel %vm943, %v2769, 0
        %v4006 = vsel %vm943, %v2770, 0
        %v4009 = vsel %vm943, %v2771, 0
        %v4012 = vsel %vm943, %v2772, 0
        %v4015 = vsel %vm943, %v2773, 0
        %v4018 = vsel %vm943, %v2774, 0
        %v4021 = vsel %vm943, %v2775, 0
        %4023 = vmatprep.subr.mxu0 0.0
        %4024 = vmatpush1.msra.mxu0 %v3902
        %4025 = vmatprep.subr.mxu0 0.0
        %4026 = vmatpush1.msra.mxu0 %v3903
        %4027 = vmatprep.subr.mxu0 0.0
        %4028 = vmatpush1.msra.mxu0 %v3904
        %4029 = vmatprep.subr.mxu0 0.0
        %4030 = vmatpush1.msra.mxu0 %v3905
        %4031 = vmatprep.subr.mxu0 0.0
        %4032 = vmatpush1.msra.mxu0 %v3906
        %4033 = vmatprep.subr.mxu0 0.0
        %4034 = vmatpush1.msra.mxu0 %v3907
        %4035 = vmatprep.subr.mxu0 0.0
        %4036 = vmatpush1.msra.mxu0 %v3908
        %4037 = vmatprep.subr.mxu0 0.0
        %4038 = vmatpush1.msra.mxu0 %v3909
        %4039 = vmatprep.subr.mxu0 0.0
        %4040 = vmatpush1.msra.mxu0 %v3910
        %4041 = vmatprep.subr.mxu0 0.0
        %4042 = vmatpush1.msra.mxu0 %v3911
        %4043 = vmatprep.subr.mxu0 0.0
        %4044 = vmatpush1.msra.mxu0 %v3912
        %4045 = vmatprep.subr.mxu0 0.0
        %4046 = vmatpush1.msra.mxu0 %v3913
        %4047 = vmatprep.subr.mxu0 0.0
        %4048 = vmatpush1.msra.mxu0 %v3914
        %4049 = vmatprep.subr.mxu0 0.0
        %4050 = vmatpush1.msra.mxu0 %v3915
        %4051 = vmatprep.subr.mxu0 0.0
        %4052 = vmatpush1.msra.mxu0 %v3916
        %4053 = vmatprep.subr.mxu0 0.0
        %4054 = vmatpush1.msra.mxu0 %v3917
        %4055 = vmatprep.subr.mxu0 0.0
        %4056 = vmatpush1.msra.mxu0 %v3918
        %4057 = vmatprep.subr.mxu0 0.0
        %4058 = vmatpush1.msra.mxu0 %v3919
        %4059 = vmatprep.subr.mxu0 0.0
        %4060 = vmatpush1.msra.mxu0 0.0
        %4061 = vmatprep.subr.mxu0 0.0
        %4062 = vmatpush1.msra.mxu0 0.0
        %4063 = vmatprep.subr.mxu0 0.0
        %4064 = vmatpush1.msra.mxu0 0.0
        %4065 = vmatprep.subr.mxu0 0.0
        %4066 = vmatpush1.msra.mxu0 0.0
        %4067 = vmatprep.subr.mxu0 0.0
        %4068 = vmatpush1.msra.mxu0 0.0
        %4069 = vmatprep.subr.mxu0 0.0
        %4070 = vmatpush1.msra.mxu0 0.0
        %4071 = vmatprep.subr.mxu0 0.0
        %4072 = vmatpush1.msra.mxu0 0.0
        %4073 = vmatprep.subr.mxu0 0.0
        %4074 = vmatpush1.msra.mxu0 0.0
        %4075 = vmatprep.subr.mxu0 0.0
        %4076 = vmatpush1.msra.mxu0 0.0
        %4077 = vmatprep.subr.mxu0 0.0
        %4078 = vmatpush1.msra.mxu0 0.0
        %4079 = vmatprep.subr.mxu0 0.0
        %4080 = vmatpush1.msra.mxu0 0.0
        %4081 = vmatprep.subr.mxu0 0.0
        %4082 = vmatpush1.msra.mxu0 0.0
        %4083 = vmatprep.subr.mxu0 0.0
        %4084 = vmatpush1.msra.mxu0 0.0
        %4085 = vmatprep.subr.mxu0 0.0
        %4086 = vmatpush1.msra.mxu0 0.0
        %4087 = vmatprep.mubr.f32.mxu0 %v3928
        %4088 = vmatmul.mubr.f32.gmra.mrb[0].mxu0 %v3870
        %v4089 = vpop.f32.mrb[0].mxu0
        %v4090 = vadd.f32 %v3925, %v4089
        %v4091 = vpop.f32.mrb[0].mxu0
        %4092 = vmatprep.mubr.f32.mxu0 %v3931
        %4093 = vmatmul.mubr.f32.gmra.mrb[0].mxu0 %v3871
        %v4094 = vpop.f32.mrb[0].mxu0
        %v4095 = vadd.f32 %v3925, %v4094
        %v4096 = vpop.f32.mrb[0].mxu0
        %4097 = vmatprep.mubr.f32.mxu0 %v3934
        %4098 = vmatmul.mubr.f32.gmra.mrb[0].mxu0 %v3872
        %v4099 = vpop.f32.mrb[0].mxu0
        %v4100 = vadd.f32 %v3925, %v4099
        %v4101 = vpop.f32.mrb[0].mxu0
        %4102 = vmatprep.mubr.f32.mxu0 %v3937
        %4103 = vmatmul.mubr.f32.gmra.mrb[0].mxu0 %v3873
        %v4104 = vpop.f32.mrb[0].mxu0
        %v4105 = vadd.f32 %v3925, %v4104
        %v4106 = vpop.f32.mrb[0].mxu0
        %4107 = vmatprep.mubr.f32.mxu0 %v3940
        %4108 = vmatmul.mubr.f32.gmra.mrb[0].mxu0 %v3874
        %v4109 = vpop.f32.mrb[0].mxu0
        %v4110 = vadd.f32 %v3925, %v4109
        %v4111 = vpop.f32.mrb[0].mxu0
        %4112 = vmatprep.mubr.f32.mxu0 %v3943
        %4113 = vmatmul.mubr.f32.gmra.mrb[0].mxu0 %v3875
        %v4114 = vpop.f32.mrb[0].mxu0
        %v4115 = vadd.f32 %v3925, %v4114
        %v4116 = vpop.f32.mrb[0].mxu0
        %4117 = vmatprep.mubr.f32.mxu0 %v3946
        %4118 = vmatmul.mubr.f32.gmra.mrb[0].mxu0 %v3876
        %v4119 = vpop.f32.mrb[0].mxu0
        %v4120 = vadd.f32 %v3925, %v4119
        %v4121 = vpop.f32.mrb[0].mxu0
        %4122 = vmatprep.mubr.f32.mxu0 %v3949
        %4123 = vmatmul.mubr.f32.gmra.mrb[0].mxu0 %v3877
        %v4124 = vpop.f32.mrb[0].mxu0
        %v4125 = vadd.f32 %v3925, %v4124
        %v4126 = vpop.f32.mrb[0].mxu0
        %4127 = vmatprep.mubr.f32.mxu0 %v3952
        %4128 = vmatmul.mubr.f32.gmra.mrb[0].mxu0 %v3878
        %v4129 = vpop.f32.mrb[0].mxu0
        %v4130 = vadd.f32 %v3925, %v4129
        %v4131 = vpop.f32.mrb[0].mxu0
        %4132 = vmatprep.mubr.f32.mxu0 %v3955
        %4133 = vmatmul.mubr.f32.gmra.mrb[0].mxu0 %v3879
        %v4134 = vpop.f32.mrb[0].mxu0
        %v4135 = vadd.f32 %v3925, %v4134
        %v4136 = vpop.f32.mrb[0].mxu0
        %4137 = vmatprep.mubr.f32.mxu0 %v3958
        %4138 = vmatmul.mubr.f32.gmra.mrb[0].mxu0 %v3880
        %v4139 = vpop.f32.mrb[0].mxu0
        %v4140 = vadd.f32 %v3925, %v4139
        %v4141 = vpop.f32.mrb[0].mxu0
        %4142 = vmatprep.mubr.f32.mxu0 %v3961
        %4143 = vmatmul.mubr.f32.gmra.mrb[0].mxu0 %v3881
        %v4144 = vpop.f32.mrb[0].mxu0
        %v4145 = vadd.f32 %v3925, %v4144
        %v4146 = vpop.f32.mrb[0].mxu0
        %4147 = vmatprep.mubr.f32.mxu0 %v3964
        %4148 = vmatmul.mubr.f32.gmra.mrb[0].mxu0 %v3882
        %v4149 = vpop.f32.mrb[0].mxu0
        %v4150 = vadd.f32 %v3925, %v4149
        %v4151 = vpop.f32.mrb[0].mxu0
        %4152 = vmatprep.mubr.f32.mxu0 %v3967
        %4153 = vmatmul.mubr.f32.gmra.mrb[0].mxu0 %v3883
        %v4154 = vpop.f32.mrb[0].mxu0
        %v4155 = vadd.f32 %v3925, %v4154
        %v4156 = vpop.f32.mrb[0].mxu0
        %4157 = vmatprep.mubr.f32.mxu0 %v3970
        %4158 = vmatmul.mubr.f32.gmra.mrb[0].mxu0 %v3884
        %v4159 = vpop.f32.mrb[0].mxu0
        %v4160 = vadd.f32 %v3925, %v4159
        %v4161 = vpop.f32.mrb[0].mxu0
        %4162 = vmatprep.mubr.f32.mxu0 %v3973
        %4163 = vmatmul.mubr.f32.gmra.mrb[0].mxu0 %v3885
        %v4164 = vpop.f32.mrb[0].mxu0
        %v4165 = vadd.f32 %v3925, %v4164
        %v4166 = vpop.f32.mrb[0].mxu0
        %4167 = vmatprep.mubr.f32.mxu0 %v3976
        %4168 = vmatmul.mubr.f32.gmra.mrb[0].mxu0 %v3886
        %v4169 = vpop.f32.mrb[0].mxu0
        %v4170 = vadd.f32 %v3925, %v4169
        %v4171 = vpop.f32.mrb[0].mxu0
        %4172 = vmatprep.mubr.f32.mxu0 %v3979
        %4173 = vmatmul.mubr.f32.gmra.mrb[0].mxu0 %v3887
        %v4174 = vpop.f32.mrb[0].mxu0
        %v4175 = vadd.f32 %v3925, %v4174
        %v4176 = vpop.f32.mrb[0].mxu0
        %4177 = vmatprep.mubr.f32.mxu0 %v3982
        %4178 = vmatmul.mubr.f32.gmra.mrb[0].mxu0 %v3888
        %v4179 = vpop.f32.mrb[0].mxu0
        %v4180 = vadd.f32 %v3925, %v4179
        %v4181 = vpop.f32.mrb[0].mxu0
        %4182 = vmatprep.mubr.f32.mxu0 %v3985
        %4183 = vmatmul.mubr.f32.gmra.mrb[0].mxu0 %v3889
        %v4184 = vpop.f32.mrb[0].mxu0
        %v4185 = vadd.f32 %v3925, %v4184
        %v4186 = vpop.f32.mrb[0].mxu0
        %4187 = vmatprep.mubr.f32.mxu0 %v3988
        %4188 = vmatmul.mubr.f32.gmra.mrb[0].mxu0 %v3890
        %v4189 = vpop.f32.mrb[0].mxu0
        %v4190 = vadd.f32 %v3925, %v4189
        %v4191 = vpop.f32.mrb[0].mxu0
        %4192 = vmatprep.mubr.f32.mxu0 %v3991
        %4193 = vmatmul.mubr.f32.gmra.mrb[0].mxu0 %v3891
        %v4194 = vpop.f32.mrb[0].mxu0
        %v4195 = vadd.f32 %v3925, %v4194
        %v4196 = vpop.f32.mrb[0].mxu0
        %4197 = vmatprep.mubr.f32.mxu0 %v3994
        %4198 = vmatmul.mubr.f32.gmra.mrb[0].mxu0 %v3892
        %v4199 = vpop.f32.mrb[0].mxu0
        %v4200 = vadd.f32 %v3925, %v4199
        %v4201 = vpop.f32.mrb[0].mxu0
        %4202 = vmatprep.mubr.f32.mxu0 %v3997
        %4203 = vmatmul.mubr.f32.gmra.mrb[0].mxu0 %v3893
        %v4204 = vpop.f32.mrb[0].mxu0
        %v4205 = vadd.f32 %v3925, %v4204
        %v4206 = vpop.f32.mrb[0].mxu0
        %4207 = vmatprep.mubr.f32.mxu0 %v4000
        %4208 = vmatmul.mubr.f32.gmra.mrb[0].mxu0 %v3894
        %v4209 = vpop.f32.mrb[0].mxu0
        %v4210 = vadd.f32 %v3925, %v4209
        %v4211 = vpop.f32.mrb[0].mxu0
        %4212 = vmatprep.mubr.f32.mxu0 %v4003
        %4213 = vmatmul.mubr.f32.gmra.mrb[0].mxu0 %v3895
        %v4214 = vpop.f32.mrb[0].mxu0
        %v4215 = vadd.f32 %v3925, %v4214
        %v4216 = vpop.f32.mrb[0].mxu0
        %4217 = vmatprep.mubr.f32.mxu0 %v4006
        %4218 = vmatmul.mubr.f32.gmra.mrb[0].mxu0 %v3896
        %v4219 = vpop.f32.mrb[0].mxu0
        %v4220 = vadd.f32 %v3925, %v4219
        %v4221 = vpop.f32.mrb[0].mxu0
        %4222 = vmatprep.mubr.f32.mxu0 %v4009
        %4223 = vmatmul.mubr.f32.gmra.mrb[0].mxu0 %v3897
        %v4224 = vpop.f32.mrb[0].mxu0
        %v4225 = vadd.f32 %v3925, %v4224
        %v4226 = vpop.f32.mrb[0].mxu0
        %4227 = vmatprep.mubr.f32.mxu0 %v4012
        %4228 = vmatmul.mubr.f32.gmra.mrb[0].mxu0 %v3898
        %v4229 = vpop.f32.mrb[0].mxu0
        %v4230 = vadd.f32 %v3925, %v4229
        %v4231 = vpop.f32.mrb[0].mxu0
        %4232 = vmatprep.mubr.f32.mxu0 %v4015
        %4233 = vmatmul.mubr.f32.gmra.mrb[0].mxu0 %v3899
        %v4234 = vpop.f32.mrb[0].mxu0
        %v4235 = vadd.f32 %v3925, %v4234
        %v4236 = vpop.f32.mrb[0].mxu0
        %4237 = vmatprep.mubr.f32.mxu0 %v4018
        %4238 = vmatmul.mubr.f32.gmra.mrb[0].mxu0 %v3900
        %v4239 = vpop.f32.mrb[0].mxu0
        %v4240 = vadd.f32 %v3925, %v4239
        %v4241 = vpop.f32.mrb[0].mxu0
        %4242 = vmatprep.mubr.f32.mxu0 %v4021
        %4243 = vmatmul.mubr.f32.gmra.mrb[0].mxu0 %v3901
        %v4244 = vpop.f32.mrb[0].mxu0
        %v4245 = vadd.f32 %v3925, %v4244
        %v4246 = vpop.f32.mrb[0].mxu0
        %4247 = vdwg.mxu0
        %v4248 = vmul.f32 %v4090, 0.5
        %v4249 = vmul.f32 %v4095, 0.5
        %v4250 = vmul.f32 %v4100, 0.5
        %v4251 = vmul.f32 %v4105, 0.5
        %v4252 = vmul.f32 %v4110, 0.5
        %v4253 = vmul.f32 %v4115, 0.5
        %v4254 = vmul.f32 %v4120, 0.5
        %v4255 = vmul.f32 %v4125, 0.5
        %v4256 = vmul.f32 %v4130, 0.5
        %v4257 = vmul.f32 %v4135, 0.5
        %v4258 = vmul.f32 %v4140, 0.5
        %v4259 = vmul.f32 %v4145, 0.5
        %v4260 = vmul.f32 %v4150, 0.5
        %v4261 = vmul.f32 %v4155, 0.5
        %v4262 = vmul.f32 %v4160, 0.5
        %v4263 = vmul.f32 %v4165, 0.5
        %v4264 = vmul.f32 %v4170, 0.5
        %v4265 = vmul.f32 %v4175, 0.5
        %v4266 = vmul.f32 %v4180, 0.5
        %v4267 = vmul.f32 %v4185, 0.5
        %v4268 = vmul.f32 %v4190, 0.5
        %v4269 = vmul.f32 %v4195, 0.5
        %v4270 = vmul.f32 %v4200, 0.5
        %v4271 = vmul.f32 %v4205, 0.5
        %v4272 = vmul.f32 %v4210, 0.5
        %v4273 = vmul.f32 %v4215, 0.5
        %v4274 = vmul.f32 %v4220, 0.5
        %v4275 = vmul.f32 %v4225, 0.5
        %v4276 = vmul.f32 %v4230, 0.5
        %v4277 = vmul.f32 %v4235, 0.5
        %v4278 = vmul.f32 %v4240, 0.5
        %v4279 = vmul.f32 %v4245, 0.5
        %v4280 = vmul.f32 %v4090, 0.044715
        %v4281 = vmul.f32 %v4095, 0.044715
        %v4282 = vmul.f32 %v4100, 0.044715
        %v4283 = vmul.f32 %v4105, 0.044715
        %v4284 = vmul.f32 %v4110, 0.044715
        %v4285 = vmul.f32 %v4115, 0.044715
        %v4286 = vmul.f32 %v4120, 0.044715
        %v4287 = vmul.f32 %v4125, 0.044715
        %v4288 = vmul.f32 %v4130, 0.044715
        %v4289 = vmul.f32 %v4135, 0.044715
        %v4290 = vmul.f32 %v4140, 0.044715
        %v4291 = vmul.f32 %v4145, 0.044715
        %v4292 = vmul.f32 %v4150, 0.044715
        %v4293 = vmul.f32 %v4155, 0.044715
        %v4294 = vmul.f32 %v4160, 0.044715
        %v4295 = vmul.f32 %v4165, 0.044715
        %v4296 = vmul.f32 %v4170, 0.044715
        %v4297 = vmul.f32 %v4175, 0.044715
        %v4298 = vmul.f32 %v4180, 0.044715
        %v4299 = vmul.f32 %v4185, 0.044715
        %v4300 = vmul.f32 %v4190, 0.044715
        %v4301 = vmul.f32 %v4195, 0.044715
        %v4302 = vmul.f32 %v4200, 0.044715
        %v4303 = vmul.f32 %v4205, 0.044715
        %v4304 = vmul.f32 %v4210, 0.044715
        %v4305 = vmul.f32 %v4215, 0.044715
        %v4306 = vmul.f32 %v4220, 0.044715
        %v4307 = vmul.f32 %v4225, 0.044715
        %v4308 = vmul.f32 %v4230, 0.044715
        %v4309 = vmul.f32 %v4235, 0.044715
        %v4310 = vmul.f32 %v4240, 0.044715
        %v4311 = vmul.f32 %v4245, 0.044715
        %v4312 = vmul.f32 %v4280, %v4090
        %v4313 = vmul.f32 %v4281, %v4095
        %v4314 = vmul.f32 %v4282, %v4100
        %v4315 = vmul.f32 %v4283, %v4105
        %v4316 = vmul.f32 %v4284, %v4110
        %v4317 = vmul.f32 %v4285, %v4115
        %v4318 = vmul.f32 %v4286, %v4120
        %v4319 = vmul.f32 %v4287, %v4125
        %v4320 = vmul.f32 %v4288, %v4130
        %v4321 = vmul.f32 %v4289, %v4135
        %v4322 = vmul.f32 %v4290, %v4140
        %v4323 = vmul.f32 %v4291, %v4145
        %v4324 = vmul.f32 %v4292, %v4150
        %v4325 = vmul.f32 %v4293, %v4155
        %v4326 = vmul.f32 %v4294, %v4160
        %v4327 = vmul.f32 %v4295, %v4165
        %v4328 = vmul.f32 %v4296, %v4170
        %v4329 = vmul.f32 %v4297, %v4175
        %v4330 = vmul.f32 %v4298, %v4180
        %v4331 = vmul.f32 %v4299, %v4185
        %v4332 = vmul.f32 %v4300, %v4190
        %v4333 = vmul.f32 %v4301, %v4195
        %v4334 = vmul.f32 %v4302, %v4200
        %v4335 = vmul.f32 %v4303, %v4205
        %v4336 = vmul.f32 %v4304, %v4210
        %v4337 = vmul.f32 %v4305, %v4215
        %v4338 = vmul.f32 %v4306, %v4220
        %v4339 = vmul.f32 %v4307, %v4225
        %v4340 = vmul.f32 %v4308, %v4230
        %v4341 = vmul.f32 %v4309, %v4235
        %v4342 = vmul.f32 %v4310, %v4240
        %v4343 = vmul.f32 %v4311, %v4245
        %v4344 = vmul.f32 %v4312, %v4090
        %v4345 = vmul.f32 %v4313, %v4095
        %v4346 = vmul.f32 %v4314, %v4100
        %v4347 = vmul.f32 %v4315, %v4105
        %v4348 = vmul.f32 %v4316, %v4110
        %v4349 = vmul.f32 %v4317, %v4115
        %v4350 = vmul.f32 %v4318, %v4120
        %v4351 = vmul.f32 %v4319, %v4125
        %v4352 = vmul.f32 %v4320, %v4130
        %v4353 = vmul.f32 %v4321, %v4135
        %v4354 = vmul.f32 %v4322, %v4140
        %v4355 = vmul.f32 %v4323, %v4145
        %v4356 = vmul.f32 %v4324, %v4150
        %v4357 = vmul.f32 %v4325, %v4155
        %v4358 = vmul.f32 %v4326, %v4160
        %v4359 = vmul.f32 %v4327, %v4165
        %v4360 = vmul.f32 %v4328, %v4170
        %v4361 = vmul.f32 %v4329, %v4175
        %v4362 = vmul.f32 %v4330, %v4180
        %v4363 = vmul.f32 %v4331, %v4185
        %v4364 = vmul.f32 %v4332, %v4190
        %v4365 = vmul.f32 %v4333, %v4195
        %v4366 = vmul.f32 %v4334, %v4200
        %v4367 = vmul.f32 %v4335, %v4205
        %v4368 = vmul.f32 %v4336, %v4210
        %v4369 = vmul.f32 %v4337, %v4215
        %v4370 = vmul.f32 %v4338, %v4220
        %v4371 = vmul.f32 %v4339, %v4225
        %v4372 = vmul.f32 %v4340, %v4230
        %v4373 = vmul.f32 %v4341, %v4235
        %v4374 = vmul.f32 %v4342, %v4240
        %v4375 = vmul.f32 %v4343, %v4245
        %v4376 = vadd.f32 %v4090, %v4344
        %v4377 = vadd.f32 %v4095, %v4345
        %v4378 = vadd.f32 %v4100, %v4346
        %v4379 = vadd.f32 %v4105, %v4347
        %v4380 = vadd.f32 %v4110, %v4348
        %v4381 = vadd.f32 %v4115, %v4349
        %v4382 = vadd.f32 %v4120, %v4350
        %v4383 = vadd.f32 %v4125, %v4351
        %v4384 = vadd.f32 %v4130, %v4352
        %v4385 = vadd.f32 %v4135, %v4353
        %v4386 = vadd.f32 %v4140, %v4354
        %v4387 = vadd.f32 %v4145, %v4355
        %v4388 = vadd.f32 %v4150, %v4356
        %v4389 = vadd.f32 %v4155, %v4357
        %v4390 = vadd.f32 %v4160, %v4358
        %v4391 = vadd.f32 %v4165, %v4359
        %v4392 = vadd.f32 %v4170, %v4360
        %v4393 = vadd.f32 %v4175, %v4361
        %v4394 = vadd.f32 %v4180, %v4362
        %v4395 = vadd.f32 %v4185, %v4363
        %v4396 = vadd.f32 %v4190, %v4364
        %v4397 = vadd.f32 %v4195, %v4365
        %v4398 = vadd.f32 %v4200, %v4366
        %v4399 = vadd.f32 %v4205, %v4367
        %v4400 = vadd.f32 %v4210, %v4368
        %v4401 = vadd.f32 %v4215, %v4369
        %v4402 = vadd.f32 %v4220, %v4370
        %v4403 = vadd.f32 %v4225, %v4371
        %v4404 = vadd.f32 %v4230, %v4372
        %v4405 = vadd.f32 %v4235, %v4373
        %v4406 = vadd.f32 %v4240, %v4374
        %v4407 = vadd.f32 %v4245, %v4375
        %v4408 = vmul.f32 %v4376, 0.7978846
        %v4409 = vmul.f32 %v4377, 0.7978846
        %v4410 = vmul.f32 %v4378, 0.7978846
        %v4411 = vmul.f32 %v4379, 0.7978846
        %v4412 = vmul.f32 %v4380, 0.7978846
        %v4413 = vmul.f32 %v4381, 0.7978846
        %v4414 = vmul.f32 %v4382, 0.7978846
        %v4415 = vmul.f32 %v4383, 0.7978846
        %v4416 = vmul.f32 %v4384, 0.7978846
        %v4417 = vmul.f32 %v4385, 0.7978846
        %v4418 = vmul.f32 %v4386, 0.7978846
        %v4419 = vmul.f32 %v4387, 0.7978846
        %v4420 = vmul.f32 %v4388, 0.7978846
        %v4421 = vmul.f32 %v4389, 0.7978846
        %v4422 = vmul.f32 %v4390, 0.7978846
        %v4423 = vmul.f32 %v4391, 0.7978846
        %v4424 = vmul.f32 %v4392, 0.7978846
        %v4425 = vmul.f32 %v4393, 0.7978846
        %v4426 = vmul.f32 %v4394, 0.7978846
        %v4427 = vmul.f32 %v4395, 0.7978846
        %v4428 = vmul.f32 %v4396, 0.7978846
        %v4429 = vmul.f32 %v4397, 0.7978846
        %v4430 = vmul.f32 %v4398, 0.7978846
        %v4431 = vmul.f32 %v4399, 0.7978846
        %v4432 = vmul.f32 %v4400, 0.7978846
        %v4433 = vmul.f32 %v4401, 0.7978846
        %v4434 = vmul.f32 %v4402, 0.7978846
        %v4435 = vmul.f32 %v4403, 0.7978846
        %v4436 = vmul.f32 %v4404, 0.7978846
        %v4437 = vmul.f32 %v4405, 0.7978846
        %v4438 = vmul.f32 %v4406, 0.7978846
        %v4439 = vmul.f32 %v4407, 0.7978846
        %v4440 = vtanh.pop %v4408
        %v4441 = vtanh.pop %v4409
        %v4442 = vtanh.pop %v4410
        %v4443 = vtanh.pop %v4411
        %v4444 = vtanh.pop %v4412
        %v4445 = vtanh.pop %v4413
        %v4446 = vtanh.pop %v4414
        %v4447 = vtanh.pop %v4415
        %v4448 = vtanh.pop %v4416
        %v4449 = vtanh.pop %v4417
        %v4450 = vtanh.pop %v4418
        %v4451 = vtanh.pop %v4419
        %v4452 = vtanh.pop %v4420
        %v4453 = vtanh.pop %v4421
        %v4454 = vtanh.pop %v4422
        %v4455 = vtanh.pop %v4423
        %v4456 = vtanh.pop %v4424
        %v4457 = vtanh.pop %v4425
        %v4458 = vtanh.pop %v4426
        %v4459 = vtanh.pop %v4427
        %v4460 = vtanh.pop %v4428
        %v4461 = vtanh.pop %v4429
        %v4462 = vtanh.pop %v4430
        %v4463 = vtanh.pop %v4431
        %v4464 = vtanh.pop %v4432
        %v4465 = vtanh.pop %v4433
        %v4466 = vtanh.pop %v4434
        %v4467 = vtanh.pop %v4435
        %v4468 = vtanh.pop %v4436
        %v4469 = vtanh.pop %v4437
        %v4470 = vtanh.pop %v4438
        %v4471 = vtanh.pop %v4439
        %v4472 = vadd.f32 %v4440, 1.0
        %v4473 = vadd.f32 %v4441, 1.0
        %v4474 = vadd.f32 %v4442, 1.0
        %v4475 = vadd.f32 %v4443, 1.0
        %v4476 = vadd.f32 %v4444, 1.0
        %v4477 = vadd.f32 %v4445, 1.0
        %v4478 = vadd.f32 %v4446, 1.0
        %v4479 = vadd.f32 %v4447, 1.0
        %v4480 = vadd.f32 %v4448, 1.0
        %v4481 = vadd.f32 %v4449, 1.0
        %v4482 = vadd.f32 %v4450, 1.0
        %v4483 = vadd.f32 %v4451, 1.0
        %v4484 = vadd.f32 %v4452, 1.0
        %v4485 = vadd.f32 %v4453, 1.0
        %v4486 = vadd.f32 %v4454, 1.0
        %v4487 = vadd.f32 %v4455, 1.0
        %v4488 = vadd.f32 %v4456, 1.0
        %v4489 = vadd.f32 %v4457, 1.0
        %v4490 = vadd.f32 %v4458, 1.0
        %v4491 = vadd.f32 %v4459, 1.0
        %v4492 = vadd.f32 %v4460, 1.0
        %v4493 = vadd.f32 %v4461, 1.0
        %v4494 = vadd.f32 %v4462, 1.0
        %v4495 = vadd.f32 %v4463, 1.0
        %v4496 = vadd.f32 %v4464, 1.0
        %v4497 = vadd.f32 %v4465, 1.0
        %v4498 = vadd.f32 %v4466, 1.0
        %v4499 = vadd.f32 %v4467, 1.0
        %v4500 = vadd.f32 %v4468, 1.0
        %v4501 = vadd.f32 %v4469, 1.0
        %v4502 = vadd.f32 %v4470, 1.0
        %v4503 = vadd.f32 %v4471, 1.0
        %v4504 = vmul.f32 %v4248, %v4472
        %v4505 = vmul.f32 %v4249, %v4473
        %v4506 = vmul.f32 %v4250, %v4474
        %v4507 = vmul.f32 %v4251, %v4475
        %v4508 = vmul.f32 %v4252, %v4476
        %v4509 = vmul.f32 %v4253, %v4477
        %v4510 = vmul.f32 %v4254, %v4478
        %v4511 = vmul.f32 %v4255, %v4479
        %v4512 = vmul.f32 %v4256, %v4480
        %v4513 = vmul.f32 %v4257, %v4481
        %v4514 = vmul.f32 %v4258, %v4482
        %v4515 = vmul.f32 %v4259, %v4483
        %v4516 = vmul.f32 %v4260, %v4484
        %v4517 = vmul.f32 %v4261, %v4485
        %v4518 = vmul.f32 %v4262, %v4486
        %v4519 = vmul.f32 %v4263, %v4487
        %v4520 = vmul.f32 %v4264, %v4488
        %v4521 = vmul.f32 %v4265, %v4489
        %v4522 = vmul.f32 %v4266, %v4490
        %v4523 = vmul.f32 %v4267, %v4491
        %v4524 = vmul.f32 %v4268, %v4492
        %v4525 = vmul.f32 %v4269, %v4493
        %v4526 = vmul.f32 %v4270, %v4494
        %v4527 = vmul.f32 %v4271, %v4495
        %v4528 = vmul.f32 %v4272, %v4496
        %v4529 = vmul.f32 %v4273, %v4497
        %v4530 = vmul.f32 %v4274, %v4498
        %v4531 = vmul.f32 %v4275, %v4499
        %v4532 = vmul.f32 %v4276, %v4500
        %v4533 = vmul.f32 %v4277, %v4501
        %v4534 = vmul.f32 %v4278, %v4502
        %v4535 = vmul.f32 %v4279, %v4503
        %v4536 = vld [vmem:[#allocation23] sm:$0xff]
        %v4537 = vld [vmem:[#allocation23 + $0x8] sm:$0xff]
        %v4538 = vld [vmem:[#allocation23 + $0x10] sm:$0xff]
        %v4539 = vld [vmem:[#allocation23 + $0x18] sm:$0xff]
        %v4540 = vld [vmem:[#allocation25] sm:$0x1]
        %v4542 = vlaneseq
        %v4543 = vshrl.u32 %v4542, 7
        %v4544 = vsub.s32 0, %v4543
        %v4545 = vrot.slane %v4540, %v4544
        %v4548 = vsel %vm3704, %v4504, 0
        %v4551 = vsel %vm3704, %v4505, 0
        %v4554 = vsel %vm3704, %v4506, 0
        %v4557 = vsel %vm3704, %v4507, 0
        %v4560 = vsel %vm3704, %v4508, 0
        %v4563 = vsel %vm3704, %v4509, 0
        %v4566 = vsel %vm3704, %v4510, 0
        %v4569 = vsel %vm3704, %v4511, 0
        %v4572 = vsel %vm3704, %v4512, 0
        %v4575 = vsel %vm3704, %v4513, 0
        %v4578 = vsel %vm3704, %v4514, 0
        %v4581 = vsel %vm3704, %v4515, 0
        %v4584 = vsel %vm3704, %v4516, 0
        %v4587 = vsel %vm3704, %v4517, 0
        %v4590 = vsel %vm3704, %v4518, 0
        %v4593 = vsel %vm3704, %v4519, 0
        %v4596 = vsel %vm3704, %v4520, 0
        %v4599 = vsel %vm3704, %v4521, 0
        %v4602 = vsel %vm3704, %v4522, 0
        %v4605 = vsel %vm3704, %v4523, 0
        %v4608 = vsel %vm3704, %v4524, 0
        %v4611 = vsel %vm3704, %v4525, 0
        %v4614 = vsel %vm3704, %v4526, 0
        %v4617 = vsel %vm3704, %v4527, 0
        %v4620 = vsel %vm3704, %v4528, 0
        %v4623 = vsel %vm3704, %v4529, 0
        %v4626 = vsel %vm3704, %v4530, 0
        %v4629 = vsel %vm3704, %v4531, 0
        %v4632 = vsel %vm3704, %v4532, 0
        %v4635 = vsel %vm3704, %v4533, 0
        %v4638 = vsel %vm3704, %v4534, 0
        %v4641 = vsel %vm3704, %v4535, 0
        %4643 = vmatprep.subr.mxu0 0.0
        %4644 = vmatpush1.msra.mxu0 %v4536
        %4645 = vmatprep.subr.mxu0 0.0
        %4646 = vmatpush1.msra.mxu0 %v4537
        %4647 = vmatprep.subr.mxu0 0.0
        %4648 = vmatpush1.msra.mxu0 %v4538
        %4649 = vmatprep.subr.mxu0 0.0
        %4650 = vmatpush1.msra.mxu0 %v4539
        %4651 = vmatprep.subr.mxu0 0.0
        %4652 = vmatpush1.msra.mxu0 0.0
        %4653 = vmatprep.subr.mxu0 0.0
        %4654 = vmatpush1.msra.mxu0 0.0
        %4655 = vmatprep.subr.mxu0 0.0
        %4656 = vmatpush1.msra.mxu0 0.0
        %4657 = vmatprep.subr.mxu0 0.0
        %4658 = vmatpush1.msra.mxu0 0.0
        %4659 = vmatprep.subr.mxu0 0.0
        %4660 = vmatpush1.msra.mxu0 0.0
        %4661 = vmatprep.subr.mxu0 0.0
        %4662 = vmatpush1.msra.mxu0 0.0
        %4663 = vmatprep.subr.mxu0 0.0
        %4664 = vmatpush1.msra.mxu0 0.0
        %4665 = vmatprep.subr.mxu0 0.0
        %4666 = vmatpush1.msra.mxu0 0.0
        %4667 = vmatprep.subr.mxu0 0.0
        %4668 = vmatpush1.msra.mxu0 0.0
        %4669 = vmatprep.subr.mxu0 0.0
        %4670 = vmatpush1.msra.mxu0 0.0
        %4671 = vmatprep.subr.mxu0 0.0
        %4672 = vmatpush1.msra.mxu0 0.0
        %4673 = vmatprep.subr.mxu0 0.0
        %4674 = vmatpush1.msra.mxu0 0.0
        %4675 = vmatprep.subr.mxu0 0.0
        %4676 = vmatpush1.msra.mxu0 0.0
        %4677 = vmatprep.subr.mxu0 0.0
        %4678 = vmatpush1.msra.mxu0 0.0
        %4679 = vmatprep.subr.mxu0 0.0
        %4680 = vmatpush1.msra.mxu0 0.0
        %4681 = vmatprep.subr.mxu0 0.0
        %4682 = vmatpush1.msra.mxu0 0.0
        %4683 = vmatprep.subr.mxu0 0.0
        %4684 = vmatpush1.msra.mxu0 0.0
        %4685 = vmatprep.subr.mxu0 0.0
        %4686 = vmatpush1.msra.mxu0 0.0
        %4687 = vmatprep.subr.mxu0 0.0
        %4688 = vmatpush1.msra.mxu0 0.0
        %4689 = vmatprep.subr.mxu0 0.0
        %4690 = vmatpush1.msra.mxu0 0.0
        %4691 = vmatprep.subr.mxu0 0.0
        %4692 = vmatpush1.msra.mxu0 0.0
        %4693 = vmatprep.subr.mxu0 0.0
        %4694 = vmatpush1.msra.mxu0 0.0
        %4695 = vmatprep.subr.mxu0 0.0
        %4696 = vmatpush1.msra.mxu0 0.0
        %4697 = vmatprep.subr.mxu0 0.0
        %4698 = vmatpush1.msra.mxu0 0.0
        %4699 = vmatprep.subr.mxu0 0.0
        %4700 = vmatpush1.msra.mxu0 0.0
        %4701 = vmatprep.subr.mxu0 0.0
        %4702 = vmatpush1.msra.mxu0 0.0
        %4703 = vmatprep.subr.mxu0 0.0
        %4704 = vmatpush1.msra.mxu0 0.0
        %4705 = vmatprep.subr.mxu0 0.0
        %4706 = vmatpush1.msra.mxu0 0.0
        %4707 = vmatprep.mubr.f32.mxu0 0.0
        %4708 = vmatmul.mubr.f32.gmra.mrb[0].mxu0 %v4548
        %v4709 = vpop.f32.mrb[0].mxu0
        %v4710 = vadd.f32 %v4545, %v4709
        %v4711 = vpop.f32.mrb[0].mxu0
        %4712 = vmatprep.mubr.f32.mxu0 0.0
        %4713 = vmatmul.mubr.f32.gmra.mrb[0].mxu0 %v4551
        %v4714 = vpop.f32.mrb[0].mxu0
        %v4715 = vadd.f32 %v4545, %v4714
        %v4716 = vpop.f32.mrb[0].mxu0
        %4717 = vmatprep.mubr.f32.mxu0 0.0
        %4718 = vmatmul.mubr.f32.gmra.mrb[0].mxu0 %v4554
        %v4719 = vpop.f32.mrb[0].mxu0
        %v4720 = vadd.f32 %v4545, %v4719
        %v4721 = vpop.f32.mrb[0].mxu0
        %4722 = vmatprep.mubr.f32.mxu0 0.0
        %4723 = vmatmul.mubr.f32.gmra.mrb[0].mxu0 %v4557
        %v4724 = vpop.f32.mrb[0].mxu0
        %v4725 = vadd.f32 %v4545, %v4724
        %v4726 = vpop.f32.mrb[0].mxu0
        %4727 = vmatprep.mubr.f32.mxu0 0.0
        %4728 = vmatmul.mubr.f32.gmra.mrb[0].mxu0 %v4560
        %v4729 = vpop.f32.mrb[0].mxu0
        %v4730 = vadd.f32 %v4545, %v4729
        %v4731 = vpop.f32.mrb[0].mxu0
        %4732 = vmatprep.mubr.f32.mxu0 0.0
        %4733 = vmatmul.mubr.f32.gmra.mrb[0].mxu0 %v4563
        %v4734 = vpop.f32.mrb[0].mxu0
        %v4735 = vadd.f32 %v4545, %v4734
        %v4736 = vpop.f32.mrb[0].mxu0
        %4737 = vmatprep.mubr.f32.mxu0 0.0
        %4738 = vmatmul.mubr.f32.gmra.mrb[0].mxu0 %v4566
        %v4739 = vpop.f32.mrb[0].mxu0
        %v4740 = vadd.f32 %v4545, %v4739
        %v4741 = vpop.f32.mrb[0].mxu0
        %4742 = vmatprep.mubr.f32.mxu0 0.0
        %4743 = vmatmul.mubr.f32.gmra.mrb[0].mxu0 %v4569
        %v4744 = vpop.f32.mrb[0].mxu0
        %v4745 = vadd.f32 %v4545, %v4744
        %v4746 = vpop.f32.mrb[0].mxu0
        %4747 = vmatprep.mubr.f32.mxu0 0.0
        %4748 = vmatmul.mubr.f32.gmra.mrb[0].mxu0 %v4572
        %v4749 = vpop.f32.mrb[0].mxu0
        %v4750 = vadd.f32 %v4545, %v4749
        %v4751 = vpop.f32.mrb[0].mxu0
        %4752 = vmatprep.mubr.f32.mxu0 0.0
        %4753 = vmatmul.mubr.f32.gmra.mrb[0].mxu0 %v4575
        %v4754 = vpop.f32.mrb[0].mxu0
        %v4755 = vadd.f32 %v4545, %v4754
        %v4756 = vpop.f32.mrb[0].mxu0
        %4757 = vmatprep.mubr.f32.mxu0 0.0
        %4758 = vmatmul.mubr.f32.gmra.mrb[0].mxu0 %v4578
        %v4759 = vpop.f32.mrb[0].mxu0
        %v4760 = vadd.f32 %v4545, %v4759
        %v4761 = vpop.f32.mrb[0].mxu0
        %4762 = vmatprep.mubr.f32.mxu0 0.0
        %4763 = vmatmul.mubr.f32.gmra.mrb[0].mxu0 %v4581
        %v4764 = vpop.f32.mrb[0].mxu0
        %v4765 = vadd.f32 %v4545, %v4764
        %v4766 = vpop.f32.mrb[0].mxu0
        %4767 = vmatprep.mubr.f32.mxu0 0.0
        %4768 = vmatmul.mubr.f32.gmra.mrb[0].mxu0 %v4584
        %v4769 = vpop.f32.mrb[0].mxu0
        %v4770 = vadd.f32 %v4545, %v4769
        %v4771 = vpop.f32.mrb[0].mxu0
        %4772 = vmatprep.mubr.f32.mxu0 0.0
        %4773 = vmatmul.mubr.f32.gmra.mrb[0].mxu0 %v4587
        %v4774 = vpop.f32.mrb[0].mxu0
        %v4775 = vadd.f32 %v4545, %v4774
        %v4776 = vpop.f32.mrb[0].mxu0
        %4777 = vmatprep.mubr.f32.mxu0 0.0
        %4778 = vmatmul.mubr.f32.gmra.mrb[0].mxu0 %v4590
        %v4779 = vpop.f32.mrb[0].mxu0
        %v4780 = vadd.f32 %v4545, %v4779
        %v4781 = vpop.f32.mrb[0].mxu0
        %4782 = vmatprep.mubr.f32.mxu0 0.0
        %4783 = vmatmul.mubr.f32.gmra.mrb[0].mxu0 %v4593
        %v4784 = vpop.f32.mrb[0].mxu0
        %v4785 = vadd.f32 %v4545, %v4784
        %v4786 = vpop.f32.mrb[0].mxu0
        %4787 = vmatprep.mubr.f32.mxu0 0.0
        %4788 = vmatmul.mubr.f32.gmra.mrb[0].mxu0 %v4596
        %v4789 = vpop.f32.mrb[0].mxu0
        %v4790 = vadd.f32 %v4545, %v4789
        %v4791 = vpop.f32.mrb[0].mxu0
        %4792 = vmatprep.mubr.f32.mxu0 0.0
        %4793 = vmatmul.mubr.f32.gmra.mrb[0].mxu0 %v4599
        %v4794 = vpop.f32.mrb[0].mxu0
        %v4795 = vadd.f32 %v4545, %v4794
        %v4796 = vpop.f32.mrb[0].mxu0
        %4797 = vmatprep.mubr.f32.mxu0 0.0
        %4798 = vmatmul.mubr.f32.gmra.mrb[0].mxu0 %v4602
        %v4799 = vpop.f32.mrb[0].mxu0
        %v4800 = vadd.f32 %v4545, %v4799
        %v4801 = vpop.f32.mrb[0].mxu0
        %4802 = vmatprep.mubr.f32.mxu0 0.0
        %4803 = vmatmul.mubr.f32.gmra.mrb[0].mxu0 %v4605
        %v4804 = vpop.f32.mrb[0].mxu0
        %v4805 = vadd.f32 %v4545, %v4804
        %v4806 = vpop.f32.mrb[0].mxu0
        %4807 = vmatprep.mubr.f32.mxu0 0.0
        %4808 = vmatmul.mubr.f32.gmra.mrb[0].mxu0 %v4608
        %v4809 = vpop.f32.mrb[0].mxu0
        %v4810 = vadd.f32 %v4545, %v4809
        %v4811 = vpop.f32.mrb[0].mxu0
        %4812 = vmatprep.mubr.f32.mxu0 0.0
        %4813 = vmatmul.mubr.f32.gmra.mrb[0].mxu0 %v4611
        %v4814 = vpop.f32.mrb[0].mxu0
        %v4815 = vadd.f32 %v4545, %v4814
        %v4816 = vpop.f32.mrb[0].mxu0
        %4817 = vmatprep.mubr.f32.mxu0 0.0
        %4818 = vmatmul.mubr.f32.gmra.mrb[0].mxu0 %v4614
        %v4819 = vpop.f32.mrb[0].mxu0
        %v4820 = vadd.f32 %v4545, %v4819
        %v4821 = vpop.f32.mrb[0].mxu0
        %4822 = vmatprep.mubr.f32.mxu0 0.0
        %4823 = vmatmul.mubr.f32.gmra.mrb[0].mxu0 %v4617
        %v4824 = vpop.f32.mrb[0].mxu0
        %v4825 = vadd.f32 %v4545, %v4824
        %v4826 = vpop.f32.mrb[0].mxu0
        %4827 = vmatprep.mubr.f32.mxu0 0.0
        %4828 = vmatmul.mubr.f32.gmra.mrb[0].mxu0 %v4620
        %v4829 = vpop.f32.mrb[0].mxu0
        %v4830 = vadd.f32 %v4545, %v4829
        %v4831 = vpop.f32.mrb[0].mxu0
        %4832 = vmatprep.mubr.f32.mxu0 0.0
        %4833 = vmatmul.mubr.f32.gmra.mrb[0].mxu0 %v4623
        %v4834 = vpop.f32.mrb[0].mxu0
        %v4835 = vadd.f32 %v4545, %v4834
        %v4836 = vpop.f32.mrb[0].mxu0
        %4837 = vmatprep.mubr.f32.mxu0 0.0
        %4838 = vmatmul.mubr.f32.gmra.mrb[0].mxu0 %v4626
        %v4839 = vpop.f32.mrb[0].mxu0
        %v4840 = vadd.f32 %v4545, %v4839
        %v4841 = vpop.f32.mrb[0].mxu0
        %4842 = vmatprep.mubr.f32.mxu0 0.0
        %4843 = vmatmul.mubr.f32.gmra.mrb[0].mxu0 %v4629
        %v4844 = vpop.f32.mrb[0].mxu0
        %v4845 = vadd.f32 %v4545, %v4844
        %v4846 = vpop.f32.mrb[0].mxu0
        %4847 = vmatprep.mubr.f32.mxu0 0.0
        %4848 = vmatmul.mubr.f32.gmra.mrb[0].mxu0 %v4632
        %v4849 = vpop.f32.mrb[0].mxu0
        %v4850 = vadd.f32 %v4545, %v4849
        %v4851 = vpop.f32.mrb[0].mxu0
        %4852 = vmatprep.mubr.f32.mxu0 0.0
        %4853 = vmatmul.mubr.f32.gmra.mrb[0].mxu0 %v4635
        %v4854 = vpop.f32.mrb[0].mxu0
        %v4855 = vadd.f32 %v4545, %v4854
        %v4856 = vpop.f32.mrb[0].mxu0
        %4857 = vmatprep.mubr.f32.mxu0 0.0
        %4858 = vmatmul.mubr.f32.gmra.mrb[0].mxu0 %v4638
        %v4859 = vpop.f32.mrb[0].mxu0
        %v4860 = vadd.f32 %v4545, %v4859
        %v4861 = vpop.f32.mrb[0].mxu0
        %4862 = vmatprep.mubr.f32.mxu0 0.0
        %4863 = vmatmul.mubr.f32.gmra.mrb[0].mxu0 %v4641
        %v4864 = vpop.f32.mrb[0].mxu0
        %v4865 = vadd.f32 %v4545, %v4864
        %v4866 = vpop.f32.mrb[0].mxu0
        %4867 = vdwg.mxu0
        %4900 = vrot.lane.b32.xlu0 %v4710, 16
        %v4901 = vpop.permute.xlu0 %4900
        %4902 = vrot.lane.b32.xlu0 %v4715, 16
        %v4903 = vpop.permute.xlu0 %4902
        %4904 = vrot.lane.b32.xlu0 %v4720, 16
        %v4905 = vpop.permute.xlu0 %4904
        %4906 = vrot.lane.b32.xlu0 %v4725, 16
        %v4907 = vpop.permute.xlu0 %4906
        %4908 = vrot.lane.b32.xlu0 %v4730, 16
        %v4909 = vpop.permute.xlu0 %4908
        %4910 = vrot.lane.b32.xlu0 %v4735, 16
        %v4911 = vpop.permute.xlu0 %4910
        %4912 = vrot.lane.b32.xlu0 %v4740, 16
        %v4913 = vpop.permute.xlu0 %4912
        %4914 = vrot.lane.b32.xlu0 %v4745, 16
        %v4915 = vpop.permute.xlu0 %4914
        %4916 = vrot.lane.b32.xlu0 %v4750, 16
        %v4917 = vpop.permute.xlu0 %4916
        %4918 = vrot.lane.b32.xlu0 %v4755, 16
        %v4919 = vpop.permute.xlu0 %4918
        %4920 = vrot.lane.b32.xlu0 %v4760, 16
        %v4921 = vpop.permute.xlu0 %4920
        %4922 = vrot.lane.b32.xlu0 %v4765, 16
        %v4923 = vpop.permute.xlu0 %4922
        %4924 = vrot.lane.b32.xlu0 %v4770, 16
        %v4925 = vpop.permute.xlu0 %4924
        %4926 = vrot.lane.b32.xlu0 %v4775, 16
        %v4927 = vpop.permute.xlu0 %4926
        %4928 = vrot.lane.b32.xlu0 %v4780, 16
        %v4929 = vpop.permute.xlu0 %4928
        %4930 = vrot.lane.b32.xlu0 %v4785, 16
        %v4931 = vpop.permute.xlu0 %4930
        %4932 = vrot.lane.b32.xlu0 %v4790, 16
        %v4933 = vpop.permute.xlu0 %4932
        %4934 = vrot.lane.b32.xlu0 %v4795, 16
        %v4935 = vpop.permute.xlu0 %4934
        %4936 = vrot.lane.b32.xlu0 %v4800, 16
        %v4937 = vpop.permute.xlu0 %4936
        %4938 = vrot.lane.b32.xlu0 %v4805, 16
        %v4939 = vpop.permute.xlu0 %4938
        %4940 = vrot.lane.b32.xlu0 %v4810, 16
        %v4941 = vpop.permute.xlu0 %4940
        %4942 = vrot.lane.b32.xlu0 %v4815, 16
        %v4943 = vpop.permute.xlu0 %4942
        %4944 = vrot.lane.b32.xlu0 %v4820, 16
        %v4945 = vpop.permute.xlu0 %4944
        %4946 = vrot.lane.b32.xlu0 %v4825, 16
        %v4947 = vpop.permute.xlu0 %4946
        %4948 = vrot.lane.b32.xlu0 %v4830, 16
        %v4949 = vpop.permute.xlu0 %4948
        %4950 = vrot.lane.b32.xlu0 %v4835, 16
        %v4951 = vpop.permute.xlu0 %4950
        %4952 = vrot.lane.b32.xlu0 %v4840, 16
        %v4953 = vpop.permute.xlu0 %4952
        %4954 = vrot.lane.b32.xlu0 %v4845, 16
        %v4955 = vpop.permute.xlu0 %4954
        %4956 = vrot.lane.b32.xlu0 %v4850, 16
        %v4957 = vpop.permute.xlu0 %4956
        %4958 = vrot.lane.b32.xlu0 %v4855, 16
        %v4959 = vpop.permute.xlu0 %4958
        %4960 = vrot.lane.b32.xlu0 %v4860, 16
        %v4961 = vpop.permute.xlu0 %4960
        %4962 = vrot.lane.b32.xlu0 %v4865, 16
        %v4963 = vpop.permute.xlu0 %4962
        %v4996 = vadd.f32 %v2422, %v4901
        %v4997 = vadd.f32 %v2423, %v4903
        %v4998 = vadd.f32 %v2424, %v4905
        %v4999 = vadd.f32 %v2425, %v4907
        %v5000 = vadd.f32 %v2426, %v4909
        %v5001 = vadd.f32 %v2427, %v4911
        %v5002 = vadd.f32 %v2428, %v4913
        %v5003 = vadd.f32 %v2429, %v4915
        %v5004 = vadd.f32 %v2430, %v4917
        %v5005 = vadd.f32 %v2431, %v4919
        %v5006 = vadd.f32 %v2432, %v4921
        %v5007 = vadd.f32 %v2433, %v4923
        %v5008 = vadd.f32 %v2434, %v4925
        %v5009 = vadd.f32 %v2435, %v4927
        %v5010 = vadd.f32 %v2436, %v4929
        %v5011 = vadd.f32 %v2437, %v4931
        %v5012 = vadd.f32 %v2438, %v4933
        %v5013 = vadd.f32 %v2439, %v4935
        %v5014 = vadd.f32 %v2440, %v4937
        %v5015 = vadd.f32 %v2441, %v4939
        %v5016 = vadd.f32 %v2442, %v4941
        %v5017 = vadd.f32 %v2443, %v4943
        %v5018 = vadd.f32 %v2444, %v4945
        %v5019 = vadd.f32 %v2445, %v4947
        %v5020 = vadd.f32 %v2446, %v4949
        %v5021 = vadd.f32 %v2447, %v4951
        %v5022 = vadd.f32 %v2448, %v4953
        %v5023 = vadd.f32 %v2449, %v4955
        %v5024 = vadd.f32 %v2450, %v4957
        %v5025 = vadd.f32 %v2451, %v4959
        %v5026 = vadd.f32 %v2452, %v4961
        %v5027 = vadd.f32 %v2453, %v4963
        %v5028 = vld [vmem:[#allocation14] sm:$0xff]
        %v5029 = vld [vmem:[#allocation14 + $0x8] sm:$0xff]
        %v5030 = vld [vmem:[#allocation16] sm:$0x1]
        %v5032 = vlaneseq
        %v5033 = vshrl.u32 %v5032, 7
        %v5034 = vsub.s32 0, %v5033
        %v5035 = vrot.slane %v5030, %v5034
        %5069 = vrot.lane.b32.xlu0 %v4996, 112
        %v5070 = vpop.permute.xlu0 %5069
        %5071 = vrot.lane.b32.xlu0 %v4997, 112
        %v5072 = vpop.permute.xlu0 %5071
        %5073 = vrot.lane.b32.xlu0 %v4998, 112
        %v5074 = vpop.permute.xlu0 %5073
        %5075 = vrot.lane.b32.xlu0 %v4999, 112
        %v5076 = vpop.permute.xlu0 %5075
        %5077 = vrot.lane.b32.xlu0 %v5000, 112
        %v5078 = vpop.permute.xlu0 %5077
        %5079 = vrot.lane.b32.xlu0 %v5001, 112
        %v5080 = vpop.permute.xlu0 %5079
        %5081 = vrot.lane.b32.xlu0 %v5002, 112
        %v5082 = vpop.permute.xlu0 %5081
        %5083 = vrot.lane.b32.xlu0 %v5003, 112
        %v5084 = vpop.permute.xlu0 %5083
        %5085 = vrot.lane.b32.xlu0 %v5004, 112
        %v5086 = vpop.permute.xlu0 %5085
        %5087 = vrot.lane.b32.xlu0 %v5005, 112
        %v5088 = vpop.permute.xlu0 %5087
        %5089 = vrot.lane.b32.xlu0 %v5006, 112
        %v5090 = vpop.permute.xlu0 %5089
        %5091 = vrot.lane.b32.xlu0 %v5007, 112
        %v5092 = vpop.permute.xlu0 %5091
        %5093 = vrot.lane.b32.xlu0 %v5008, 112
        %v5094 = vpop.permute.xlu0 %5093
        %5095 = vrot.lane.b32.xlu0 %v5009, 112
        %v5096 = vpop.permute.xlu0 %5095
        %5097 = vrot.lane.b32.xlu0 %v5010, 112
        %v5098 = vpop.permute.xlu0 %5097
        %5099 = vrot.lane.b32.xlu0 %v5011, 112
        %v5100 = vpop.permute.xlu0 %5099
        %5101 = vrot.lane.b32.xlu0 %v5012, 112
        %v5102 = vpop.permute.xlu0 %5101
        %5103 = vrot.lane.b32.xlu0 %v5013, 112
        %v5104 = vpop.permute.xlu0 %5103
        %5105 = vrot.lane.b32.xlu0 %v5014, 112
        %v5106 = vpop.permute.xlu0 %5105
        %5107 = vrot.lane.b32.xlu0 %v5015, 112
        %v5108 = vpop.permute.xlu0 %5107
        %5109 = vrot.lane.b32.xlu0 %v5016, 112
        %v5110 = vpop.permute.xlu0 %5109
        %5111 = vrot.lane.b32.xlu0 %v5017, 112
        %v5112 = vpop.permute.xlu0 %5111
        %5113 = vrot.lane.b32.xlu0 %v5018, 112
        %v5114 = vpop.permute.xlu0 %5113
        %5115 = vrot.lane.b32.xlu0 %v5019, 112
        %v5116 = vpop.permute.xlu0 %5115
        %5117 = vrot.lane.b32.xlu0 %v5020, 112
        %v5118 = vpop.permute.xlu0 %5117
        %5119 = vrot.lane.b32.xlu0 %v5021, 112
        %v5120 = vpop.permute.xlu0 %5119
        %5121 = vrot.lane.b32.xlu0 %v5022, 112
        %v5122 = vpop.permute.xlu0 %5121
        %5123 = vrot.lane.b32.xlu0 %v5023, 112
        %v5124 = vpop.permute.xlu0 %5123
        %5125 = vrot.lane.b32.xlu0 %v5024, 112
        %v5126 = vpop.permute.xlu0 %5125
        %5127 = vrot.lane.b32.xlu0 %v5025, 112
        %v5128 = vpop.permute.xlu0 %5127
        %5129 = vrot.lane.b32.xlu0 %v5026, 112
        %v5130 = vpop.permute.xlu0 %5129
        %5131 = vrot.lane.b32.xlu0 %v5027, 112
        %v5132 = vpop.permute.xlu0 %5131
        %v5133 = vsel %vm943, %v5070, 0
        %v5135 = vsel %vm943, %v5072, 0
        %v5137 = vsel %vm943, %v5074, 0
        %v5139 = vsel %vm943, %v5076, 0
        %v5141 = vsel %vm943, %v5078, 0
        %v5143 = vsel %vm943, %v5080, 0
        %v5145 = vsel %vm943, %v5082, 0
        %v5147 = vsel %vm943, %v5084, 0
        %v5149 = vsel %vm943, %v5086, 0
        %v5151 = vsel %vm943, %v5088, 0
        %v5153 = vsel %vm943, %v5090, 0
        %v5155 = vsel %vm943, %v5092, 0
        %v5157 = vsel %vm943, %v5094, 0
        %v5159 = vsel %vm943, %v5096, 0
        %v5161 = vsel %vm943, %v5098, 0
        %v5163 = vsel %vm943, %v5100, 0
        %v5165 = vsel %vm943, %v5102, 0
        %v5167 = vsel %vm943, %v5104, 0
        %v5169 = vsel %vm943, %v5106, 0
        %v5171 = vsel %vm943, %v5108, 0
        %v5173 = vsel %vm943, %v5110, 0
        %v5175 = vsel %vm943, %v5112, 0
        %v5177 = vsel %vm943, %v5114, 0
        %v5179 = vsel %vm943, %v5116, 0
        %v5181 = vsel %vm943, %v5118, 0
        %v5183 = vsel %vm943, %v5120, 0
        %v5185 = vsel %vm943, %v5122, 0
        %v5187 = vsel %vm943, %v5124, 0
        %v5189 = vsel %vm943, %v5126, 0
        %v5191 = vsel %vm943, %v5128, 0
        %v5193 = vsel %vm943, %v5130, 0
        %v5195 = vsel %vm943, %v5132, 0
        %5197 = vmatprep.subr.mxu0 0.0
        %5198 = vmatpush1.msra.mxu0 %v5028
        %5199 = vmatprep.subr.mxu0 0.0
        %5200 = vmatpush1.msra.mxu0 %v5029
        %5201 = vmatprep.subr.mxu0 0.0
        %5202 = vmatpush1.msra.mxu0 0.0
        %5203 = vmatprep.subr.mxu0 0.0
        %5204 = vmatpush1.msra.mxu0 0.0
        %5205 = vmatprep.subr.mxu0 0.0
        %5206 = vmatpush1.msra.mxu0 0.0
        %5207 = vmatprep.subr.mxu0 0.0
        %5208 = vmatpush1.msra.mxu0 0.0
        %5209 = vmatprep.subr.mxu0 0.0
        %5210 = vmatpush1.msra.mxu0 0.0
        %5211 = vmatprep.subr.mxu0 0.0
        %5212 = vmatpush1.msra.mxu0 0.0
        %5213 = vmatprep.subr.mxu0 0.0
        %5214 = vmatpush1.msra.mxu0 0.0
        %5215 = vmatprep.subr.mxu0 0.0
        %5216 = vmatpush1.msra.mxu0 0.0
        %5217 = vmatprep.subr.mxu0 0.0
        %5218 = vmatpush1.msra.mxu0 0.0
        %5219 = vmatprep.subr.mxu0 0.0
        %5220 = vmatpush1.msra.mxu0 0.0
        %5221 = vmatprep.subr.mxu0 0.0
        %5222 = vmatpush1.msra.mxu0 0.0
        %5223 = vmatprep.subr.mxu0 0.0
        %5224 = vmatpush1.msra.mxu0 0.0
        %5225 = vmatprep.subr.mxu0 0.0
        %5226 = vmatpush1.msra.mxu0 0.0
        %5227 = vmatprep.subr.mxu0 0.0
        %5228 = vmatpush1.msra.mxu0 0.0
        %5229 = vmatprep.subr.mxu0 0.0
        %5230 = vmatpush1.msra.mxu0 0.0
        %5231 = vmatprep.subr.mxu0 0.0
        %5232 = vmatpush1.msra.mxu0 0.0
        %5233 = vmatprep.subr.mxu0 0.0
        %5234 = vmatpush1.msra.mxu0 0.0
        %5235 = vmatprep.subr.mxu0 0.0
        %5236 = vmatpush1.msra.mxu0 0.0
        %5237 = vmatprep.subr.mxu0 0.0
        %5238 = vmatpush1.msra.mxu0 0.0
        %5239 = vmatprep.subr.mxu0 0.0
        %5240 = vmatpush1.msra.mxu0 0.0
        %5241 = vmatprep.subr.mxu0 0.0
        %5242 = vmatpush1.msra.mxu0 0.0
        %5243 = vmatprep.subr.mxu0 0.0
        %5244 = vmatpush1.msra.mxu0 0.0
        %5245 = vmatprep.subr.mxu0 0.0
        %5246 = vmatpush1.msra.mxu0 0.0
        %5247 = vmatprep.subr.mxu0 0.0
        %5248 = vmatpush1.msra.mxu0 0.0
        %5249 = vmatprep.subr.mxu0 0.0
        %5250 = vmatpush1.msra.mxu0 0.0
        %5251 = vmatprep.subr.mxu0 0.0
        %5252 = vmatpush1.msra.mxu0 0.0
        %5253 = vmatprep.subr.mxu0 0.0
        %5254 = vmatpush1.msra.mxu0 0.0
        %5255 = vmatprep.subr.mxu0 0.0
        %5256 = vmatpush1.msra.mxu0 0.0
        %5257 = vmatprep.subr.mxu0 0.0
        %5258 = vmatpush1.msra.mxu0 0.0
        %5259 = vmatprep.subr.mxu0 0.0
        %5260 = vmatpush1.msra.mxu0 0.0
        %5261 = vmatprep.mubr.f32.mxu0 0.0
        %5262 = vmatmul.mubr.f32.gmra.mrb[0].mxu0 %v5133
        %v5263 = vpop.f32.mrb[0].mxu0
        %v5264 = vadd.f32 %v5035, %v5263
        %v5265 = vpop.f32.mrb[0].mxu0
        %5266 = vmatprep.mubr.f32.mxu0 0.0
        %5267 = vmatmul.mubr.f32.gmra.mrb[0].mxu0 %v5135
        %v5268 = vpop.f32.mrb[0].mxu0
        %v5269 = vadd.f32 %v5035, %v5268
        %v5270 = vpop.f32.mrb[0].mxu0
        %5271 = vmatprep.mubr.f32.mxu0 0.0
        %5272 = vmatmul.mubr.f32.gmra.mrb[0].mxu0 %v5137
        %v5273 = vpop.f32.mrb[0].mxu0
        %v5274 = vadd.f32 %v5035, %v5273
        %v5275 = vpop.f32.mrb[0].mxu0
        %5276 = vmatprep.mubr.f32.mxu0 0.0
        %5277 = vmatmul.mubr.f32.gmra.mrb[0].mxu0 %v5139
        %v5278 = vpop.f32.mrb[0].mxu0
        %v5279 = vadd.f32 %v5035, %v5278
        %v5280 = vpop.f32.mrb[0].mxu0
        %5281 = vmatprep.mubr.f32.mxu0 0.0
        %5282 = vmatmul.mubr.f32.gmra.mrb[0].mxu0 %v5141
        %v5283 = vpop.f32.mrb[0].mxu0
        %v5284 = vadd.f32 %v5035, %v5283
        %v5285 = vpop.f32.mrb[0].mxu0
        %5286 = vmatprep.mubr.f32.mxu0 0.0
        %5287 = vmatmul.mubr.f32.gmra.mrb[0].mxu0 %v5143
        %v5288 = vpop.f32.mrb[0].mxu0
        %v5289 = vadd.f32 %v5035, %v5288
        %v5290 = vpop.f32.mrb[0].mxu0
        %5291 = vmatprep.mubr.f32.mxu0 0.0
        %5292 = vmatmul.mubr.f32.gmra.mrb[0].mxu0 %v5145
        %v5293 = vpop.f32.mrb[0].mxu0
        %v5294 = vadd.f32 %v5035, %v5293
        %v5295 = vpop.f32.mrb[0].mxu0
        %5296 = vmatprep.mubr.f32.mxu0 0.0
        %5297 = vmatmul.mubr.f32.gmra.mrb[0].mxu0 %v5147
        %v5298 = vpop.f32.mrb[0].mxu0
        %v5299 = vadd.f32 %v5035, %v5298
        %v5300 = vpop.f32.mrb[0].mxu0
        %5301 = vmatprep.mubr.f32.mxu0 0.0
        %5302 = vmatmul.mubr.f32.gmra.mrb[0].mxu0 %v5149
        %v5303 = vpop.f32.mrb[0].mxu0
        %v5304 = vadd.f32 %v5035, %v5303
        %v5305 = vpop.f32.mrb[0].mxu0
        %5306 = vmatprep.mubr.f32.mxu0 0.0
        %5307 = vmatmul.mubr.f32.gmra.mrb[0].mxu0 %v5151
        %v5308 = vpop.f32.mrb[0].mxu0
        %v5309 = vadd.f32 %v5035, %v5308
        %v5310 = vpop.f32.mrb[0].mxu0
        %5311 = vmatprep.mubr.f32.mxu0 0.0
        %5312 = vmatmul.mubr.f32.gmra.mrb[0].mxu0 %v5153
        %v5313 = vpop.f32.mrb[0].mxu0
        %v5314 = vadd.f32 %v5035, %v5313
        %v5315 = vpop.f32.mrb[0].mxu0
        %5316 = vmatprep.mubr.f32.mxu0 0.0
        %5317 = vmatmul.mubr.f32.gmra.mrb[0].mxu0 %v5155
        %v5318 = vpop.f32.mrb[0].mxu0
        %v5319 = vadd.f32 %v5035, %v5318
        %v5320 = vpop.f32.mrb[0].mxu0
        %5321 = vmatprep.mubr.f32.mxu0 0.0
        %5322 = vmatmul.mubr.f32.gmra.mrb[0].mxu0 %v5157
        %v5323 = vpop.f32.mrb[0].mxu0
        %v5324 = vadd.f32 %v5035, %v5323
        %v5325 = vpop.f32.mrb[0].mxu0
        %5326 = vmatprep.mubr.f32.mxu0 0.0
        %5327 = vmatmul.mubr.f32.gmra.mrb[0].mxu0 %v5159
        %v5328 = vpop.f32.mrb[0].mxu0
        %v5329 = vadd.f32 %v5035, %v5328
        %v5330 = vpop.f32.mrb[0].mxu0
        %5331 = vmatprep.mubr.f32.mxu0 0.0
        %5332 = vmatmul.mubr.f32.gmra.mrb[0].mxu0 %v5161
        %v5333 = vpop.f32.mrb[0].mxu0
        %v5334 = vadd.f32 %v5035, %v5333
        %v5335 = vpop.f32.mrb[0].mxu0
        %5336 = vmatprep.mubr.f32.mxu0 0.0
        %5337 = vmatmul.mubr.f32.gmra.mrb[0].mxu0 %v5163
        %v5338 = vpop.f32.mrb[0].mxu0
        %v5339 = vadd.f32 %v5035, %v5338
        %v5340 = vpop.f32.mrb[0].mxu0
        %5341 = vmatprep.mubr.f32.mxu0 0.0
        %5342 = vmatmul.mubr.f32.gmra.mrb[0].mxu0 %v5165
        %v5343 = vpop.f32.mrb[0].mxu0
        %v5344 = vadd.f32 %v5035, %v5343
        %v5345 = vpop.f32.mrb[0].mxu0
        %5346 = vmatprep.mubr.f32.mxu0 0.0
        %5347 = vmatmul.mubr.f32.gmra.mrb[0].mxu0 %v5167
        %v5348 = vpop.f32.mrb[0].mxu0
        %v5349 = vadd.f32 %v5035, %v5348
        %v5350 = vpop.f32.mrb[0].mxu0
        %5351 = vmatprep.mubr.f32.mxu0 0.0
        %5352 = vmatmul.mubr.f32.gmra.mrb[0].mxu0 %v5169
        %v5353 = vpop.f32.mrb[0].mxu0
        %v5354 = vadd.f32 %v5035, %v5353
        %v5355 = vpop.f32.mrb[0].mxu0
        %5356 = vmatprep.mubr.f32.mxu0 0.0
        %5357 = vmatmul.mubr.f32.gmra.mrb[0].mxu0 %v5171
        %v5358 = vpop.f32.mrb[0].mxu0
        %v5359 = vadd.f32 %v5035, %v5358
        %v5360 = vpop.f32.mrb[0].mxu0
        %5361 = vmatprep.mubr.f32.mxu0 0.0
        %5362 = vmatmul.mubr.f32.gmra.mrb[0].mxu0 %v5173
        %v5363 = vpop.f32.mrb[0].mxu0
        %v5364 = vadd.f32 %v5035, %v5363
        %v5365 = vpop.f32.mrb[0].mxu0
        %5366 = vmatprep.mubr.f32.mxu0 0.0
        %5367 = vmatmul.mubr.f32.gmra.mrb[0].mxu0 %v5175
        %v5368 = vpop.f32.mrb[0].mxu0
        %v5369 = vadd.f32 %v5035, %v5368
        %v5370 = vpop.f32.mrb[0].mxu0
        %5371 = vmatprep.mubr.f32.mxu0 0.0
        %5372 = vmatmul.mubr.f32.gmra.mrb[0].mxu0 %v5177
        %v5373 = vpop.f32.mrb[0].mxu0
        %v5374 = vadd.f32 %v5035, %v5373
        %v5375 = vpop.f32.mrb[0].mxu0
        %5376 = vmatprep.mubr.f32.mxu0 0.0
        %5377 = vmatmul.mubr.f32.gmra.mrb[0].mxu0 %v5179
        %v5378 = vpop.f32.mrb[0].mxu0
        %v5379 = vadd.f32 %v5035, %v5378
        %v5380 = vpop.f32.mrb[0].mxu0
        %5381 = vmatprep.mubr.f32.mxu0 0.0
        %5382 = vmatmul.mubr.f32.gmra.mrb[0].mxu0 %v5181
        %v5383 = vpop.f32.mrb[0].mxu0
        %v5384 = vadd.f32 %v5035, %v5383
        %v5385 = vpop.f32.mrb[0].mxu0
        %5386 = vmatprep.mubr.f32.mxu0 0.0
        %5387 = vmatmul.mubr.f32.gmra.mrb[0].mxu0 %v5183
        %v5388 = vpop.f32.mrb[0].mxu0
        %v5389 = vadd.f32 %v5035, %v5388
        %v5390 = vpop.f32.mrb[0].mxu0
        %5391 = vmatprep.mubr.f32.mxu0 0.0
        %5392 = vmatmul.mubr.f32.gmra.mrb[0].mxu0 %v5185
        %v5393 = vpop.f32.mrb[0].mxu0
        %v5394 = vadd.f32 %v5035, %v5393
        %v5395 = vpop.f32.mrb[0].mxu0
        %5396 = vmatprep.mubr.f32.mxu0 0.0
        %5397 = vmatmul.mubr.f32.gmra.mrb[0].mxu0 %v5187
        %v5398 = vpop.f32.mrb[0].mxu0
        %v5399 = vadd.f32 %v5035, %v5398
        %v5400 = vpop.f32.mrb[0].mxu0
        %5401 = vmatprep.mubr.f32.mxu0 0.0
        %5402 = vmatmul.mubr.f32.gmra.mrb[0].mxu0 %v5189
        %v5403 = vpop.f32.mrb[0].mxu0
        %v5404 = vadd.f32 %v5035, %v5403
        %v5405 = vpop.f32.mrb[0].mxu0
        %5406 = vmatprep.mubr.f32.mxu0 0.0
        %5407 = vmatmul.mubr.f32.gmra.mrb[0].mxu0 %v5191
        %v5408 = vpop.f32.mrb[0].mxu0
        %v5409 = vadd.f32 %v5035, %v5408
        %v5410 = vpop.f32.mrb[0].mxu0
        %5411 = vmatprep.mubr.f32.mxu0 0.0
        %5412 = vmatmul.mubr.f32.gmra.mrb[0].mxu0 %v5193
        %v5413 = vpop.f32.mrb[0].mxu0
        %v5414 = vadd.f32 %v5035, %v5413
        %v5415 = vpop.f32.mrb[0].mxu0
        %5416 = vmatprep.mubr.f32.mxu0 0.0
        %5417 = vmatmul.mubr.f32.gmra.mrb[0].mxu0 %v5195
        %v5418 = vpop.f32.mrb[0].mxu0
        %v5419 = vadd.f32 %v5035, %v5418
        %v5420 = vpop.f32.mrb[0].mxu0
        %5421 = vdwg.mxu0
        %v5422 = vadd.f32 %v5264, %v1047
        %v5423 = vadd.f32 %v5269, %v1048
        %v5424 = vadd.f32 %v5274, %v1049
        %v5425 = vadd.f32 %v5279, %v1050
        %v5426 = vadd.f32 %v5284, %v1051
        %v5427 = vadd.f32 %v5289, %v1052
        %v5428 = vadd.f32 %v5294, %v1053
        %v5429 = vadd.f32 %v5299, %v1054
        %v5430 = vadd.f32 %v5304, %v1055
        %v5431 = vadd.f32 %v5309, %v1056
        %v5432 = vadd.f32 %v5314, %v1057
        %v5433 = vadd.f32 %v5319, %v1058
        %v5434 = vadd.f32 %v5324, %v1059
        %v5435 = vadd.f32 %v5329, %v1060
        %v5436 = vadd.f32 %v5334, %v1061
        %v5437 = vadd.f32 %v5339, %v1062
        %v5438 = vadd.f32 %v5344, %v1063
        %v5439 = vadd.f32 %v5349, %v1064
        %v5440 = vadd.f32 %v5354, %v1065
        %v5441 = vadd.f32 %v5359, %v1066
        %v5442 = vadd.f32 %v5364, %v1067
        %v5443 = vadd.f32 %v5369, %v1068
        %v5444 = vadd.f32 %v5374, %v1069
        %v5445 = vadd.f32 %v5379, %v1070
        %v5446 = vadd.f32 %v5384, %v1071
        %v5447 = vadd.f32 %v5389, %v1072
        %v5448 = vadd.f32 %v5394, %v1073
        %v5449 = vadd.f32 %v5399, %v1074
        %v5450 = vadd.f32 %v5404, %v1075
        %v5451 = vadd.f32 %v5409, %v1076
        %v5452 = vadd.f32 %v5414, %v1077
        %v5453 = vadd.f32 %v5419, %v1078
        %v5454 = vmul.f32 %v5422, %v5422
        %v5455 = vmul.f32 %v5423, %v5423
        %v5456 = vmul.f32 %v5424, %v5424
        %v5457 = vmul.f32 %v5425, %v5425
        %v5458 = vmul.f32 %v5426, %v5426
        %v5459 = vmul.f32 %v5427, %v5427
        %v5460 = vmul.f32 %v5428, %v5428
        %v5461 = vmul.f32 %v5429, %v5429
        %v5462 = vmul.f32 %v5430, %v5430
        %v5463 = vmul.f32 %v5431, %v5431
        %v5464 = vmul.f32 %v5432, %v5432
        %v5465 = vmul.f32 %v5433, %v5433
        %v5466 = vmul.f32 %v5434, %v5434
        %v5467 = vmul.f32 %v5435, %v5435
        %v5468 = vmul.f32 %v5436, %v5436
        %v5469 = vmul.f32 %v5437, %v5437
        %v5470 = vmul.f32 %v5438, %v5438
        %v5471 = vmul.f32 %v5439, %v5439
        %v5472 = vmul.f32 %v5440, %v5440
        %v5473 = vmul.f32 %v5441, %v5441
        %v5474 = vmul.f32 %v5442, %v5442
        %v5475 = vmul.f32 %v5443, %v5443
        %v5476 = vmul.f32 %v5444, %v5444
        %v5477 = vmul.f32 %v5445, %v5445
        %v5478 = vmul.f32 %v5446, %v5446
        %v5479 = vmul.f32 %v5447, %v5447
        %v5480 = vmul.f32 %v5448, %v5448
        %v5481 = vmul.f32 %v5449, %v5449
        %v5482 = vmul.f32 %v5450, %v5450
        %v5483 = vmul.f32 %v5451, %v5451
        %v5484 = vmul.f32 %v5452, %v5452
        %v5485 = vmul.f32 %v5453, %v5453
        %v5486 = vsel %vm943, %v5454, 0.0
        %5487 = vadd.xlane.f32.xlu0 %v5486
        %v5488 = vpop.xlane.xlu0 %5487
        %v5489 = vsel %vm943, %v5455, 0.0
        %5490 = vadd.xlane.f32.xlu0 %v5489
        %v5491 = vpop.xlane.xlu0 %5490
        %v5492 = vsel %vm943, %v5456, 0.0
        %5493 = vadd.xlane.f32.xlu0 %v5492
        %v5494 = vpop.xlane.xlu0 %5493
        %v5495 = vsel %vm943, %v5457, 0.0
        %5496 = vadd.xlane.f32.xlu0 %v5495
        %v5497 = vpop.xlane.xlu0 %5496
        %v5498 = vsel %vm943, %v5458, 0.0
        %5499 = vadd.xlane.f32.xlu0 %v5498
        %v5500 = vpop.xlane.xlu0 %5499
        %v5501 = vsel %vm943, %v5459, 0.0
        %5502 = vadd.xlane.f32.xlu0 %v5501
        %v5503 = vpop.xlane.xlu0 %5502
        %v5504 = vsel %vm943, %v5460, 0.0
        %5505 = vadd.xlane.f32.xlu0 %v5504
        %v5506 = vpop.xlane.xlu0 %5505
        %v5507 = vsel %vm943, %v5461, 0.0
        %5508 = vadd.xlane.f32.xlu0 %v5507
        %v5509 = vpop.xlane.xlu0 %5508
        %v5510 = vsel %vm943, %v5462, 0.0
        %5511 = vadd.xlane.f32.xlu0 %v5510
        %v5512 = vpop.xlane.xlu0 %5511
        %v5513 = vsel %vm943, %v5463, 0.0
        %5514 = vadd.xlane.f32.xlu0 %v5513
        %v5515 = vpop.xlane.xlu0 %5514
        %v5516 = vsel %vm943, %v5464, 0.0
        %5517 = vadd.xlane.f32.xlu0 %v5516
        %v5518 = vpop.xlane.xlu0 %5517
        %v5519 = vsel %vm943, %v5465, 0.0
        %5520 = vadd.xlane.f32.xlu0 %v5519
        %v5521 = vpop.xlane.xlu0 %5520
        %v5522 = vsel %vm943, %v5466, 0.0
        %5523 = vadd.xlane.f32.xlu0 %v5522
        %v5524 = vpop.xlane.xlu0 %5523
        %v5525 = vsel %vm943, %v5467, 0.0
        %5526 = vadd.xlane.f32.xlu0 %v5525
        %v5527 = vpop.xlane.xlu0 %5526
        %v5528 = vsel %vm943, %v5468, 0.0
        %5529 = vadd.xlane.f32.xlu0 %v5528
        %v5530 = vpop.xlane.xlu0 %5529
        %v5531 = vsel %vm943, %v5469, 0.0
        %5532 = vadd.xlane.f32.xlu0 %v5531
        %v5533 = vpop.xlane.xlu0 %5532
        %v5534 = vsel %vm943, %v5470, 0.0
        %5535 = vadd.xlane.f32.xlu0 %v5534
        %v5536 = vpop.xlane.xlu0 %5535
        %v5537 = vsel %vm943, %v5471, 0.0
        %5538 = vadd.xlane.f32.xlu0 %v5537
        %v5539 = vpop.xlane.xlu0 %5538
        %v5540 = vsel %vm943, %v5472, 0.0
        %5541 = vadd.xlane.f32.xlu0 %v5540
        %v5542 = vpop.xlane.xlu0 %5541
        %v5543 = vsel %vm943, %v5473, 0.0
        %5544 = vadd.xlane.f32.xlu0 %v5543
        %v5545 = vpop.xlane.xlu0 %5544
        %v5546 = vsel %vm943, %v5474, 0.0
        %5547 = vadd.xlane.f32.xlu0 %v5546
        %v5548 = vpop.xlane.xlu0 %5547
        %v5549 = vsel %vm943, %v5475, 0.0
        %5550 = vadd.xlane.f32.xlu0 %v5549
        %v5551 = vpop.xlane.xlu0 %5550
        %v5552 = vsel %vm943, %v5476, 0.0
        %5553 = vadd.xlane.f32.xlu0 %v5552
        %v5554 = vpop.xlane.xlu0 %5553
        %v5555 = vsel %vm943, %v5477, 0.0
        %5556 = vadd.xlane.f32.xlu0 %v5555
        %v5557 = vpop.xlane.xlu0 %5556
        %v5558 = vsel %vm943, %v5478, 0.0
        %5559 = vadd.xlane.f32.xlu0 %v5558
        %v5560 = vpop.xlane.xlu0 %5559
        %v5561 = vsel %vm943, %v5479, 0.0
        %5562 = vadd.xlane.f32.xlu0 %v5561
        %v5563 = vpop.xlane.xlu0 %5562
        %v5564 = vsel %vm943, %v5480, 0.0
        %5565 = vadd.xlane.f32.xlu0 %v5564
        %v5566 = vpop.xlane.xlu0 %5565
        %v5567 = vsel %vm943, %v5481, 0.0
        %5568 = vadd.xlane.f32.xlu0 %v5567
        %v5569 = vpop.xlane.xlu0 %5568
        %v5570 = vsel %vm943, %v5482, 0.0
        %5571 = vadd.xlane.f32.xlu0 %v5570
        %v5572 = vpop.xlane.xlu0 %5571
        %v5573 = vsel %vm943, %v5483, 0.0
        %5574 = vadd.xlane.f32.xlu0 %v5573
        %v5575 = vpop.xlane.xlu0 %5574
        %v5576 = vsel %vm943, %v5484, 0.0
        %5577 = vadd.xlane.f32.xlu0 %v5576
        %v5578 = vpop.xlane.xlu0 %5577
        %v5579 = vsel %vm943, %v5485, 0.0
        %5580 = vadd.xlane.f32.xlu0 %v5579
        %v5581 = vpop.xlane.xlu0 %5580
        %v5582 = vmax.f32 %v5488, 1e-24
        %v5583 = vmax.f32 %v5491, 1e-24
        %v5584 = vmax.f32 %v5494, 1e-24
        %v5585 = vmax.f32 %v5497, 1e-24
        %v5586 = vmax.f32 %v5500, 1e-24
        %v5587 = vmax.f32 %v5503, 1e-24
        %v5588 = vmax.f32 %v5506, 1e-24
        %v5589 = vmax.f32 %v5509, 1e-24
        %v5590 = vmax.f32 %v5512, 1e-24
        %v5591 = vmax.f32 %v5515, 1e-24
        %v5592 = vmax.f32 %v5518, 1e-24
        %v5593 = vmax.f32 %v5521, 1e-24
        %v5594 = vmax.f32 %v5524, 1e-24
        %v5595 = vmax.f32 %v5527, 1e-24
        %v5596 = vmax.f32 %v5530, 1e-24
        %v5597 = vmax.f32 %v5533, 1e-24
        %v5598 = vmax.f32 %v5536, 1e-24
        %v5599 = vmax.f32 %v5539, 1e-24
        %v5600 = vmax.f32 %v5542, 1e-24
        %v5601 = vmax.f32 %v5545, 1e-24
        %v5602 = vmax.f32 %v5548, 1e-24
        %v5603 = vmax.f32 %v5551, 1e-24
        %v5604 = vmax.f32 %v5554, 1e-24
        %v5605 = vmax.f32 %v5557, 1e-24
        %v5606 = vmax.f32 %v5560, 1e-24
        %v5607 = vmax.f32 %v5563, 1e-24
        %v5608 = vmax.f32 %v5566, 1e-24
        %v5609 = vmax.f32 %v5569, 1e-24
        %v5610 = vmax.f32 %v5572, 1e-24
        %v5611 = vmax.f32 %v5575, 1e-24
        %v5612 = vmax.f32 %v5578, 1e-24
        %v5613 = vmax.f32 %v5581, 1e-24
        %v5614 = vrsqrt.pop %v5582
        %v5615 = vrsqrt.pop %v5583
        %v5616 = vrsqrt.pop %v5584
        %v5617 = vrsqrt.pop %v5585
        %v5618 = vrsqrt.pop %v5586
        %v5619 = vrsqrt.pop %v5587
        %v5620 = vrsqrt.pop %v5588
        %v5621 = vrsqrt.pop %v5589
        %v5622 = vrsqrt.pop %v5590
        %v5623 = vrsqrt.pop %v5591
        %v5624 = vrsqrt.pop %v5592
        %v5625 = vrsqrt.pop %v5593
        %v5626 = vrsqrt.pop %v5594
        %v5627 = vrsqrt.pop %v5595
        %v5628 = vrsqrt.pop %v5596
        %v5629 = vrsqrt.pop %v5597
        %v5630 = vrsqrt.pop %v5598
        %v5631 = vrsqrt.pop %v5599
        %v5632 = vrsqrt.pop %v5600
        %v5633 = vrsqrt.pop %v5601
        %v5634 = vrsqrt.pop %v5602
        %v5635 = vrsqrt.pop %v5603
        %v5636 = vrsqrt.pop %v5604
        %v5637 = vrsqrt.pop %v5605
        %v5638 = vrsqrt.pop %v5606
        %v5639 = vrsqrt.pop %v5607
        %v5640 = vrsqrt.pop %v5608
        %v5641 = vrsqrt.pop %v5609
        %v5642 = vrsqrt.pop %v5610
        %v5643 = vrsqrt.pop %v5611
        %v5644 = vrsqrt.pop %v5612
        %v5645 = vrsqrt.pop %v5613
        %v5646 = vmul.f32 %v5422, %v5614
        %v5647 = vmul.f32 %v5423, %v5615
        %v5648 = vmul.f32 %v5424, %v5616
        %v5649 = vmul.f32 %v5425, %v5617
        %v5650 = vmul.f32 %v5426, %v5618
        %v5651 = vmul.f32 %v5427, %v5619
        %v5652 = vmul.f32 %v5428, %v5620
        %v5653 = vmul.f32 %v5429, %v5621
        %v5654 = vmul.f32 %v5430, %v5622
        %v5655 = vmul.f32 %v5431, %v5623
        %v5656 = vmul.f32 %v5432, %v5624
        %v5657 = vmul.f32 %v5433, %v5625
        %v5658 = vmul.f32 %v5434, %v5626
        %v5659 = vmul.f32 %v5435, %v5627
        %v5660 = vmul.f32 %v5436, %v5628
        %v5661 = vmul.f32 %v5437, %v5629
        %v5662 = vmul.f32 %v5438, %v5630
        %v5663 = vmul.f32 %v5439, %v5631
        %v5664 = vmul.f32 %v5440, %v5632
        %v5665 = vmul.f32 %v5441, %v5633
        %v5666 = vmul.f32 %v5442, %v5634
        %v5667 = vmul.f32 %v5443, %v5635
        %v5668 = vmul.f32 %v5444, %v5636
        %v5669 = vmul.f32 %v5445, %v5637
        %v5670 = vmul.f32 %v5446, %v5638
        %v5671 = vmul.f32 %v5447, %v5639
        %v5672 = vmul.f32 %v5448, %v5640
        %v5673 = vmul.f32 %v5449, %v5641
        %v5674 = vmul.f32 %v5450, %v5642
        %v5675 = vmul.f32 %v5451, %v5643
        %v5676 = vmul.f32 %v5452, %v5644
        %v5677 = vmul.f32 %v5453, %v5645
        %v5678 = vld [vmem:[#allocation29] sm:$0xff]
        %v5679 = vld [vmem:[#allocation29 + $0x8] sm:$0xff]
        %v5680 = vld [vmem:[#allocation31] sm:$0x1]
        %v5682 = vlaneseq
        %v5683 = vshrl.u32 %v5682, 7
        %v5684 = vsub.s32 0, %v5683
        %v5685 = vrot.slane %v5680, %v5684
        %v5688 = vsel %vm943, %v5646, 0
        %v5691 = vsel %vm943, %v5647, 0
        %v5694 = vsel %vm943, %v5648, 0
        %v5697 = vsel %vm943, %v5649, 0
        %v5700 = vsel %vm943, %v5650, 0
        %v5703 = vsel %vm943, %v5651, 0
        %v5706 = vsel %vm943, %v5652, 0
        %v5709 = vsel %vm943, %v5653, 0
        %v5712 = vsel %vm943, %v5654, 0
        %v5715 = vsel %vm943, %v5655, 0
        %v5718 = vsel %vm943, %v5656, 0
        %v5721 = vsel %vm943, %v5657, 0
        %v5724 = vsel %vm943, %v5658, 0
        %v5727 = vsel %vm943, %v5659, 0
        %v5730 = vsel %vm943, %v5660, 0
        %v5733 = vsel %vm943, %v5661, 0
        %v5736 = vsel %vm943, %v5662, 0
        %v5739 = vsel %vm943, %v5663, 0
        %v5742 = vsel %vm943, %v5664, 0
        %v5745 = vsel %vm943, %v5665, 0
        %v5748 = vsel %vm943, %v5666, 0
        %v5751 = vsel %vm943, %v5667, 0
        %v5754 = vsel %vm943, %v5668, 0
        %v5757 = vsel %vm943, %v5669, 0
        %v5760 = vsel %vm943, %v5670, 0
        %v5763 = vsel %vm943, %v5671, 0
        %v5766 = vsel %vm943, %v5672, 0
        %v5769 = vsel %vm943, %v5673, 0
        %v5772 = vsel %vm943, %v5674, 0
        %v5775 = vsel %vm943, %v5675, 0
        %v5778 = vsel %vm943, %v5676, 0
        %v5781 = vsel %vm943, %v5677, 0
        %5783 = vmatprep.subr.mxu0 0.0
        %5784 = vmatpush1.msra.mxu0 %v5678
        %5785 = vmatprep.subr.mxu0 0.0
        %5786 = vmatpush1.msra.mxu0 %v5679
        %5787 = vmatprep.subr.mxu0 0.0
        %5788 = vmatpush1.msra.mxu0 0.0
        %5789 = vmatprep.subr.mxu0 0.0
        %5790 = vmatpush1.msra.mxu0 0.0
        %5791 = vmatprep.subr.mxu0 0.0
        %5792 = vmatpush1.msra.mxu0 0.0
        %5793 = vmatprep.subr.mxu0 0.0
        %5794 = vmatpush1.msra.mxu0 0.0
        %5795 = vmatprep.subr.mxu0 0.0
        %5796 = vmatpush1.msra.mxu0 0.0
        %5797 = vmatprep.subr.mxu0 0.0
        %5798 = vmatpush1.msra.mxu0 0.0
        %5799 = vmatprep.subr.mxu0 0.0
        %5800 = vmatpush1.msra.mxu0 0.0
        %5801 = vmatprep.subr.mxu0 0.0
        %5802 = vmatpush1.msra.mxu0 0.0
        %5803 = vmatprep.subr.mxu0 0.0
        %5804 = vmatpush1.msra.mxu0 0.0
        %5805 = vmatprep.subr.mxu0 0.0
        %5806 = vmatpush1.msra.mxu0 0.0
        %5807 = vmatprep.subr.mxu0 0.0
        %5808 = vmatpush1.msra.mxu0 0.0
        %5809 = vmatprep.subr.mxu0 0.0
        %5810 = vmatpush1.msra.mxu0 0.0
        %5811 = vmatprep.subr.mxu0 0.0
        %5812 = vmatpush1.msra.mxu0 0.0
        %5813 = vmatprep.subr.mxu0 0.0
        %5814 = vmatpush1.msra.mxu0 0.0
        %5815 = vmatprep.subr.mxu0 0.0
        %5816 = vmatpush1.msra.mxu0 0.0
        %5817 = vmatprep.subr.mxu0 0.0
        %5818 = vmatpush1.msra.mxu0 0.0
        %5819 = vmatprep.subr.mxu0 0.0
        %5820 = vmatpush1.msra.mxu0 0.0
        %5821 = vmatprep.subr.mxu0 0.0
        %5822 = vmatpush1.msra.mxu0 0.0
        %5823 = vmatprep.subr.mxu0 0.0
        %5824 = vmatpush1.msra.mxu0 0.0
        %5825 = vmatprep.subr.mxu0 0.0
        %5826 = vmatpush1.msra.mxu0 0.0
        %5827 = vmatprep.subr.mxu0 0.0
        %5828 = vmatpush1.msra.mxu0 0.0
        %5829 = vmatprep.subr.mxu0 0.0
        %5830 = vmatpush1.msra.mxu0 0.0
        %5831 = vmatprep.subr.mxu0 0.0
        %5832 = vmatpush1.msra.mxu0 0.0
        %5833 = vmatprep.subr.mxu0 0.0
        %5834 = vmatpush1.msra.mxu0 0.0
        %5835 = vmatprep.subr.mxu0 0.0
        %5836 = vmatpush1.msra.mxu0 0.0
        %5837 = vmatprep.subr.mxu0 0.0
        %5838 = vmatpush1.msra.mxu0 0.0
        %5839 = vmatprep.subr.mxu0 0.0
        %5840 = vmatpush1.msra.mxu0 0.0
        %5841 = vmatprep.subr.mxu0 0.0
        %5842 = vmatpush1.msra.mxu0 0.0
        %5843 = vmatprep.subr.mxu0 0.0
        %5844 = vmatpush1.msra.mxu0 0.0
        %5845 = vmatprep.subr.mxu0 0.0
        %5846 = vmatpush1.msra.mxu0 0.0
        %5847 = vmatprep.mubr.f32.mxu0 0.0
        %5848 = vmatmul.mubr.f32.gmra.mrb[0].mxu0 %v5688
        %v5849 = vpop.f32.mrb[0].mxu0
        %v5850 = vadd.f32 %v5685, %v5849
        %v5851 = vpop.f32.mrb[0].mxu0
        %5852 = vmatprep.mubr.f32.mxu0 0.0
        %5853 = vmatmul.mubr.f32.gmra.mrb[0].mxu0 %v5691
        %v5854 = vpop.f32.mrb[0].mxu0
        %v5855 = vadd.f32 %v5685, %v5854
        %v5856 = vpop.f32.mrb[0].mxu0
        %5857 = vmatprep.mubr.f32.mxu0 0.0
        %5858 = vmatmul.mubr.f32.gmra.mrb[0].mxu0 %v5694
        %v5859 = vpop.f32.mrb[0].mxu0
        %v5860 = vadd.f32 %v5685, %v5859
        %v5861 = vpop.f32.mrb[0].mxu0
        %5862 = vmatprep.mubr.f32.mxu0 0.0
        %5863 = vmatmul.mubr.f32.gmra.mrb[0].mxu0 %v5697
        %v5864 = vpop.f32.mrb[0].mxu0
        %v5865 = vadd.f32 %v5685, %v5864
        %v5866 = vpop.f32.mrb[0].mxu0
        %5867 = vmatprep.mubr.f32.mxu0 0.0
        %5868 = vmatmul.mubr.f32.gmra.mrb[0].mxu0 %v5700
        %v5869 = vpop.f32.mrb[0].mxu0
        %v5870 = vadd.f32 %v5685, %v5869
        %v5871 = vpop.f32.mrb[0].mxu0
        %5872 = vmatprep.mubr.f32.mxu0 0.0
        %5873 = vmatmul.mubr.f32.gmra.mrb[0].mxu0 %v5703
        %v5874 = vpop.f32.mrb[0].mxu0
        %v5875 = vadd.f32 %v5685, %v5874
        %v5876 = vpop.f32.mrb[0].mxu0
        %5877 = vmatprep.mubr.f32.mxu0 0.0
        %5878 = vmatmul.mubr.f32.gmra.mrb[0].mxu0 %v5706
        %v5879 = vpop.f32.mrb[0].mxu0
        %v5880 = vadd.f32 %v5685, %v5879
        %v5881 = vpop.f32.mrb[0].mxu0
        %5882 = vmatprep.mubr.f32.mxu0 0.0
        %5883 = vmatmul.mubr.f32.gmra.mrb[0].mxu0 %v5709
        %v5884 = vpop.f32.mrb[0].mxu0
        %v5885 = vadd.f32 %v5685, %v5884
        %v5886 = vpop.f32.mrb[0].mxu0
        %5887 = vmatprep.mubr.f32.mxu0 0.0
        %5888 = vmatmul.mubr.f32.gmra.mrb[0].mxu0 %v5712
        %v5889 = vpop.f32.mrb[0].mxu0
        %v5890 = vadd.f32 %v5685, %v5889
        %v5891 = vpop.f32.mrb[0].mxu0
        %5892 = vmatprep.mubr.f32.mxu0 0.0
        %5893 = vmatmul.mubr.f32.gmra.mrb[0].mxu0 %v5715
        %v5894 = vpop.f32.mrb[0].mxu0
        %v5895 = vadd.f32 %v5685, %v5894
        %v5896 = vpop.f32.mrb[0].mxu0
        %5897 = vmatprep.mubr.f32.mxu0 0.0
        %5898 = vmatmul.mubr.f32.gmra.mrb[0].mxu0 %v5718
        %v5899 = vpop.f32.mrb[0].mxu0
        %v5900 = vadd.f32 %v5685, %v5899
        %v5901 = vpop.f32.mrb[0].mxu0
        %5902 = vmatprep.mubr.f32.mxu0 0.0
        %5903 = vmatmul.mubr.f32.gmra.mrb[0].mxu0 %v5721
        %v5904 = vpop.f32.mrb[0].mxu0
        %v5905 = vadd.f32 %v5685, %v5904
        %v5906 = vpop.f32.mrb[0].mxu0
        %5907 = vmatprep.mubr.f32.mxu0 0.0
        %5908 = vmatmul.mubr.f32.gmra.mrb[0].mxu0 %v5724
        %v5909 = vpop.f32.mrb[0].mxu0
        %v5910 = vadd.f32 %v5685, %v5909
        %v5911 = vpop.f32.mrb[0].mxu0
        %5912 = vmatprep.mubr.f32.mxu0 0.0
        %5913 = vmatmul.mubr.f32.gmra.mrb[0].mxu0 %v5727
        %v5914 = vpop.f32.mrb[0].mxu0
        %v5915 = vadd.f32 %v5685, %v5914
        %v5916 = vpop.f32.mrb[0].mxu0
        %5917 = vmatprep.mubr.f32.mxu0 0.0
        %5918 = vmatmul.mubr.f32.gmra.mrb[0].mxu0 %v5730
        %v5919 = vpop.f32.mrb[0].mxu0
        %v5920 = vadd.f32 %v5685, %v5919
        %v5921 = vpop.f32.mrb[0].mxu0
        %5922 = vmatprep.mubr.f32.mxu0 0.0
        %5923 = vmatmul.mubr.f32.gmra.mrb[0].mxu0 %v5733
        %v5924 = vpop.f32.mrb[0].mxu0
        %v5925 = vadd.f32 %v5685, %v5924
        %v5926 = vpop.f32.mrb[0].mxu0
        %5927 = vmatprep.mubr.f32.mxu0 0.0
        %5928 = vmatmul.mubr.f32.gmra.mrb[0].mxu0 %v5736
        %v5929 = vpop.f32.mrb[0].mxu0
        %v5930 = vadd.f32 %v5685, %v5929
        %v5931 = vpop.f32.mrb[0].mxu0
        %5932 = vmatprep.mubr.f32.mxu0 0.0
        %5933 = vmatmul.mubr.f32.gmra.mrb[0].mxu0 %v5739
        %v5934 = vpop.f32.mrb[0].mxu0
        %v5935 = vadd.f32 %v5685, %v5934
        %v5936 = vpop.f32.mrb[0].mxu0
        %5937 = vmatprep.mubr.f32.mxu0 0.0
        %5938 = vmatmul.mubr.f32.gmra.mrb[0].mxu0 %v5742
        %v5939 = vpop.f32.mrb[0].mxu0
        %v5940 = vadd.f32 %v5685, %v5939
        %v5941 = vpop.f32.mrb[0].mxu0
        %5942 = vmatprep.mubr.f32.mxu0 0.0
        %5943 = vmatmul.mubr.f32.gmra.mrb[0].mxu0 %v5745
        %v5944 = vpop.f32.mrb[0].mxu0
        %v5945 = vadd.f32 %v5685, %v5944
        %v5946 = vpop.f32.mrb[0].mxu0
        %5947 = vmatprep.mubr.f32.mxu0 0.0
        %5948 = vmatmul.mubr.f32.gmra.mrb[0].mxu0 %v5748
        %v5949 = vpop.f32.mrb[0].mxu0
        %v5950 = vadd.f32 %v5685, %v5949
        %v5951 = vpop.f32.mrb[0].mxu0
        %5952 = vmatprep.mubr.f32.mxu0 0.0
        %5953 = vmatmul.mubr.f32.gmra.mrb[0].mxu0 %v5751
        %v5954 = vpop.f32.mrb[0].mxu0
        %v5955 = vadd.f32 %v5685, %v5954
        %v5956 = vpop.f32.mrb[0].mxu0
        %5957 = vmatprep.mubr.f32.mxu0 0.0
        %5958 = vmatmul.mubr.f32.gmra.mrb[0].mxu0 %v5754
        %v5959 = vpop.f32.mrb[0].mxu0
        %v5960 = vadd.f32 %v5685, %v5959
        %v5961 = vpop.f32.mrb[0].mxu0
        %5962 = vmatprep.mubr.f32.mxu0 0.0
        %5963 = vmatmul.mubr.f32.gmra.mrb[0].mxu0 %v5757
        %v5964 = vpop.f32.mrb[0].mxu0
        %v5965 = vadd.f32 %v5685, %v5964
        %v5966 = vpop.f32.mrb[0].mxu0
        %5967 = vmatprep.mubr.f32.mxu0 0.0
        %5968 = vmatmul.mubr.f32.gmra.mrb[0].mxu0 %v5760
        %v5969 = vpop.f32.mrb[0].mxu0
        %v5970 = vadd.f32 %v5685, %v5969
        %v5971 = vpop.f32.mrb[0].mxu0
        %5972 = vmatprep.mubr.f32.mxu0 0.0
        %5973 = vmatmul.mubr.f32.gmra.mrb[0].mxu0 %v5763
        %v5974 = vpop.f32.mrb[0].mxu0
        %v5975 = vadd.f32 %v5685, %v5974
        %v5976 = vpop.f32.mrb[0].mxu0
        %5977 = vmatprep.mubr.f32.mxu0 0.0
        %5978 = vmatmul.mubr.f32.gmra.mrb[0].mxu0 %v5766
        %v5979 = vpop.f32.mrb[0].mxu0
        %v5980 = vadd.f32 %v5685, %v5979
        %v5981 = vpop.f32.mrb[0].mxu0
        %5982 = vmatprep.mubr.f32.mxu0 0.0
        %5983 = vmatmul.mubr.f32.gmra.mrb[0].mxu0 %v5769
        %v5984 = vpop.f32.mrb[0].mxu0
        %v5985 = vadd.f32 %v5685, %v5984
        %v5986 = vpop.f32.mrb[0].mxu0
        %5987 = vmatprep.mubr.f32.mxu0 0.0
        %5988 = vmatmul.mubr.f32.gmra.mrb[0].mxu0 %v5772
        %v5989 = vpop.f32.mrb[0].mxu0
        %v5990 = vadd.f32 %v5685, %v5989
        %v5991 = vpop.f32.mrb[0].mxu0
        %5992 = vmatprep.mubr.f32.mxu0 0.0
        %5993 = vmatmul.mubr.f32.gmra.mrb[0].mxu0 %v5775
        %v5994 = vpop.f32.mrb[0].mxu0
        %v5995 = vadd.f32 %v5685, %v5994
        %v5996 = vpop.f32.mrb[0].mxu0
        %5997 = vmatprep.mubr.f32.mxu0 0.0
        %5998 = vmatmul.mubr.f32.gmra.mrb[0].mxu0 %v5778
        %v5999 = vpop.f32.mrb[0].mxu0
        %v6000 = vadd.f32 %v5685, %v5999
        %v6001 = vpop.f32.mrb[0].mxu0
        %6002 = vmatprep.mubr.f32.mxu0 0.0
        %6003 = vmatmul.mubr.f32.gmra.mrb[0].mxu0 %v5781
        %v6004 = vpop.f32.mrb[0].mxu0
        %v6005 = vadd.f32 %v5685, %v6004
        %v6006 = vpop.f32.mrb[0].mxu0
        %6007 = vdwg.mxu0
        %v6008 = vmul.f32 %v5850, 0.5
        %v6009 = vmul.f32 %v5855, 0.5
        %v6010 = vmul.f32 %v5860, 0.5
        %v6011 = vmul.f32 %v5865, 0.5
        %v6012 = vmul.f32 %v5870, 0.5
        %v6013 = vmul.f32 %v5875, 0.5
        %v6014 = vmul.f32 %v5880, 0.5
        %v6015 = vmul.f32 %v5885, 0.5
        %v6016 = vmul.f32 %v5890, 0.5
        %v6017 = vmul.f32 %v5895, 0.5
        %v6018 = vmul.f32 %v5900, 0.5
        %v6019 = vmul.f32 %v5905, 0.5
        %v6020 = vmul.f32 %v5910, 0.5
        %v6021 = vmul.f32 %v5915, 0.5
        %v6022 = vmul.f32 %v5920, 0.5
        %v6023 = vmul.f32 %v5925, 0.5
        %v6024 = vmul.f32 %v5930, 0.5
        %v6025 = vmul.f32 %v5935, 0.5
        %v6026 = vmul.f32 %v5940, 0.5
        %v6027 = vmul.f32 %v5945, 0.5
        %v6028 = vmul.f32 %v5950, 0.5
        %v6029 = vmul.f32 %v5955, 0.5
        %v6030 = vmul.f32 %v5960, 0.5
        %v6031 = vmul.f32 %v5965, 0.5
        %v6032 = vmul.f32 %v5970, 0.5
        %v6033 = vmul.f32 %v5975, 0.5
        %v6034 = vmul.f32 %v5980, 0.5
        %v6035 = vmul.f32 %v5985, 0.5
        %v6036 = vmul.f32 %v5990, 0.5
        %v6037 = vmul.f32 %v5995, 0.5
        %v6038 = vmul.f32 %v6000, 0.5
        %v6039 = vmul.f32 %v6005, 0.5
        %v6040 = vmul.f32 %v5850, 0.044715
        %v6041 = vmul.f32 %v5855, 0.044715
        %v6042 = vmul.f32 %v5860, 0.044715
        %v6043 = vmul.f32 %v5865, 0.044715
        %v6044 = vmul.f32 %v5870, 0.044715
        %v6045 = vmul.f32 %v5875, 0.044715
        %v6046 = vmul.f32 %v5880, 0.044715
        %v6047 = vmul.f32 %v5885, 0.044715
        %v6048 = vmul.f32 %v5890, 0.044715
        %v6049 = vmul.f32 %v5895, 0.044715
        %v6050 = vmul.f32 %v5900, 0.044715
        %v6051 = vmul.f32 %v5905, 0.044715
        %v6052 = vmul.f32 %v5910, 0.044715
        %v6053 = vmul.f32 %v5915, 0.044715
        %v6054 = vmul.f32 %v5920, 0.044715
        %v6055 = vmul.f32 %v5925, 0.044715
        %v6056 = vmul.f32 %v5930, 0.044715
        %v6057 = vmul.f32 %v5935, 0.044715
        %v6058 = vmul.f32 %v5940, 0.044715
        %v6059 = vmul.f32 %v5945, 0.044715
        %v6060 = vmul.f32 %v5950, 0.044715
        %v6061 = vmul.f32 %v5955, 0.044715
        %v6062 = vmul.f32 %v5960, 0.044715
        %v6063 = vmul.f32 %v5965, 0.044715
        %v6064 = vmul.f32 %v5970, 0.044715
        %v6065 = vmul.f32 %v5975, 0.044715
        %v6066 = vmul.f32 %v5980, 0.044715
        %v6067 = vmul.f32 %v5985, 0.044715
        %v6068 = vmul.f32 %v5990, 0.044715
        %v6069 = vmul.f32 %v5995, 0.044715
        %v6070 = vmul.f32 %v6000, 0.044715
        %v6071 = vmul.f32 %v6005, 0.044715
        %v6072 = vmul.f32 %v6040, %v5850
        %v6073 = vmul.f32 %v6041, %v5855
        %v6074 = vmul.f32 %v6042, %v5860
        %v6075 = vmul.f32 %v6043, %v5865
        %v6076 = vmul.f32 %v6044, %v5870
        %v6077 = vmul.f32 %v6045, %v5875
        %v6078 = vmul.f32 %v6046, %v5880
        %v6079 = vmul.f32 %v6047, %v5885
        %v6080 = vmul.f32 %v6048, %v5890
        %v6081 = vmul.f32 %v6049, %v5895
        %v6082 = vmul.f32 %v6050, %v5900
        %v6083 = vmul.f32 %v6051, %v5905
        %v6084 = vmul.f32 %v6052, %v5910
        %v6085 = vmul.f32 %v6053, %v5915
        %v6086 = vmul.f32 %v6054, %v5920
        %v6087 = vmul.f32 %v6055, %v5925
        %v6088 = vmul.f32 %v6056, %v5930
        %v6089 = vmul.f32 %v6057, %v5935
        %v6090 = vmul.f32 %v6058, %v5940
        %v6091 = vmul.f32 %v6059, %v5945
        %v6092 = vmul.f32 %v6060, %v5950
        %v6093 = vmul.f32 %v6061, %v5955
        %v6094 = vmul.f32 %v6062, %v5960
        %v6095 = vmul.f32 %v6063, %v5965
        %v6096 = vmul.f32 %v6064, %v5970
        %v6097 = vmul.f32 %v6065, %v5975
        %v6098 = vmul.f32 %v6066, %v5980
        %v6099 = vmul.f32 %v6067, %v5985
        %v6100 = vmul.f32 %v6068, %v5990
        %v6101 = vmul.f32 %v6069, %v5995
        %v6102 = vmul.f32 %v6070, %v6000
        %v6103 = vmul.f32 %v6071, %v6005
        %v6104 = vmul.f32 %v6072, %v5850
        %v6105 = vmul.f32 %v6073, %v5855
        %v6106 = vmul.f32 %v6074, %v5860
        %v6107 = vmul.f32 %v6075, %v5865
        %v6108 = vmul.f32 %v6076, %v5870
        %v6109 = vmul.f32 %v6077, %v5875
        %v6110 = vmul.f32 %v6078, %v5880
        %v6111 = vmul.f32 %v6079, %v5885
        %v6112 = vmul.f32 %v6080, %v5890
        %v6113 = vmul.f32 %v6081, %v5895
        %v6114 = vmul.f32 %v6082, %v5900
        %v6115 = vmul.f32 %v6083, %v5905
        %v6116 = vmul.f32 %v6084, %v5910
        %v6117 = vmul.f32 %v6085, %v5915
        %v6118 = vmul.f32 %v6086, %v5920
        %v6119 = vmul.f32 %v6087, %v5925
        %v6120 = vmul.f32 %v6088, %v5930
        %v6121 = vmul.f32 %v6089, %v5935
        %v6122 = vmul.f32 %v6090, %v5940
        %v6123 = vmul.f32 %v6091, %v5945
        %v6124 = vmul.f32 %v6092, %v5950
        %v6125 = vmul.f32 %v6093, %v5955
        %v6126 = vmul.f32 %v6094, %v5960
        %v6127 = vmul.f32 %v6095, %v5965
        %v6128 = vmul.f32 %v6096, %v5970
        %v6129 = vmul.f32 %v6097, %v5975
        %v6130 = vmul.f32 %v6098, %v5980
        %v6131 = vmul.f32 %v6099, %v5985
        %v6132 = vmul.f32 %v6100, %v5990
        %v6133 = vmul.f32 %v6101, %v5995
        %v6134 = vmul.f32 %v6102, %v6000
        %v6135 = vmul.f32 %v6103, %v6005
        %v6136 = vadd.f32 %v5850, %v6104
        %v6137 = vadd.f32 %v5855, %v6105
        %v6138 = vadd.f32 %v5860, %v6106
        %v6139 = vadd.f32 %v5865, %v6107
        %v6140 = vadd.f32 %v5870, %v6108
        %v6141 = vadd.f32 %v5875, %v6109
        %v6142 = vadd.f32 %v5880, %v6110
        %v6143 = vadd.f32 %v5885, %v6111
        %v6144 = vadd.f32 %v5890, %v6112
        %v6145 = vadd.f32 %v5895, %v6113
        %v6146 = vadd.f32 %v5900, %v6114
        %v6147 = vadd.f32 %v5905, %v6115
        %v6148 = vadd.f32 %v5910, %v6116
        %v6149 = vadd.f32 %v5915, %v6117
        %v6150 = vadd.f32 %v5920, %v6118
        %v6151 = vadd.f32 %v5925, %v6119
        %v6152 = vadd.f32 %v5930, %v6120
        %v6153 = vadd.f32 %v5935, %v6121
        %v6154 = vadd.f32 %v5940, %v6122
        %v6155 = vadd.f32 %v5945, %v6123
        %v6156 = vadd.f32 %v5950, %v6124
        %v6157 = vadd.f32 %v5955, %v6125
        %v6158 = vadd.f32 %v5960, %v6126
        %v6159 = vadd.f32 %v5965, %v6127
        %v6160 = vadd.f32 %v5970, %v6128
        %v6161 = vadd.f32 %v5975, %v6129
        %v6162 = vadd.f32 %v5980, %v6130
        %v6163 = vadd.f32 %v5985, %v6131
        %v6164 = vadd.f32 %v5990, %v6132
        %v6165 = vadd.f32 %v5995, %v6133
        %v6166 = vadd.f32 %v6000, %v6134
        %v6167 = vadd.f32 %v6005, %v6135
        %v6168 = vmul.f32 %v6136, 0.7978846
        %v6169 = vmul.f32 %v6137, 0.7978846
        %v6170 = vmul.f32 %v6138, 0.7978846
        %v6171 = vmul.f32 %v6139, 0.7978846
        %v6172 = vmul.f32 %v6140, 0.7978846
        %v6173 = vmul.f32 %v6141, 0.7978846
        %v6174 = vmul.f32 %v6142, 0.7978846
        %v6175 = vmul.f32 %v6143, 0.7978846
        %v6176 = vmul.f32 %v6144, 0.7978846
        %v6177 = vmul.f32 %v6145, 0.7978846
        %v6178 = vmul.f32 %v6146, 0.7978846
        %v6179 = vmul.f32 %v6147, 0.7978846
        %v6180 = vmul.f32 %v6148, 0.7978846
        %v6181 = vmul.f32 %v6149, 0.7978846
        %v6182 = vmul.f32 %v6150, 0.7978846
        %v6183 = vmul.f32 %v6151, 0.7978846
        %v6184 = vmul.f32 %v6152, 0.7978846
        %v6185 = vmul.f32 %v6153, 0.7978846
        %v6186 = vmul.f32 %v6154, 0.7978846
        %v6187 = vmul.f32 %v6155, 0.7978846
        %v6188 = vmul.f32 %v6156, 0.7978846
        %v6189 = vmul.f32 %v6157, 0.7978846
        %v6190 = vmul.f32 %v6158, 0.7978846
        %v6191 = vmul.f32 %v6159, 0.7978846
        %v6192 = vmul.f32 %v6160, 0.7978846
        %v6193 = vmul.f32 %v6161, 0.7978846
        %v6194 = vmul.f32 %v6162, 0.7978846
        %v6195 = vmul.f32 %v6163, 0.7978846
        %v6196 = vmul.f32 %v6164, 0.7978846
        %v6197 = vmul.f32 %v6165, 0.7978846
        %v6198 = vmul.f32 %v6166, 0.7978846
        %v6199 = vmul.f32 %v6167, 0.7978846
        %v6200 = vtanh.pop %v6168
        %v6201 = vtanh.pop %v6169
        %v6202 = vtanh.pop %v6170
        %v6203 = vtanh.pop %v6171
        %v6204 = vtanh.pop %v6172
        %v6205 = vtanh.pop %v6173
        %v6206 = vtanh.pop %v6174
        %v6207 = vtanh.pop %v6175
        %v6208 = vtanh.pop %v6176
        %v6209 = vtanh.pop %v6177
        %v6210 = vtanh.pop %v6178
        %v6211 = vtanh.pop %v6179
        %v6212 = vtanh.pop %v6180
        %v6213 = vtanh.pop %v6181
        %v6214 = vtanh.pop %v6182
        %v6215 = vtanh.pop %v6183
        %v6216 = vtanh.pop %v6184
        %v6217 = vtanh.pop %v6185
        %v6218 = vtanh.pop %v6186
        %v6219 = vtanh.pop %v6187
        %v6220 = vtanh.pop %v6188
        %v6221 = vtanh.pop %v6189
        %v6222 = vtanh.pop %v6190
        %v6223 = vtanh.pop %v6191
        %v6224 = vtanh.pop %v6192
        %v6225 = vtanh.pop %v6193
        %v6226 = vtanh.pop %v6194
        %v6227 = vtanh.pop %v6195
        %v6228 = vtanh.pop %v6196
        %v6229 = vtanh.pop %v6197
        %v6230 = vtanh.pop %v6198
        %v6231 = vtanh.pop %v6199
        %v6232 = vadd.f32 %v6200, 1.0
        %v6233 = vadd.f32 %v6201, 1.0
        %v6234 = vadd.f32 %v6202, 1.0
        %v6235 = vadd.f32 %v6203, 1.0
        %v6236 = vadd.f32 %v6204, 1.0
        %v6237 = vadd.f32 %v6205, 1.0
        %v6238 = vadd.f32 %v6206, 1.0
        %v6239 = vadd.f32 %v6207, 1.0
        %v6240 = vadd.f32 %v6208, 1.0
        %v6241 = vadd.f32 %v6209, 1.0
        %v6242 = vadd.f32 %v6210, 1.0
        %v6243 = vadd.f32 %v6211, 1.0
        %v6244 = vadd.f32 %v6212, 1.0
        %v6245 = vadd.f32 %v6213, 1.0
        %v6246 = vadd.f32 %v6214, 1.0
        %v6247 = vadd.f32 %v6215, 1.0
        %v6248 = vadd.f32 %v6216, 1.0
        %v6249 = vadd.f32 %v6217, 1.0
        %v6250 = vadd.f32 %v6218, 1.0
        %v6251 = vadd.f32 %v6219, 1.0
        %v6252 = vadd.f32 %v6220, 1.0
        %v6253 = vadd.f32 %v6221, 1.0
        %v6254 = vadd.f32 %v6222, 1.0
        %v6255 = vadd.f32 %v6223, 1.0
        %v6256 = vadd.f32 %v6224, 1.0
        %v6257 = vadd.f32 %v6225, 1.0
        %v6258 = vadd.f32 %v6226, 1.0
        %v6259 = vadd.f32 %v6227, 1.0
        %v6260 = vadd.f32 %v6228, 1.0
        %v6261 = vadd.f32 %v6229, 1.0
        %v6262 = vadd.f32 %v6230, 1.0
        %v6263 = vadd.f32 %v6231, 1.0
        %v6264 = vmul.f32 %v6008, %v6232
        %v6265 = vmul.f32 %v6009, %v6233
        %v6266 = vmul.f32 %v6010, %v6234
        %v6267 = vmul.f32 %v6011, %v6235
        %v6268 = vmul.f32 %v6012, %v6236
        %v6269 = vmul.f32 %v6013, %v6237
        %v6270 = vmul.f32 %v6014, %v6238
        %v6271 = vmul.f32 %v6015, %v6239
        %v6272 = vmul.f32 %v6016, %v6240
        %v6273 = vmul.f32 %v6017, %v6241
        %v6274 = vmul.f32 %v6018, %v6242
        %v6275 = vmul.f32 %v6019, %v6243
        %v6276 = vmul.f32 %v6020, %v6244
        %v6277 = vmul.f32 %v6021, %v6245
        %v6278 = vmul.f32 %v6022, %v6246
        %v6279 = vmul.f32 %v6023, %v6247
        %v6280 = vmul.f32 %v6024, %v6248
        %v6281 = vmul.f32 %v6025, %v6249
        %v6282 = vmul.f32 %v6026, %v6250
        %v6283 = vmul.f32 %v6027, %v6251
        %v6284 = vmul.f32 %v6028, %v6252
        %v6285 = vmul.f32 %v6029, %v6253
        %v6286 = vmul.f32 %v6030, %v6254
        %v6287 = vmul.f32 %v6031, %v6255
        %v6288 = vmul.f32 %v6032, %v6256
        %v6289 = vmul.f32 %v6033, %v6257
        %v6290 = vmul.f32 %v6034, %v6258
        %v6291 = vmul.f32 %v6035, %v6259
        %v6292 = vmul.f32 %v6036, %v6260
        %v6293 = vmul.f32 %v6037, %v6261
        %v6294 = vmul.f32 %v6038, %v6262
        %v6295 = vmul.f32 %v6039, %v6263
        %s6296 = scalar_lea.vmem [#allocation4], 24
        %6297 = vst.msk [vmem:[%s6296 + $0x1] sm:$0xff] %vm1001, %v6264
        %6298 = vst.msk [vmem:[%s6296 + $0x9] sm:$0xff] %vm1001, %v6265
        %6299 = vst.msk [vmem:[%s6296 + $0x19] sm:$0xff] %vm1001, %v6266
        %6300 = vst.msk [vmem:[%s6296 + $0x21] sm:$0xff] %vm1001, %v6267
        %6301 = vst.msk [vmem:[%s6296 + $0x31] sm:$0xff] %vm1001, %v6268
        %6302 = vst.msk [vmem:[%s6296 + $0x39] sm:$0xff] %vm1001, %v6269
        %6303 = vst.msk [vmem:[%s6296 + $0x49] sm:$0xff] %vm1001, %v6270
        %6304 = vst.msk [vmem:[%s6296 + $0x51] sm:$0xff] %vm1001, %v6271
        %6305 = vst.msk [vmem:[%s6296 + $0x61] sm:$0xff] %vm1001, %v6272
        %6306 = vst.msk [vmem:[%s6296 + $0x69] sm:$0xff] %vm1001, %v6273
        %6307 = vst.msk [vmem:[%s6296 + $0x79] sm:$0xff] %vm1001, %v6274
        %6308 = vst.msk [vmem:[%s6296 + $0x81] sm:$0xff] %vm1001, %v6275
        %6309 = vst.msk [vmem:[%s6296 + $0x91] sm:$0xff] %vm1001, %v6276
        %6310 = vst.msk [vmem:[%s6296 + $0x99] sm:$0xff] %vm1001, %v6277
        %6311 = vst.msk [vmem:[%s6296 + $0xa9] sm:$0xff] %vm1001, %v6278
        %6312 = vst.msk [vmem:[%s6296 + $0xb1] sm:$0xff] %vm1001, %v6279
        %6313 = vst.msk [vmem:[%s6296 + $0xc1] sm:$0xff] %vm1001, %v6280
        %6314 = vst.msk [vmem:[%s6296 + $0xc9] sm:$0xff] %vm1001, %v6281
        %6315 = vst.msk [vmem:[%s6296 + $0xd9] sm:$0xff] %vm1001, %v6282
        %6316 = vst.msk [vmem:[%s6296 + $0xe1] sm:$0xff] %vm1001, %v6283
        %6317 = vst.msk [vmem:[%s6296 + $0xf1] sm:$0xff] %vm1001, %v6284
        %6318 = vst.msk [vmem:[%s6296 + $0xf9] sm:$0xff] %vm1001, %v6285
        %6319 = vst.msk [vmem:[%s6296 + $0x109] sm:$0xff] %vm1001, %v6286
        %6320 = vst.msk [vmem:[%s6296 + $0x111] sm:$0xff] %vm1001, %v6287
        %6321 = vst.msk [vmem:[%s6296 + $0x121] sm:$0xff] %vm1001, %v6288
        %6322 = vst.msk [vmem:[%s6296 + $0x129] sm:$0xff] %vm1001, %v6289
        %6323 = vst.msk [vmem:[%s6296 + $0x139] sm:$0xff] %vm1001, %v6290
        %6324 = vst.msk [vmem:[%s6296 + $0x141] sm:$0xff] %vm1001, %v6291
        %6325 = vst.msk [vmem:[%s6296 + $0x151] sm:$0xff] %vm1001, %v6292
        %6326 = vst.msk [vmem:[%s6296 + $0x159] sm:$0xff] %vm1001, %v6293
        %6327 = vst.msk [vmem:[%s6296 + $0x169] sm:$0xff] %vm1001, %v6294
        %6328 = vst.msk [vmem:[%s6296 + $0x171] sm:$0xff] %vm1001, %v6295
        %v6329 = vld [vmem:[#allocation4] sm:$0xff]
        %v6330 = vld [vmem:[#allocation4 + $0x8] sm:$0xff]
        %v6331 = vld [vmem:[#allocation4 + $0x18] sm:$0xff]
        %v6332 = vld [vmem:[#allocation4 + $0x20] sm:$0xff]
        %v6333 = vld [vmem:[#allocation4 + $0x30] sm:$0xff]
        %v6334 = vld [vmem:[#allocation4 + $0x38] sm:$0xff]
        %v6335 = vld [vmem:[#allocation4 + $0x48] sm:$0xff]
        %v6336 = vld [vmem:[#allocation4 + $0x50] sm:$0xff]
        %v6337 = vld [vmem:[#allocation4 + $0x60] sm:$0xff]
        %v6338 = vld [vmem:[#allocation4 + $0x68] sm:$0xff]
        %v6339 = vld [vmem:[#allocation4 + $0x78] sm:$0xff]
        %v6340 = vld [vmem:[#allocation4 + $0x80] sm:$0xff]
        %v6341 = vld [vmem:[#allocation4 + $0x90] sm:$0xff]
        %v6342 = vld [vmem:[#allocation4 + $0x98] sm:$0xff]
        %v6343 = vld [vmem:[#allocation4 + $0xa8] sm:$0xff]
        %v6344 = vld [vmem:[#allocation4 + $0xb0] sm:$0xff]
        %v6345 = vld [vmem:[#allocation4 + $0xc0] sm:$0xff]
        %v6346 = vld [vmem:[#allocation4 + $0xc8] sm:$0xff]
        %v6347 = vld [vmem:[#allocation4 + $0xd8] sm:$0xff]
        %v6348 = vld [vmem:[#allocation4 + $0xe0] sm:$0xff]
        %v6349 = vld [vmem:[#allocation4 + $0xf0] sm:$0xff]
        %v6350 = vld [vmem:[#allocation4 + $0xf8] sm:$0xff]
        %v6351 = vld [vmem:[#allocation4 + $0x108] sm:$0xff]
        %v6352 = vld [vmem:[#allocation4 + $0x110] sm:$0xff]
        %v6353 = vld [vmem:[#allocation4 + $0x120] sm:$0xff]
        %v6354 = vld [vmem:[#allocation4 + $0x128] sm:$0xff]
        %v6355 = vld [vmem:[#allocation4 + $0x138] sm:$0xff]
        %v6356 = vld [vmem:[#allocation4 + $0x140] sm:$0xff]
        %v6357 = vld [vmem:[#allocation4 + $0x150] sm:$0xff]
        %v6358 = vld [vmem:[#allocation4 + $0x158] sm:$0xff]
        %v6359 = vld [vmem:[#allocation4 + $0x168] sm:$0xff]
        %v6360 = vld [vmem:[#allocation4 + $0x170] sm:$0xff]
        %v6361 = vld [vmem:[#allocation4 + $0x1] sm:$0xff]
        %v6362 = vld [vmem:[#allocation4 + $0x9] sm:$0xff]
        %v6363 = vld [vmem:[#allocation4 + $0x19] sm:$0xff]
        %v6364 = vld [vmem:[#allocation4 + $0x21] sm:$0xff]
        %v6365 = vld [vmem:[#allocation4 + $0x31] sm:$0xff]
        %v6366 = vld [vmem:[#allocation4 + $0x39] sm:$0xff]
        %v6367 = vld [vmem:[#allocation4 + $0x49] sm:$0xff]
        %v6368 = vld [vmem:[#allocation4 + $0x51] sm:$0xff]
        %v6369 = vld [vmem:[#allocation4 + $0x61] sm:$0xff]
        %v6370 = vld [vmem:[#allocation4 + $0x69] sm:$0xff]
        %v6371 = vld [vmem:[#allocation4 + $0x79] sm:$0xff]
        %v6372 = vld [vmem:[#allocation4 + $0x81] sm:$0xff]
        %v6373 = vld [vmem:[#allocation4 + $0x91] sm:$0xff]
        %v6374 = vld [vmem:[#allocation4 + $0x99] sm:$0xff]
        %v6375 = vld [vmem:[#allocation4 + $0xa9] sm:$0xff]
        %v6376 = vld [vmem:[#allocation4 + $0xb1] sm:$0xff]
        %v6377 = vld [vmem:[#allocation4 + $0xc1] sm:$0xff]
        %v6378 = vld [vmem:[#allocation4 + $0xc9] sm:$0xff]
        %v6379 = vld [vmem:[#allocation4 + $0xd9] sm:$0xff]
        %v6380 = vld [vmem:[#allocation4 + $0xe1] sm:$0xff]
        %v6381 = vld [vmem:[#allocation4 + $0xf1] sm:$0xff]
        %v6382 = vld [vmem:[#allocation4 + $0xf9] sm:$0xff]
        %v6383 = vld [vmem:[#allocation4 + $0x109] sm:$0xff]
        %v6384 = vld [vmem:[#allocation4 + $0x111] sm:$0xff]
        %v6385 = vld [vmem:[#allocation4 + $0x121] sm:$0xff]
        %v6386 = vld [vmem:[#allocation4 + $0x129] sm:$0xff]
        %v6387 = vld [vmem:[#allocation4 + $0x139] sm:$0xff]
        %v6388 = vld [vmem:[#allocation4 + $0x141] sm:$0xff]
        %v6389 = vld [vmem:[#allocation4 + $0x151] sm:$0xff]
        %v6390 = vld [vmem:[#allocation4 + $0x159] sm:$0xff]
        %v6391 = vld [vmem:[#allocation4 + $0x169] sm:$0xff]
        %v6392 = vld [vmem:[#allocation4 + $0x171] sm:$0xff]
        %v6393 = vld [vmem:[#allocation4 + $0x2] sm:$0xff]
        %v6394 = vld [vmem:[#allocation4 + $0xa] sm:$0xff]
        %v6395 = vld [vmem:[#allocation4 + $0x1a] sm:$0xff]
        %v6396 = vld [vmem:[#allocation4 + $0x22] sm:$0xff]
        %v6397 = vld [vmem:[#allocation4 + $0x32] sm:$0xff]
        %v6398 = vld [vmem:[#allocation4 + $0x3a] sm:$0xff]
        %v6399 = vld [vmem:[#allocation4 + $0x4a] sm:$0xff]
        %v6400 = vld [vmem:[#allocation4 + $0x52] sm:$0xff]
        %v6401 = vld [vmem:[#allocation4 + $0x62] sm:$0xff]
        %v6402 = vld [vmem:[#allocation4 + $0x6a] sm:$0xff]
        %v6403 = vld [vmem:[#allocation4 + $0x7a] sm:$0xff]
        %v6404 = vld [vmem:[#allocation4 + $0x82] sm:$0xff]
        %v6405 = vld [vmem:[#allocation4 + $0x92] sm:$0xff]
        %v6406 = vld [vmem:[#allocation4 + $0x9a] sm:$0xff]
        %v6407 = vld [vmem:[#allocation4 + $0xaa] sm:$0xff]
        %v6408 = vld [vmem:[#allocation4 + $0xb2] sm:$0xff]
        %v6409 = vld [vmem:[#allocation4 + $0xc2] sm:$0xff]
        %v6410 = vld [vmem:[#allocation4 + $0xca] sm:$0xff]
        %v6411 = vld [vmem:[#allocation4 + $0xda] sm:$0xff]
        %v6412 = vld [vmem:[#allocation4 + $0xe2] sm:$0xff]
        %v6413 = vld [vmem:[#allocation4 + $0xf2] sm:$0xff]
        %v6414 = vld [vmem:[#allocation4 + $0xfa] sm:$0xff]
        %v6415 = vld [vmem:[#allocation4 + $0x10a] sm:$0xff]
        %v6416 = vld [vmem:[#allocation4 + $0x112] sm:$0xff]
        %v6417 = vld [vmem:[#allocation4 + $0x122] sm:$0xff]
        %v6418 = vld [vmem:[#allocation4 + $0x12a] sm:$0xff]
        %v6419 = vld [vmem:[#allocation4 + $0x13a] sm:$0xff]
        %v6420 = vld [vmem:[#allocation4 + $0x142] sm:$0xff]
        %v6421 = vld [vmem:[#allocation4 + $0x152] sm:$0xff]
        %v6422 = vld [vmem:[#allocation4 + $0x15a] sm:$0xff]
        %v6423 = vld [vmem:[#allocation4 + $0x16a] sm:$0xff]
        %v6424 = vld [vmem:[#allocation4 + $0x172] sm:$0xff]
        %v6425 = vld [vmem:[%s6296] sm:$0xff]
        %v6426 = vld [vmem:[%s6296 + $0x8] sm:$0xff]
        %v6427 = vld [vmem:[%s6296 + $0x18] sm:$0xff]
        %v6428 = vld [vmem:[%s6296 + $0x20] sm:$0xff]
        %v6429 = vld [vmem:[%s6296 + $0x30] sm:$0xff]
        %v6430 = vld [vmem:[%s6296 + $0x38] sm:$0xff]
        %v6431 = vld [vmem:[%s6296 + $0x48] sm:$0xff]
        %v6432 = vld [vmem:[%s6296 + $0x50] sm:$0xff]
        %v6433 = vld [vmem:[%s6296 + $0x60] sm:$0xff]
        %v6434 = vld [vmem:[%s6296 + $0x68] sm:$0xff]
        %v6435 = vld [vmem:[%s6296 + $0x78] sm:$0xff]
        %v6436 = vld [vmem:[%s6296 + $0x80] sm:$0xff]
        %v6437 = vld [vmem:[%s6296 + $0x90] sm:$0xff]
        %v6438 = vld [vmem:[%s6296 + $0x98] sm:$0xff]
        %v6439 = vld [vmem:[%s6296 + $0xa8] sm:$0xff]
        %v6440 = vld [vmem:[%s6296 + $0xb0] sm:$0xff]
        %v6441 = vld [vmem:[%s6296 + $0xc0] sm:$0xff]
        %v6442 = vld [vmem:[%s6296 + $0xc8] sm:$0xff]
        %v6443 = vld [vmem:[%s6296 + $0xd8] sm:$0xff]
        %v6444 = vld [vmem:[%s6296 + $0xe0] sm:$0xff]
        %v6445 = vld [vmem:[%s6296 + $0xf0] sm:$0xff]
        %v6446 = vld [vmem:[%s6296 + $0xf8] sm:$0xff]
        %v6447 = vld [vmem:[%s6296 + $0x108] sm:$0xff]
        %v6448 = vld [vmem:[%s6296 + $0x110] sm:$0xff]
        %v6449 = vld [vmem:[%s6296 + $0x120] sm:$0xff]
        %v6450 = vld [vmem:[%s6296 + $0x128] sm:$0xff]
        %v6451 = vld [vmem:[%s6296 + $0x138] sm:$0xff]
        %v6452 = vld [vmem:[%s6296 + $0x140] sm:$0xff]
        %v6453 = vld [vmem:[%s6296 + $0x150] sm:$0xff]
        %v6454 = vld [vmem:[%s6296 + $0x158] sm:$0xff]
        %v6455 = vld [vmem:[%s6296 + $0x168] sm:$0xff]
        %v6456 = vld [vmem:[%s6296 + $0x170] sm:$0xff]
        %v6457 = vld [vmem:[%s6296 + $0x1] sm:$0xff]
        %v6458 = vld [vmem:[%s6296 + $0x9] sm:$0xff]
        %v6459 = vld [vmem:[%s6296 + $0x19] sm:$0xff]
        %v6460 = vld [vmem:[%s6296 + $0x21] sm:$0xff]
        %v6461 = vld [vmem:[%s6296 + $0x31] sm:$0xff]
        %v6462 = vld [vmem:[%s6296 + $0x39] sm:$0xff]
        %v6463 = vld [vmem:[%s6296 + $0x49] sm:$0xff]
        %v6464 = vld [vmem:[%s6296 + $0x51] sm:$0xff]
        %v6465 = vld [vmem:[%s6296 + $0x61] sm:$0xff]
        %v6466 = vld [vmem:[%s6296 + $0x69] sm:$0xff]
        %v6467 = vld [vmem:[%s6296 + $0x79] sm:$0xff]
        %v6468 = vld [vmem:[%s6296 + $0x81] sm:$0xff]
        %v6469 = vld [vmem:[%s6296 + $0x91] sm:$0xff]
        %v6470 = vld [vmem:[%s6296 + $0x99] sm:$0xff]
        %v6471 = vld [vmem:[%s6296 + $0xa9] sm:$0xff]
        %v6472 = vld [vmem:[%s6296 + $0xb1] sm:$0xff]
        %v6473 = vld [vmem:[%s6296 + $0xc1] sm:$0xff]
        %v6474 = vld [vmem:[%s6296 + $0xc9] sm:$0xff]
        %v6475 = vld [vmem:[%s6296 + $0xd9] sm:$0xff]
        %v6476 = vld [vmem:[%s6296 + $0xe1] sm:$0xff]
        %v6477 = vld [vmem:[%s6296 + $0xf1] sm:$0xff]
        %v6478 = vld [vmem:[%s6296 + $0xf9] sm:$0xff]
        %v6479 = vld [vmem:[%s6296 + $0x109] sm:$0xff]
        %v6480 = vld [vmem:[%s6296 + $0x111] sm:$0xff]
        %v6481 = vld [vmem:[%s6296 + $0x121] sm:$0xff]
        %v6482 = vld [vmem:[%s6296 + $0x129] sm:$0xff]
        %v6483 = vld [vmem:[%s6296 + $0x139] sm:$0xff]
        %v6484 = vld [vmem:[%s6296 + $0x141] sm:$0xff]
        %v6485 = vld [vmem:[%s6296 + $0x151] sm:$0xff]
        %v6486 = vld [vmem:[%s6296 + $0x159] sm:$0xff]
        %v6487 = vld [vmem:[%s6296 + $0x169] sm:$0xff]
        %v6488 = vld [vmem:[%s6296 + $0x171] sm:$0xff]
        %v6489 = vld [vmem:[%s6296 + $0x2] sm:$0xff]
        %v6490 = vld [vmem:[%s6296 + $0xa] sm:$0xff]
        %v6491 = vld [vmem:[%s6296 + $0x1a] sm:$0xff]
        %v6492 = vld [vmem:[%s6296 + $0x22] sm:$0xff]
        %v6493 = vld [vmem:[%s6296 + $0x32] sm:$0xff]
        %v6494 = vld [vmem:[%s6296 + $0x3a] sm:$0xff]
        %v6495 = vld [vmem:[%s6296 + $0x4a] sm:$0xff]
        %v6496 = vld [vmem:[%s6296 + $0x52] sm:$0xff]
        %v6497 = vld [vmem:[%s6296 + $0x62] sm:$0xff]
        %v6498 = vld [vmem:[%s6296 + $0x6a] sm:$0xff]
        %v6499 = vld [vmem:[%s6296 + $0x7a] sm:$0xff]
        %v6500 = vld [vmem:[%s6296 + $0x82] sm:$0xff]
        %v6501 = vld [vmem:[%s6296 + $0x92] sm:$0xff]
        %v6502 = vld [vmem:[%s6296 + $0x9a] sm:$0xff]
        %v6503 = vld [vmem:[%s6296 + $0xaa] sm:$0xff]
        %v6504 = vld [vmem:[%s6296 + $0xb2] sm:$0xff]
        %v6505 = vld [vmem:[%s6296 + $0xc2] sm:$0xff]
        %v6506 = vld [vmem:[%s6296 + $0xca] sm:$0xff]
        %v6507 = vld [vmem:[%s6296 + $0xda] sm:$0xff]
        %v6508 = vld [vmem:[%s6296 + $0xe2] sm:$0xff]
        %v6509 = vld [vmem:[%s6296 + $0xf2] sm:$0xff]
        %v6510 = vld [vmem:[%s6296 + $0xfa] sm:$0xff]
        %v6511 = vld [vmem:[%s6296 + $0x10a] sm:$0xff]
        %v6512 = vld [vmem:[%s6296 + $0x112] sm:$0xff]
        %v6513 = vld [vmem:[%s6296 + $0x122] sm:$0xff]
        %v6514 = vld [vmem:[%s6296 + $0x12a] sm:$0xff]
        %v6515 = vld [vmem:[%s6296 + $0x13a] sm:$0xff]
        %v6516 = vld [vmem:[%s6296 + $0x142] sm:$0xff]
        %v6517 = vld [vmem:[%s6296 + $0x152] sm:$0xff]
        %v6518 = vld [vmem:[%s6296 + $0x15a] sm:$0xff]
        %v6519 = vld [vmem:[%s6296 + $0x16a] sm:$0xff]
        %v6520 = vld [vmem:[%s6296 + $0x172] sm:$0xff]
        %s6521 = scalar_lea.vmem [#allocation4], 48
        %v6522 = vld [vmem:[%s6521] sm:$0xff]
        %v6523 = vld [vmem:[%s6521 + $0x8] sm:$0xff]
        %v6524 = vld [vmem:[%s6521 + $0x18] sm:$0xff]
        %v6525 = vld [vmem:[%s6521 + $0x20] sm:$0xff]
        %v6526 = vld [vmem:[%s6521 + $0x30] sm:$0xff]
        %v6527 = vld [vmem:[%s6521 + $0x38] sm:$0xff]
        %v6528 = vld [vmem:[%s6521 + $0x48] sm:$0xff]
        %v6529 = vld [vmem:[%s6521 + $0x50] sm:$0xff]
        %v6530 = vld [vmem:[%s6521 + $0x60] sm:$0xff]
        %v6531 = vld [vmem:[%s6521 + $0x68] sm:$0xff]
        %v6532 = vld [vmem:[%s6521 + $0x78] sm:$0xff]
        %v6533 = vld [vmem:[%s6521 + $0x80] sm:$0xff]
        %v6534 = vld [vmem:[%s6521 + $0x90] sm:$0xff]
        %v6535 = vld [vmem:[%s6521 + $0x98] sm:$0xff]
        %v6536 = vld [vmem:[%s6521 + $0xa8] sm:$0xff]
        %v6537 = vld [vmem:[%s6521 + $0xb0] sm:$0xff]
        %v6538 = vld [vmem:[%s6521 + $0xc0] sm:$0xff]
        %v6539 = vld [vmem:[%s6521 + $0xc8] sm:$0xff]
        %v6540 = vld [vmem:[%s6521 + $0xd8] sm:$0xff]
        %v6541 = vld [vmem:[%s6521 + $0xe0] sm:$0xff]
        %v6542 = vld [vmem:[%s6521 + $0xf0] sm:$0xff]
        %v6543 = vld [vmem:[%s6521 + $0xf8] sm:$0xff]
        %v6544 = vld [vmem:[%s6521 + $0x108] sm:$0xff]
        %v6545 = vld [vmem:[%s6521 + $0x110] sm:$0xff]
        %v6546 = vld [vmem:[%s6521 + $0x120] sm:$0xff]
        %v6547 = vld [vmem:[%s6521 + $0x128] sm:$0xff]
        %v6548 = vld [vmem:[%s6521 + $0x138] sm:$0xff]
        %v6549 = vld [vmem:[%s6521 + $0x140] sm:$0xff]
        %v6550 = vld [vmem:[%s6521 + $0x150] sm:$0xff]
        %v6551 = vld [vmem:[%s6521 + $0x158] sm:$0xff]
        %v6552 = vld [vmem:[%s6521 + $0x168] sm:$0xff]
        %v6553 = vld [vmem:[%s6521 + $0x170] sm:$0xff]
        %v6554 = vld [vmem:[%s6521 + $0x1] sm:$0xff]
        %v6555 = vld [vmem:[%s6521 + $0x9] sm:$0xff]
        %v6556 = vld [vmem:[%s6521 + $0x19] sm:$0xff]
        %v6557 = vld [vmem:[%s6521 + $0x21] sm:$0xff]
        %v6558 = vld [vmem:[%s6521 + $0x31] sm:$0xff]
        %v6559 = vld [vmem:[%s6521 + $0x39] sm:$0xff]
        %v6560 = vld [vmem:[%s6521 + $0x49] sm:$0xff]
        %v6561 = vld [vmem:[%s6521 + $0x51] sm:$0xff]
        %v6562 = vld [vmem:[%s6521 + $0x61] sm:$0xff]
        %v6563 = vld [vmem:[%s6521 + $0x69] sm:$0xff]
        %v6564 = vld [vmem:[%s6521 + $0x79] sm:$0xff]
        %v6565 = vld [vmem:[%s6521 + $0x81] sm:$0xff]
        %v6566 = vld [vmem:[%s6521 + $0x91] sm:$0xff]
        %v6567 = vld [vmem:[%s6521 + $0x99] sm:$0xff]
        %v6568 = vld [vmem:[%s6521 + $0xa9] sm:$0xff]
        %v6569 = vld [vmem:[%s6521 + $0xb1] sm:$0xff]
        %v6570 = vld [vmem:[%s6521 + $0xc1] sm:$0xff]
        %v6571 = vld [vmem:[%s6521 + $0xc9] sm:$0xff]
        %v6572 = vld [vmem:[%s6521 + $0xd9] sm:$0xff]
        %v6573 = vld [vmem:[%s6521 + $0xe1] sm:$0xff]
        %v6574 = vld [vmem:[%s6521 + $0xf1] sm:$0xff]
        %v6575 = vld [vmem:[%s6521 + $0xf9] sm:$0xff]
        %v6576 = vld [vmem:[%s6521 + $0x109] sm:$0xff]
        %v6577 = vld [vmem:[%s6521 + $0x111] sm:$0xff]
        %v6578 = vld [vmem:[%s6521 + $0x121] sm:$0xff]
        %v6579 = vld [vmem:[%s6521 + $0x129] sm:$0xff]
        %v6580 = vld [vmem:[%s6521 + $0x139] sm:$0xff]
        %v6581 = vld [vmem:[%s6521 + $0x141] sm:$0xff]
        %v6582 = vld [vmem:[%s6521 + $0x151] sm:$0xff]
        %v6583 = vld [vmem:[%s6521 + $0x159] sm:$0xff]
        %v6584 = vld [vmem:[%s6521 + $0x169] sm:$0xff]
        %v6585 = vld [vmem:[%s6521 + $0x171] sm:$0xff]
        %v6586 = vld [vmem:[%s6521 + $0x2] sm:$0xff]
        %v6587 = vld [vmem:[%s6521 + $0xa] sm:$0xff]
        %v6588 = vld [vmem:[%s6521 + $0x1a] sm:$0xff]
        %v6589 = vld [vmem:[%s6521 + $0x22] sm:$0xff]
        %v6590 = vld [vmem:[%s6521 + $0x32] sm:$0xff]
        %v6591 = vld [vmem:[%s6521 + $0x3a] sm:$0xff]
        %v6592 = vld [vmem:[%s6521 + $0x4a] sm:$0xff]
        %v6593 = vld [vmem:[%s6521 + $0x52] sm:$0xff]
        %v6594 = vld [vmem:[%s6521 + $0x62] sm:$0xff]
        %v6595 = vld [vmem:[%s6521 + $0x6a] sm:$0xff]
        %v6596 = vld [vmem:[%s6521 + $0x7a] sm:$0xff]
        %v6597 = vld [vmem:[%s6521 + $0x82] sm:$0xff]
        %v6598 = vld [vmem:[%s6521 + $0x92] sm:$0xff]
        %v6599 = vld [vmem:[%s6521 + $0x9a] sm:$0xff]
        %v6600 = vld [vmem:[%s6521 + $0xaa] sm:$0xff]
        %v6601 = vld [vmem:[%s6521 + $0xb2] sm:$0xff]
        %v6602 = vld [vmem:[%s6521 + $0xc2] sm:$0xff]
        %v6603 = vld [vmem:[%s6521 + $0xca] sm:$0xff]
        %v6604 = vld [vmem:[%s6521 + $0xda] sm:$0xff]
        %v6605 = vld [vmem:[%s6521 + $0xe2] sm:$0xff]
        %v6606 = vld [vmem:[%s6521 + $0xf2] sm:$0xff]
        %v6607 = vld [vmem:[%s6521 + $0xfa] sm:$0xff]
        %v6608 = vld [vmem:[%s6521 + $0x10a] sm:$0xff]
        %v6609 = vld [vmem:[%s6521 + $0x112] sm:$0xff]
        %v6610 = vld [vmem:[%s6521 + $0x122] sm:$0xff]
        %v6611 = vld [vmem:[%s6521 + $0x12a] sm:$0xff]
        %v6612 = vld [vmem:[%s6521 + $0x13a] sm:$0xff]
        %v6613 = vld [vmem:[%s6521 + $0x142] sm:$0xff]
        %v6614 = vld [vmem:[%s6521 + $0x152] sm:$0xff]
        %v6615 = vld [vmem:[%s6521 + $0x15a] sm:$0xff]
        %v6616 = vld [vmem:[%s6521 + $0x16a] sm:$0xff]
        %v6617 = vld [vmem:[%s6521 + $0x172] sm:$0xff]
        %6650 = vrot.lane.b32.xlu0 %v6361, 8
        %v6651 = vpop.permute.xlu0 %6650
        %6652 = vrot.lane.b32.xlu0 %v6362, 8
        %v6653 = vpop.permute.xlu0 %6652
        %6654 = vrot.lane.b32.xlu0 %v6363, 8
        %v6655 = vpop.permute.xlu0 %6654
        %6656 = vrot.lane.b32.xlu0 %v6364, 8
        %v6657 = vpop.permute.xlu0 %6656
        %6658 = vrot.lane.b32.xlu0 %v6365, 8
        %v6659 = vpop.permute.xlu0 %6658
        %6660 = vrot.lane.b32.xlu0 %v6366, 8
        %v6661 = vpop.permute.xlu0 %6660
        %6662 = vrot.lane.b32.xlu0 %v6367, 8
        %v6663 = vpop.permute.xlu0 %6662
        %6664 = vrot.lane.b32.xlu0 %v6368, 8
        %v6665 = vpop.permute.xlu0 %6664
        %6666 = vrot.lane.b32.xlu0 %v6369, 8
        %v6667 = vpop.permute.xlu0 %6666
        %6668 = vrot.lane.b32.xlu0 %v6370, 8
        %v6669 = vpop.permute.xlu0 %6668
        %6670 = vrot.lane.b32.xlu0 %v6371, 8
        %v6671 = vpop.permute.xlu0 %6670
        %6672 = vrot.lane.b32.xlu0 %v6372, 8
        %v6673 = vpop.permute.xlu0 %6672
        %6674 = vrot.lane.b32.xlu0 %v6373, 8
        %v6675 = vpop.permute.xlu0 %6674
        %6676 = vrot.lane.b32.xlu0 %v6374, 8
        %v6677 = vpop.permute.xlu0 %6676
        %6678 = vrot.lane.b32.xlu0 %v6375, 8
        %v6679 = vpop.permute.xlu0 %6678
        %6680 = vrot.lane.b32.xlu0 %v6376, 8
        %v6681 = vpop.permute.xlu0 %6680
        %6682 = vrot.lane.b32.xlu0 %v6377, 8
        %v6683 = vpop.permute.xlu0 %6682
        %6684 = vrot.lane.b32.xlu0 %v6378, 8
        %v6685 = vpop.permute.xlu0 %6684
        %6686 = vrot.lane.b32.xlu0 %v6379, 8
        %v6687 = vpop.permute.xlu0 %6686
        %6688 = vrot.lane.b32.xlu0 %v6380, 8
        %v6689 = vpop.permute.xlu0 %6688
        %6690 = vrot.lane.b32.xlu0 %v6381, 8
        %v6691 = vpop.permute.xlu0 %6690
        %6692 = vrot.lane.b32.xlu0 %v6382, 8
        %v6693 = vpop.permute.xlu0 %6692
        %6694 = vrot.lane.b32.xlu0 %v6383, 8
        %v6695 = vpop.permute.xlu0 %6694
        %6696 = vrot.lane.b32.xlu0 %v6384, 8
        %v6697 = vpop.permute.xlu0 %6696
        %6698 = vrot.lane.b32.xlu0 %v6385, 8
        %v6699 = vpop.permute.xlu0 %6698
        %6700 = vrot.lane.b32.xlu0 %v6386, 8
        %v6701 = vpop.permute.xlu0 %6700
        %6702 = vrot.lane.b32.xlu0 %v6387, 8
        %v6703 = vpop.permute.xlu0 %6702
        %6704 = vrot.lane.b32.xlu0 %v6388, 8
        %v6705 = vpop.permute.xlu0 %6704
        %6706 = vrot.lane.b32.xlu0 %v6389, 8
        %v6707 = vpop.permute.xlu0 %6706
        %6708 = vrot.lane.b32.xlu0 %v6390, 8
        %v6709 = vpop.permute.xlu0 %6708
        %6710 = vrot.lane.b32.xlu0 %v6391, 8
        %v6711 = vpop.permute.xlu0 %6710
        %6712 = vrot.lane.b32.xlu0 %v6392, 8
        %v6713 = vpop.permute.xlu0 %6712
        %6778 = vrot.lane.b32.xlu0 %v6393, 16
        %v6779 = vpop.permute.xlu0 %6778
        %6780 = vrot.lane.b32.xlu0 %v6394, 16
        %v6781 = vpop.permute.xlu0 %6780
        %6782 = vrot.lane.b32.xlu0 %v6395, 16
        %v6783 = vpop.permute.xlu0 %6782
        %6784 = vrot.lane.b32.xlu0 %v6396, 16
        %v6785 = vpop.permute.xlu0 %6784
        %6786 = vrot.lane.b32.xlu0 %v6397, 16
        %v6787 = vpop.permute.xlu0 %6786
        %6788 = vrot.lane.b32.xlu0 %v6398, 16
        %v6789 = vpop.permute.xlu0 %6788
        %6790 = vrot.lane.b32.xlu0 %v6399, 16
        %v6791 = vpop.permute.xlu0 %6790
        %6792 = vrot.lane.b32.xlu0 %v6400, 16
        %v6793 = vpop.permute.xlu0 %6792
        %6794 = vrot.lane.b32.xlu0 %v6401, 16
        %v6795 = vpop.permute.xlu0 %6794
        %6796 = vrot.lane.b32.xlu0 %v6402, 16
        %v6797 = vpop.permute.xlu0 %6796
        %6798 = vrot.lane.b32.xlu0 %v6403, 16
        %v6799 = vpop.permute.xlu0 %6798
        %6800 = vrot.lane.b32.xlu0 %v6404, 16
        %v6801 = vpop.permute.xlu0 %6800
        %6802 = vrot.lane.b32.xlu0 %v6405, 16
        %v6803 = vpop.permute.xlu0 %6802
        %6804 = vrot.lane.b32.xlu0 %v6406, 16
        %v6805 = vpop.permute.xlu0 %6804
        %6806 = vrot.lane.b32.xlu0 %v6407, 16
        %v6807 = vpop.permute.xlu0 %6806
        %6808 = vrot.lane.b32.xlu0 %v6408, 16
        %v6809 = vpop.permute.xlu0 %6808
        %6810 = vrot.lane.b32.xlu0 %v6409, 16
        %v6811 = vpop.permute.xlu0 %6810
        %6812 = vrot.lane.b32.xlu0 %v6410, 16
        %v6813 = vpop.permute.xlu0 %6812
        %6814 = vrot.lane.b32.xlu0 %v6411, 16
        %v6815 = vpop.permute.xlu0 %6814
        %6816 = vrot.lane.b32.xlu0 %v6412, 16
        %v6817 = vpop.permute.xlu0 %6816
        %6818 = vrot.lane.b32.xlu0 %v6413, 16
        %v6819 = vpop.permute.xlu0 %6818
        %6820 = vrot.lane.b32.xlu0 %v6414, 16
        %v6821 = vpop.permute.xlu0 %6820
        %6822 = vrot.lane.b32.xlu0 %v6415, 16
        %v6823 = vpop.permute.xlu0 %6822
        %6824 = vrot.lane.b32.xlu0 %v6416, 16
        %v6825 = vpop.permute.xlu0 %6824
        %6826 = vrot.lane.b32.xlu0 %v6417, 16
        %v6827 = vpop.permute.xlu0 %6826
        %6828 = vrot.lane.b32.xlu0 %v6418, 16
        %v6829 = vpop.permute.xlu0 %6828
        %6830 = vrot.lane.b32.xlu0 %v6419, 16
        %v6831 = vpop.permute.xlu0 %6830
        %6832 = vrot.lane.b32.xlu0 %v6420, 16
        %v6833 = vpop.permute.xlu0 %6832
        %6834 = vrot.lane.b32.xlu0 %v6421, 16
        %v6835 = vpop.permute.xlu0 %6834
        %6836 = vrot.lane.b32.xlu0 %v6422, 16
        %v6837 = vpop.permute.xlu0 %6836
        %6838 = vrot.lane.b32.xlu0 %v6423, 16
        %v6839 = vpop.permute.xlu0 %6838
        %6840 = vrot.lane.b32.xlu0 %v6424, 16
        %v6841 = vpop.permute.xlu0 %6840
        %6906 = vrot.lane.b32.xlu0 %v6425, 24
        %v6907 = vpop.permute.xlu0 %6906
        %6908 = vrot.lane.b32.xlu0 %v6426, 24
        %v6909 = vpop.permute.xlu0 %6908
        %6910 = vrot.lane.b32.xlu0 %v6427, 24
        %v6911 = vpop.permute.xlu0 %6910
        %6912 = vrot.lane.b32.xlu0 %v6428, 24
        %v6913 = vpop.permute.xlu0 %6912
        %6914 = vrot.lane.b32.xlu0 %v6429, 24
        %v6915 = vpop.permute.xlu0 %6914
        %6916 = vrot.lane.b32.xlu0 %v6430, 24
        %v6917 = vpop.permute.xlu0 %6916
        %6918 = vrot.lane.b32.xlu0 %v6431, 24
        %v6919 = vpop.permute.xlu0 %6918
        %6920 = vrot.lane.b32.xlu0 %v6432, 24
        %v6921 = vpop.permute.xlu0 %6920
        %6922 = vrot.lane.b32.xlu0 %v6433, 24
        %v6923 = vpop.permute.xlu0 %6922
        %6924 = vrot.lane.b32.xlu0 %v6434, 24
        %v6925 = vpop.permute.xlu0 %6924
        %6926 = vrot.lane.b32.xlu0 %v6435, 24
        %v6927 = vpop.permute.xlu0 %6926
        %6928 = vrot.lane.b32.xlu0 %v6436, 24
        %v6929 = vpop.permute.xlu0 %6928
        %6930 = vrot.lane.b32.xlu0 %v6437, 24
        %v6931 = vpop.permute.xlu0 %6930
        %6932 = vrot.lane.b32.xlu0 %v6438, 24
        %v6933 = vpop.permute.xlu0 %6932
        %6934 = vrot.lane.b32.xlu0 %v6439, 24
        %v6935 = vpop.permute.xlu0 %6934
        %6936 = vrot.lane.b32.xlu0 %v6440, 24
        %v6937 = vpop.permute.xlu0 %6936
        %6938 = vrot.lane.b32.xlu0 %v6441, 24
        %v6939 = vpop.permute.xlu0 %6938
        %6940 = vrot.lane.b32.xlu0 %v6442, 24
        %v6941 = vpop.permute.xlu0 %6940
        %6942 = vrot.lane.b32.xlu0 %v6443, 24
        %v6943 = vpop.permute.xlu0 %6942
        %6944 = vrot.lane.b32.xlu0 %v6444, 24
        %v6945 = vpop.permute.xlu0 %6944
        %6946 = vrot.lane.b32.xlu0 %v6445, 24
        %v6947 = vpop.permute.xlu0 %6946
        %6948 = vrot.lane.b32.xlu0 %v6446, 24
        %v6949 = vpop.permute.xlu0 %6948
        %6950 = vrot.lane.b32.xlu0 %v6447, 24
        %v6951 = vpop.permute.xlu0 %6950
        %6952 = vrot.lane.b32.xlu0 %v6448, 24
        %v6953 = vpop.permute.xlu0 %6952
        %6954 = vrot.lane.b32.xlu0 %v6449, 24
        %v6955 = vpop.permute.xlu0 %6954
        %6956 = vrot.lane.b32.xlu0 %v6450, 24
        %v6957 = vpop.permute.xlu0 %6956
        %6958 = vrot.lane.b32.xlu0 %v6451, 24
        %v6959 = vpop.permute.xlu0 %6958
        %6960 = vrot.lane.b32.xlu0 %v6452, 24
        %v6961 = vpop.permute.xlu0 %6960
        %6962 = vrot.lane.b32.xlu0 %v6453, 24
        %v6963 = vpop.permute.xlu0 %6962
        %6964 = vrot.lane.b32.xlu0 %v6454, 24
        %v6965 = vpop.permute.xlu0 %6964
        %6966 = vrot.lane.b32.xlu0 %v6455, 24
        %v6967 = vpop.permute.xlu0 %6966
        %6968 = vrot.lane.b32.xlu0 %v6456, 24
        %v6969 = vpop.permute.xlu0 %6968
        %7034 = vrot.lane.b32.xlu0 %v6457, 32
        %v7035 = vpop.permute.xlu0 %7034
        %7036 = vrot.lane.b32.xlu0 %v6458, 32
        %v7037 = vpop.permute.xlu0 %7036
        %7038 = vrot.lane.b32.xlu0 %v6459, 32
        %v7039 = vpop.permute.xlu0 %7038
        %7040 = vrot.lane.b32.xlu0 %v6460, 32
        %v7041 = vpop.permute.xlu0 %7040
        %7042 = vrot.lane.b32.xlu0 %v6461, 32
        %v7043 = vpop.permute.xlu0 %7042
        %7044 = vrot.lane.b32.xlu0 %v6462, 32
        %v7045 = vpop.permute.xlu0 %7044
        %7046 = vrot.lane.b32.xlu0 %v6463, 32
        %v7047 = vpop.permute.xlu0 %7046
        %7048 = vrot.lane.b32.xlu0 %v6464, 32
        %v7049 = vpop.permute.xlu0 %7048
        %7050 = vrot.lane.b32.xlu0 %v6465, 32
        %v7051 = vpop.permute.xlu0 %7050
        %7052 = vrot.lane.b32.xlu0 %v6466, 32
        %v7053 = vpop.permute.xlu0 %7052
        %7054 = vrot.lane.b32.xlu0 %v6467, 32
        %v7055 = vpop.permute.xlu0 %7054
        %7056 = vrot.lane.b32.xlu0 %v6468, 32
        %v7057 = vpop.permute.xlu0 %7056
        %7058 = vrot.lane.b32.xlu0 %v6469, 32
        %v7059 = vpop.permute.xlu0 %7058
        %7060 = vrot.lane.b32.xlu0 %v6470, 32
        %v7061 = vpop.permute.xlu0 %7060
        %7062 = vrot.lane.b32.xlu0 %v6471, 32
        %v7063 = vpop.permute.xlu0 %7062
        %7064 = vrot.lane.b32.xlu0 %v6472, 32
        %v7065 = vpop.permute.xlu0 %7064
        %7066 = vrot.lane.b32.xlu0 %v6473, 32
        %v7067 = vpop.permute.xlu0 %7066
        %7068 = vrot.lane.b32.xlu0 %v6474, 32
        %v7069 = vpop.permute.xlu0 %7068
        %7070 = vrot.lane.b32.xlu0 %v6475, 32
        %v7071 = vpop.permute.xlu0 %7070
        %7072 = vrot.lane.b32.xlu0 %v6476, 32
        %v7073 = vpop.permute.xlu0 %7072
        %7074 = vrot.lane.b32.xlu0 %v6477, 32
        %v7075 = vpop.permute.xlu0 %7074
        %7076 = vrot.lane.b32.xlu0 %v6478, 32
        %v7077 = vpop.permute.xlu0 %7076
        %7078 = vrot.lane.b32.xlu0 %v6479, 32
        %v7079 = vpop.permute.xlu0 %7078
        %7080 = vrot.lane.b32.xlu0 %v6480, 32
        %v7081 = vpop.permute.xlu0 %7080
        %7082 = vrot.lane.b32.xlu0 %v6481, 32
        %v7083 = vpop.permute.xlu0 %7082
        %7084 = vrot.lane.b32.xlu0 %v6482, 32
        %v7085 = vpop.permute.xlu0 %7084
        %7086 = vrot.lane.b32.xlu0 %v6483, 32
        %v7087 = vpop.permute.xlu0 %7086
        %7088 = vrot.lane.b32.xlu0 %v6484, 32
        %v7089 = vpop.permute.xlu0 %7088
        %7090 = vrot.lane.b32.xlu0 %v6485, 32
        %v7091 = vpop.permute.xlu0 %7090
        %7092 = vrot.lane.b32.xlu0 %v6486, 32
        %v7093 = vpop.permute.xlu0 %7092
        %7094 = vrot.lane.b32.xlu0 %v6487, 32
        %v7095 = vpop.permute.xlu0 %7094
        %7096 = vrot.lane.b32.xlu0 %v6488, 32
        %v7097 = vpop.permute.xlu0 %7096
        %7162 = vrot.lane.b32.xlu0 %v6489, 40
        %v7163 = vpop.permute.xlu0 %7162
        %7164 = vrot.lane.b32.xlu0 %v6490, 40
        %v7165 = vpop.permute.xlu0 %7164
        %7166 = vrot.lane.b32.xlu0 %v6491, 40
        %v7167 = vpop.permute.xlu0 %7166
        %7168 = vrot.lane.b32.xlu0 %v6492, 40
        %v7169 = vpop.permute.xlu0 %7168
        %7170 = vrot.lane.b32.xlu0 %v6493, 40
        %v7171 = vpop.permute.xlu0 %7170
        %7172 = vrot.lane.b32.xlu0 %v6494, 40
        %v7173 = vpop.permute.xlu0 %7172
        %7174 = vrot.lane.b32.xlu0 %v6495, 40
        %v7175 = vpop.permute.xlu0 %7174
        %7176 = vrot.lane.b32.xlu0 %v6496, 40
        %v7177 = vpop.permute.xlu0 %7176
        %7178 = vrot.lane.b32.xlu0 %v6497, 40
        %v7179 = vpop.permute.xlu0 %7178
        %7180 = vrot.lane.b32.xlu0 %v6498, 40
        %v7181 = vpop.permute.xlu0 %7180
        %7182 = vrot.lane.b32.xlu0 %v6499, 40
        %v7183 = vpop.permute.xlu0 %7182
        %7184 = vrot.lane.b32.xlu0 %v6500, 40
        %v7185 = vpop.permute.xlu0 %7184
        %7186 = vrot.lane.b32.xlu0 %v6501, 40
        %v7187 = vpop.permute.xlu0 %7186
        %7188 = vrot.lane.b32.xlu0 %v6502, 40
        %v7189 = vpop.permute.xlu0 %7188
        %7190 = vrot.lane.b32.xlu0 %v6503, 40
        %v7191 = vpop.permute.xlu0 %7190
        %7192 = vrot.lane.b32.xlu0 %v6504, 40
        %v7193 = vpop.permute.xlu0 %7192
        %7194 = vrot.lane.b32.xlu0 %v6505, 40
        %v7195 = vpop.permute.xlu0 %7194
        %7196 = vrot.lane.b32.xlu0 %v6506, 40
        %v7197 = vpop.permute.xlu0 %7196
        %7198 = vrot.lane.b32.xlu0 %v6507, 40
        %v7199 = vpop.permute.xlu0 %7198
        %7200 = vrot.lane.b32.xlu0 %v6508, 40
        %v7201 = vpop.permute.xlu0 %7200
        %7202 = vrot.lane.b32.xlu0 %v6509, 40
        %v7203 = vpop.permute.xlu0 %7202
        %7204 = vrot.lane.b32.xlu0 %v6510, 40
        %v7205 = vpop.permute.xlu0 %7204
        %7206 = vrot.lane.b32.xlu0 %v6511, 40
        %v7207 = vpop.permute.xlu0 %7206
        %7208 = vrot.lane.b32.xlu0 %v6512, 40
        %v7209 = vpop.permute.xlu0 %7208
        %7210 = vrot.lane.b32.xlu0 %v6513, 40
        %v7211 = vpop.permute.xlu0 %7210
        %7212 = vrot.lane.b32.xlu0 %v6514, 40
        %v7213 = vpop.permute.xlu0 %7212
        %7214 = vrot.lane.b32.xlu0 %v6515, 40
        %v7215 = vpop.permute.xlu0 %7214
        %7216 = vrot.lane.b32.xlu0 %v6516, 40
        %v7217 = vpop.permute.xlu0 %7216
        %7218 = vrot.lane.b32.xlu0 %v6517, 40
        %v7219 = vpop.permute.xlu0 %7218
        %7220 = vrot.lane.b32.xlu0 %v6518, 40
        %v7221 = vpop.permute.xlu0 %7220
        %7222 = vrot.lane.b32.xlu0 %v6519, 40
        %v7223 = vpop.permute.xlu0 %7222
        %7224 = vrot.lane.b32.xlu0 %v6520, 40
        %v7225 = vpop.permute.xlu0 %7224
        %7290 = vrot.lane.b32.xlu0 %v6522, 48
        %v7291 = vpop.permute.xlu0 %7290
        %7292 = vrot.lane.b32.xlu0 %v6523, 48
        %v7293 = vpop.permute.xlu0 %7292
        %7294 = vrot.lane.b32.xlu0 %v6524, 48
        %v7295 = vpop.permute.xlu0 %7294
        %7296 = vrot.lane.b32.xlu0 %v6525, 48
        %v7297 = vpop.permute.xlu0 %7296
        %7298 = vrot.lane.b32.xlu0 %v6526, 48
        %v7299 = vpop.permute.xlu0 %7298
        %7300 = vrot.lane.b32.xlu0 %v6527, 48
        %v7301 = vpop.permute.xlu0 %7300
        %7302 = vrot.lane.b32.xlu0 %v6528, 48
        %v7303 = vpop.permute.xlu0 %7302
        %7304 = vrot.lane.b32.xlu0 %v6529, 48
        %v7305 = vpop.permute.xlu0 %7304
        %7306 = vrot.lane.b32.xlu0 %v6530, 48
        %v7307 = vpop.permute.xlu0 %7306
        %7308 = vrot.lane.b32.xlu0 %v6531, 48
        %v7309 = vpop.permute.xlu0 %7308
        %7310 = vrot.lane.b32.xlu0 %v6532, 48
        %v7311 = vpop.permute.xlu0 %7310
        %7312 = vrot.lane.b32.xlu0 %v6533, 48
        %v7313 = vpop.permute.xlu0 %7312
        %7314 = vrot.lane.b32.xlu0 %v6534, 48
        %v7315 = vpop.permute.xlu0 %7314
        %7316 = vrot.lane.b32.xlu0 %v6535, 48
        %v7317 = vpop.permute.xlu0 %7316
        %7318 = vrot.lane.b32.xlu0 %v6536, 48
        %v7319 = vpop.permute.xlu0 %7318
        %7320 = vrot.lane.b32.xlu0 %v6537, 48
        %v7321 = vpop.permute.xlu0 %7320
        %7322 = vrot.lane.b32.xlu0 %v6538, 48
        %v7323 = vpop.permute.xlu0 %7322
        %7324 = vrot.lane.b32.xlu0 %v6539, 48
        %v7325 = vpop.permute.xlu0 %7324
        %7326 = vrot.lane.b32.xlu0 %v6540, 48
        %v7327 = vpop.permute.xlu0 %7326
        %7328 = vrot.lane.b32.xlu0 %v6541, 48
        %v7329 = vpop.permute.xlu0 %7328
        %7330 = vrot.lane.b32.xlu0 %v6542, 48
        %v7331 = vpop.permute.xlu0 %7330
        %7332 = vrot.lane.b32.xlu0 %v6543, 48
        %v7333 = vpop.permute.xlu0 %7332
        %7334 = vrot.lane.b32.xlu0 %v6544, 48
        %v7335 = vpop.permute.xlu0 %7334
        %7336 = vrot.lane.b32.xlu0 %v6545, 48
        %v7337 = vpop.permute.xlu0 %7336
        %7338 = vrot.lane.b32.xlu0 %v6546, 48
        %v7339 = vpop.permute.xlu0 %7338
        %7340 = vrot.lane.b32.xlu0 %v6547, 48
        %v7341 = vpop.permute.xlu0 %7340
        %7342 = vrot.lane.b32.xlu0 %v6548, 48
        %v7343 = vpop.permute.xlu0 %7342
        %7344 = vrot.lane.b32.xlu0 %v6549, 48
        %v7345 = vpop.permute.xlu0 %7344
        %7346 = vrot.lane.b32.xlu0 %v6550, 48
        %v7347 = vpop.permute.xlu0 %7346
        %7348 = vrot.lane.b32.xlu0 %v6551, 48
        %v7349 = vpop.permute.xlu0 %7348
        %7350 = vrot.lane.b32.xlu0 %v6552, 48
        %v7351 = vpop.permute.xlu0 %7350
        %7352 = vrot.lane.b32.xlu0 %v6553, 48
        %v7353 = vpop.permute.xlu0 %7352
        %7418 = vrot.lane.b32.xlu0 %v6554, 56
        %v7419 = vpop.permute.xlu0 %7418
        %7420 = vrot.lane.b32.xlu0 %v6555, 56
        %v7421 = vpop.permute.xlu0 %7420
        %7422 = vrot.lane.b32.xlu0 %v6556, 56
        %v7423 = vpop.permute.xlu0 %7422
        %7424 = vrot.lane.b32.xlu0 %v6557, 56
        %v7425 = vpop.permute.xlu0 %7424
        %7426 = vrot.lane.b32.xlu0 %v6558, 56
        %v7427 = vpop.permute.xlu0 %7426
        %7428 = vrot.lane.b32.xlu0 %v6559, 56
        %v7429 = vpop.permute.xlu0 %7428
        %7430 = vrot.lane.b32.xlu0 %v6560, 56
        %v7431 = vpop.permute.xlu0 %7430
        %7432 = vrot.lane.b32.xlu0 %v6561, 56
        %v7433 = vpop.permute.xlu0 %7432
        %7434 = vrot.lane.b32.xlu0 %v6562, 56
        %v7435 = vpop.permute.xlu0 %7434
        %7436 = vrot.lane.b32.xlu0 %v6563, 56
        %v7437 = vpop.permute.xlu0 %7436
        %7438 = vrot.lane.b32.xlu0 %v6564, 56
        %v7439 = vpop.permute.xlu0 %7438
        %7440 = vrot.lane.b32.xlu0 %v6565, 56
        %v7441 = vpop.permute.xlu0 %7440
        %7442 = vrot.lane.b32.xlu0 %v6566, 56
        %v7443 = vpop.permute.xlu0 %7442
        %7444 = vrot.lane.b32.xlu0 %v6567, 56
        %v7445 = vpop.permute.xlu0 %7444
        %7446 = vrot.lane.b32.xlu0 %v6568, 56
        %v7447 = vpop.permute.xlu0 %7446
        %7448 = vrot.lane.b32.xlu0 %v6569, 56
        %v7449 = vpop.permute.xlu0 %7448
        %7450 = vrot.lane.b32.xlu0 %v6570, 56
        %v7451 = vpop.permute.xlu0 %7450
        %7452 = vrot.lane.b32.xlu0 %v6571, 56
        %v7453 = vpop.permute.xlu0 %7452
        %7454 = vrot.lane.b32.xlu0 %v6572, 56
        %v7455 = vpop.permute.xlu0 %7454
        %7456 = vrot.lane.b32.xlu0 %v6573, 56
        %v7457 = vpop.permute.xlu0 %7456
        %7458 = vrot.lane.b32.xlu0 %v6574, 56
        %v7459 = vpop.permute.xlu0 %7458
        %7460 = vrot.lane.b32.xlu0 %v6575, 56
        %v7461 = vpop.permute.xlu0 %7460
        %7462 = vrot.lane.b32.xlu0 %v6576, 56
        %v7463 = vpop.permute.xlu0 %7462
        %7464 = vrot.lane.b32.xlu0 %v6577, 56
        %v7465 = vpop.permute.xlu0 %7464
        %7466 = vrot.lane.b32.xlu0 %v6578, 56
        %v7467 = vpop.permute.xlu0 %7466
        %7468 = vrot.lane.b32.xlu0 %v6579, 56
        %v7469 = vpop.permute.xlu0 %7468
        %7470 = vrot.lane.b32.xlu0 %v6580, 56
        %v7471 = vpop.permute.xlu0 %7470
        %7472 = vrot.lane.b32.xlu0 %v6581, 56
        %v7473 = vpop.permute.xlu0 %7472
        %7474 = vrot.lane.b32.xlu0 %v6582, 56
        %v7475 = vpop.permute.xlu0 %7474
        %7476 = vrot.lane.b32.xlu0 %v6583, 56
        %v7477 = vpop.permute.xlu0 %7476
        %7478 = vrot.lane.b32.xlu0 %v6584, 56
        %v7479 = vpop.permute.xlu0 %7478
        %7480 = vrot.lane.b32.xlu0 %v6585, 56
        %v7481 = vpop.permute.xlu0 %7480
        %7546 = vrot.lane.b32.xlu0 %v6586, 64
        %v7547 = vpop.permute.xlu0 %7546
        %7548 = vrot.lane.b32.xlu0 %v6587, 64
        %v7549 = vpop.permute.xlu0 %7548
        %7550 = vrot.lane.b32.xlu0 %v6588, 64
        %v7551 = vpop.permute.xlu0 %7550
        %7552 = vrot.lane.b32.xlu0 %v6589, 64
        %v7553 = vpop.permute.xlu0 %7552
        %7554 = vrot.lane.b32.xlu0 %v6590, 64
        %v7555 = vpop.permute.xlu0 %7554
        %7556 = vrot.lane.b32.xlu0 %v6591, 64
        %v7557 = vpop.permute.xlu0 %7556
        %7558 = vrot.lane.b32.xlu0 %v6592, 64
        %v7559 = vpop.permute.xlu0 %7558
        %7560 = vrot.lane.b32.xlu0 %v6593, 64
        %v7561 = vpop.permute.xlu0 %7560
        %7562 = vrot.lane.b32.xlu0 %v6594, 64
        %v7563 = vpop.permute.xlu0 %7562
        %7564 = vrot.lane.b32.xlu0 %v6595, 64
        %v7565 = vpop.permute.xlu0 %7564
        %7566 = vrot.lane.b32.xlu0 %v6596, 64
        %v7567 = vpop.permute.xlu0 %7566
        %7568 = vrot.lane.b32.xlu0 %v6597, 64
        %v7569 = vpop.permute.xlu0 %7568
        %7570 = vrot.lane.b32.xlu0 %v6598, 64
        %v7571 = vpop.permute.xlu0 %7570
        %7572 = vrot.lane.b32.xlu0 %v6599, 64
        %v7573 = vpop.permute.xlu0 %7572
        %7574 = vrot.lane.b32.xlu0 %v6600, 64
        %v7575 = vpop.permute.xlu0 %7574
        %7576 = vrot.lane.b32.xlu0 %v6601, 64
        %v7577 = vpop.permute.xlu0 %7576
        %7578 = vrot.lane.b32.xlu0 %v6602, 64
        %v7579 = vpop.permute.xlu0 %7578
        %7580 = vrot.lane.b32.xlu0 %v6603, 64
        %v7581 = vpop.permute.xlu0 %7580
        %7582 = vrot.lane.b32.xlu0 %v6604, 64
        %v7583 = vpop.permute.xlu0 %7582
        %7584 = vrot.lane.b32.xlu0 %v6605, 64
        %v7585 = vpop.permute.xlu0 %7584
        %7586 = vrot.lane.b32.xlu0 %v6606, 64
        %v7587 = vpop.permute.xlu0 %7586
        %7588 = vrot.lane.b32.xlu0 %v6607, 64
        %v7589 = vpop.permute.xlu0 %7588
        %7590 = vrot.lane.b32.xlu0 %v6608, 64
        %v7591 = vpop.permute.xlu0 %7590
        %7592 = vrot.lane.b32.xlu0 %v6609, 64
        %v7593 = vpop.permute.xlu0 %7592
        %7594 = vrot.lane.b32.xlu0 %v6610, 64
        %v7595 = vpop.permute.xlu0 %7594
        %7596 = vrot.lane.b32.xlu0 %v6611, 64
        %v7597 = vpop.permute.xlu0 %7596
        %7598 = vrot.lane.b32.xlu0 %v6612, 64
        %v7599 = vpop.permute.xlu0 %7598
        %7600 = vrot.lane.b32.xlu0 %v6613, 64
        %v7601 = vpop.permute.xlu0 %7600
        %7602 = vrot.lane.b32.xlu0 %v6614, 64
        %v7603 = vpop.permute.xlu0 %7602
        %7604 = vrot.lane.b32.xlu0 %v6615, 64
        %v7605 = vpop.permute.xlu0 %7604
        %7606 = vrot.lane.b32.xlu0 %v6616, 64
        %v7607 = vpop.permute.xlu0 %7606
        %7608 = vrot.lane.b32.xlu0 %v6617, 64
        %v7609 = vpop.permute.xlu0 %7608
        %v7642 = vsel %vm1001, %v6329, %v6651
        %v7643 = vsel %vm1001, %v6330, %v6653
        %v7644 = vsel %vm1001, %v6331, %v6655
        %v7645 = vsel %vm1001, %v6332, %v6657
        %v7646 = vsel %vm1001, %v6333, %v6659
        %v7647 = vsel %vm1001, %v6334, %v6661
        %v7648 = vsel %vm1001, %v6335, %v6663
        %v7649 = vsel %vm1001, %v6336, %v6665
        %v7650 = vsel %vm1001, %v6337, %v6667
        %v7651 = vsel %vm1001, %v6338, %v6669
        %v7652 = vsel %vm1001, %v6339, %v6671
        %v7653 = vsel %vm1001, %v6340, %v6673
        %v7654 = vsel %vm1001, %v6341, %v6675
        %v7655 = vsel %vm1001, %v6342, %v6677
        %v7656 = vsel %vm1001, %v6343, %v6679
        %v7657 = vsel %vm1001, %v6344, %v6681
        %v7658 = vsel %vm1001, %v6345, %v6683
        %v7659 = vsel %vm1001, %v6346, %v6685
        %v7660 = vsel %vm1001, %v6347, %v6687
        %v7661 = vsel %vm1001, %v6348, %v6689
        %v7662 = vsel %vm1001, %v6349, %v6691
        %v7663 = vsel %vm1001, %v6350, %v6693
        %v7664 = vsel %vm1001, %v6351, %v6695
        %v7665 = vsel %vm1001, %v6352, %v6697
        %v7666 = vsel %vm1001, %v6353, %v6699
        %v7667 = vsel %vm1001, %v6354, %v6701
        %v7668 = vsel %vm1001, %v6355, %v6703
        %v7669 = vsel %vm1001, %v6356, %v6705
        %v7670 = vsel %vm1001, %v6357, %v6707
        %v7671 = vsel %vm1001, %v6358, %v6709
        %v7672 = vsel %vm1001, %v6359, %v6711
        %v7673 = vsel %vm1001, %v6360, %v6713
        %v7674 = vsel %vm943, %v7642, %v6779
        %v7675 = vsel %vm943, %v7643, %v6781
        %v7676 = vsel %vm943, %v7644, %v6783
        %v7677 = vsel %vm943, %v7645, %v6785
        %v7678 = vsel %vm943, %v7646, %v6787
        %v7679 = vsel %vm943, %v7647, %v6789
        %v7680 = vsel %vm943, %v7648, %v6791
        %v7681 = vsel %vm943, %v7649, %v6793
        %v7682 = vsel %vm943, %v7650, %v6795
        %v7683 = vsel %vm943, %v7651, %v6797
        %v7684 = vsel %vm943, %v7652, %v6799
        %v7685 = vsel %vm943, %v7653, %v6801
        %v7686 = vsel %vm943, %v7654, %v6803
        %v7687 = vsel %vm943, %v7655, %v6805
        %v7688 = vsel %vm943, %v7656, %v6807
        %v7689 = vsel %vm943, %v7657, %v6809
        %v7690 = vsel %vm943, %v7658, %v6811
        %v7691 = vsel %vm943, %v7659, %v6813
        %v7692 = vsel %vm943, %v7660, %v6815
        %v7693 = vsel %vm943, %v7661, %v6817
        %v7694 = vsel %vm943, %v7662, %v6819
        %v7695 = vsel %vm943, %v7663, %v6821
        %v7696 = vsel %vm943, %v7664, %v6823
        %v7697 = vsel %vm943, %v7665, %v6825
        %v7698 = vsel %vm943, %v7666, %v6827
        %v7699 = vsel %vm943, %v7667, %v6829
        %v7700 = vsel %vm943, %v7668, %v6831
        %v7701 = vsel %vm943, %v7669, %v6833
        %v7702 = vsel %vm943, %v7670, %v6835
        %v7703 = vsel %vm943, %v7671, %v6837
        %v7704 = vsel %vm943, %v7672, %v6839
        %v7705 = vsel %vm943, %v7673, %v6841
        %vm7706 = vcmask 195584
        %v7707 = vsel %vm7706, %v7674, %v6907
        %v7708 = vsel %vm7706, %v7675, %v6909
        %v7709 = vsel %vm7706, %v7676, %v6911
        %v7710 = vsel %vm7706, %v7677, %v6913
        %v7711 = vsel %vm7706, %v7678, %v6915
        %v7712 = vsel %vm7706, %v7679, %v6917
        %v7713 = vsel %vm7706, %v7680, %v6919
        %v7714 = vsel %vm7706, %v7681, %v6921
        %v7715 = vsel %vm7706, %v7682, %v6923
        %v7716 = vsel %vm7706, %v7683, %v6925
        %v7717 = vsel %vm7706, %v7684, %v6927
        %v7718 = vsel %vm7706, %v7685, %v6929
        %v7719 = vsel %vm7706, %v7686, %v6931
        %v7720 = vsel %vm7706, %v7687, %v6933
        %v7721 = vsel %vm7706, %v7688, %v6935
        %v7722 = vsel %vm7706, %v7689, %v6937
        %v7723 = vsel %vm7706, %v7690, %v6939
        %v7724 = vsel %vm7706, %v7691, %v6941
        %v7725 = vsel %vm7706, %v7692, %v6943
        %v7726 = vsel %vm7706, %v7693, %v6945
        %v7727 = vsel %vm7706, %v7694, %v6947
        %v7728 = vsel %vm7706, %v7695, %v6949
        %v7729 = vsel %vm7706, %v7696, %v6951
        %v7730 = vsel %vm7706, %v7697, %v6953
        %v7731 = vsel %vm7706, %v7698, %v6955
        %v7732 = vsel %vm7706, %v7699, %v6957
        %v7733 = vsel %vm7706, %v7700, %v6959
        %v7734 = vsel %vm7706, %v7701, %v6961
        %v7735 = vsel %vm7706, %v7702, %v6963
        %v7736 = vsel %vm7706, %v7703, %v6965
        %v7737 = vsel %vm7706, %v7704, %v6967
        %v7738 = vsel %vm7706, %v7705, %v6969
        %v7739 = vsel %vm3704, %v7707, %v7035
        %v7740 = vsel %vm3704, %v7708, %v7037
        %v7741 = vsel %vm3704, %v7709, %v7039
        %v7742 = vsel %vm3704, %v7710, %v7041
        %v7743 = vsel %vm3704, %v7711, %v7043
        %v7744 = vsel %vm3704, %v7712, %v7045
        %v7745 = vsel %vm3704, %v7713, %v7047
        %v7746 = vsel %vm3704, %v7714, %v7049
        %v7747 = vsel %vm3704, %v7715, %v7051
        %v7748 = vsel %vm3704, %v7716, %v7053
        %v7749 = vsel %vm3704, %v7717, %v7055
        %v7750 = vsel %vm3704, %v7718, %v7057
        %v7751 = vsel %vm3704, %v7719, %v7059
        %v7752 = vsel %vm3704, %v7720, %v7061
        %v7753 = vsel %vm3704, %v7721, %v7063
        %v7754 = vsel %vm3704, %v7722, %v7065
        %v7755 = vsel %vm3704, %v7723, %v7067
        %v7756 = vsel %vm3704, %v7724, %v7069
        %v7757 = vsel %vm3704, %v7725, %v7071
        %v7758 = vsel %vm3704, %v7726, %v7073
        %v7759 = vsel %vm3704, %v7727, %v7075
        %v7760 = vsel %vm3704, %v7728, %v7077
        %v7761 = vsel %vm3704, %v7729, %v7079
        %v7762 = vsel %vm3704, %v7730, %v7081
        %v7763 = vsel %vm3704, %v7731, %v7083
        %v7764 = vsel %vm3704, %v7732, %v7085
        %v7765 = vsel %vm3704, %v7733, %v7087
        %v7766 = vsel %vm3704, %v7734, %v7089
        %v7767 = vsel %vm3704, %v7735, %v7091
        %v7768 = vsel %vm3704, %v7736, %v7093
        %v7769 = vsel %vm3704, %v7737, %v7095
        %v7770 = vsel %vm3704, %v7738, %v7097
        %vm7771 = vcmask 326656
        %v7772 = vsel %vm7771, %v7739, %v7163
        %v7773 = vsel %vm7771, %v7740, %v7165
        %v7774 = vsel %vm7771, %v7741, %v7167
        %v7775 = vsel %vm7771, %v7742, %v7169
        %v7776 = vsel %vm7771, %v7743, %v7171
        %v7777 = vsel %vm7771, %v7744, %v7173
        %v7778 = vsel %vm7771, %v7745, %v7175
        %v7779 = vsel %vm7771, %v7746, %v7177
        %v7780 = vsel %vm7771, %v7747, %v7179
        %v7781 = vsel %vm7771, %v7748, %v7181
        %v7782 = vsel %vm7771, %v7749, %v7183
        %v7783 = vsel %vm7771, %v7750, %v7185
        %v7784 = vsel %vm7771, %v7751, %v7187
        %v7785 = vsel %vm7771, %v7752, %v7189
        %v7786 = vsel %vm7771, %v7753, %v7191
        %v7787 = vsel %vm7771, %v7754, %v7193
        %v7788 = vsel %vm7771, %v7755, %v7195
        %v7789 = vsel %vm7771, %v7756, %v7197
        %v7790 = vsel %vm7771, %v7757, %v7199
        %v7791 = vsel %vm7771, %v7758, %v7201
        %v7792 = vsel %vm7771, %v7759, %v7203
        %v7793 = vsel %vm7771, %v7760, %v7205
        %v7794 = vsel %vm7771, %v7761, %v7207
        %v7795 = vsel %vm7771, %v7762, %v7209
        %v7796 = vsel %vm7771, %v7763, %v7211
        %v7797 = vsel %vm7771, %v7764, %v7213
        %v7798 = vsel %vm7771, %v7765, %v7215
        %v7799 = vsel %vm7771, %v7766, %v7217
        %v7800 = vsel %vm7771, %v7767, %v7219
        %v7801 = vsel %vm7771, %v7768, %v7221
        %v7802 = vsel %vm7771, %v7769, %v7223
        %v7803 = vsel %vm7771, %v7770, %v7225
        %v7804 = vsel %vm3737, %v7772, %v7291
        %v7805 = vsel %vm3737, %v7773, %v7293
        %v7806 = vsel %vm3737, %v7774, %v7295
        %v7807 = vsel %vm3737, %v7775, %v7297
        %v7808 = vsel %vm3737, %v7776, %v7299
        %v7809 = vsel %vm3737, %v7777, %v7301
        %v7810 = vsel %vm3737, %v7778, %v7303
        %v7811 = vsel %vm3737, %v7779, %v7305
        %v7812 = vsel %vm3737, %v7780, %v7307
        %v7813 = vsel %vm3737, %v7781, %v7309
        %v7814 = vsel %vm3737, %v7782, %v7311
        %v7815 = vsel %vm3737, %v7783, %v7313
        %v7816 = vsel %vm3737, %v7784, %v7315
        %v7817 = vsel %vm3737, %v7785, %v7317
        %v7818 = vsel %vm3737, %v7786, %v7319
        %v7819 = vsel %vm3737, %v7787, %v7321
        %v7820 = vsel %vm3737, %v7788, %v7323
        %v7821 = vsel %vm3737, %v7789, %v7325
        %v7822 = vsel %vm3737, %v7790, %v7327
        %v7823 = vsel %vm3737, %v7791, %v7329
        %v7824 = vsel %vm3737, %v7792, %v7331
        %v7825 = vsel %vm3737, %v7793, %v7333
        %v7826 = vsel %vm3737, %v7794, %v7335
        %v7827 = vsel %vm3737, %v7795, %v7337
        %v7828 = vsel %vm3737, %v7796, %v7339
        %v7829 = vsel %vm3737, %v7797, %v7341
        %v7830 = vsel %vm3737, %v7798, %v7343
        %v7831 = vsel %vm3737, %v7799, %v7345
        %v7832 = vsel %vm3737, %v7800, %v7347
        %v7833 = vsel %vm3737, %v7801, %v7349
        %v7834 = vsel %vm3737, %v7802, %v7351
        %v7835 = vsel %vm3737, %v7803, %v7353
        %vm7836 = vcmask 457728
        %v7837 = vsel %vm7836, %v7804, %v7419
        %v7838 = vsel %vm7836, %v7805, %v7421
        %v7839 = vsel %vm7836, %v7806, %v7423
        %v7840 = vsel %vm7836, %v7807, %v7425
        %v7841 = vsel %vm7836, %v7808, %v7427
        %v7842 = vsel %vm7836, %v7809, %v7429
        %v7843 = vsel %vm7836, %v7810, %v7431
        %v7844 = vsel %vm7836, %v7811, %v7433
        %v7845 = vsel %vm7836, %v7812, %v7435
        %v7846 = vsel %vm7836, %v7813, %v7437
        %v7847 = vsel %vm7836, %v7814, %v7439
        %v7848 = vsel %vm7836, %v7815, %v7441
        %v7849 = vsel %vm7836, %v7816, %v7443
        %v7850 = vsel %vm7836, %v7817, %v7445
        %v7851 = vsel %vm7836, %v7818, %v7447
        %v7852 = vsel %vm7836, %v7819, %v7449
        %v7853 = vsel %vm7836, %v7820, %v7451
        %v7854 = vsel %vm7836, %v7821, %v7453
        %v7855 = vsel %vm7836, %v7822, %v7455
        %v7856 = vsel %vm7836, %v7823, %v7457
        %v7857 = vsel %vm7836, %v7824, %v7459
        %v7858 = vsel %vm7836, %v7825, %v7461
        %v7859 = vsel %vm7836, %v7826, %v7463
        %v7860 = vsel %vm7836, %v7827, %v7465
        %v7861 = vsel %vm7836, %v7828, %v7467
        %v7862 = vsel %vm7836, %v7829, %v7469
        %v7863 = vsel %vm7836, %v7830, %v7471
        %v7864 = vsel %vm7836, %v7831, %v7473
        %v7865 = vsel %vm7836, %v7832, %v7475
        %v7866 = vsel %vm7836, %v7833, %v7477
        %v7867 = vsel %vm7836, %v7834, %v7479
        %v7868 = vsel %vm7836, %v7835, %v7481
        %v7869 = vsel %vm3770, %v7837, %v7547
        %v7870 = vsel %vm3770, %v7838, %v7549
        %v7871 = vsel %vm3770, %v7839, %v7551
        %v7872 = vsel %vm3770, %v7840, %v7553
        %v7873 = vsel %vm3770, %v7841, %v7555
        %v7874 = vsel %vm3770, %v7842, %v7557
        %v7875 = vsel %vm3770, %v7843, %v7559
        %v7876 = vsel %vm3770, %v7844, %v7561
        %v7877 = vsel %vm3770, %v7845, %v7563
        %v7878 = vsel %vm3770, %v7846, %v7565
        %v7879 = vsel %vm3770, %v7847, %v7567
        %v7880 = vsel %vm3770, %v7848, %v7569
        %v7881 = vsel %vm3770, %v7849, %v7571
        %v7882 = vsel %vm3770, %v7850, %v7573
        %v7883 = vsel %vm3770, %v7851, %v7575
        %v7884 = vsel %vm3770, %v7852, %v7577
        %v7885 = vsel %vm3770, %v7853, %v7579
        %v7886 = vsel %vm3770, %v7854, %v7581
        %v7887 = vsel %vm3770, %v7855, %v7583
        %v7888 = vsel %vm3770, %v7856, %v7585
        %v7889 = vsel %vm3770, %v7857, %v7587
        %v7890 = vsel %vm3770, %v7858, %v7589
        %v7891 = vsel %vm3770, %v7859, %v7591
        %v7892 = vsel %vm3770, %v7860, %v7593
        %v7893 = vsel %vm3770, %v7861, %v7595
        %v7894 = vsel %vm3770, %v7862, %v7597
        %v7895 = vsel %vm3770, %v7863, %v7599
        %v7896 = vsel %vm3770, %v7864, %v7601
        %v7897 = vsel %vm3770, %v7865, %v7603
        %v7898 = vsel %vm3770, %v7866, %v7605
        %v7899 = vsel %vm3770, %v7867, %v7607
        %v7900 = vsel %vm3770, %v7868, %v7609
        %v7901 = vld [vmem:[#allocation32] sm:$0xff]
        %v7902 = vld [vmem:[#allocation32 + $0x8] sm:$0xff]
        %v7903 = vld [vmem:[#allocation32 + $0x10] sm:$0xff]
        %v7904 = vld [vmem:[#allocation32 + $0x18] sm:$0xff]
        %v7905 = vld [vmem:[#allocation32 + $0x20] sm:$0xff]
        %v7906 = vld [vmem:[#allocation32 + $0x28] sm:$0xff]
        %v7907 = vld [vmem:[#allocation32 + $0x30] sm:$0xff]
        %v7908 = vld [vmem:[#allocation32 + $0x38] sm:$0xff]
        %v7909 = vld [vmem:[#allocation32 + $0x40] sm:$0xff]
        %v7910 = vld [vmem:[#allocation34] sm:$0x1]
        %v7912 = vlaneseq
        %v7913 = vshrl.u32 %v7912, 7
        %v7914 = vsub.s32 0, %v7913
        %v7915 = vrot.slane %v7910, %v7914
        %vm7917 = vcmask 588800
        %v7919 = vsel %vm7917, %v7869, 0
        %v7922 = vsel %vm7917, %v7870, 0
        %v7925 = vsel %vm7917, %v7871, 0
        %v7928 = vsel %vm7917, %v7872, 0
        %v7931 = vsel %vm7917, %v7873, 0
        %v7934 = vsel %vm7917, %v7874, 0
        %v7937 = vsel %vm7917, %v7875, 0
        %v7940 = vsel %vm7917, %v7876, 0
        %v7943 = vsel %vm7917, %v7877, 0
        %v7946 = vsel %vm7917, %v7878, 0
        %v7949 = vsel %vm7917, %v7879, 0
        %v7952 = vsel %vm7917, %v7880, 0
        %v7955 = vsel %vm7917, %v7881, 0
        %v7958 = vsel %vm7917, %v7882, 0
        %v7961 = vsel %vm7917, %v7883, 0
        %v7964 = vsel %vm7917, %v7884, 0
        %v7967 = vsel %vm7917, %v7885, 0
        %v7970 = vsel %vm7917, %v7886, 0
        %v7973 = vsel %vm7917, %v7887, 0
        %v7976 = vsel %vm7917, %v7888, 0
        %v7979 = vsel %vm7917, %v7889, 0
        %v7982 = vsel %vm7917, %v7890, 0
        %v7985 = vsel %vm7917, %v7891, 0
        %v7988 = vsel %vm7917, %v7892, 0
        %v7991 = vsel %vm7917, %v7893, 0
        %v7994 = vsel %vm7917, %v7894, 0
        %v7997 = vsel %vm7917, %v7895, 0
        %v8000 = vsel %vm7917, %v7896, 0
        %v8003 = vsel %vm7917, %v7897, 0
        %v8006 = vsel %vm7917, %v7898, 0
        %v8009 = vsel %vm7917, %v7899, 0
        %v8012 = vsel %vm7917, %v7900, 0
        %8014 = vmatprep.subr.mxu0 0.0
        %8015 = vmatpush1.msra.mxu0 %v7901
        %8016 = vmatprep.subr.mxu0 0.0
        %8017 = vmatpush1.msra.mxu0 %v7902
        %8018 = vmatprep.subr.mxu0 0.0
        %8019 = vmatpush1.msra.mxu0 %v7903
        %8020 = vmatprep.subr.mxu0 0.0
        %8021 = vmatpush1.msra.mxu0 %v7904
        %8022 = vmatprep.subr.mxu0 0.0
        %8023 = vmatpush1.msra.mxu0 %v7905
        %8024 = vmatprep.subr.mxu0 0.0
        %8025 = vmatpush1.msra.mxu0 %v7906
        %8026 = vmatprep.subr.mxu0 0.0
        %8027 = vmatpush1.msra.mxu0 %v7907
        %8028 = vmatprep.subr.mxu0 0.0
        %8029 = vmatpush1.msra.mxu0 %v7908
        %8030 = vmatprep.subr.mxu0 0.0
        %8031 = vmatpush1.msra.mxu0 %v7909
        %8032 = vmatprep.subr.mxu0 0.0
        %8033 = vmatpush1.msra.mxu0 0.0
        %8034 = vmatprep.subr.mxu0 0.0
        %8035 = vmatpush1.msra.mxu0 0.0
        %8036 = vmatprep.subr.mxu0 0.0
        %8037 = vmatpush1.msra.mxu0 0.0
        %8038 = vmatprep.subr.mxu0 0.0
        %8039 = vmatpush1.msra.mxu0 0.0
        %8040 = vmatprep.subr.mxu0 0.0
        %8041 = vmatpush1.msra.mxu0 0.0
        %8042 = vmatprep.subr.mxu0 0.0
        %8043 = vmatpush1.msra.mxu0 0.0
        %8044 = vmatprep.subr.mxu0 0.0
        %8045 = vmatpush1.msra.mxu0 0.0
        %8046 = vmatprep.subr.mxu0 0.0
        %8047 = vmatpush1.msra.mxu0 0.0
        %8048 = vmatprep.subr.mxu0 0.0
        %8049 = vmatpush1.msra.mxu0 0.0
        %8050 = vmatprep.subr.mxu0 0.0
        %8051 = vmatpush1.msra.mxu0 0.0
        %8052 = vmatprep.subr.mxu0 0.0
        %8053 = vmatpush1.msra.mxu0 0.0
        %8054 = vmatprep.subr.mxu0 0.0
        %8055 = vmatpush1.msra.mxu0 0.0
        %8056 = vmatprep.subr.mxu0 0.0
        %8057 = vmatpush1.msra.mxu0 0.0
        %8058 = vmatprep.subr.mxu0 0.0
        %8059 = vmatpush1.msra.mxu0 0.0
        %8060 = vmatprep.subr.mxu0 0.0
        %8061 = vmatpush1.msra.mxu0 0.0
        %8062 = vmatprep.subr.mxu0 0.0
        %8063 = vmatpush1.msra.mxu0 0.0
        %8064 = vmatprep.subr.mxu0 0.0
        %8065 = vmatpush1.msra.mxu0 0.0
        %8066 = vmatprep.subr.mxu0 0.0
        %8067 = vmatpush1.msra.mxu0 0.0
        %8068 = vmatprep.subr.mxu0 0.0
        %8069 = vmatpush1.msra.mxu0 0.0
        %8070 = vmatprep.subr.mxu0 0.0
        %8071 = vmatpush1.msra.mxu0 0.0
        %8072 = vmatprep.subr.mxu0 0.0
        %8073 = vmatpush1.msra.mxu0 0.0
        %8074 = vmatprep.subr.mxu0 0.0
        %8075 = vmatpush1.msra.mxu0 0.0
        %8076 = vmatprep.subr.mxu0 0.0
        %8077 = vmatpush1.msra.mxu0 0.0
        %8078 = vmatprep.mubr.f32.mxu0 0.0
        %8079 = vmatmul.mubr.f32.gmra.mrb[0].mxu0 %v7919
        %v8080 = vpop.f32.mrb[0].mxu0
        %v8081 = vadd.f32 %v7915, %v8080
        %v8082 = vpop.f32.mrb[0].mxu0
        %8083 = vmatprep.mubr.f32.mxu0 0.0
        %8084 = vmatmul.mubr.f32.gmra.mrb[0].mxu0 %v7922
        %v8085 = vpop.f32.mrb[0].mxu0
        %v8086 = vadd.f32 %v7915, %v8085
        %v8087 = vpop.f32.mrb[0].mxu0
        %8088 = vmatprep.mubr.f32.mxu0 0.0
        %8089 = vmatmul.mubr.f32.gmra.mrb[0].mxu0 %v7925
        %v8090 = vpop.f32.mrb[0].mxu0
        %v8091 = vadd.f32 %v7915, %v8090
        %v8092 = vpop.f32.mrb[0].mxu0
        %8093 = vmatprep.mubr.f32.mxu0 0.0
        %8094 = vmatmul.mubr.f32.gmra.mrb[0].mxu0 %v7928
        %v8095 = vpop.f32.mrb[0].mxu0
        %v8096 = vadd.f32 %v7915, %v8095
        %v8097 = vpop.f32.mrb[0].mxu0
        %8098 = vmatprep.mubr.f32.mxu0 0.0
        %8099 = vmatmul.mubr.f32.gmra.mrb[0].mxu0 %v7931
        %v8100 = vpop.f32.mrb[0].mxu0
        %v8101 = vadd.f32 %v7915, %v8100
        %v8102 = vpop.f32.mrb[0].mxu0
        %8103 = vmatprep.mubr.f32.mxu0 0.0
        %8104 = vmatmul.mubr.f32.gmra.mrb[0].mxu0 %v7934
        %v8105 = vpop.f32.mrb[0].mxu0
        %v8106 = vadd.f32 %v7915, %v8105
        %v8107 = vpop.f32.mrb[0].mxu0
        %8108 = vmatprep.mubr.f32.mxu0 0.0
        %8109 = vmatmul.mubr.f32.gmra.mrb[0].mxu0 %v7937
        %v8110 = vpop.f32.mrb[0].mxu0
        %v8111 = vadd.f32 %v7915, %v8110
        %v8112 = vpop.f32.mrb[0].mxu0
        %8113 = vmatprep.mubr.f32.mxu0 0.0
        %8114 = vmatmul.mubr.f32.gmra.mrb[0].mxu0 %v7940
        %v8115 = vpop.f32.mrb[0].mxu0
        %v8116 = vadd.f32 %v7915, %v8115
        %v8117 = vpop.f32.mrb[0].mxu0
        %8118 = vmatprep.mubr.f32.mxu0 0.0
        %8119 = vmatmul.mubr.f32.gmra.mrb[0].mxu0 %v7943
        %v8120 = vpop.f32.mrb[0].mxu0
        %v8121 = vadd.f32 %v7915, %v8120
        %v8122 = vpop.f32.mrb[0].mxu0
        %8123 = vmatprep.mubr.f32.mxu0 0.0
        %8124 = vmatmul.mubr.f32.gmra.mrb[0].mxu0 %v7946
        %v8125 = vpop.f32.mrb[0].mxu0
        %v8126 = vadd.f32 %v7915, %v8125
        %v8127 = vpop.f32.mrb[0].mxu0
        %8128 = vmatprep.mubr.f32.mxu0 0.0
        %8129 = vmatmul.mubr.f32.gmra.mrb[0].mxu0 %v7949
        %v8130 = vpop.f32.mrb[0].mxu0
        %v8131 = vadd.f32 %v7915, %v8130
        %v8132 = vpop.f32.mrb[0].mxu0
        %8133 = vmatprep.mubr.f32.mxu0 0.0
        %8134 = vmatmul.mubr.f32.gmra.mrb[0].mxu0 %v7952
        %v8135 = vpop.f32.mrb[0].mxu0
        %v8136 = vadd.f32 %v7915, %v8135
        %v8137 = vpop.f32.mrb[0].mxu0
        %8138 = vmatprep.mubr.f32.mxu0 0.0
        %8139 = vmatmul.mubr.f32.gmra.mrb[0].mxu0 %v7955
        %v8140 = vpop.f32.mrb[0].mxu0
        %v8141 = vadd.f32 %v7915, %v8140
        %v8142 = vpop.f32.mrb[0].mxu0
        %8143 = vmatprep.mubr.f32.mxu0 0.0
        %8144 = vmatmul.mubr.f32.gmra.mrb[0].mxu0 %v7958
        %v8145 = vpop.f32.mrb[0].mxu0
        %v8146 = vadd.f32 %v7915, %v8145
        %v8147 = vpop.f32.mrb[0].mxu0
        %8148 = vmatprep.mubr.f32.mxu0 0.0
        %8149 = vmatmul.mubr.f32.gmra.mrb[0].mxu0 %v7961
        %v8150 = vpop.f32.mrb[0].mxu0
        %v8151 = vadd.f32 %v7915, %v8150
        %v8152 = vpop.f32.mrb[0].mxu0
        %8153 = vmatprep.mubr.f32.mxu0 0.0
        %8154 = vmatmul.mubr.f32.gmra.mrb[0].mxu0 %v7964
        %v8155 = vpop.f32.mrb[0].mxu0
        %v8156 = vadd.f32 %v7915, %v8155
        %v8157 = vpop.f32.mrb[0].mxu0
        %8158 = vmatprep.mubr.f32.mxu0 0.0
        %8159 = vmatmul.mubr.f32.gmra.mrb[0].mxu0 %v7967
        %v8160 = vpop.f32.mrb[0].mxu0
        %v8161 = vadd.f32 %v7915, %v8160
        %v8162 = vpop.f32.mrb[0].mxu0
        %8163 = vmatprep.mubr.f32.mxu0 0.0
        %8164 = vmatmul.mubr.f32.gmra.mrb[0].mxu0 %v7970
        %v8165 = vpop.f32.mrb[0].mxu0
        %v8166 = vadd.f32 %v7915, %v8165
        %v8167 = vpop.f32.mrb[0].mxu0
        %8168 = vmatprep.mubr.f32.mxu0 0.0
        %8169 = vmatmul.mubr.f32.gmra.mrb[0].mxu0 %v7973
        %v8170 = vpop.f32.mrb[0].mxu0
        %v8171 = vadd.f32 %v7915, %v8170
        %v8172 = vpop.f32.mrb[0].mxu0
        %8173 = vmatprep.mubr.f32.mxu0 0.0
        %8174 = vmatmul.mubr.f32.gmra.mrb[0].mxu0 %v7976
        %v8175 = vpop.f32.mrb[0].mxu0
        %v8176 = vadd.f32 %v7915, %v8175
        %v8177 = vpop.f32.mrb[0].mxu0
        %8178 = vmatprep.mubr.f32.mxu0 0.0
        %8179 = vmatmul.mubr.f32.gmra.mrb[0].mxu0 %v7979
        %v8180 = vpop.f32.mrb[0].mxu0
        %v8181 = vadd.f32 %v7915, %v8180
        %v8182 = vpop.f32.mrb[0].mxu0
        %8183 = vmatprep.mubr.f32.mxu0 0.0
        %8184 = vmatmul.mubr.f32.gmra.mrb[0].mxu0 %v7982
        %v8185 = vpop.f32.mrb[0].mxu0
        %v8186 = vadd.f32 %v7915, %v8185
        %v8187 = vpop.f32.mrb[0].mxu0
        %8188 = vmatprep.mubr.f32.mxu0 0.0
        %8189 = vmatmul.mubr.f32.gmra.mrb[0].mxu0 %v7985
        %v8190 = vpop.f32.mrb[0].mxu0
        %v8191 = vadd.f32 %v7915, %v8190
        %v8192 = vpop.f32.mrb[0].mxu0
        %8193 = vmatprep.mubr.f32.mxu0 0.0
        %8194 = vmatmul.mubr.f32.gmra.mrb[0].mxu0 %v7988
        %v8195 = vpop.f32.mrb[0].mxu0
        %v8196 = vadd.f32 %v7915, %v8195
        %v8197 = vpop.f32.mrb[0].mxu0
        %8198 = vmatprep.mubr.f32.mxu0 0.0
        %8199 = vmatmul.mubr.f32.gmra.mrb[0].mxu0 %v7991
        %v8200 = vpop.f32.mrb[0].mxu0
        %v8201 = vadd.f32 %v7915, %v8200
        %v8202 = vpop.f32.mrb[0].mxu0
        %8203 = vmatprep.mubr.f32.mxu0 0.0
        %8204 = vmatmul.mubr.f32.gmra.mrb[0].mxu0 %v7994
        %v8205 = vpop.f32.mrb[0].mxu0
        %v8206 = vadd.f32 %v7915, %v8205
        %v8207 = vpop.f32.mrb[0].mxu0
        %8208 = vmatprep.mubr.f32.mxu0 0.0
        %8209 = vmatmul.mubr.f32.gmra.mrb[0].mxu0 %v7997
        %v8210 = vpop.f32.mrb[0].mxu0
        %v8211 = vadd.f32 %v7915, %v8210
        %v8212 = vpop.f32.mrb[0].mxu0
        %8213 = vmatprep.mubr.f32.mxu0 0.0
        %8214 = vmatmul.mubr.f32.gmra.mrb[0].mxu0 %v8000
        %v8215 = vpop.f32.mrb[0].mxu0
        %v8216 = vadd.f32 %v7915, %v8215
        %v8217 = vpop.f32.mrb[0].mxu0
        %8218 = vmatprep.mubr.f32.mxu0 0.0
        %8219 = vmatmul.mubr.f32.gmra.mrb[0].mxu0 %v8003
        %v8220 = vpop.f32.mrb[0].mxu0
        %v8221 = vadd.f32 %v7915, %v8220
        %v8222 = vpop.f32.mrb[0].mxu0
        %8223 = vmatprep.mubr.f32.mxu0 0.0
        %8224 = vmatmul.mubr.f32.gmra.mrb[0].mxu0 %v8006
        %v8225 = vpop.f32.mrb[0].mxu0
        %v8226 = vadd.f32 %v7915, %v8225
        %v8227 = vpop.f32.mrb[0].mxu0
        %8228 = vmatprep.mubr.f32.mxu0 0.0
        %8229 = vmatmul.mubr.f32.gmra.mrb[0].mxu0 %v8009
        %v8230 = vpop.f32.mrb[0].mxu0
        %v8231 = vadd.f32 %v7915, %v8230
        %v8232 = vpop.f32.mrb[0].mxu0
        %8233 = vmatprep.mubr.f32.mxu0 0.0
        %8234 = vmatmul.mubr.f32.gmra.mrb[0].mxu0 %v8012
        %v8235 = vpop.f32.mrb[0].mxu0
        %v8236 = vadd.f32 %v7915, %v8235
        %v8237 = vpop.f32.mrb[0].mxu0
        %8238 = vdwg.mxu0
        %v8239 = vmul.f32 %v8081, 0.5
        %v8240 = vmul.f32 %v8086, 0.5
        %v8241 = vmul.f32 %v8091, 0.5
        %v8242 = vmul.f32 %v8096, 0.5
        %v8243 = vmul.f32 %v8101, 0.5
        %v8244 = vmul.f32 %v8106, 0.5
        %v8245 = vmul.f32 %v8111, 0.5
        %v8246 = vmul.f32 %v8116, 0.5
        %v8247 = vmul.f32 %v8121, 0.5
        %v8248 = vmul.f32 %v8126, 0.5
        %v8249 = vmul.f32 %v8131, 0.5
        %v8250 = vmul.f32 %v8136, 0.5
        %v8251 = vmul.f32 %v8141, 0.5
        %v8252 = vmul.f32 %v8146, 0.5
        %v8253 = vmul.f32 %v8151, 0.5
        %v8254 = vmul.f32 %v8156, 0.5
        %v8255 = vmul.f32 %v8161, 0.5
        %v8256 = vmul.f32 %v8166, 0.5
        %v8257 = vmul.f32 %v8171, 0.5
        %v8258 = vmul.f32 %v8176, 0.5
        %v8259 = vmul.f32 %v8181, 0.5
        %v8260 = vmul.f32 %v8186, 0.5
        %v8261 = vmul.f32 %v8191, 0.5
        %v8262 = vmul.f32 %v8196, 0.5
        %v8263 = vmul.f32 %v8201, 0.5
        %v8264 = vmul.f32 %v8206, 0.5
        %v8265 = vmul.f32 %v8211, 0.5
        %v8266 = vmul.f32 %v8216, 0.5
        %v8267 = vmul.f32 %v8221, 0.5
        %v8268 = vmul.f32 %v8226, 0.5
        %v8269 = vmul.f32 %v8231, 0.5
        %v8270 = vmul.f32 %v8236, 0.5
        %v8271 = vmul.f32 %v8081, 0.044715
        %v8272 = vmul.f32 %v8086, 0.044715
        %v8273 = vmul.f32 %v8091, 0.044715
        %v8274 = vmul.f32 %v8096, 0.044715
        %v8275 = vmul.f32 %v8101, 0.044715
        %v8276 = vmul.f32 %v8106, 0.044715
        %v8277 = vmul.f32 %v8111, 0.044715
        %v8278 = vmul.f32 %v8116, 0.044715
        %v8279 = vmul.f32 %v8121, 0.044715
        %v8280 = vmul.f32 %v8126, 0.044715
        %v8281 = vmul.f32 %v8131, 0.044715
        %v8282 = vmul.f32 %v8136, 0.044715
        %v8283 = vmul.f32 %v8141, 0.044715
        %v8284 = vmul.f32 %v8146, 0.044715
        %v8285 = vmul.f32 %v8151, 0.044715
        %v8286 = vmul.f32 %v8156, 0.044715
        %v8287 = vmul.f32 %v8161, 0.044715
        %v8288 = vmul.f32 %v8166, 0.044715
        %v8289 = vmul.f32 %v8171, 0.044715
        %v8290 = vmul.f32 %v8176, 0.044715
        %v8291 = vmul.f32 %v8181, 0.044715
        %v8292 = vmul.f32 %v8186, 0.044715
        %v8293 = vmul.f32 %v8191, 0.044715
        %v8294 = vmul.f32 %v8196, 0.044715
        %v8295 = vmul.f32 %v8201, 0.044715
        %v8296 = vmul.f32 %v8206, 0.044715
        %v8297 = vmul.f32 %v8211, 0.044715
        %v8298 = vmul.f32 %v8216, 0.044715
        %v8299 = vmul.f32 %v8221, 0.044715
        %v8300 = vmul.f32 %v8226, 0.044715
        %v8301 = vmul.f32 %v8231, 0.044715
        %v8302 = vmul.f32 %v8236, 0.044715
        %v8303 = vmul.f32 %v8271, %v8081
        %v8304 = vmul.f32 %v8272, %v8086
        %v8305 = vmul.f32 %v8273, %v8091
        %v8306 = vmul.f32 %v8274, %v8096
        %v8307 = vmul.f32 %v8275, %v8101
        %v8308 = vmul.f32 %v8276, %v8106
        %v8309 = vmul.f32 %v8277, %v8111
        %v8310 = vmul.f32 %v8278, %v8116
        %v8311 = vmul.f32 %v8279, %v8121
        %v8312 = vmul.f32 %v8280, %v8126
        %v8313 = vmul.f32 %v8281, %v8131
        %v8314 = vmul.f32 %v8282, %v8136
        %v8315 = vmul.f32 %v8283, %v8141
        %v8316 = vmul.f32 %v8284, %v8146
        %v8317 = vmul.f32 %v8285, %v8151
        %v8318 = vmul.f32 %v8286, %v8156
        %v8319 = vmul.f32 %v8287, %v8161
        %v8320 = vmul.f32 %v8288, %v8166
        %v8321 = vmul.f32 %v8289, %v8171
        %v8322 = vmul.f32 %v8290, %v8176
        %v8323 = vmul.f32 %v8291, %v8181
        %v8324 = vmul.f32 %v8292, %v8186
        %v8325 = vmul.f32 %v8293, %v8191
        %v8326 = vmul.f32 %v8294, %v8196
        %v8327 = vmul.f32 %v8295, %v8201
        %v8328 = vmul.f32 %v8296, %v8206
        %v8329 = vmul.f32 %v8297, %v8211
        %v8330 = vmul.f32 %v8298, %v8216
        %v8331 = vmul.f32 %v8299, %v8221
        %v8332 = vmul.f32 %v8300, %v8226
        %v8333 = vmul.f32 %v8301, %v8231
        %v8334 = vmul.f32 %v8302, %v8236
        %v8335 = vmul.f32 %v8303, %v8081
        %v8336 = vmul.f32 %v8304, %v8086
        %v8337 = vmul.f32 %v8305, %v8091
        %v8338 = vmul.f32 %v8306, %v8096
        %v8339 = vmul.f32 %v8307, %v8101
        %v8340 = vmul.f32 %v8308, %v8106
        %v8341 = vmul.f32 %v8309, %v8111
        %v8342 = vmul.f32 %v8310, %v8116
        %v8343 = vmul.f32 %v8311, %v8121
        %v8344 = vmul.f32 %v8312, %v8126
        %v8345 = vmul.f32 %v8313, %v8131
        %v8346 = vmul.f32 %v8314, %v8136
        %v8347 = vmul.f32 %v8315, %v8141
        %v8348 = vmul.f32 %v8316, %v8146
        %v8349 = vmul.f32 %v8317, %v8151
        %v8350 = vmul.f32 %v8318, %v8156
        %v8351 = vmul.f32 %v8319, %v8161
        %v8352 = vmul.f32 %v8320, %v8166
        %v8353 = vmul.f32 %v8321, %v8171
        %v8354 = vmul.f32 %v8322, %v8176
        %v8355 = vmul.f32 %v8323, %v8181
        %v8356 = vmul.f32 %v8324, %v8186
        %v8357 = vmul.f32 %v8325, %v8191
        %v8358 = vmul.f32 %v8326, %v8196
        %v8359 = vmul.f32 %v8327, %v8201
        %v8360 = vmul.f32 %v8328, %v8206
        %v8361 = vmul.f32 %v8329, %v8211
        %v8362 = vmul.f32 %v8330, %v8216
        %v8363 = vmul.f32 %v8331, %v8221
        %v8364 = vmul.f32 %v8332, %v8226
        %v8365 = vmul.f32 %v8333, %v8231
        %v8366 = vmul.f32 %v8334, %v8236
        %v8367 = vadd.f32 %v8081, %v8335
        %v8368 = vadd.f32 %v8086, %v8336
        %v8369 = vadd.f32 %v8091, %v8337
        %v8370 = vadd.f32 %v8096, %v8338
        %v8371 = vadd.f32 %v8101, %v8339
        %v8372 = vadd.f32 %v8106, %v8340
        %v8373 = vadd.f32 %v8111, %v8341
        %v8374 = vadd.f32 %v8116, %v8342
        %v8375 = vadd.f32 %v8121, %v8343
        %v8376 = vadd.f32 %v8126, %v8344
        %v8377 = vadd.f32 %v8131, %v8345
        %v8378 = vadd.f32 %v8136, %v8346
        %v8379 = vadd.f32 %v8141, %v8347
        %v8380 = vadd.f32 %v8146, %v8348
        %v8381 = vadd.f32 %v8151, %v8349
        %v8382 = vadd.f32 %v8156, %v8350
        %v8383 = vadd.f32 %v8161, %v8351
        %v8384 = vadd.f32 %v8166, %v8352
        %v8385 = vadd.f32 %v8171, %v8353
        %v8386 = vadd.f32 %v8176, %v8354
        %v8387 = vadd.f32 %v8181, %v8355
        %v8388 = vadd.f32 %v8186, %v8356
        %v8389 = vadd.f32 %v8191, %v8357
        %v8390 = vadd.f32 %v8196, %v8358
        %v8391 = vadd.f32 %v8201, %v8359
        %v8392 = vadd.f32 %v8206, %v8360
        %v8393 = vadd.f32 %v8211, %v8361
        %v8394 = vadd.f32 %v8216, %v8362
        %v8395 = vadd.f32 %v8221, %v8363
        %v8396 = vadd.f32 %v8226, %v8364
        %v8397 = vadd.f32 %v8231, %v8365
        %v8398 = vadd.f32 %v8236, %v8366
        %v8399 = vmul.f32 %v8367, 0.7978846
        %v8400 = vmul.f32 %v8368, 0.7978846
        %v8401 = vmul.f32 %v8369, 0.7978846
        %v8402 = vmul.f32 %v8370, 0.7978846
        %v8403 = vmul.f32 %v8371, 0.7978846
        %v8404 = vmul.f32 %v8372, 0.7978846
        %v8405 = vmul.f32 %v8373, 0.7978846
        %v8406 = vmul.f32 %v8374, 0.7978846
        %v8407 = vmul.f32 %v8375, 0.7978846
        %v8408 = vmul.f32 %v8376, 0.7978846
        %v8409 = vmul.f32 %v8377, 0.7978846
        %v8410 = vmul.f32 %v8378, 0.7978846
        %v8411 = vmul.f32 %v8379, 0.7978846
        %v8412 = vmul.f32 %v8380, 0.7978846
        %v8413 = vmul.f32 %v8381, 0.7978846
        %v8414 = vmul.f32 %v8382, 0.7978846
        %v8415 = vmul.f32 %v8383, 0.7978846
        %v8416 = vmul.f32 %v8384, 0.7978846
        %v8417 = vmul.f32 %v8385, 0.7978846
        %v8418 = vmul.f32 %v8386, 0.7978846
        %v8419 = vmul.f32 %v8387, 0.7978846
        %v8420 = vmul.f32 %v8388, 0.7978846
        %v8421 = vmul.f32 %v8389, 0.7978846
        %v8422 = vmul.f32 %v8390, 0.7978846
        %v8423 = vmul.f32 %v8391, 0.7978846
        %v8424 = vmul.f32 %v8392, 0.7978846
        %v8425 = vmul.f32 %v8393, 0.7978846
        %v8426 = vmul.f32 %v8394, 0.7978846
        %v8427 = vmul.f32 %v8395, 0.7978846
        %v8428 = vmul.f32 %v8396, 0.7978846
        %v8429 = vmul.f32 %v8397, 0.7978846
        %v8430 = vmul.f32 %v8398, 0.7978846
        %v8431 = vtanh.pop %v8399
        %v8432 = vtanh.pop %v8400
        %v8433 = vtanh.pop %v8401
        %v8434 = vtanh.pop %v8402
        %v8435 = vtanh.pop %v8403
        %v8436 = vtanh.pop %v8404
        %v8437 = vtanh.pop %v8405
        %v8438 = vtanh.pop %v8406
        %v8439 = vtanh.pop %v8407
        %v8440 = vtanh.pop %v8408
        %v8441 = vtanh.pop %v8409
        %v8442 = vtanh.pop %v8410
        %v8443 = vtanh.pop %v8411
        %v8444 = vtanh.pop %v8412
        %v8445 = vtanh.pop %v8413
        %v8446 = vtanh.pop %v8414
        %v8447 = vtanh.pop %v8415
        %v8448 = vtanh.pop %v8416
        %v8449 = vtanh.pop %v8417
        %v8450 = vtanh.pop %v8418
        %v8451 = vtanh.pop %v8419
        %v8452 = vtanh.pop %v8420
        %v8453 = vtanh.pop %v8421
        %v8454 = vtanh.pop %v8422
        %v8455 = vtanh.pop %v8423
        %v8456 = vtanh.pop %v8424
        %v8457 = vtanh.pop %v8425
        %v8458 = vtanh.pop %v8426
        %v8459 = vtanh.pop %v8427
        %v8460 = vtanh.pop %v8428
        %v8461 = vtanh.pop %v8429
        %v8462 = vtanh.pop %v8430
        %v8463 = vadd.f32 %v8431, 1.0
        %v8464 = vadd.f32 %v8432, 1.0
        %v8465 = vadd.f32 %v8433, 1.0
        %v8466 = vadd.f32 %v8434, 1.0
        %v8467 = vadd.f32 %v8435, 1.0
        %v8468 = vadd.f32 %v8436, 1.0
        %v8469 = vadd.f32 %v8437, 1.0
        %v8470 = vadd.f32 %v8438, 1.0
        %v8471 = vadd.f32 %v8439, 1.0
        %v8472 = vadd.f32 %v8440, 1.0
        %v8473 = vadd.f32 %v8441, 1.0
        %v8474 = vadd.f32 %v8442, 1.0
        %v8475 = vadd.f32 %v8443, 1.0
        %v8476 = vadd.f32 %v8444, 1.0
        %v8477 = vadd.f32 %v8445, 1.0
        %v8478 = vadd.f32 %v8446, 1.0
        %v8479 = vadd.f32 %v8447, 1.0
        %v8480 = vadd.f32 %v8448, 1.0
        %v8481 = vadd.f32 %v8449, 1.0
        %v8482 = vadd.f32 %v8450, 1.0
        %v8483 = vadd.f32 %v8451, 1.0
        %v8484 = vadd.f32 %v8452, 1.0
        %v8485 = vadd.f32 %v8453, 1.0
        %v8486 = vadd.f32 %v8454, 1.0
        %v8487 = vadd.f32 %v8455, 1.0
        %v8488 = vadd.f32 %v8456, 1.0
        %v8489 = vadd.f32 %v8457, 1.0
        %v8490 = vadd.f32 %v8458, 1.0
        %v8491 = vadd.f32 %v8459, 1.0
        %v8492 = vadd.f32 %v8460, 1.0
        %v8493 = vadd.f32 %v8461, 1.0
        %v8494 = vadd.f32 %v8462, 1.0
        %v8495 = vmul.f32 %v8239, %v8463
        %v8496 = vmul.f32 %v8240, %v8464
        %v8497 = vmul.f32 %v8241, %v8465
        %v8498 = vmul.f32 %v8242, %v8466
        %v8499 = vmul.f32 %v8243, %v8467
        %v8500 = vmul.f32 %v8244, %v8468
        %v8501 = vmul.f32 %v8245, %v8469
        %v8502 = vmul.f32 %v8246, %v8470
        %v8503 = vmul.f32 %v8247, %v8471
        %v8504 = vmul.f32 %v8248, %v8472
        %v8505 = vmul.f32 %v8249, %v8473
        %v8506 = vmul.f32 %v8250, %v8474
        %v8507 = vmul.f32 %v8251, %v8475
        %v8508 = vmul.f32 %v8252, %v8476
        %v8509 = vmul.f32 %v8253, %v8477
        %v8510 = vmul.f32 %v8254, %v8478
        %v8511 = vmul.f32 %v8255, %v8479
        %v8512 = vmul.f32 %v8256, %v8480
        %v8513 = vmul.f32 %v8257, %v8481
        %v8514 = vmul.f32 %v8258, %v8482
        %v8515 = vmul.f32 %v8259, %v8483
        %v8516 = vmul.f32 %v8260, %v8484
        %v8517 = vmul.f32 %v8261, %v8485
        %v8518 = vmul.f32 %v8262, %v8486
        %v8519 = vmul.f32 %v8263, %v8487
        %v8520 = vmul.f32 %v8264, %v8488
        %v8521 = vmul.f32 %v8265, %v8489
        %v8522 = vmul.f32 %v8266, %v8490
        %v8523 = vmul.f32 %v8267, %v8491
        %v8524 = vmul.f32 %v8268, %v8492
        %v8525 = vmul.f32 %v8269, %v8493
        %v8526 = vmul.f32 %v8270, %v8494
        %v8527 = vsel %vm1001, %v8495, %v6264
        %v8528 = vsel %vm1001, %v8496, %v6265
        %v8529 = vsel %vm1001, %v8497, %v6266
        %v8530 = vsel %vm1001, %v8498, %v6267
        %v8531 = vsel %vm1001, %v8499, %v6268
        %v8532 = vsel %vm1001, %v8500, %v6269
        %v8533 = vsel %vm1001, %v8501, %v6270
        %v8534 = vsel %vm1001, %v8502, %v6271
        %v8535 = vsel %vm1001, %v8503, %v6272
        %v8536 = vsel %vm1001, %v8504, %v6273
        %v8537 = vsel %vm1001, %v8505, %v6274
        %v8538 = vsel %vm1001, %v8506, %v6275
        %v8539 = vsel %vm1001, %v8507, %v6276
        %v8540 = vsel %vm1001, %v8508, %v6277
        %v8541 = vsel %vm1001, %v8509, %v6278
        %v8542 = vsel %vm1001, %v8510, %v6279
        %v8543 = vsel %vm1001, %v8511, %v6280
        %v8544 = vsel %vm1001, %v8512, %v6281
        %v8545 = vsel %vm1001, %v8513, %v6282
        %v8546 = vsel %vm1001, %v8514, %v6283
        %v8547 = vsel %vm1001, %v8515, %v6284
        %v8548 = vsel %vm1001, %v8516, %v6285
        %v8549 = vsel %vm1001, %v8517, %v6286
        %v8550 = vsel %vm1001, %v8518, %v6287
        %v8551 = vsel %vm1001, %v8519, %v6288
        %v8552 = vsel %vm1001, %v8520, %v6289
        %v8553 = vsel %vm1001, %v8521, %v6290
        %v8554 = vsel %vm1001, %v8522, %v6291
        %v8555 = vsel %vm1001, %v8523, %v6292
        %v8556 = vsel %vm1001, %v8524, %v6293
        %v8557 = vsel %vm1001, %v8525, %v6294
        %v8558 = vsel %vm1001, %v8526, %v6295
        %v8559 = vld [vmem:[#allocation35] sm:$0xff]
        %v8560 = vld [vmem:[#allocation35 + $0x8] sm:$0xff]
        %v8561 = vld [vmem:[#allocation35 + $0x10] sm:$0xff]
        %v8562 = vld [vmem:[#allocation35 + $0x18] sm:$0xff]
        %v8563 = vld [vmem:[#allocation37] sm:$0x1]
        %v8565 = vlaneseq
        %v8566 = vshrl.u32 %v8565, 7
        %v8567 = vsub.s32 0, %v8566
        %v8568 = vrot.slane %v8563, %v8567
        %v8571 = vsel %vm3704, %v8527, 0
        %v8574 = vsel %vm3704, %v8528, 0
        %v8577 = vsel %vm3704, %v8529, 0
        %v8580 = vsel %vm3704, %v8530, 0
        %v8583 = vsel %vm3704, %v8531, 0
        %v8586 = vsel %vm3704, %v8532, 0
        %v8589 = vsel %vm3704, %v8533, 0
        %v8592 = vsel %vm3704, %v8534, 0
        %v8595 = vsel %vm3704, %v8535, 0
        %v8598 = vsel %vm3704, %v8536, 0
        %v8601 = vsel %vm3704, %v8537, 0
        %v8604 = vsel %vm3704, %v8538, 0
        %v8607 = vsel %vm3704, %v8539, 0
        %v8610 = vsel %vm3704, %v8540, 0
        %v8613 = vsel %vm3704, %v8541, 0
        %v8616 = vsel %vm3704, %v8542, 0
        %v8619 = vsel %vm3704, %v8543, 0
        %v8622 = vsel %vm3704, %v8544, 0
        %v8625 = vsel %vm3704, %v8545, 0
        %v8628 = vsel %vm3704, %v8546, 0
        %v8631 = vsel %vm3704, %v8547, 0
        %v8634 = vsel %vm3704, %v8548, 0
        %v8637 = vsel %vm3704, %v8549, 0
        %v8640 = vsel %vm3704, %v8550, 0
        %v8643 = vsel %vm3704, %v8551, 0
        %v8646 = vsel %vm3704, %v8552, 0
        %v8649 = vsel %vm3704, %v8553, 0
        %v8652 = vsel %vm3704, %v8554, 0
        %v8655 = vsel %vm3704, %v8555, 0
        %v8658 = vsel %vm3704, %v8556, 0
        %v8661 = vsel %vm3704, %v8557, 0
        %v8664 = vsel %vm3704, %v8558, 0
        %8666 = vmatprep.subr.mxu0 0.0
        %8667 = vmatpush1.msra.mxu0 %v8559
        %8668 = vmatprep.subr.mxu0 0.0
        %8669 = vmatpush1.msra.mxu0 %v8560
        %8670 = vmatprep.subr.mxu0 0.0
        %8671 = vmatpush1.msra.mxu0 %v8561
        %8672 = vmatprep.subr.mxu0 0.0
        %8673 = vmatpush1.msra.mxu0 %v8562
        %8674 = vmatprep.subr.mxu0 0.0
        %8675 = vmatpush1.msra.mxu0 0.0
        %8676 = vmatprep.subr.mxu0 0.0
        %8677 = vmatpush1.msra.mxu0 0.0
        %8678 = vmatprep.subr.mxu0 0.0
        %8679 = vmatpush1.msra.mxu0 0.0
        %8680 = vmatprep.subr.mxu0 0.0
        %8681 = vmatpush1.msra.mxu0 0.0
        %8682 = vmatprep.subr.mxu0 0.0
        %8683 = vmatpush1.msra.mxu0 0.0
        %8684 = vmatprep.subr.mxu0 0.0
        %8685 = vmatpush1.msra.mxu0 0.0
        %8686 = vmatprep.subr.mxu0 0.0
        %8687 = vmatpush1.msra.mxu0 0.0
        %8688 = vmatprep.subr.mxu0 0.0
        %8689 = vmatpush1.msra.mxu0 0.0
        %8690 = vmatprep.subr.mxu0 0.0
        %8691 = vmatpush1.msra.mxu0 0.0
        %8692 = vmatprep.subr.mxu0 0.0
        %8693 = vmatpush1.msra.mxu0 0.0
        %8694 = vmatprep.subr.mxu0 0.0
        %8695 = vmatpush1.msra.mxu0 0.0
        %8696 = vmatprep.subr.mxu0 0.0
        %8697 = vmatpush1.msra.mxu0 0.0
        %8698 = vmatprep.subr.mxu0 0.0
        %8699 = vmatpush1.msra.mxu0 0.0
        %8700 = vmatprep.subr.mxu0 0.0
        %8701 = vmatpush1.msra.mxu0 0.0
        %8702 = vmatprep.subr.mxu0 0.0
        %8703 = vmatpush1.msra.mxu0 0.0
        %8704 = vmatprep.subr.mxu0 0.0
        %8705 = vmatpush1.msra.mxu0 0.0
        %8706 = vmatprep.subr.mxu0 0.0
        %8707 = vmatpush1.msra.mxu0 0.0
        %8708 = vmatprep.subr.mxu0 0.0
        %8709 = vmatpush1.msra.mxu0 0.0
        %8710 = vmatprep.subr.mxu0 0.0
        %8711 = vmatpush1.msra.mxu0 0.0
        %8712 = vmatprep.subr.mxu0 0.0
        %8713 = vmatpush1.msra.mxu0 0.0
        %8714 = vmatprep.subr.mxu0 0.0
        %8715 = vmatpush1.msra.mxu0 0.0
        %8716 = vmatprep.subr.mxu0 0.0
        %8717 = vmatpush1.msra.mxu0 0.0
        %8718 = vmatprep.subr.mxu0 0.0
        %8719 = vmatpush1.msra.mxu0 0.0
        %8720 = vmatprep.subr.mxu0 0.0
        %8721 = vmatpush1.msra.mxu0 0.0
        %8722 = vmatprep.subr.mxu0 0.0
        %8723 = vmatpush1.msra.mxu0 0.0
        %8724 = vmatprep.subr.mxu0 0.0
        %8725 = vmatpush1.msra.mxu0 0.0
        %8726 = vmatprep.subr.mxu0 0.0
        %8727 = vmatpush1.msra.mxu0 0.0
        %8728 = vmatprep.subr.mxu0 0.0
        %8729 = vmatpush1.msra.mxu0 0.0
        %8730 = vmatprep.mubr.f32.mxu0 0.0
        %8731 = vmatmul.mubr.f32.gmra.mrb[0].mxu0 %v8571
        %v8732 = vpop.f32.mrb[0].mxu0
        %v8733 = vadd.f32 %v8568, %v8732
        %v8734 = vpop.f32.mrb[0].mxu0
        %8735 = vmatprep.mubr.f32.mxu0 0.0
        %8736 = vmatmul.mubr.f32.gmra.mrb[0].mxu0 %v8574
        %v8737 = vpop.f32.mrb[0].mxu0
        %v8738 = vadd.f32 %v8568, %v8737
        %v8739 = vpop.f32.mrb[0].mxu0
        %8740 = vmatprep.mubr.f32.mxu0 0.0
        %8741 = vmatmul.mubr.f32.gmra.mrb[0].mxu0 %v8577
        %v8742 = vpop.f32.mrb[0].mxu0
        %v8743 = vadd.f32 %v8568, %v8742
        %v8744 = vpop.f32.mrb[0].mxu0
        %8745 = vmatprep.mubr.f32.mxu0 0.0
        %8746 = vmatmul.mubr.f32.gmra.mrb[0].mxu0 %v8580
        %v8747 = vpop.f32.mrb[0].mxu0
        %v8748 = vadd.f32 %v8568, %v8747
        %v8749 = vpop.f32.mrb[0].mxu0
        %8750 = vmatprep.mubr.f32.mxu0 0.0
        %8751 = vmatmul.mubr.f32.gmra.mrb[0].mxu0 %v8583
        %v8752 = vpop.f32.mrb[0].mxu0
        %v8753 = vadd.f32 %v8568, %v8752
        %v8754 = vpop.f32.mrb[0].mxu0
        %8755 = vmatprep.mubr.f32.mxu0 0.0
        %8756 = vmatmul.mubr.f32.gmra.mrb[0].mxu0 %v8586
        %v8757 = vpop.f32.mrb[0].mxu0
        %v8758 = vadd.f32 %v8568, %v8757
        %v8759 = vpop.f32.mrb[0].mxu0
        %8760 = vmatprep.mubr.f32.mxu0 0.0
        %8761 = vmatmul.mubr.f32.gmra.mrb[0].mxu0 %v8589
        %v8762 = vpop.f32.mrb[0].mxu0
        %v8763 = vadd.f32 %v8568, %v8762
        %v8764 = vpop.f32.mrb[0].mxu0
        %8765 = vmatprep.mubr.f32.mxu0 0.0
        %8766 = vmatmul.mubr.f32.gmra.mrb[0].mxu0 %v8592
        %v8767 = vpop.f32.mrb[0].mxu0
        %v8768 = vadd.f32 %v8568, %v8767
        %v8769 = vpop.f32.mrb[0].mxu0
        %8770 = vmatprep.mubr.f32.mxu0 0.0
        %8771 = vmatmul.mubr.f32.gmra.mrb[0].mxu0 %v8595
        %v8772 = vpop.f32.mrb[0].mxu0
        %v8773 = vadd.f32 %v8568, %v8772
        %v8774 = vpop.f32.mrb[0].mxu0
        %8775 = vmatprep.mubr.f32.mxu0 0.0
        %8776 = vmatmul.mubr.f32.gmra.mrb[0].mxu0 %v8598
        %v8777 = vpop.f32.mrb[0].mxu0
        %v8778 = vadd.f32 %v8568, %v8777
        %v8779 = vpop.f32.mrb[0].mxu0
        %8780 = vmatprep.mubr.f32.mxu0 0.0
        %8781 = vmatmul.mubr.f32.gmra.mrb[0].mxu0 %v8601
        %v8782 = vpop.f32.mrb[0].mxu0
        %v8783 = vadd.f32 %v8568, %v8782
        %v8784 = vpop.f32.mrb[0].mxu0
        %8785 = vmatprep.mubr.f32.mxu0 0.0
        %8786 = vmatmul.mubr.f32.gmra.mrb[0].mxu0 %v8604
        %v8787 = vpop.f32.mrb[0].mxu0
        %v8788 = vadd.f32 %v8568, %v8787
        %v8789 = vpop.f32.mrb[0].mxu0
        %8790 = vmatprep.mubr.f32.mxu0 0.0
        %8791 = vmatmul.mubr.f32.gmra.mrb[0].mxu0 %v8607
        %v8792 = vpop.f32.mrb[0].mxu0
        %v8793 = vadd.f32 %v8568, %v8792
        %v8794 = vpop.f32.mrb[0].mxu0
        %8795 = vmatprep.mubr.f32.mxu0 0.0
        %8796 = vmatmul.mubr.f32.gmra.mrb[0].mxu0 %v8610
        %v8797 = vpop.f32.mrb[0].mxu0
        %v8798 = vadd.f32 %v8568, %v8797
        %v8799 = vpop.f32.mrb[0].mxu0
        %8800 = vmatprep.mubr.f32.mxu0 0.0
        %8801 = vmatmul.mubr.f32.gmra.mrb[0].mxu0 %v8613
        %v8802 = vpop.f32.mrb[0].mxu0
        %v8803 = vadd.f32 %v8568, %v8802
        %v8804 = vpop.f32.mrb[0].mxu0
        %8805 = vmatprep.mubr.f32.mxu0 0.0
        %8806 = vmatmul.mubr.f32.gmra.mrb[0].mxu0 %v8616
        %v8807 = vpop.f32.mrb[0].mxu0
        %v8808 = vadd.f32 %v8568, %v8807
        %v8809 = vpop.f32.mrb[0].mxu0
        %8810 = vmatprep.mubr.f32.mxu0 0.0
        %8811 = vmatmul.mubr.f32.gmra.mrb[0].mxu0 %v8619
        %v8812 = vpop.f32.mrb[0].mxu0
        %v8813 = vadd.f32 %v8568, %v8812
        %v8814 = vpop.f32.mrb[0].mxu0
        %8815 = vmatprep.mubr.f32.mxu0 0.0
        %8816 = vmatmul.mubr.f32.gmra.mrb[0].mxu0 %v8622
        %v8817 = vpop.f32.mrb[0].mxu0
        %v8818 = vadd.f32 %v8568, %v8817
        %v8819 = vpop.f32.mrb[0].mxu0
        %8820 = vmatprep.mubr.f32.mxu0 0.0
        %8821 = vmatmul.mubr.f32.gmra.mrb[0].mxu0 %v8625
        %v8822 = vpop.f32.mrb[0].mxu0
        %v8823 = vadd.f32 %v8568, %v8822
        %v8824 = vpop.f32.mrb[0].mxu0
        %8825 = vmatprep.mubr.f32.mxu0 0.0
        %8826 = vmatmul.mubr.f32.gmra.mrb[0].mxu0 %v8628
        %v8827 = vpop.f32.mrb[0].mxu0
        %v8828 = vadd.f32 %v8568, %v8827
        %v8829 = vpop.f32.mrb[0].mxu0
        %8830 = vmatprep.mubr.f32.mxu0 0.0
        %8831 = vmatmul.mubr.f32.gmra.mrb[0].mxu0 %v8631
        %v8832 = vpop.f32.mrb[0].mxu0
        %v8833 = vadd.f32 %v8568, %v8832
        %v8834 = vpop.f32.mrb[0].mxu0
        %8835 = vmatprep.mubr.f32.mxu0 0.0
        %8836 = vmatmul.mubr.f32.gmra.mrb[0].mxu0 %v8634
        %v8837 = vpop.f32.mrb[0].mxu0
        %v8838 = vadd.f32 %v8568, %v8837
        %v8839 = vpop.f32.mrb[0].mxu0
        %8840 = vmatprep.mubr.f32.mxu0 0.0
        %8841 = vmatmul.mubr.f32.gmra.mrb[0].mxu0 %v8637
        %v8842 = vpop.f32.mrb[0].mxu0
        %v8843 = vadd.f32 %v8568, %v8842
        %v8844 = vpop.f32.mrb[0].mxu0
        %8845 = vmatprep.mubr.f32.mxu0 0.0
        %8846 = vmatmul.mubr.f32.gmra.mrb[0].mxu0 %v8640
        %v8847 = vpop.f32.mrb[0].mxu0
        %v8848 = vadd.f32 %v8568, %v8847
        %v8849 = vpop.f32.mrb[0].mxu0
        %8850 = vmatprep.mubr.f32.mxu0 0.0
        %8851 = vmatmul.mubr.f32.gmra.mrb[0].mxu0 %v8643
        %v8852 = vpop.f32.mrb[0].mxu0
        %v8853 = vadd.f32 %v8568, %v8852
        %v8854 = vpop.f32.mrb[0].mxu0
        %8855 = vmatprep.mubr.f32.mxu0 0.0
        %8856 = vmatmul.mubr.f32.gmra.mrb[0].mxu0 %v8646
        %v8857 = vpop.f32.mrb[0].mxu0
        %v8858 = vadd.f32 %v8568, %v8857
        %v8859 = vpop.f32.mrb[0].mxu0
        %8860 = vmatprep.mubr.f32.mxu0 0.0
        %8861 = vmatmul.mubr.f32.gmra.mrb[0].mxu0 %v8649
        %v8862 = vpop.f32.mrb[0].mxu0
        %v8863 = vadd.f32 %v8568, %v8862
        %v8864 = vpop.f32.mrb[0].mxu0
        %8865 = vmatprep.mubr.f32.mxu0 0.0
        %8866 = vmatmul.mubr.f32.gmra.mrb[0].mxu0 %v8652
        %v8867 = vpop.f32.mrb[0].mxu0
        %v8868 = vadd.f32 %v8568, %v8867
        %v8869 = vpop.f32.mrb[0].mxu0
        %8870 = vmatprep.mubr.f32.mxu0 0.0
        %8871 = vmatmul.mubr.f32.gmra.mrb[0].mxu0 %v8655
        %v8872 = vpop.f32.mrb[0].mxu0
        %v8873 = vadd.f32 %v8568, %v8872
        %v8874 = vpop.f32.mrb[0].mxu0
        %8875 = vmatprep.mubr.f32.mxu0 0.0
        %8876 = vmatmul.mubr.f32.gmra.mrb[0].mxu0 %v8658
        %v8877 = vpop.f32.mrb[0].mxu0
        %v8878 = vadd.f32 %v8568, %v8877
        %v8879 = vpop.f32.mrb[0].mxu0
        %8880 = vmatprep.mubr.f32.mxu0 0.0
        %8881 = vmatmul.mubr.f32.gmra.mrb[0].mxu0 %v8661
        %v8882 = vpop.f32.mrb[0].mxu0
        %v8883 = vadd.f32 %v8568, %v8882
        %v8884 = vpop.f32.mrb[0].mxu0
        %8885 = vmatprep.mubr.f32.mxu0 0.0
        %8886 = vmatmul.mubr.f32.gmra.mrb[0].mxu0 %v8664
        %v8887 = vpop.f32.mrb[0].mxu0
        %v8888 = vadd.f32 %v8568, %v8887
        %v8889 = vpop.f32.mrb[0].mxu0
        %8890 = vdwg.mxu0
        %v8891 = vadd.f32 %v8733, %v5422
        %v8892 = vadd.f32 %v8738, %v5423
        %v8893 = vadd.f32 %v8743, %v5424
        %v8894 = vadd.f32 %v8748, %v5425
        %v8895 = vadd.f32 %v8753, %v5426
        %v8896 = vadd.f32 %v8758, %v5427
        %v8897 = vadd.f32 %v8763, %v5428
        %v8898 = vadd.f32 %v8768, %v5429
        %v8899 = vadd.f32 %v8773, %v5430
        %v8900 = vadd.f32 %v8778, %v5431
        %v8901 = vadd.f32 %v8783, %v5432
        %v8902 = vadd.f32 %v8788, %v5433
        %v8903 = vadd.f32 %v8793, %v5434
        %v8904 = vadd.f32 %v8798, %v5435
        %v8905 = vadd.f32 %v8803, %v5436
        %v8906 = vadd.f32 %v8808, %v5437
        %v8907 = vadd.f32 %v8813, %v5438
        %v8908 = vadd.f32 %v8818, %v5439
        %v8909 = vadd.f32 %v8823, %v5440
        %v8910 = vadd.f32 %v8828, %v5441
        %v8911 = vadd.f32 %v8833, %v5442
        %v8912 = vadd.f32 %v8838, %v5443
        %v8913 = vadd.f32 %v8843, %v5444
        %v8914 = vadd.f32 %v8848, %v5445
        %v8915 = vadd.f32 %v8853, %v5446
        %v8916 = vadd.f32 %v8858, %v5447
        %v8917 = vadd.f32 %v8863, %v5448
        %v8918 = vadd.f32 %v8868, %v5449
        %v8919 = vadd.f32 %v8873, %v5450
        %v8920 = vadd.f32 %v8878, %v5451
        %v8921 = vadd.f32 %v8883, %v5452
        %v8922 = vadd.f32 %v8888, %v5453
        %8923 = vst.msk [vmem:[%s942] sm:$0xff] %vm943, %v8891
        %8924 = vst.msk [vmem:[%s942 + $0x8] sm:$0xff] %vm943, %v8892
        %8925 = vst.msk [vmem:[%s942 + $0x10] sm:$0xff] %vm943, %v8893
        %8926 = vst.msk [vmem:[%s942 + $0x18] sm:$0xff] %vm943, %v8894
        %8927 = vst.msk [vmem:[%s942 + $0x20] sm:$0xff] %vm943, %v8895
        %8928 = vst.msk [vmem:[%s942 + $0x28] sm:$0xff] %vm943, %v8896
        %8929 = vst.msk [vmem:[%s942 + $0x30] sm:$0xff] %vm943, %v8897
        %8930 = vst.msk [vmem:[%s942 + $0x38] sm:$0xff] %vm943, %v8898
        %8931 = vst.msk [vmem:[%s942 + $0x40] sm:$0xff] %vm943, %v8899
        %8932 = vst.msk [vmem:[%s942 + $0x48] sm:$0xff] %vm943, %v8900
        %8933 = vst.msk [vmem:[%s942 + $0x50] sm:$0xff] %vm943, %v8901
        %8934 = vst.msk [vmem:[%s942 + $0x58] sm:$0xff] %vm943, %v8902
        %8935 = vst.msk [vmem:[%s942 + $0x60] sm:$0xff] %vm943, %v8903
        %8936 = vst.msk [vmem:[%s942 + $0x68] sm:$0xff] %vm943, %v8904
        %8937 = vst.msk [vmem:[%s942 + $0x70] sm:$0xff] %vm943, %v8905
        %8938 = vst.msk [vmem:[%s942 + $0x78] sm:$0xff] %vm943, %v8906
        %8939 = vst.msk [vmem:[%s942 + $0x80] sm:$0xff] %vm943, %v8907
        %8940 = vst.msk [vmem:[%s942 + $0x88] sm:$0xff] %vm943, %v8908
        %8941 = vst.msk [vmem:[%s942 + $0x90] sm:$0xff] %vm943, %v8909
        %8942 = vst.msk [vmem:[%s942 + $0x98] sm:$0xff] %vm943, %v8910
        %8943 = vst.msk [vmem:[%s942 + $0xa0] sm:$0xff] %vm943, %v8911
        %8944 = vst.msk [vmem:[%s942 + $0xa8] sm:$0xff] %vm943, %v8912
        %8945 = vst.msk [vmem:[%s942 + $0xb0] sm:$0xff] %vm943, %v8913
        %8946 = vst.msk [vmem:[%s942 + $0xb8] sm:$0xff] %vm943, %v8914
        %8947 = vst.msk [vmem:[%s942 + $0xc0] sm:$0xff] %vm943, %v8915
        %8948 = vst.msk [vmem:[%s942 + $0xc8] sm:$0xff] %vm943, %v8916
        %8949 = vst.msk [vmem:[%s942 + $0xd0] sm:$0xff] %vm943, %v8917
        %8950 = vst.msk [vmem:[%s942 + $0xd8] sm:$0xff] %vm943, %v8918
        %8951 = vst.msk [vmem:[%s942 + $0xe0] sm:$0xff] %vm943, %v8919
        %8952 = vst.msk [vmem:[%s942 + $0xe8] sm:$0xff] %vm943, %v8920
        %8953 = vst.msk [vmem:[%s942 + $0xf0] sm:$0xff] %vm943, %v8921
        %8954 = vst.msk [vmem:[%s942 + $0xf8] sm:$0xff] %vm943, %v8922
        %s8955 = sand.u32 %s502, 1
        %s8956 = scalar_lea.sflag [#allocation7], %s8955
        %s8957 = sand.u32 %s502, 1
        %s8958 = smul.addr %s8957, 256
        %s8959 = scalar_lea.vmem [#allocation38], %s8958
        // Predicated region
        $region189: #{fmb_forward.1} parent=103 // pred_check
          %p8960 = pneg %p512
        $region190: #{fmb_forward.1} parent=103 // pred_check_branch
          %8962 = sbr.rel (%p8960) target = $region192
        $region191: #{fmb_forward.1} parent=103 // pred_region
          %s8964 = ssub.s32 4096, 4096
          %8965 = vsyncadd %s8956, %s8964
          %s8966 = smul.addr %s48, 32
          %s8967 = smul.addr %s8966, 128
          %s8968 = scalar_lea.hbm %s21, %s8967
          %s8969 = sshll.u32 %s8959, 4
          %s8970 = int_to_ptr.vmem [resolvable:$true] %s8969
          %8975 = dma.vmem_to_hbm [thread:$0]  %s8970, 4096, %s8968, %s8956, 128, 128, 8
        $region192: #{fmb_forward.1} parent=103 // pred_fallthru
          _
      $region104: #{fmb_forward.1} parent=5 // pred_fallthru
        _
      %p8976 = scmp.le.s32.totalorder 2, %s43
      // Predicated region
      $region193: #{fmb_forward.1} parent=5 // pred_check
        %p8977 = pneg %p8976
      $region194: #{fmb_forward.1} parent=5 // pred_check_branch
        %8979 = sbr.rel (%p8977) target = $region196
      $region195: #{fmb_forward.1} parent=5 // pred_region
        %s8980 = ssub.s32 %s43, 2
        // Predicated region
        $region197: #{fmb_forward.1} parent=195 // pred_check
          %p8981 = pneg %p518
        $region198: #{fmb_forward.1} parent=195 // pred_check_branch
          %8983 = sbr.rel (%p8981) target = $region200
        $region199: #{fmb_forward.1} parent=195 // pred_region
          %s8984 = sand.u32 %s503, 1
          %s8985 = scalar_lea.sflag [#allocation7], %s8984
          %s8986 = sand.u32 %s503, 1
          %s8987 = smul.addr %s8986, 256
          %s8988 = scalar_lea.vmem [#allocation38], %s8987
          %8989 = dma.done %s8985, 4096
        $region200: #{fmb_forward.1} parent=195 // pred_fallthru
          _
      $region196: #{fmb_forward.1} parent=5 // pred_fallthru
        _
    $region6: #{fmb_forward.1} parent=1 // loop_footer
      %s47 = sadd.s32 1, %s43
    $region7: #{fmb_forward.1} parent=1 // loop_footer_branch
      %42 = sbr.rel target = $region3
    $region8: #{fmb_forward.1} parent=1 // loop_exit
      _
    %8990 = vsyncpa [#allocation6], 1
    %s8991 = scalar_lea.sflag [#allocation6], 1
    %8992 = vsyncpa %s8991, 1
    %8993 = vsyncpa [#allocation9], 1
    %8994 = vsyncpa [#allocation12], 1
    %8995 = vsyncpa [#allocation15], 1
    %8996 = vsyncpa [#allocation18], 1
    %8997 = vsyncpa [#allocation21], 1
    %8998 = vsyncpa [#allocation24], 1
    %8999 = vsyncpa [#allocation27], 1
    %9000 = vsyncpa [#allocation30], 1
    %9001 = vsyncpa [#allocation33], 1
    %9002 = vsyncpa [#allocation36], 1
    %9003 = vsyncpa [#allocation7], 1
    %s9004 = scalar_lea.sflag [#allocation7], 1
    %9005 = vsyncpa %s9004, 1

</llo_original>
